<compile_context>
chip_gen: v7x
topology: tpu7x:2x2x1
jax: 0.10.0
libtpu: 0.0.40
codegen_flags: <defaults>
</compile_context>

<pallas_src>
import functools

import jax
import jax.numpy as jnp
from jax.experimental import pallas as pl
from jax.experimental.pallas import tpu as pltpu


def _mlp_kernel(x_ref, wg_ref, wu_ref, wd_ref, out_ref, statp_ref,
                rsum_ref, isq_ref, *, t_i, eps):
    i = pl.program_id(2)
    # Contract the last dim of both operands: x @ W^T with W in nn.Linear layout.
    nt = (((1,), (1,)), ((), ()))

    @pl.when(i == 0)
    def _init():
        out_ref[...] = jnp.zeros_like(out_ref)      # resident f32 accumulator
        rsum_ref[...] = jnp.zeros_like(rsum_ref)

    x = x_ref[...]                                                    # (tS, H) bf16
    g = jax.lax.dot_general(x, wg_ref[...], nt,
                            preferred_element_type=jnp.float32)       # (tS, tI)
    u = jax.lax.dot_general(x, wu_ref[...], nt,
                            preferred_element_type=jnp.float32)       # (tS, tI)
    inter = (g * jax.nn.sigmoid(g)) * u                               # silu(g)*u, f32
    inter_sq = inter * inter                                          # computed once
    rsum_ref[...] += jnp.sum(inter_sq, axis=-1, keepdims=True)        # (tS, 1) f32

    col = pl.multiple_of(i * t_i, t_i)
    isq_ref[:, pl.ds(col, t_i)] = inter_sq.astype(isq_ref.dtype)      # bf16 stat scratch

    # down-projection partial accumulated straight into the resident output block.
    out_ref[...] += jax.lax.dot_general(inter.astype(wd_ref.dtype), wd_ref[...], nt,
                                        preferred_element_type=jnp.float32)

    @pl.when(i == pl.num_programs(2) - 1)
    def _finalize():
        # Exact reciprocal: the stat feeds a top-k ranking (no approx EUP recip).
        # eps guards all-zero intermediate rows (reference would give NaN).
        r = 1.0 / (rsum_ref[...] + eps)                               # (tS, 1) f32
        # Single fused scale-and-reduce over the bf16 scratch; one lane-dense
        # (1, I) store.  TODO(synk): could be a (1,tS)@(tS,I) MXU dot (r^T @ isq)
        # to take the epilogue off the VPU entirely.
        statp_ref[...] = jnp.sum(isq_ref[...] * r, axis=0, keepdims=True)


def _physical_vmem_bytes():
    try:
        info = pltpu.get_tpu_info()
        return int(getattr(info, "vmem_capacity_bytes", 64 << 20))
    except Exception:
        return 64 << 20  # conservative (v7x); v5e/v6e have 128 MiB


def _vmem_bytes(t_s, t_i, H, I):
    bf, f4 = 2, 4
    in_bufs = 2 * (t_s * H * bf + 2 * t_i * H * bf + H * t_i * bf)   # dbl-buffered bf16 in
    out_bufs = 2 * (t_s * H * f4 + max(I, 128) * f4)                 # f32 outputs
    scratch = t_s * 128 * f4 + t_s * I * bf                          # rsum (lane pad) + bf16 isq
    return in_bufs + out_bufs + scratch


def llama_mlp_forward(x, w_gate, w_up, w_down, k_factor):
    """Prefill forward of LlamaMLP (mode='gen', seq_len > 1).

    x:       (B, S, H) float32
    w_gate:  (I, H)   nn.Linear(hidden, intermediate).weight layout
    w_up:    (I, H)
    w_down:  (H, I)   nn.Linear(intermediate, hidden).weight layout
    Returns (down_proj, neuron_stat, (topk_weight, topk_indices, reduced_weights)).
    """
    B, S, H = x.shape
    I = w_gate.shape[0]

    # Generation-aware VMEM budget (v5e/v6e: 128 MiB physical, v7x: 64 MiB),
    # minus headroom for compiler-internal scratch.
    phys = _physical_vmem_bytes()
    budget = max(phys - (16 << 20), 24 << 20)

    # I-tile: 256 preferred.  Weights are fully re-streamed per (b, s_tile)
    # regardless of t_i, so a narrower I-tile costs no HBM traffic but frees
    # VMEM that is spent on a larger sequence tile (the real bandwidth lever).
    t_i = next((c for c in (256, 512, 128) if I % c == 0), I)

    # Sequence tile: largest candidate that fits the budget (arithmetic intensity
    # scales with t_s).  Note: on v7x, also consider keeping B * (S // t_s) >= 2
    # so both TensorCores get a shard.
    s_cands = [c for c in (1024, 512, 256, 128) if S % c == 0]
    if not s_cands:
        t_s = S
    else:
        t_s = next((c for c in s_cands if _vmem_bytes(c, t_i, H, I) <= budget),
                   s_cands[-1])
    n_s = S // t_s
    n_i = I // t_i

    est = _vmem_bytes(t_s, t_i, H, I)
    vmem_limit = int(min(max(est + (8 << 20), 32 << 20),
                         max(phys - (8 << 20), 32 << 20)))

    # bf16 operands: MXU-native rate and half the weight DMA.  This cast is the
    # ONLY per-call weight preprocessing; pass bf16 weights (cached at model load)
    # to make it a no-op.  f32 accumulation happens inside the kernel.
    x_bf = x.astype(jnp.bfloat16)
    wg = jnp.asarray(w_gate).astype(jnp.bfloat16)   # (I, H), original layout
    wu = jnp.asarray(w_up).astype(jnp.bfloat16)     # (I, H)
    wd = jnp.asarray(w_down).astype(jnp.bfloat16)   # (H, I)

    kernel = functools.partial(_mlp_kernel, t_i=t_i, eps=1e-12)

    down_proj, stat_partial = pl.pallas_call(
        kernel,
        out_shape=(
            # TODO(synk): emit bf16 down_proj (with an f32 acc scratch) if the
            # consumer accepts it -- halves output writeback.
            jax.ShapeDtypeStruct((B, S, H), jnp.float32),
            jax.ShapeDtypeStruct((B * n_s, 1, I), jnp.float32),
        ),
        grid_spec=pltpu.PrefetchScalarGridSpec(
            num_scalar_prefetch=0,
            grid=(B, n_s, n_i),
            in_specs=[
                pl.BlockSpec((None, t_s, H), lambda b, s, i: (b, s, 0)),   # x tile
                pl.BlockSpec((t_i, H), lambda b, s, i: (i, 0)),            # gate (I, H)
                pl.BlockSpec((t_i, H), lambda b, s, i: (i, 0)),            # up   (I, H)
                pl.BlockSpec((H, t_i), lambda b, s, i: (0, i)),            # down (H, I)
            ],
            out_specs=[
                pl.BlockSpec((None, t_s, H), lambda b, s, i: (b, s, 0)),   # down_proj
                pl.BlockSpec((None, 1, I),
                             lambda b, s, i: (b * n_s + s, 0, 0)),         # stat partial
            ],
            scratch_shapes=[
                pltpu.VMEM((t_s, 1), jnp.float32),        # per-token row-sum accumulator
                pltpu.VMEM((t_s, I), jnp.bfloat16),       # inter^2 stat scratch (bf16)
            ],
        ),
        compiler_params=pltpu.CompilerParams(
            dimension_semantics=("parallel", "parallel", "arbitrary"),
            vmem_limit_bytes=vmem_limit,
        ),
    )(x_bf, wg, wu, wd)

    # Reduce the per-s-tile partials (tiny) and take the sqrt.
    neuron_stat = jnp.sqrt(jnp.sum(stat_partial.reshape(B, n_s, I), axis=1))  # (B, I)

    # select_neurons(..., 'topk', k) + prepare_reduced_weights (plain-JAX glue).
    k = int(I * k_factor)
    topk_weight, topk_indices = jax.lax.top_k(neuron_stat, k)
    # torch's prepare_reduced_weights asserts batch == 1; mirror it via batch 0.
    idx0 = topk_indices[0]
    reduced_weights = {
        "gate_proj_reduced": jnp.asarray(w_gate)[idx0],        # (k, H)
        "up_proj_reduced": jnp.asarray(w_up)[idx0],            # (k, H)
        "down_proj_reduced": jnp.asarray(w_down)[:, idx0],     # (H, k)
    }
    # TODO(synk): decode branch (x.shape[1] == 1) reuses this kernel with the
    # reduced weights above; not exercised here (prefill path only).
    return down_proj, neuron_stat, (topk_weight, topk_indices, reduced_weights)


def _reference_forward(x, w_gate, w_up, w_down):
    hi = jax.lax.Precision.HIGHEST
    g = jnp.einsum("bsh,ih->bsi", x, w_gate, precision=hi)
    u = jnp.einsum("bsh,ih->bsi", x, w_up, precision=hi)
    inter = jax.nn.silu(g) * u
    down = jnp.einsum("bsi,hi->bsh", inter, w_down, precision=hi)
    row_norm = jnp.linalg.norm(inter, axis=-1, keepdims=True)
    stat = jnp.linalg.norm(inter / row_norm, axis=1)
    return down, stat


if __name__ == "__main__":
    # Small but 128-aligned shapes; tiled grid (B=2, n_s, n_i>1) is exercised.
    B, S, H, I = 2, 512, 256, 1024
    k_factor = 0.5

    key = jax.random.PRNGKey(0)
    kx, kg, ku, kd = jax.random.split(key, 4)
    x = jax.random.normal(kx, (B, S, H), dtype=jnp.float32)
    w_gate = jax.random.normal(kg, (I, H), dtype=jnp.float32) * (1.0 / H ** 0.5)
    w_up = jax.random.normal(ku, (I, H), dtype=jnp.float32) * (1.0 / H ** 0.5)
    w_down = jax.random.normal(kd, (H, I), dtype=jnp.float32) * (1.0 / I ** 0.5)

    down_proj, neuron_stat, (topk_w, topk_idx, reduced) = llama_mlp_forward(
        x, w_gate, w_up, w_down, k_factor)
    jax.block_until_ready(down_proj)
    jax.block_until_ready(neuron_stat)
    jax.block_until_ready(topk_idx)

    # Reference uses the same bf16-rounded operands the kernel sees.
    xb = x.astype(jnp.bfloat16).astype(jnp.float32)
    wgb = w_gate.astype(jnp.bfloat16).astype(jnp.float32)
    wub = w_up.astype(jnp.bfloat16).astype(jnp.float32)
    wdb = w_down.astype(jnp.bfloat16).astype(jnp.float32)
    ref_down, ref_stat = _reference_forward(xb, wgb, wub, wdb)

    assert jnp.allclose(down_proj, ref_down, rtol=3e-2, atol=3e-2), "down_proj mismatch"
    assert jnp.allclose(neuron_stat, ref_stat, rtol=3e-2, atol=3e-2), "neuron_stat mismatch"
    assert reduced["gate_proj_reduced"].shape == (int(I * k_factor), H)

    print("KERNEL_OK")
</pallas_src>

<mosaic_0001>
module attributes {stable_mosaic.version = 11 : i64} {
  func.func @_mlp_kernel(%arg0: i32, %arg1: i32, %arg2: i32, %arg3: memref<1x512x256xbf16, #tpu.memory_space<vmem>>, %arg4: memref<256x256xbf16, #tpu.memory_space<vmem>>, %arg5: memref<256x256xbf16, #tpu.memory_space<vmem>>, %arg6: memref<256x256xbf16, #tpu.memory_space<vmem>>, %arg7: memref<1x512x256xf32, #tpu.memory_space<vmem>>, %arg8: memref<1x1x1024xf32, #tpu.memory_space<vmem>>, %arg9: memref<512x1xf32, #tpu.memory_space<vmem>>, %arg10: memref<512x1024xbf16, #tpu.memory_space<vmem>>) attributes {dimension_semantics = [#tpu.dimension_semantics<parallel>, #tpu.dimension_semantics<parallel>, #tpu.dimension_semantics<arbitrary>], iteration_bounds = array<i64: 2, 1, 4>, scalar_prefetch = 0 : i64, scratch_operands = 2 : i64, tpu.core_type = #tpu.core_type<tc>, window_params = [{transform_indices = @transform_0, window_bounds = array<i64: 1, 512, 256>}, {transform_indices = @transform_1, window_bounds = array<i64: 256, 256>}, {transform_indices = @transform_2, window_bounds = array<i64: 256, 256>}, {transform_indices = @transform_3, window_bounds = array<i64: 256, 256>}, {transform_indices = @transform_4, window_bounds = array<i64: 1, 512, 256>}, {transform_indices = @transform_5, window_bounds = array<i64: 1, 1, 1024>}]} {
    %c0_i32 = arith.constant 0 : i32
    %0 = arith.cmpi eq, %arg2, %c0_i32 : i32
    %1 = arith.extui %0 : i1 to i32
    %c0_i32_0 = arith.constant 0 : i32
    %2 = arith.cmpi ne, %1, %c0_i32_0 : i32
    scf.if %2 {
      %cst_25 = arith.constant 0.000000e+00 : f32
      %39 = vector.broadcast %cst_25 : f32 to vector<512x256xf32>
      %c0_26 = arith.constant 0 : index
      %c0_27 = arith.constant 0 : index
      %c0_28 = arith.constant 0 : index
      %40 = vector.load %arg7[%c0_26, %c0_27, %c0_28] : memref<1x512x256xf32, #tpu.memory_space<vmem>>, vector<1x512x256xf32>
      %41 = vector.shape_cast %40 : vector<1x512x256xf32> to vector<512x256xf32>
      %42 = vector.shape_cast %39 : vector<512x256xf32> to vector<1x512x256xf32>
      tpu.vector_store %arg7[%c0_26, %c0_27, %c0_28], %42 {strides = array<i32>} : memref<1x512x256xf32, #tpu.memory_space<vmem>>, vector<1x512x256xf32>,
      %cst_29 = arith.constant 0.000000e+00 : f32
      %43 = vector.broadcast %cst_29 : f32 to vector<512x1xf32>
      %c0_30 = arith.constant 0 : index
      %c0_31 = arith.constant 0 : index
      %44 = vector.load %arg9[%c0_30, %c0_31] : memref<512x1xf32, #tpu.memory_space<vmem>>, vector<512x1xf32>
      tpu.vector_store %arg9[%c0_30, %c0_31], %43 {strides = array<i32>} : memref<512x1xf32, #tpu.memory_space<vmem>>, vector<512x1xf32>,
    } else {
    }
    %c0 = arith.constant 0 : index
    %c0_1 = arith.constant 0 : index
    %c0_2 = arith.constant 0 : index
    %3 = vector.load %arg3[%c0, %c0_1, %c0_2] : memref<1x512x256xbf16, #tpu.memory_space<vmem>>, vector<1x512x256xbf16>
    %4 = vector.shape_cast %3 : vector<1x512x256xbf16> to vector<512x256xbf16>
    %c0_3 = arith.constant 0 : index
    %c0_4 = arith.constant 0 : index
    %5 = vector.load %arg4[%c0_3, %c0_4] : memref<256x256xbf16, #tpu.memory_space<vmem>>, vector<256x256xbf16>
    %cst = arith.constant dense<0.000000e+00> : vector<512x256xf32>
    %6 = tpu.matmul %4, %5, %cst {dimension_numbers = #tpu.dot_dimension_numbers<[1], [1], [0], [0], [0, 0, 1, 0], [], []>} : vector<512x256xbf16>, vector<256x256xbf16>, vector<512x256xf32> -> vector<512x256xf32>
    %c0_5 = arith.constant 0 : index
    %c0_6 = arith.constant 0 : index
    %7 = vector.load %arg5[%c0_5, %c0_6] : memref<256x256xbf16, #tpu.memory_space<vmem>>, vector<256x256xbf16>
    %cst_7 = arith.constant dense<0.000000e+00> : vector<512x256xf32>
    %8 = tpu.matmul %4, %7, %cst_7 {dimension_numbers = #tpu.dot_dimension_numbers<[1], [1], [0], [0], [0, 0, 1, 0], [], []>} : vector<512x256xbf16>, vector<256x256xbf16>, vector<512x256xf32> -> vector<512x256xf32>
    %9 = arith.negf %6 : vector<512x256xf32>
    %10 = math.exp %9 : vector<512x256xf32>
    %cst_8 = arith.constant 1.000000e+00 : f32
    %11 = vector.broadcast %cst_8 : f32 to vector<512x256xf32>
    %12 = arith.addf %11, %10 : vector<512x256xf32>
    %13 = arith.divf %11, %12 : vector<512x256xf32>
    %14 = arith.mulf %6, %13 : vector<512x256xf32>
    %15 = arith.mulf %14, %8 : vector<512x256xf32>
    %16 = arith.mulf %15, %15 : vector<512x256xf32>
    %c0_9 = arith.constant 0 : index
    %c0_10 = arith.constant 0 : index
    %17 = vector.load %arg9[%c0_9, %c0_10] : memref<512x1xf32, #tpu.memory_space<vmem>>, vector<512x1xf32>
    %cst_11 = arith.constant dense<0.000000e+00> : vector<512xf32>
    %18 = vector.multi_reduction <add>, %16, %cst_11 [1] : vector<512x256xf32> to vector<512xf32>
    %19 = vector.shape_cast %18 : vector<512xf32> to vector<512x1xf32>
    %20 = arith.addf %17, %19 : vector<512x1xf32>
    %c0_12 = arith.constant 0 : index
    %c0_13 = arith.constant 0 : index
    %21 = vector.load %arg9[%c0_12, %c0_13] : memref<512x1xf32, #tpu.memory_space<vmem>>, vector<512x1xf32>
    tpu.vector_store %arg9[%c0_12, %c0_13], %20 {strides = array<i32>} : memref<512x1xf32, #tpu.memory_space<vmem>>, vector<512x1xf32>,
    %c256_i32 = arith.constant 256 : i32
    %22 = arith.muli %arg2, %c256_i32 : i32
    %23 = tpu.assume_multiple %22, 256 : i32
    %24 = arith.truncf %16 : vector<512x256xf32> to vector<512x256xbf16>
    %c0_14 = arith.constant 0 : index
    %25 = arith.index_cast %23 : i32 to index
    %26 = vector.load %arg10[%c0_14, %25] : memref<512x1024xbf16, #tpu.memory_space<vmem>>, vector<512x256xbf16>
    tpu.vector_store %arg10[%c0_14, %25], %24 {strides = array<i32>} : memref<512x1024xbf16, #tpu.memory_space<vmem>>, vector<512x256xbf16>,
    %c0_15 = arith.constant 0 : index
    %c0_16 = arith.constant 0 : index
    %c0_17 = arith.constant 0 : index
    %27 = vector.load %arg7[%c0_15, %c0_16, %c0_17] : memref<1x512x256xf32, #tpu.memory_space<vmem>>, vector<1x512x256xf32>
    %28 = vector.shape_cast %27 : vector<1x512x256xf32> to vector<512x256xf32>
    %29 = arith.truncf %15 : vector<512x256xf32> to vector<512x256xbf16>
    %c0_18 = arith.constant 0 : index
    %c0_19 = arith.constant 0 : index
    %30 = vector.load %arg6[%c0_18, %c0_19] : memref<256x256xbf16, #tpu.memory_space<vmem>>, vector<256x256xbf16>
    %cst_20 = arith.constant dense<0.000000e+00> : vector<512x256xf32>
    %31 = tpu.matmul %29, %30, %cst_20 {dimension_numbers = #tpu.dot_dimension_numbers<[1], [1], [0], [0], [0, 0, 1, 0], [], []>} : vector<512x256xbf16>, vector<256x256xbf16>, vector<512x256xf32> -> vector<512x256xf32>
    %32 = arith.addf %28, %31 : vector<512x256xf32>
    %c0_21 = arith.constant 0 : index
    %c0_22 = arith.constant 0 : index
    %c0_23 = arith.constant 0 : index
    %33 = vector.load %arg7[%c0_21, %c0_22, %c0_23] : memref<1x512x256xf32, #tpu.memory_space<vmem>>, vector<1x512x256xf32>
    %34 = vector.shape_cast %33 : vector<1x512x256xf32> to vector<512x256xf32>
    %35 = vector.shape_cast %32 : vector<512x256xf32> to vector<1x512x256xf32>
    tpu.vector_store %arg7[%c0_21, %c0_22, %c0_23], %35 {strides = array<i32>} : memref<1x512x256xf32, #tpu.memory_space<vmem>>, vector<1x512x256xf32>,
    %c3_i32 = arith.constant 3 : i32
    %36 = arith.cmpi eq, %arg2, %c3_i32 : i32
    %37 = arith.extui %36 : i1 to i32
    %c0_i32_24 = arith.constant 0 : i32
    %38 = arith.cmpi ne, %37, %c0_i32_24 : i32
    scf.if %38 {
      %c0_25 = arith.constant 0 : index
      %c0_26 = arith.constant 0 : index
      %39 = vector.load %arg9[%c0_25, %c0_26] : memref<512x1xf32, #tpu.memory_space<vmem>>, vector<512x1xf32>
      %cst_27 = arith.constant 9.99999996E-13 : f32
      %40 = vector.broadcast %cst_27 : f32 to vector<512x1xf32>
      %41 = arith.addf %39, %40 : vector<512x1xf32>
      %cst_28 = arith.constant 1.000000e+00 : f32
      %42 = vector.broadcast %cst_28 : f32 to vector<512x1xf32>
      %43 = arith.divf %42, %41 : vector<512x1xf32>
      %c0_29 = arith.constant 0 : index
      %c0_30 = arith.constant 0 : index
      %44 = vector.load %arg10[%c0_29, %c0_30] : memref<512x1024xbf16, #tpu.memory_space<vmem>>, vector<512x1024xbf16>
      %45 = arith.extf %44 : vector<512x1024xbf16> to vector<512x1024xf32>
      %46 = vector.broadcast %43 : vector<512x1xf32> to vector<512x1024xf32>
      %47 = arith.mulf %45, %46 : vector<512x1024xf32>
      %cst_31 = arith.constant dense<0.000000e+00> : vector<1024xf32>
      %48 = vector.multi_reduction <add>, %47, %cst_31 [0] : vector<512x1024xf32> to vector<1024xf32>
      %49 = vector.shape_cast %48 : vector<1024xf32> to vector<1x1024xf32>
      %c0_32 = arith.constant 0 : index
      %c0_33 = arith.constant 0 : index
      %c0_34 = arith.constant 0 : index
      %50 = vector.load %arg8[%c0_32, %c0_33, %c0_34] : memref<1x1x1024xf32, #tpu.memory_space<vmem>>, vector<1x1x1024xf32>
      %51 = vector.shape_cast %50 : vector<1x1x1024xf32> to vector<1x1024xf32>
      %52 = vector.shape_cast %49 : vector<1x1024xf32> to vector<1x1x1024xf32>
      tpu.vector_store %arg8[%c0_32, %c0_33, %c0_34], %52 {strides = array<i32>} : memref<1x1x1024xf32, #tpu.memory_space<vmem>>, vector<1x1x1024xf32>,
    } else {
    }
    return
  }
  func.func @transform_0(%arg0: i32, %arg1: i32, %arg2: i32) -> (i32, i32, i32) {
    %c0_i32 = arith.constant 0 : i32
    %c0_i32_0 = arith.constant 0 : i32
    return %arg0, %arg1, %c0_i32 : i32, i32, i32
  }
  func.func @transform_1(%arg0: i32, %arg1: i32, %arg2: i32) -> (i32, i32) {
    %c0_i32 = arith.constant 0 : i32
    %c0_i32_0 = arith.constant 0 : i32
    return %arg2, %c0_i32 : i32, i32
  }
  func.func @transform_2(%arg0: i32, %arg1: i32, %arg2: i32) -> (i32, i32) {
    %c0_i32 = arith.constant 0 : i32
    %c0_i32_0 = arith.constant 0 : i32
    return %arg2, %c0_i32 : i32, i32
  }
  func.func @transform_3(%arg0: i32, %arg1: i32, %arg2: i32) -> (i32, i32) {
    %c0_i32 = arith.constant 0 : i32
    %c0_i32_0 = arith.constant 0 : i32
    return %c0_i32, %arg2 : i32, i32
  }
  func.func @transform_4(%arg0: i32, %arg1: i32, %arg2: i32) -> (i32, i32, i32) {
    %c0_i32 = arith.constant 0 : i32
    %c0_i32_0 = arith.constant 0 : i32
    return %arg0, %arg1, %c0_i32 : i32, i32, i32
  }
  func.func @transform_5(%arg0: i32, %arg1: i32, %arg2: i32) -> (i32, i32, i32) {
    %c1_i32 = arith.constant 1 : i32
    %0 = arith.muli %arg0, %c1_i32 : i32
    %1 = arith.addi %0, %arg1 : i32
    %c0_i32 = arith.constant 0 : i32
    %c0_i32_0 = arith.constant 0 : i32
    %c0_i32_1 = arith.constant 0 : i32
    return %1, %c0_i32, %c0_i32_0 : i32, i32, i32
  }
}

</mosaic_0001>

<llo_original>
// kernel: tpu_custom_call.1
$region0: #{tpu_custom_call.1}
  #allocation0 [shape = 'u32[]', space=smem, size = 0x4, offset = 0x4, fixed_abs, tag = 'smem constant byte address 0x4 - core index']
  #allocation1 [shape = 'u32[144,128]{1,0:T(1,128)}', space=vmem, size = 0x12000, scoped, tag = 'internal scratch']
  #allocation2 [shape = 'f32[512,1]{1,0:T(8,128)}', space=vmem, size = 0x40000, scoped, tag = 'scratch operand']
  #allocation3 [shape = 'bf16[512,1024]{1,0:T(16,128)(2,1)}', space=vmem, size = 0x100000, scoped, tag = 'scratch operand']
  %s0 = inlined_call_operand.hbm [shape: bf16[2,512,256], index: 0, kind: input, shape index: {}]
  %s1 = inlined_call_operand.hbm [shape: bf16[1024,256], index: 1, kind: input, shape index: {}]
  %s2 = inlined_call_operand.hbm [shape: bf16[1024,256], index: 2, kind: input, shape index: {}]
  %s3 = inlined_call_operand.hbm [shape: bf16[256,1024], index: 3, kind: input, shape index: {}]
  %s4 = inlined_call_operand.hbm [shape: f32[2,512,256], index: 4, kind: output, shape index: {0}]
  %s5 = inlined_call_operand.hbm [shape: f32[2,1,1024], index: 5, kind: output, shape index: {1}]
  %6 = xla_tuple %s4, %s5
  %s7 = sld [smem:[#allocation0]]
  $region81: #{tpu_custom_call.1} parent=0
    _
  %s9 = ssub.s32 1, %s7
  %s10 = scalar_select 0, %s9, %s7
  $region1: #{tpu_custom_call.1} parent=0
    #allocation4 [shape = 'u8[524288]{0}', space=vmem, size = 0x80000, scoped, tag = 'input window, operand 0']
    #allocation5 [shape = 's32[2]{0}', space=sflag, size = 0x8, scoped, tag = 'scoped memory for tpu_custom_call.1']
    #allocation6 [shape = 's32[2]{0}', space=sflag, size = 0x8, scoped, tag = 'scoped memory for tpu_custom_call.1']
    #allocation7 [shape = 'u8[262144]{0}', space=vmem, size = 0x40000, scoped, tag = 'input window, operand 1']
    #allocation8 [shape = 's32[2]{0}', space=sflag, size = 0x8, scoped, tag = 'scoped memory for tpu_custom_call.1']
    #allocation9 [shape = 'u8[262144]{0}', space=vmem, size = 0x40000, scoped, tag = 'input window, operand 2']
    #allocation10 [shape = 'u8[262144]{0}', space=vmem, size = 0x40000, scoped, tag = 'input window, operand 3']
    #allocation11 [shape = 's32[2]{0}', space=sflag, size = 0x8, scoped, tag = 'scoped memory for tpu_custom_call.1']
    #allocation12 [shape = 'u8[1048576]{0}', space=vmem, size = 0x100000, scoped, tag = 'output window, operand 0']
    #allocation13 [shape = 'u8[8192]{0}', space=vmem, size = 0x2000, scoped, tag = 'output window, operand 1']
    #allocation14 [shape = 's32[2]{0}', space=sflag, size = 0x8, scoped, tag = 'scoped memory for tpu_custom_call.1']
    %11 = vsyncpa [#allocation5], 0
    %s12 = scalar_lea.sflag [#allocation5], 1
    %13 = vsyncpa %s12, 0
    %14 = vsyncpa [#allocation8], 0
    %s15 = scalar_lea.sflag [#allocation8], 1
    %16 = vsyncpa %s15, 0
    %17 = vsyncpa [#allocation11], 0
    %s18 = scalar_lea.sflag [#allocation11], 1
    %19 = vsyncpa %s18, 0
    %20 = vsyncpa [#allocation6], 0
    %s21 = scalar_lea.sflag [#allocation6], 1
    %22 = vsyncpa %s21, 0
    %23 = vsyncpa [#allocation14], 0
    %s24 = scalar_lea.sflag [#allocation14], 1
    %25 = vsyncpa %s24, 0
    loop: start=0, step=1, limit=10
    $region2: #{tpu_custom_call.1} parent=1 // loop_pre_header
      _
    $region3: #{tpu_custom_call.1} parent=1 // loop_header
      %s27 = sphi 0, %s31
      %p28 = scmp.ge.s32.totalorder %s27, 10
      %s34 = sphi 0, %s53
      %s35 = sphi 0, %s49
      %s36 = sphi 0, %s45
      %s37 = sphi 0, %s34
      %s38 = sphi 0, %s35
      %s39 = sphi 0, %s36
      %s40 = sphi 0, %s37
      %s41 = sphi 0, %s38
      %s42 = sphi 0, %s39
      %s58 = sphi 0, %s60
      %s61 = sphi 0, %s58
      %s62 = sphi 0, %s61
      %s78 = sphi 0, %s62
      %s84 = sphi 0, %s86
      %s87 = sphi 0, %s84
      %s88 = sphi 0, %s87
      %s104 = sphi 0, %s88
      %s110 = sphi 0, %s112
      %s113 = sphi 0, %s110
      %s114 = sphi 0, %s113
      %s130 = sphi 0, %s114
      %s136 = sphi 0, %s138
      %s139 = sphi 0, %s136
      %s140 = sphi 0, %s139
      %s156 = sphi 0, %s140
      %s164 = sphi 0, %s166
      %s167 = sphi 0, %s164
      %s168 = sphi 0, %s167
      %s184 = sphi 0, %s168
      %s192 = sphi 0, %s194
      %s195 = sphi 0, %s192
      %s196 = sphi 0, %s195
      %s212 = sphi 0, %s196
    $region4: #{tpu_custom_call.1} parent=1 // loop_header_branch
      %30 = sbr.rel (%p28) target = $region8
    $region5: #{tpu_custom_call.1} parent=1 // loop_body
      %s32 = ssub.s32 %s27, 1
      %s33 = ssub.s32 %s27, 2
      %s43 = sadd.s32 1, %s36
      %p44 = scmp.ge.s32.totalorder %s43, 4
      %s45 = scalar_select %p44, 0, %s43
      %s46 = sadd.s32 1, %s35
      %s47 = scalar_select %p44, %s46, %s35
      %p48 = scmp.ge.s32.totalorder %s47, 1
      %s49 = scalar_select %p48, 0, %s47
      %s50 = sadd.s32 1, %s34
      %s51 = scalar_select %p48, %s50, %s34
      %p52 = scmp.ge.s32.totalorder %s51, 2
      %s53 = scalar_select %p52, 0, %s51
      %s54 = ssub.s32 %s34, %s53
      %s55 = ssub.s32 %s35, %s49
      %s56 = sor.u32 %s54, %s55
      %p57 = scmp.eq.s32.totalorder %s56, 0
      %s59 = sadd.s32 %s58, 1
      %s60 = scalar_select %p57, %s58, %s59
      %p63 = pneg %p57
      %p64 = scmp.eq.s32.totalorder %s27, 7
      %p65 = por %p63, %p64
      %p66 = scmp.ne.s32.totalorder %s58, %s61
      %p67 = scmp.eq.s32.totalorder %s27, 0
      %p68 = por %p66, %p67
      %p69 = scmp.ne.s32.totalorder %s58, %s61
      %p70 = scmp.eq.s32.totalorder %s32, 7
      %p71 = por %p69, %p70
      %p72 = scmp.ne.s32.totalorder %s61, %s62
      %p73 = scmp.eq.s32.totalorder %s32, 0
      %p74 = por %p72, %p73
      %p75 = scmp.ne.s32.totalorder %s61, %s62
      %p76 = scmp.eq.s32.totalorder %s33, 7
      %p77 = por %p75, %p76
      %p79 = scmp.ne.s32.totalorder %s62, %s78
      %p80 = scmp.eq.s32.totalorder %s33, 0
      %p81 = por %p79, %p80
      %s82 = ssub.s32 %s36, %s45
      %p83 = scmp.eq.s32.totalorder %s82, 0
      %s85 = sadd.s32 %s84, 1
      %s86 = scalar_select %p83, %s84, %s85
      %p89 = pneg %p83
      %p90 = scmp.eq.s32.totalorder %s27, 7
      %p91 = por %p89, %p90
      %p92 = scmp.ne.s32.totalorder %s84, %s87
      %p93 = scmp.eq.s32.totalorder %s27, 0
      %p94 = por %p92, %p93
      %p95 = scmp.ne.s32.totalorder %s84, %s87
      %p96 = scmp.eq.s32.totalorder %s32, 7
      %p97 = por %p95, %p96
      %p98 = scmp.ne.s32.totalorder %s87, %s88
      %p99 = scmp.eq.s32.totalorder %s32, 0
      %p100 = por %p98, %p99
      %p101 = scmp.ne.s32.totalorder %s87, %s88
      %p102 = scmp.eq.s32.totalorder %s33, 7
      %p103 = por %p101, %p102
      %p105 = scmp.ne.s32.totalorder %s88, %s104
      %p106 = scmp.eq.s32.totalorder %s33, 0
      %p107 = por %p105, %p106
      %s108 = ssub.s32 %s36, %s45
      %p109 = scmp.eq.s32.totalorder %s108, 0
      %s111 = sadd.s32 %s110, 1
      %s112 = scalar_select %p109, %s110, %s111
      %p115 = pneg %p109
      %p116 = scmp.eq.s32.totalorder %s27, 7
      %p117 = por %p115, %p116
      %p118 = scmp.ne.s32.totalorder %s110, %s113
      %p119 = scmp.eq.s32.totalorder %s27, 0
      %p120 = por %p118, %p119
      %p121 = scmp.ne.s32.totalorder %s110, %s113
      %p122 = scmp.eq.s32.totalorder %s32, 7
      %p123 = por %p121, %p122
      %p124 = scmp.ne.s32.totalorder %s113, %s114
      %p125 = scmp.eq.s32.totalorder %s32, 0
      %p126 = por %p124, %p125
      %p127 = scmp.ne.s32.totalorder %s113, %s114
      %p128 = scmp.eq.s32.totalorder %s33, 7
      %p129 = por %p127, %p128
      %p131 = scmp.ne.s32.totalorder %s114, %s130
      %p132 = scmp.eq.s32.totalorder %s33, 0
      %p133 = por %p131, %p132
      %s134 = ssub.s32 %s36, %s45
      %p135 = scmp.eq.s32.totalorder %s134, 0
      %s137 = sadd.s32 %s136, 1
      %s138 = scalar_select %p135, %s136, %s137
      %p141 = pneg %p135
      %p142 = scmp.eq.s32.totalorder %s27, 7
      %p143 = por %p141, %p142
      %p144 = scmp.ne.s32.totalorder %s136, %s139
      %p145 = scmp.eq.s32.totalorder %s27, 0
      %p146 = por %p144, %p145
      %p147 = scmp.ne.s32.totalorder %s136, %s139
      %p148 = scmp.eq.s32.totalorder %s32, 7
      %p149 = por %p147, %p148
      %p150 = scmp.ne.s32.totalorder %s139, %s140
      %p151 = scmp.eq.s32.totalorder %s32, 0
      %p152 = por %p150, %p151
      %p153 = scmp.ne.s32.totalorder %s139, %s140
      %p154 = scmp.eq.s32.totalorder %s33, 7
      %p155 = por %p153, %p154
      %p157 = scmp.ne.s32.totalorder %s140, %s156
      %p158 = scmp.eq.s32.totalorder %s33, 0
      %p159 = por %p157, %p158
      %s160 = ssub.s32 %s34, %s53
      %s161 = ssub.s32 %s35, %s49
      %s162 = sor.u32 %s160, %s161
      %p163 = scmp.eq.s32.totalorder %s162, 0
      %s165 = sadd.s32 %s164, 1
      %s166 = scalar_select %p163, %s164, %s165
      %p169 = pneg %p163
      %p170 = scmp.eq.s32.totalorder %s27, 7
      %p171 = por %p169, %p170
      %p172 = scmp.ne.s32.totalorder %s164, %s167
      %p173 = scmp.eq.s32.totalorder %s27, 0
      %p174 = por %p172, %p173
      %p175 = scmp.ne.s32.totalorder %s164, %s167
      %p176 = scmp.eq.s32.totalorder %s32, 7
      %p177 = por %p175, %p176
      %p178 = scmp.ne.s32.totalorder %s167, %s168
      %p179 = scmp.eq.s32.totalorder %s32, 0
      %p180 = por %p178, %p179
      %p181 = scmp.ne.s32.totalorder %s167, %s168
      %p182 = scmp.eq.s32.totalorder %s33, 7
      %p183 = por %p181, %p182
      %p185 = scmp.ne.s32.totalorder %s168, %s184
      %p186 = scmp.eq.s32.totalorder %s33, 0
      %p187 = por %p185, %p186
      %s188 = sadd.s32 %s34, %s35
      %s189 = sadd.s32 %s53, %s49
      %s190 = ssub.s32 %s188, %s189
      %p191 = scmp.eq.s32.totalorder %s190, 0
      %s193 = sadd.s32 %s192, 1
      %s194 = scalar_select %p191, %s192, %s193
      %p197 = pneg %p191
      %p198 = scmp.eq.s32.totalorder %s27, 7
      %p199 = por %p197, %p198
      %p200 = scmp.ne.s32.totalorder %s192, %s195
      %p201 = scmp.eq.s32.totalorder %s27, 0
      %p202 = por %p200, %p201
      %p203 = scmp.ne.s32.totalorder %s192, %s195
      %p204 = scmp.eq.s32.totalorder %s32, 7
      %p205 = por %p203, %p204
      %p206 = scmp.ne.s32.totalorder %s195, %s196
      %p207 = scmp.eq.s32.totalorder %s32, 0
      %p208 = por %p206, %p207
      %p209 = scmp.ne.s32.totalorder %s195, %s196
      %p210 = scmp.eq.s32.totalorder %s33, 7
      %p211 = por %p209, %p210
      %p213 = scmp.ne.s32.totalorder %s196, %s212
      %p214 = scmp.eq.s32.totalorder %s33, 0
      %p215 = por %p213, %p214
      %p216 = scmp.le.s32.totalorder 1, %s27
      %p217 = scmp.lt.s32.totalorder %s27, 9
      %p218 = pnand %p216, %p217
      %p219 = pneg %p218
      // Predicated region
      $region9: #{tpu_custom_call.1} parent=5 // pred_check
        _
      $region10: #{tpu_custom_call.1} parent=5 // pred_check_branch
        %221 = sbr.rel (%p218) target = $region12
      $region11: #{tpu_custom_call.1} parent=5 // pred_region
        %s222 = ssub.s32 %s27, 1
      $region12: #{tpu_custom_call.1} parent=5 // pred_fallthru
        _
      %p223 = scmp.lt.s32.totalorder %s27, 8
      // Predicated region
      $region13: #{tpu_custom_call.1} parent=5 // pred_check
        %p224 = pneg %p223
      $region14: #{tpu_custom_call.1} parent=5 // pred_check_branch
        %226 = sbr.rel (%p224) target = $region16
      $region15: #{tpu_custom_call.1} parent=5 // pred_region
        // Predicated region
        $region17: #{tpu_custom_call.1} parent=15 // pred_check
          %p227 = pneg %p68
        $region18: #{tpu_custom_call.1} parent=15 // pred_check_branch
          %229 = sbr.rel (%p227) target = $region20
        $region19: #{tpu_custom_call.1} parent=15 // pred_region
          %s230 = sand.u32 %s58, 1
          %s231 = scalar_lea.sflag [#allocation5], %s230
          %s232 = sand.u32 %s58, 1
          %s233 = smul.addr %s232, 512
          %s234 = scalar_lea.vmem [#allocation4], %s233
          %s235 = smul.u32 64, %s35
          %s237 = ssub.s32 8192, 8192
          %238 = vsyncadd %s231, %s237
          %s239 = smul.addr %s235, 2
          %s240 = smul.addr %s34, 128
          %s241 = sadd.s32 %s239, %s240
          %s242 = smul.addr %s241, 64
          %s243 = scalar_lea.hbm %s0, %s242
          %s244 = sshll.u32 %s234, 4
          %s245 = int_to_ptr.vmem [resolvable:$true] %s244
          %250 = dma.hbm_to_vmem [thread:$0]  %s243, 8192, %s245, %s231, 128, 128, 8
        $region20: #{tpu_custom_call.1} parent=15 // pred_fallthru
          _
        // Predicated region
        $region21: #{tpu_custom_call.1} parent=15 // pred_check
          %p251 = pneg %p94
        $region22: #{tpu_custom_call.1} parent=15 // pred_check_branch
          %253 = sbr.rel (%p251) target = $region24
        $region23: #{tpu_custom_call.1} parent=15 // pred_region
          %s254 = sand.u32 %s27, 1
          %s255 = scalar_lea.sflag [#allocation8], %s254
          %s256 = sand.u32 %s84, 1
          %s257 = smul.addr %s256, 256
          %s258 = scalar_lea.vmem [#allocation7], %s257
          %s259 = smul.u32 32, %s36
          %s261 = ssub.s32 4096, 4096
          %262 = vsyncadd %s255, %s261
          %s263 = smul.addr %s259, 2
          %s264 = smul.addr %s263, 64
          %s265 = scalar_lea.hbm %s1, %s264
          %s266 = sshll.u32 %s258, 4
          %s267 = int_to_ptr.vmem [resolvable:$true] %s266
          %272 = dma.hbm_to_vmem [thread:$0]  %s265, 4096, %s267, %s255, 128, 128, 8
        $region24: #{tpu_custom_call.1} parent=15 // pred_fallthru
          _
        // Predicated region
        $region25: #{tpu_custom_call.1} parent=15 // pred_check
          %p273 = pneg %p120
        $region26: #{tpu_custom_call.1} parent=15 // pred_check_branch
          %275 = sbr.rel (%p273) target = $region28
        $region27: #{tpu_custom_call.1} parent=15 // pred_region
          %s276 = sand.u32 %s27, 1
          %s277 = scalar_lea.sflag [#allocation8], %s276
          %s278 = sand.u32 %s110, 1
          %s279 = smul.addr %s278, 256
          %s280 = scalar_lea.vmem [#allocation9], %s279
          %s281 = smul.u32 32, %s36
          %s283 = ssub.s32 4096, 4096
          %284 = vsyncadd %s277, %s283
          %s285 = smul.addr %s281, 2
          %s286 = smul.addr %s285, 64
          %s287 = scalar_lea.hbm %s2, %s286
          %s288 = sshll.u32 %s280, 4
          %s289 = int_to_ptr.vmem [resolvable:$true] %s288
          %294 = dma.hbm_to_vmem [thread:$0]  %s287, 4096, %s289, %s277, 128, 128, 8
        $region28: #{tpu_custom_call.1} parent=15 // pred_fallthru
          _
        // Predicated region
        $region29: #{tpu_custom_call.1} parent=15 // pred_check
          %p295 = pneg %p146
        $region30: #{tpu_custom_call.1} parent=15 // pred_check_branch
          %297 = sbr.rel (%p295) target = $region32
        $region31: #{tpu_custom_call.1} parent=15 // pred_region
          %s298 = sand.u32 %s136, 1
          %s299 = scalar_lea.sflag [#allocation11], %s298
          %s300 = sand.u32 %s136, 1
          %s301 = smul.addr %s300, 256
          %s302 = scalar_lea.vmem [#allocation10], %s301
          %s303 = smul.u32 2, %s36
          %s305 = ssub.s32 4096, 4096
          %306 = vsyncadd %s299, %s305
          %s307 = smul.addr %s303, 64
          %s308 = scalar_lea.hbm %s3, %s307
          %s309 = sshll.u32 %s302, 4
          %s310 = int_to_ptr.vmem [resolvable:$true] %s309
          %315 = dma.hbm_to_vmem [thread:$0]  %s308, 4096, %s310, %s299, 512, 128, 8
        $region32: #{tpu_custom_call.1} parent=15 // pred_fallthru
          _
      $region16: #{tpu_custom_call.1} parent=5 // pred_fallthru
        _
      %p316 = scmp.le.s32.totalorder 1, %s27
      %p317 = scmp.lt.s32.totalorder %s27, 9
      %p318 = pnand %p316, %p317
      %p319 = pneg %p318
      // Predicated region
      $region33: #{tpu_custom_call.1} parent=5 // pred_check
        _
      $region34: #{tpu_custom_call.1} parent=5 // pred_check_branch
        %321 = sbr.rel (%p318) target = $region36
      $region35: #{tpu_custom_call.1} parent=5 // pred_region
        %s322 = ssub.s32 %s27, 1
        %s323 = sand.u32 %s61, 1
        %s324 = scalar_lea.sflag [#allocation5], %s323
        %s325 = sand.u32 %s61, 1
        %s326 = smul.addr %s325, 512
        %s327 = scalar_lea.vmem [#allocation4], %s326
        // Predicated region
        $region37: #{tpu_custom_call.1} parent=35 // pred_check
          %p328 = pneg %p74
        $region38: #{tpu_custom_call.1} parent=35 // pred_check_branch
          %330 = sbr.rel (%p328) target = $region40
        $region39: #{tpu_custom_call.1} parent=35 // pred_region
          %331 = dma.done %s324, 8192
        $region40: #{tpu_custom_call.1} parent=35 // pred_fallthru
          _
        %s332 = sand.u32 %s32, 1
        %s333 = scalar_lea.sflag [#allocation8], %s332
        %s334 = sand.u32 %s87, 1
        %s335 = smul.addr %s334, 256
        %s336 = scalar_lea.vmem [#allocation7], %s335
        // Predicated region
        $region41: #{tpu_custom_call.1} parent=35 // pred_check
          %p337 = pneg %p100
        $region42: #{tpu_custom_call.1} parent=35 // pred_check_branch
          %339 = sbr.rel (%p337) target = $region44
        $region43: #{tpu_custom_call.1} parent=35 // pred_region
          %340 = dma.done %s333, 4096
        $region44: #{tpu_custom_call.1} parent=35 // pred_fallthru
          _
        %s341 = sand.u32 %s32, 1
        %s342 = scalar_lea.sflag [#allocation8], %s341
        %s343 = sand.u32 %s113, 1
        %s344 = smul.addr %s343, 256
        %s345 = scalar_lea.vmem [#allocation9], %s344
        // Predicated region
        $region45: #{tpu_custom_call.1} parent=35 // pred_check
          %p346 = pneg %p126
        $region46: #{tpu_custom_call.1} parent=35 // pred_check_branch
          %348 = sbr.rel (%p346) target = $region48
        $region47: #{tpu_custom_call.1} parent=35 // pred_region
          %349 = dma.done %s342, 4096
        $region48: #{tpu_custom_call.1} parent=35 // pred_fallthru
          _
        %s350 = sand.u32 %s139, 1
        %s351 = scalar_lea.sflag [#allocation11], %s350
        %s352 = sand.u32 %s139, 1
        %s353 = smul.addr %s352, 256
        %s354 = scalar_lea.vmem [#allocation10], %s353
        // Predicated region
        $region49: #{tpu_custom_call.1} parent=35 // pred_check
          %p355 = pneg %p152
        $region50: #{tpu_custom_call.1} parent=35 // pred_check_branch
          %357 = sbr.rel (%p355) target = $region52
        $region51: #{tpu_custom_call.1} parent=35 // pred_region
          %358 = dma.done %s351, 4096
        $region52: #{tpu_custom_call.1} parent=35 // pred_fallthru
          _
        %s359 = sand.u32 %s61, 1
        %s360 = scalar_lea.sflag [#allocation5], %s359
        %s361 = sand.u32 %s61, 1
        %s362 = smul.addr %s361, 512
        %s363 = scalar_lea.vmem [#allocation4], %s362
        %p364 = pneg %p74
        %p365 = pneg %p71
        %s366 = sand.u32 %s32, 1
        %s367 = scalar_lea.sflag [#allocation8], %s366
        %s368 = sand.u32 %s87, 1
        %s369 = smul.addr %s368, 256
        %s370 = scalar_lea.vmem [#allocation7], %s369
        %p371 = pneg %p100
        %p372 = pneg %p97
        %s373 = sand.u32 %s32, 1
        %s374 = scalar_lea.sflag [#allocation8], %s373
        %s375 = sand.u32 %s113, 1
        %s376 = smul.addr %s375, 256
        %s377 = scalar_lea.vmem [#allocation9], %s376
        %p378 = pneg %p126
        %p379 = pneg %p123
        %s380 = sand.u32 %s139, 1
        %s381 = scalar_lea.sflag [#allocation11], %s380
        %s382 = sand.u32 %s139, 1
        %s383 = smul.addr %s382, 256
        %s384 = scalar_lea.vmem [#allocation10], %s383
        %p385 = pneg %p152
        %p386 = pneg %p149
        %p387 = pneg %p180
        %p388 = pneg %p177
        %s389 = sand.u32 %s167, 1
        %s390 = scalar_lea.sflag [#allocation6], %s389
        %s391 = sand.u32 %s167, 1
        %s392 = smul.addr %s391, 1024
        %s393 = scalar_lea.vmem [#allocation12], %s392
        %p394 = pneg %p208
        %p395 = pneg %p205
        %s396 = sand.u32 %s195, 1
        %s397 = scalar_lea.sflag [#allocation14], %s396
        %s398 = sand.u32 %s195, 1
        %s399 = smul.addr %s398, 8
        %s400 = scalar_lea.vmem [#allocation13], %s399
        %s401 = smul.u32 64, %s38
        %s402 = smul.u32 32, %s39
        %s403 = smul.u32 32, %s39
        %s404 = smul.u32 2, %s39
        %s405 = smul.u32 64, %s38
        %s406 = sadd.s32 %s37, %s38
        %p407 = scmp.eq.s32.totalorder %s39, 0
        // Predicated region
        $region53: #{tpu_custom_call.1} parent=35 // pred_check
          %p408 = pneg %p407
        $region54: #{tpu_custom_call.1} parent=35 // pred_check_branch
          %410 = sbr.rel (%p408) target = $region56
        $region55: #{tpu_custom_call.1} parent=35 // pred_region
          %411 = vst [vmem:[%s393] sm:$0xff] 0.0
          %412 = vst [vmem:[%s393 + $0x8] sm:$0xff] 0.0
          %413 = vst [vmem:[%s393 + $0x10] sm:$0xff] 0.0
          %414 = vst [vmem:[%s393 + $0x18] sm:$0xff] 0.0
          %415 = vst [vmem:[%s393 + $0x20] sm:$0xff] 0.0
          %416 = vst [vmem:[%s393 + $0x28] sm:$0xff] 0.0
          %417 = vst [vmem:[%s393 + $0x30] sm:$0xff] 0.0
          %418 = vst [vmem:[%s393 + $0x38] sm:$0xff] 0.0
          %419 = vst [vmem:[%s393 + $0x40] sm:$0xff] 0.0
          %420 = vst [vmem:[%s393 + $0x48] sm:$0xff] 0.0
          %421 = vst [vmem:[%s393 + $0x50] sm:$0xff] 0.0
          %422 = vst [vmem:[%s393 + $0x58] sm:$0xff] 0.0
          %423 = vst [vmem:[%s393 + $0x60] sm:$0xff] 0.0
          %424 = vst [vmem:[%s393 + $0x68] sm:$0xff] 0.0
          %425 = vst [vmem:[%s393 + $0x70] sm:$0xff] 0.0
          %426 = vst [vmem:[%s393 + $0x78] sm:$0xff] 0.0
          %427 = vst [vmem:[%s393 + $0x80] sm:$0xff] 0.0
          %428 = vst [vmem:[%s393 + $0x88] sm:$0xff] 0.0
          %429 = vst [vmem:[%s393 + $0x90] sm:$0xff] 0.0
          %430 = vst [vmem:[%s393 + $0x98] sm:$0xff] 0.0
          %431 = vst [vmem:[%s393 + $0xa0] sm:$0xff] 0.0
          %432 = vst [vmem:[%s393 + $0xa8] sm:$0xff] 0.0
          %433 = vst [vmem:[%s393 + $0xb0] sm:$0xff] 0.0
          %434 = vst [vmem:[%s393 + $0xb8] sm:$0xff] 0.0
          %435 = vst [vmem:[%s393 + $0xc0] sm:$0xff] 0.0
          %436 = vst [vmem:[%s393 + $0xc8] sm:$0xff] 0.0
          %437 = vst [vmem:[%s393 + $0xd0] sm:$0xff] 0.0
          %438 = vst [vmem:[%s393 + $0xd8] sm:$0xff] 0.0
          %439 = vst [vmem:[%s393 + $0xe0] sm:$0xff] 0.0
          %440 = vst [vmem:[%s393 + $0xe8] sm:$0xff] 0.0
          %441 = vst [vmem:[%s393 + $0xf0] sm:$0xff] 0.0
          %442 = vst [vmem:[%s393 + $0xf8] sm:$0xff] 0.0
          %443 = vst [vmem:[%s393 + $0x100] sm:$0xff] 0.0
          %444 = vst [vmem:[%s393 + $0x108] sm:$0xff] 0.0
          %445 = vst [vmem:[%s393 + $0x110] sm:$0xff] 0.0
          %446 = vst [vmem:[%s393 + $0x118] sm:$0xff] 0.0
          %447 = vst [vmem:[%s393 + $0x120] sm:$0xff] 0.0
          %448 = vst [vmem:[%s393 + $0x128] sm:$0xff] 0.0
          %449 = vst [vmem:[%s393 + $0x130] sm:$0xff] 0.0
          %450 = vst [vmem:[%s393 + $0x138] sm:$0xff] 0.0
          %451 = vst [vmem:[%s393 + $0x140] sm:$0xff] 0.0
          %452 = vst [vmem:[%s393 + $0x148] sm:$0xff] 0.0
          %453 = vst [vmem:[%s393 + $0x150] sm:$0xff] 0.0
          %454 = vst [vmem:[%s393 + $0x158] sm:$0xff] 0.0
          %455 = vst [vmem:[%s393 + $0x160] sm:$0xff] 0.0
          %456 = vst [vmem:[%s393 + $0x168] sm:$0xff] 0.0
          %457 = vst [vmem:[%s393 + $0x170] sm:$0xff] 0.0
          %458 = vst [vmem:[%s393 + $0x178] sm:$0xff] 0.0
          %459 = vst [vmem:[%s393 + $0x180] sm:$0xff] 0.0
          %460 = vst [vmem:[%s393 + $0x188] sm:$0xff] 0.0
          %461 = vst [vmem:[%s393 + $0x190] sm:$0xff] 0.0
          %462 = vst [vmem:[%s393 + $0x198] sm:$0xff] 0.0
          %463 = vst [vmem:[%s393 + $0x1a0] sm:$0xff] 0.0
          %464 = vst [vmem:[%s393 + $0x1a8] sm:$0xff] 0.0
          %465 = vst [vmem:[%s393 + $0x1b0] sm:$0xff] 0.0
          %466 = vst [vmem:[%s393 + $0x1b8] sm:$0xff] 0.0
          %467 = vst [vmem:[%s393 + $0x1c0] sm:$0xff] 0.0
          %468 = vst [vmem:[%s393 + $0x1c8] sm:$0xff] 0.0
          %469 = vst [vmem:[%s393 + $0x1d0] sm:$0xff] 0.0
          %470 = vst [vmem:[%s393 + $0x1d8] sm:$0xff] 0.0
          %471 = vst [vmem:[%s393 + $0x1e0] sm:$0xff] 0.0
          %472 = vst [vmem:[%s393 + $0x1e8] sm:$0xff] 0.0
          %473 = vst [vmem:[%s393 + $0x1f0] sm:$0xff] 0.0
          %474 = vst [vmem:[%s393 + $0x1f8] sm:$0xff] 0.0
          %475 = vst [vmem:[%s393 + $0x200] sm:$0xff] 0.0
          %476 = vst [vmem:[%s393 + $0x208] sm:$0xff] 0.0
          %477 = vst [vmem:[%s393 + $0x210] sm:$0xff] 0.0
          %478 = vst [vmem:[%s393 + $0x218] sm:$0xff] 0.0
          %479 = vst [vmem:[%s393 + $0x220] sm:$0xff] 0.0
          %480 = vst [vmem:[%s393 + $0x228] sm:$0xff] 0.0
          %481 = vst [vmem:[%s393 + $0x230] sm:$0xff] 0.0
          %482 = vst [vmem:[%s393 + $0x238] sm:$0xff] 0.0
          %483 = vst [vmem:[%s393 + $0x240] sm:$0xff] 0.0
          %484 = vst [vmem:[%s393 + $0x248] sm:$0xff] 0.0
          %485 = vst [vmem:[%s393 + $0x250] sm:$0xff] 0.0
          %486 = vst [vmem:[%s393 + $0x258] sm:$0xff] 0.0
          %487 = vst [vmem:[%s393 + $0x260] sm:$0xff] 0.0
          %488 = vst [vmem:[%s393 + $0x268] sm:$0xff] 0.0
          %489 = vst [vmem:[%s393 + $0x270] sm:$0xff] 0.0
          %490 = vst [vmem:[%s393 + $0x278] sm:$0xff] 0.0
          %491 = vst [vmem:[%s393 + $0x280] sm:$0xff] 0.0
          %492 = vst [vmem:[%s393 + $0x288] sm:$0xff] 0.0
          %493 = vst [vmem:[%s393 + $0x290] sm:$0xff] 0.0
          %494 = vst [vmem:[%s393 + $0x298] sm:$0xff] 0.0
          %495 = vst [vmem:[%s393 + $0x2a0] sm:$0xff] 0.0
          %496 = vst [vmem:[%s393 + $0x2a8] sm:$0xff] 0.0
          %497 = vst [vmem:[%s393 + $0x2b0] sm:$0xff] 0.0
          %498 = vst [vmem:[%s393 + $0x2b8] sm:$0xff] 0.0
          %499 = vst [vmem:[%s393 + $0x2c0] sm:$0xff] 0.0
          %500 = vst [vmem:[%s393 + $0x2c8] sm:$0xff] 0.0
          %501 = vst [vmem:[%s393 + $0x2d0] sm:$0xff] 0.0
          %502 = vst [vmem:[%s393 + $0x2d8] sm:$0xff] 0.0
          %503 = vst [vmem:[%s393 + $0x2e0] sm:$0xff] 0.0
          %504 = vst [vmem:[%s393 + $0x2e8] sm:$0xff] 0.0
          %505 = vst [vmem:[%s393 + $0x2f0] sm:$0xff] 0.0
          %506 = vst [vmem:[%s393 + $0x2f8] sm:$0xff] 0.0
          %507 = vst [vmem:[%s393 + $0x300] sm:$0xff] 0.0
          %508 = vst [vmem:[%s393 + $0x308] sm:$0xff] 0.0
          %509 = vst [vmem:[%s393 + $0x310] sm:$0xff] 0.0
          %510 = vst [vmem:[%s393 + $0x318] sm:$0xff] 0.0
          %511 = vst [vmem:[%s393 + $0x320] sm:$0xff] 0.0
          %512 = vst [vmem:[%s393 + $0x328] sm:$0xff] 0.0
          %513 = vst [vmem:[%s393 + $0x330] sm:$0xff] 0.0
          %514 = vst [vmem:[%s393 + $0x338] sm:$0xff] 0.0
          %515 = vst [vmem:[%s393 + $0x340] sm:$0xff] 0.0
          %516 = vst [vmem:[%s393 + $0x348] sm:$0xff] 0.0
          %517 = vst [vmem:[%s393 + $0x350] sm:$0xff] 0.0
          %518 = vst [vmem:[%s393 + $0x358] sm:$0xff] 0.0
          %519 = vst [vmem:[%s393 + $0x360] sm:$0xff] 0.0
          %520 = vst [vmem:[%s393 + $0x368] sm:$0xff] 0.0
          %521 = vst [vmem:[%s393 + $0x370] sm:$0xff] 0.0
          %522 = vst [vmem:[%s393 + $0x378] sm:$0xff] 0.0
          %523 = vst [vmem:[%s393 + $0x380] sm:$0xff] 0.0
          %524 = vst [vmem:[%s393 + $0x388] sm:$0xff] 0.0
          %525 = vst [vmem:[%s393 + $0x390] sm:$0xff] 0.0
          %526 = vst [vmem:[%s393 + $0x398] sm:$0xff] 0.0
          %527 = vst [vmem:[%s393 + $0x3a0] sm:$0xff] 0.0
          %528 = vst [vmem:[%s393 + $0x3a8] sm:$0xff] 0.0
          %529 = vst [vmem:[%s393 + $0x3b0] sm:$0xff] 0.0
          %530 = vst [vmem:[%s393 + $0x3b8] sm:$0xff] 0.0
          %531 = vst [vmem:[%s393 + $0x3c0] sm:$0xff] 0.0
          %532 = vst [vmem:[%s393 + $0x3c8] sm:$0xff] 0.0
          %533 = vst [vmem:[%s393 + $0x3d0] sm:$0xff] 0.0
          %534 = vst [vmem:[%s393 + $0x3d8] sm:$0xff] 0.0
          %535 = vst [vmem:[%s393 + $0x3e0] sm:$0xff] 0.0
          %536 = vst [vmem:[%s393 + $0x3e8] sm:$0xff] 0.0
          %537 = vst [vmem:[%s393 + $0x3f0] sm:$0xff] 0.0
          %538 = vst [vmem:[%s393 + $0x3f8] sm:$0xff] 0.0
          %vm539 = vcmask 7168
          %540 = vst.msk [vmem:[#allocation2] sm:$0xff] %vm539, 0.0
          %541 = vst.msk [vmem:[#allocation2 + $0x8] sm:$0xff] %vm539, 0.0
          %542 = vst.msk [vmem:[#allocation2 + $0x10] sm:$0xff] %vm539, 0.0
          %543 = vst.msk [vmem:[#allocation2 + $0x18] sm:$0xff] %vm539, 0.0
          %544 = vst.msk [vmem:[#allocation2 + $0x20] sm:$0xff] %vm539, 0.0
          %545 = vst.msk [vmem:[#allocation2 + $0x28] sm:$0xff] %vm539, 0.0
          %546 = vst.msk [vmem:[#allocation2 + $0x30] sm:$0xff] %vm539, 0.0
          %547 = vst.msk [vmem:[#allocation2 + $0x38] sm:$0xff] %vm539, 0.0
          %548 = vst.msk [vmem:[#allocation2 + $0x40] sm:$0xff] %vm539, 0.0
          %549 = vst.msk [vmem:[#allocation2 + $0x48] sm:$0xff] %vm539, 0.0
          %550 = vst.msk [vmem:[#allocation2 + $0x50] sm:$0xff] %vm539, 0.0
          %551 = vst.msk [vmem:[#allocation2 + $0x58] sm:$0xff] %vm539, 0.0
          %552 = vst.msk [vmem:[#allocation2 + $0x60] sm:$0xff] %vm539, 0.0
          %553 = vst.msk [vmem:[#allocation2 + $0x68] sm:$0xff] %vm539, 0.0
          %554 = vst.msk [vmem:[#allocation2 + $0x70] sm:$0xff] %vm539, 0.0
          %555 = vst.msk [vmem:[#allocation2 + $0x78] sm:$0xff] %vm539, 0.0
          %556 = vst.msk [vmem:[#allocation2 + $0x80] sm:$0xff] %vm539, 0.0
          %557 = vst.msk [vmem:[#allocation2 + $0x88] sm:$0xff] %vm539, 0.0
          %558 = vst.msk [vmem:[#allocation2 + $0x90] sm:$0xff] %vm539, 0.0
          %559 = vst.msk [vmem:[#allocation2 + $0x98] sm:$0xff] %vm539, 0.0
          %560 = vst.msk [vmem:[#allocation2 + $0xa0] sm:$0xff] %vm539, 0.0
          %561 = vst.msk [vmem:[#allocation2 + $0xa8] sm:$0xff] %vm539, 0.0
          %562 = vst.msk [vmem:[#allocation2 + $0xb0] sm:$0xff] %vm539, 0.0
          %563 = vst.msk [vmem:[#allocation2 + $0xb8] sm:$0xff] %vm539, 0.0
          %564 = vst.msk [vmem:[#allocation2 + $0xc0] sm:$0xff] %vm539, 0.0
          %565 = vst.msk [vmem:[#allocation2 + $0xc8] sm:$0xff] %vm539, 0.0
          %566 = vst.msk [vmem:[#allocation2 + $0xd0] sm:$0xff] %vm539, 0.0
          %567 = vst.msk [vmem:[#allocation2 + $0xd8] sm:$0xff] %vm539, 0.0
          %568 = vst.msk [vmem:[#allocation2 + $0xe0] sm:$0xff] %vm539, 0.0
          %569 = vst.msk [vmem:[#allocation2 + $0xe8] sm:$0xff] %vm539, 0.0
          %570 = vst.msk [vmem:[#allocation2 + $0xf0] sm:$0xff] %vm539, 0.0
          %571 = vst.msk [vmem:[#allocation2 + $0xf8] sm:$0xff] %vm539, 0.0
          %572 = vst.msk [vmem:[#allocation2 + $0x100] sm:$0xff] %vm539, 0.0
          %573 = vst.msk [vmem:[#allocation2 + $0x108] sm:$0xff] %vm539, 0.0
          %574 = vst.msk [vmem:[#allocation2 + $0x110] sm:$0xff] %vm539, 0.0
          %575 = vst.msk [vmem:[#allocation2 + $0x118] sm:$0xff] %vm539, 0.0
          %576 = vst.msk [vmem:[#allocation2 + $0x120] sm:$0xff] %vm539, 0.0
          %577 = vst.msk [vmem:[#allocation2 + $0x128] sm:$0xff] %vm539, 0.0
          %578 = vst.msk [vmem:[#allocation2 + $0x130] sm:$0xff] %vm539, 0.0
          %579 = vst.msk [vmem:[#allocation2 + $0x138] sm:$0xff] %vm539, 0.0
          %580 = vst.msk [vmem:[#allocation2 + $0x140] sm:$0xff] %vm539, 0.0
          %581 = vst.msk [vmem:[#allocation2 + $0x148] sm:$0xff] %vm539, 0.0
          %582 = vst.msk [vmem:[#allocation2 + $0x150] sm:$0xff] %vm539, 0.0
          %583 = vst.msk [vmem:[#allocation2 + $0x158] sm:$0xff] %vm539, 0.0
          %584 = vst.msk [vmem:[#allocation2 + $0x160] sm:$0xff] %vm539, 0.0
          %585 = vst.msk [vmem:[#allocation2 + $0x168] sm:$0xff] %vm539, 0.0
          %586 = vst.msk [vmem:[#allocation2 + $0x170] sm:$0xff] %vm539, 0.0
          %587 = vst.msk [vmem:[#allocation2 + $0x178] sm:$0xff] %vm539, 0.0
          %588 = vst.msk [vmem:[#allocation2 + $0x180] sm:$0xff] %vm539, 0.0
          %589 = vst.msk [vmem:[#allocation2 + $0x188] sm:$0xff] %vm539, 0.0
          %590 = vst.msk [vmem:[#allocation2 + $0x190] sm:$0xff] %vm539, 0.0
          %591 = vst.msk [vmem:[#allocation2 + $0x198] sm:$0xff] %vm539, 0.0
          %592 = vst.msk [vmem:[#allocation2 + $0x1a0] sm:$0xff] %vm539, 0.0
          %593 = vst.msk [vmem:[#allocation2 + $0x1a8] sm:$0xff] %vm539, 0.0
          %594 = vst.msk [vmem:[#allocation2 + $0x1b0] sm:$0xff] %vm539, 0.0
          %595 = vst.msk [vmem:[#allocation2 + $0x1b8] sm:$0xff] %vm539, 0.0
          %596 = vst.msk [vmem:[#allocation2 + $0x1c0] sm:$0xff] %vm539, 0.0
          %597 = vst.msk [vmem:[#allocation2 + $0x1c8] sm:$0xff] %vm539, 0.0
          %598 = vst.msk [vmem:[#allocation2 + $0x1d0] sm:$0xff] %vm539, 0.0
          %599 = vst.msk [vmem:[#allocation2 + $0x1d8] sm:$0xff] %vm539, 0.0
          %600 = vst.msk [vmem:[#allocation2 + $0x1e0] sm:$0xff] %vm539, 0.0
          %601 = vst.msk [vmem:[#allocation2 + $0x1e8] sm:$0xff] %vm539, 0.0
          %602 = vst.msk [vmem:[#allocation2 + $0x1f0] sm:$0xff] %vm539, 0.0
          %603 = vst.msk [vmem:[#allocation2 + $0x1f8] sm:$0xff] %vm539, 0.0
        $region56: #{tpu_custom_call.1} parent=35 // pred_fallthru
          _
        %v604 = vld [vmem:[%s327] sm:$0xff]
        %v605 = vld [vmem:[%s327 + $0x8] sm:$0xff]
        %v606 = vld [vmem:[%s327 + $0x10] sm:$0xff]
        %v607 = vld [vmem:[%s327 + $0x18] sm:$0xff]
        %v608 = vld [vmem:[%s327 + $0x20] sm:$0xff]
        %v609 = vld [vmem:[%s327 + $0x28] sm:$0xff]
        %v610 = vld [vmem:[%s327 + $0x30] sm:$0xff]
        %v611 = vld [vmem:[%s327 + $0x38] sm:$0xff]
        %v612 = vld [vmem:[%s327 + $0x40] sm:$0xff]
        %v613 = vld [vmem:[%s327 + $0x48] sm:$0xff]
        %v614 = vld [vmem:[%s327 + $0x50] sm:$0xff]
        %v615 = vld [vmem:[%s327 + $0x58] sm:$0xff]
        %v616 = vld [vmem:[%s327 + $0x60] sm:$0xff]
        %v617 = vld [vmem:[%s327 + $0x68] sm:$0xff]
        %v618 = vld [vmem:[%s327 + $0x70] sm:$0xff]
        %v619 = vld [vmem:[%s327 + $0x78] sm:$0xff]
        %v620 = vld [vmem:[%s327 + $0x80] sm:$0xff]
        %v621 = vld [vmem:[%s327 + $0x88] sm:$0xff]
        %v622 = vld [vmem:[%s327 + $0x90] sm:$0xff]
        %v623 = vld [vmem:[%s327 + $0x98] sm:$0xff]
        %v624 = vld [vmem:[%s327 + $0xa0] sm:$0xff]
        %v625 = vld [vmem:[%s327 + $0xa8] sm:$0xff]
        %v626 = vld [vmem:[%s327 + $0xb0] sm:$0xff]
        %v627 = vld [vmem:[%s327 + $0xb8] sm:$0xff]
        %v628 = vld [vmem:[%s327 + $0xc0] sm:$0xff]
        %v629 = vld [vmem:[%s327 + $0xc8] sm:$0xff]
        %v630 = vld [vmem:[%s327 + $0xd0] sm:$0xff]
        %v631 = vld [vmem:[%s327 + $0xd8] sm:$0xff]
        %v632 = vld [vmem:[%s327 + $0xe0] sm:$0xff]
        %v633 = vld [vmem:[%s327 + $0xe8] sm:$0xff]
        %v634 = vld [vmem:[%s327 + $0xf0] sm:$0xff]
        %v635 = vld [vmem:[%s327 + $0xf8] sm:$0xff]
        %v636 = vld [vmem:[%s327 + $0x100] sm:$0xff]
        %v637 = vld [vmem:[%s327 + $0x108] sm:$0xff]
        %v638 = vld [vmem:[%s327 + $0x110] sm:$0xff]
        %v639 = vld [vmem:[%s327 + $0x118] sm:$0xff]
        %v640 = vld [vmem:[%s327 + $0x120] sm:$0xff]
        %v641 = vld [vmem:[%s327 + $0x128] sm:$0xff]
        %v642 = vld [vmem:[%s327 + $0x130] sm:$0xff]
        %v643 = vld [vmem:[%s327 + $0x138] sm:$0xff]
        %v644 = vld [vmem:[%s327 + $0x140] sm:$0xff]
        %v645 = vld [vmem:[%s327 + $0x148] sm:$0xff]
        %v646 = vld [vmem:[%s327 + $0x150] sm:$0xff]
        %v647 = vld [vmem:[%s327 + $0x158] sm:$0xff]
        %v648 = vld [vmem:[%s327 + $0x160] sm:$0xff]
        %v649 = vld [vmem:[%s327 + $0x168] sm:$0xff]
        %v650 = vld [vmem:[%s327 + $0x170] sm:$0xff]
        %v651 = vld [vmem:[%s327 + $0x178] sm:$0xff]
        %v652 = vld [vmem:[%s327 + $0x180] sm:$0xff]
        %v653 = vld [vmem:[%s327 + $0x188] sm:$0xff]
        %v654 = vld [vmem:[%s327 + $0x190] sm:$0xff]
        %v655 = vld [vmem:[%s327 + $0x198] sm:$0xff]
        %v656 = vld [vmem:[%s327 + $0x1a0] sm:$0xff]
        %v657 = vld [vmem:[%s327 + $0x1a8] sm:$0xff]
        %v658 = vld [vmem:[%s327 + $0x1b0] sm:$0xff]
        %v659 = vld [vmem:[%s327 + $0x1b8] sm:$0xff]
        %v660 = vld [vmem:[%s327 + $0x1c0] sm:$0xff]
        %v661 = vld [vmem:[%s327 + $0x1c8] sm:$0xff]
        %v662 = vld [vmem:[%s327 + $0x1d0] sm:$0xff]
        %v663 = vld [vmem:[%s327 + $0x1d8] sm:$0xff]
        %v664 = vld [vmem:[%s327 + $0x1e0] sm:$0xff]
        %v665 = vld [vmem:[%s327 + $0x1e8] sm:$0xff]
        %v666 = vld [vmem:[%s327 + $0x1f0] sm:$0xff]
        %v667 = vld [vmem:[%s327 + $0x1f8] sm:$0xff]
        %v668 = vld [vmem:[%s336] sm:$0xff]
        %v669 = vld [vmem:[%s336 + $0x8] sm:$0xff]
        %v670 = vld [vmem:[%s336 + $0x10] sm:$0xff]
        %v671 = vld [vmem:[%s336 + $0x18] sm:$0xff]
        %v672 = vld [vmem:[%s336 + $0x20] sm:$0xff]
        %v673 = vld [vmem:[%s336 + $0x28] sm:$0xff]
        %v674 = vld [vmem:[%s336 + $0x30] sm:$0xff]
        %v675 = vld [vmem:[%s336 + $0x38] sm:$0xff]
        %v676 = vld [vmem:[%s336 + $0x40] sm:$0xff]
        %v677 = vld [vmem:[%s336 + $0x48] sm:$0xff]
        %v678 = vld [vmem:[%s336 + $0x50] sm:$0xff]
        %v679 = vld [vmem:[%s336 + $0x58] sm:$0xff]
        %v680 = vld [vmem:[%s336 + $0x60] sm:$0xff]
        %v681 = vld [vmem:[%s336 + $0x68] sm:$0xff]
        %v682 = vld [vmem:[%s336 + $0x70] sm:$0xff]
        %v683 = vld [vmem:[%s336 + $0x78] sm:$0xff]
        %v684 = vld [vmem:[%s336 + $0x80] sm:$0xff]
        %v685 = vld [vmem:[%s336 + $0x88] sm:$0xff]
        %v686 = vld [vmem:[%s336 + $0x90] sm:$0xff]
        %v687 = vld [vmem:[%s336 + $0x98] sm:$0xff]
        %v688 = vld [vmem:[%s336 + $0xa0] sm:$0xff]
        %v689 = vld [vmem:[%s336 + $0xa8] sm:$0xff]
        %v690 = vld [vmem:[%s336 + $0xb0] sm:$0xff]
        %v691 = vld [vmem:[%s336 + $0xb8] sm:$0xff]
        %v692 = vld [vmem:[%s336 + $0xc0] sm:$0xff]
        %v693 = vld [vmem:[%s336 + $0xc8] sm:$0xff]
        %v694 = vld [vmem:[%s336 + $0xd0] sm:$0xff]
        %v695 = vld [vmem:[%s336 + $0xd8] sm:$0xff]
        %v696 = vld [vmem:[%s336 + $0xe0] sm:$0xff]
        %v697 = vld [vmem:[%s336 + $0xe8] sm:$0xff]
        %v698 = vld [vmem:[%s336 + $0xf0] sm:$0xff]
        %v699 = vld [vmem:[%s336 + $0xf8] sm:$0xff]
        %v764 = vunpack.c.l.b16 %v604
        %v765 = vunpack.c.h.b16 %v604
        %v766 = vunpack.c.l.b16 %v605
        %v767 = vunpack.c.h.b16 %v605
        %v768 = vunpack.c.l.b16 %v606
        %v769 = vunpack.c.h.b16 %v606
        %v770 = vunpack.c.l.b16 %v607
        %v771 = vunpack.c.h.b16 %v607
        %v772 = vunpack.c.l.b16 %v608
        %v773 = vunpack.c.h.b16 %v608
        %v774 = vunpack.c.l.b16 %v609
        %v775 = vunpack.c.h.b16 %v609
        %v776 = vunpack.c.l.b16 %v610
        %v777 = vunpack.c.h.b16 %v610
        %v778 = vunpack.c.l.b16 %v611
        %v779 = vunpack.c.h.b16 %v611
        %v780 = vunpack.c.l.b16 %v612
        %v781 = vunpack.c.h.b16 %v612
        %v782 = vunpack.c.l.b16 %v613
        %v783 = vunpack.c.h.b16 %v613
        %v784 = vunpack.c.l.b16 %v614
        %v785 = vunpack.c.h.b16 %v614
        %v786 = vunpack.c.l.b16 %v615
        %v787 = vunpack.c.h.b16 %v615
        %v788 = vunpack.c.l.b16 %v616
        %v789 = vunpack.c.h.b16 %v616
        %v790 = vunpack.c.l.b16 %v617
        %v791 = vunpack.c.h.b16 %v617
        %v792 = vunpack.c.l.b16 %v618
        %v793 = vunpack.c.h.b16 %v618
        %v794 = vunpack.c.l.b16 %v619
        %v795 = vunpack.c.h.b16 %v619
        %v796 = vunpack.c.l.b16 %v620
        %v797 = vunpack.c.h.b16 %v620
        %v798 = vunpack.c.l.b16 %v621
        %v799 = vunpack.c.h.b16 %v621
        %v800 = vunpack.c.l.b16 %v622
        %v801 = vunpack.c.h.b16 %v622
        %v802 = vunpack.c.l.b16 %v623
        %v803 = vunpack.c.h.b16 %v623
        %v804 = vunpack.c.l.b16 %v624
        %v805 = vunpack.c.h.b16 %v624
        %v806 = vunpack.c.l.b16 %v625
        %v807 = vunpack.c.h.b16 %v625
        %v808 = vunpack.c.l.b16 %v626
        %v809 = vunpack.c.h.b16 %v626
        %v810 = vunpack.c.l.b16 %v627
        %v811 = vunpack.c.h.b16 %v627
        %v812 = vunpack.c.l.b16 %v628
        %v813 = vunpack.c.h.b16 %v628
        %v814 = vunpack.c.l.b16 %v629
        %v815 = vunpack.c.h.b16 %v629
        %v816 = vunpack.c.l.b16 %v630
        %v817 = vunpack.c.h.b16 %v630
        %v818 = vunpack.c.l.b16 %v631
        %v819 = vunpack.c.h.b16 %v631
        %v820 = vunpack.c.l.b16 %v632
        %v821 = vunpack.c.h.b16 %v632
        %v822 = vunpack.c.l.b16 %v633
        %v823 = vunpack.c.h.b16 %v633
        %v824 = vunpack.c.l.b16 %v634
        %v825 = vunpack.c.h.b16 %v634
        %v826 = vunpack.c.l.b16 %v635
        %v827 = vunpack.c.h.b16 %v635
        %v828 = vunpack.c.l.b16 %v636
        %v829 = vunpack.c.h.b16 %v636
        %v830 = vunpack.c.l.b16 %v637
        %v831 = vunpack.c.h.b16 %v637
        %v832 = vunpack.c.l.b16 %v638
        %v833 = vunpack.c.h.b16 %v638
        %v834 = vunpack.c.l.b16 %v639
        %v835 = vunpack.c.h.b16 %v639
        %v836 = vunpack.c.l.b16 %v640
        %v837 = vunpack.c.h.b16 %v640
        %v838 = vunpack.c.l.b16 %v641
        %v839 = vunpack.c.h.b16 %v641
        %v840 = vunpack.c.l.b16 %v642
        %v841 = vunpack.c.h.b16 %v642
        %v842 = vunpack.c.l.b16 %v643
        %v843 = vunpack.c.h.b16 %v643
        %v844 = vunpack.c.l.b16 %v644
        %v845 = vunpack.c.h.b16 %v644
        %v846 = vunpack.c.l.b16 %v645
        %v847 = vunpack.c.h.b16 %v645
        %v848 = vunpack.c.l.b16 %v646
        %v849 = vunpack.c.h.b16 %v646
        %v850 = vunpack.c.l.b16 %v647
        %v851 = vunpack.c.h.b16 %v647
        %v852 = vunpack.c.l.b16 %v648
        %v853 = vunpack.c.h.b16 %v648
        %v854 = vunpack.c.l.b16 %v649
        %v855 = vunpack.c.h.b16 %v649
        %v856 = vunpack.c.l.b16 %v650
        %v857 = vunpack.c.h.b16 %v650
        %v858 = vunpack.c.l.b16 %v651
        %v859 = vunpack.c.h.b16 %v651
        %v860 = vunpack.c.l.b16 %v652
        %v861 = vunpack.c.h.b16 %v652
        %v862 = vunpack.c.l.b16 %v653
        %v863 = vunpack.c.h.b16 %v653
        %v864 = vunpack.c.l.b16 %v654
        %v865 = vunpack.c.h.b16 %v654
        %v866 = vunpack.c.l.b16 %v655
        %v867 = vunpack.c.h.b16 %v655
        %v868 = vunpack.c.l.b16 %v656
        %v869 = vunpack.c.h.b16 %v656
        %v870 = vunpack.c.l.b16 %v657
        %v871 = vunpack.c.h.b16 %v657
        %v872 = vunpack.c.l.b16 %v658
        %v873 = vunpack.c.h.b16 %v658
        %v874 = vunpack.c.l.b16 %v659
        %v875 = vunpack.c.h.b16 %v659
        %v876 = vunpack.c.l.b16 %v660
        %v877 = vunpack.c.h.b16 %v660
        %v878 = vunpack.c.l.b16 %v661
        %v879 = vunpack.c.h.b16 %v661
        %v880 = vunpack.c.l.b16 %v662
        %v881 = vunpack.c.h.b16 %v662
        %v882 = vunpack.c.l.b16 %v663
        %v883 = vunpack.c.h.b16 %v663
        %v884 = vunpack.c.l.b16 %v664
        %v885 = vunpack.c.h.b16 %v664
        %v886 = vunpack.c.l.b16 %v665
        %v887 = vunpack.c.h.b16 %v665
        %v888 = vunpack.c.l.b16 %v666
        %v889 = vunpack.c.h.b16 %v666
        %v890 = vunpack.c.l.b16 %v667
        %v891 = vunpack.c.h.b16 %v667
        %v892 = vpack.c.b16 %v766, %v764
        %v893 = vpack.c.b16 %v767, %v765
        %v894 = vpack.c.b16 %v770, %v768
        %v895 = vpack.c.b16 %v771, %v769
        %v896 = vpack.c.b16 %v774, %v772
        %v897 = vpack.c.b16 %v775, %v773
        %v898 = vpack.c.b16 %v778, %v776
        %v899 = vpack.c.b16 %v779, %v777
        %v900 = vpack.c.b16 %v782, %v780
        %v901 = vpack.c.b16 %v783, %v781
        %v902 = vpack.c.b16 %v786, %v784
        %v903 = vpack.c.b16 %v787, %v785
        %v904 = vpack.c.b16 %v790, %v788
        %v905 = vpack.c.b16 %v791, %v789
        %v906 = vpack.c.b16 %v794, %v792
        %v907 = vpack.c.b16 %v795, %v793
        %v908 = vpack.c.b16 %v798, %v796
        %v909 = vpack.c.b16 %v799, %v797
        %v910 = vpack.c.b16 %v802, %v800
        %v911 = vpack.c.b16 %v803, %v801
        %v912 = vpack.c.b16 %v806, %v804
        %v913 = vpack.c.b16 %v807, %v805
        %v914 = vpack.c.b16 %v810, %v808
        %v915 = vpack.c.b16 %v811, %v809
        %v916 = vpack.c.b16 %v814, %v812
        %v917 = vpack.c.b16 %v815, %v813
        %v918 = vpack.c.b16 %v818, %v816
        %v919 = vpack.c.b16 %v819, %v817
        %v920 = vpack.c.b16 %v822, %v820
        %v921 = vpack.c.b16 %v823, %v821
        %v922 = vpack.c.b16 %v826, %v824
        %v923 = vpack.c.b16 %v827, %v825
        %v924 = vpack.c.b16 %v830, %v828
        %v925 = vpack.c.b16 %v831, %v829
        %v926 = vpack.c.b16 %v834, %v832
        %v927 = vpack.c.b16 %v835, %v833
        %v928 = vpack.c.b16 %v838, %v836
        %v929 = vpack.c.b16 %v839, %v837
        %v930 = vpack.c.b16 %v842, %v840
        %v931 = vpack.c.b16 %v843, %v841
        %v932 = vpack.c.b16 %v846, %v844
        %v933 = vpack.c.b16 %v847, %v845
        %v934 = vpack.c.b16 %v850, %v848
        %v935 = vpack.c.b16 %v851, %v849
        %v936 = vpack.c.b16 %v854, %v852
        %v937 = vpack.c.b16 %v855, %v853
        %v938 = vpack.c.b16 %v858, %v856
        %v939 = vpack.c.b16 %v859, %v857
        %v940 = vpack.c.b16 %v862, %v860
        %v941 = vpack.c.b16 %v863, %v861
        %v942 = vpack.c.b16 %v866, %v864
        %v943 = vpack.c.b16 %v867, %v865
        %v944 = vpack.c.b16 %v870, %v868
        %v945 = vpack.c.b16 %v871, %v869
        %v946 = vpack.c.b16 %v874, %v872
        %v947 = vpack.c.b16 %v875, %v873
        %v948 = vpack.c.b16 %v878, %v876
        %v949 = vpack.c.b16 %v879, %v877
        %v950 = vpack.c.b16 %v882, %v880
        %v951 = vpack.c.b16 %v883, %v881
        %v952 = vpack.c.b16 %v886, %v884
        %v953 = vpack.c.b16 %v887, %v885
        %v954 = vpack.c.b16 %v890, %v888
        %v955 = vpack.c.b16 %v891, %v889
        %v1052 = vunpack.c.l.b16 %v668
        %v1053 = vunpack.c.h.b16 %v668
        %v1054 = vunpack.c.l.b16 %v669
        %v1055 = vunpack.c.h.b16 %v669
        %v1056 = vunpack.c.l.b16 %v670
        %v1057 = vunpack.c.h.b16 %v670
        %v1058 = vunpack.c.l.b16 %v671
        %v1059 = vunpack.c.h.b16 %v671
        %v1060 = vunpack.c.l.b16 %v672
        %v1061 = vunpack.c.h.b16 %v672
        %v1062 = vunpack.c.l.b16 %v673
        %v1063 = vunpack.c.h.b16 %v673
        %v1064 = vunpack.c.l.b16 %v674
        %v1065 = vunpack.c.h.b16 %v674
        %v1066 = vunpack.c.l.b16 %v675
        %v1067 = vunpack.c.h.b16 %v675
        %v1068 = vunpack.c.l.b16 %v676
        %v1069 = vunpack.c.h.b16 %v676
        %v1070 = vunpack.c.l.b16 %v677
        %v1071 = vunpack.c.h.b16 %v677
        %v1072 = vunpack.c.l.b16 %v678
        %v1073 = vunpack.c.h.b16 %v678
        %v1074 = vunpack.c.l.b16 %v679
        %v1075 = vunpack.c.h.b16 %v679
        %v1076 = vunpack.c.l.b16 %v680
        %v1077 = vunpack.c.h.b16 %v680
        %v1078 = vunpack.c.l.b16 %v681
        %v1079 = vunpack.c.h.b16 %v681
        %v1080 = vunpack.c.l.b16 %v682
        %v1081 = vunpack.c.h.b16 %v682
        %v1082 = vunpack.c.l.b16 %v683
        %v1083 = vunpack.c.h.b16 %v683
        %v1084 = vunpack.c.l.b16 %v684
        %v1085 = vunpack.c.h.b16 %v684
        %v1086 = vunpack.c.l.b16 %v685
        %v1087 = vunpack.c.h.b16 %v685
        %v1088 = vunpack.c.l.b16 %v686
        %v1089 = vunpack.c.h.b16 %v686
        %v1090 = vunpack.c.l.b16 %v687
        %v1091 = vunpack.c.h.b16 %v687
        %v1092 = vunpack.c.l.b16 %v688
        %v1093 = vunpack.c.h.b16 %v688
        %v1094 = vunpack.c.l.b16 %v689
        %v1095 = vunpack.c.h.b16 %v689
        %v1096 = vunpack.c.l.b16 %v690
        %v1097 = vunpack.c.h.b16 %v690
        %v1098 = vunpack.c.l.b16 %v691
        %v1099 = vunpack.c.h.b16 %v691
        %v1100 = vunpack.c.l.b16 %v692
        %v1101 = vunpack.c.h.b16 %v692
        %v1102 = vunpack.c.l.b16 %v693
        %v1103 = vunpack.c.h.b16 %v693
        %v1104 = vunpack.c.l.b16 %v694
        %v1105 = vunpack.c.h.b16 %v694
        %v1106 = vunpack.c.l.b16 %v695
        %v1107 = vunpack.c.h.b16 %v695
        %v1108 = vunpack.c.l.b16 %v696
        %v1109 = vunpack.c.h.b16 %v696
        %v1110 = vunpack.c.l.b16 %v697
        %v1111 = vunpack.c.h.b16 %v697
        %v1112 = vunpack.c.l.b16 %v698
        %v1113 = vunpack.c.h.b16 %v698
        %v1114 = vunpack.c.l.b16 %v699
        %v1115 = vunpack.c.h.b16 %v699
        %v1116 = vpack.c.b16 %v1054, %v1052
        %v1117 = vpack.c.b16 %v1055, %v1053
        %v1118 = vpack.c.b16 %v1058, %v1056
        %v1119 = vpack.c.b16 %v1059, %v1057
        %v1120 = vpack.c.b16 %v1062, %v1060
        %v1121 = vpack.c.b16 %v1063, %v1061
        %v1122 = vpack.c.b16 %v1066, %v1064
        %v1123 = vpack.c.b16 %v1067, %v1065
        %v1124 = vpack.c.b16 %v1070, %v1068
        %v1125 = vpack.c.b16 %v1071, %v1069
        %v1126 = vpack.c.b16 %v1074, %v1072
        %v1127 = vpack.c.b16 %v1075, %v1073
        %v1128 = vpack.c.b16 %v1078, %v1076
        %v1129 = vpack.c.b16 %v1079, %v1077
        %v1130 = vpack.c.b16 %v1082, %v1080
        %v1131 = vpack.c.b16 %v1083, %v1081
        %v1132 = vpack.c.b16 %v1086, %v1084
        %v1133 = vpack.c.b16 %v1087, %v1085
        %v1134 = vpack.c.b16 %v1090, %v1088
        %v1135 = vpack.c.b16 %v1091, %v1089
        %v1136 = vpack.c.b16 %v1094, %v1092
        %v1137 = vpack.c.b16 %v1095, %v1093
        %v1138 = vpack.c.b16 %v1098, %v1096
        %v1139 = vpack.c.b16 %v1099, %v1097
        %v1140 = vpack.c.b16 %v1102, %v1100
        %v1141 = vpack.c.b16 %v1103, %v1101
        %v1142 = vpack.c.b16 %v1106, %v1104
        %v1143 = vpack.c.b16 %v1107, %v1105
        %v1144 = vpack.c.b16 %v1110, %v1108
        %v1145 = vpack.c.b16 %v1111, %v1109
        %v1146 = vpack.c.b16 %v1114, %v1112
        %v1147 = vpack.c.b16 %v1115, %v1113
        %1180 = vmatprep.subr.bf16.mxu0 %v1117
        %1181 = vmatpush1.bf16.xpose.msra.mxu0 %v1116
        %1182 = vmatprep.subr.bf16.mxu0 %v1119
        %1183 = vmatpush1.bf16.xpose.msra.mxu0 %v1118
        %1184 = vmatprep.subr.bf16.mxu0 %v1121
        %1185 = vmatpush1.bf16.xpose.msra.mxu0 %v1120
        %1186 = vmatprep.subr.bf16.mxu0 %v1123
        %1187 = vmatpush1.bf16.xpose.msra.mxu0 %v1122
        %1188 = vmatprep.subr.bf16.mxu0 %v1125
        %1189 = vmatpush1.bf16.xpose.msra.mxu0 %v1124
        %1190 = vmatprep.subr.bf16.mxu0 %v1127
        %1191 = vmatpush1.bf16.xpose.msra.mxu0 %v1126
        %1192 = vmatprep.subr.bf16.mxu0 %v1129
        %1193 = vmatpush1.bf16.xpose.msra.mxu0 %v1128
        %1194 = vmatprep.subr.bf16.mxu0 %v1131
        %1195 = vmatpush1.bf16.xpose.msra.mxu0 %v1130
        %1196 = vmatprep.subr.bf16.mxu0 %v1133
        %1197 = vmatpush1.bf16.xpose.msra.mxu0 %v1132
        %1198 = vmatprep.subr.bf16.mxu0 %v1135
        %1199 = vmatpush1.bf16.xpose.msra.mxu0 %v1134
        %1200 = vmatprep.subr.bf16.mxu0 %v1137
        %1201 = vmatpush1.bf16.xpose.msra.mxu0 %v1136
        %1202 = vmatprep.subr.bf16.mxu0 %v1139
        %1203 = vmatpush1.bf16.xpose.msra.mxu0 %v1138
        %1204 = vmatprep.subr.bf16.mxu0 %v1141
        %1205 = vmatpush1.bf16.xpose.msra.mxu0 %v1140
        %1206 = vmatprep.subr.bf16.mxu0 %v1143
        %1207 = vmatpush1.bf16.xpose.msra.mxu0 %v1142
        %1208 = vmatprep.subr.bf16.mxu0 %v1145
        %1209 = vmatpush1.bf16.xpose.msra.mxu0 %v1144
        %1210 = vmatprep.subr.bf16.mxu0 %v1147
        %1211 = vmatpush1.bf16.xpose.msra.mxu0 %v1146
        %1212 = vmatprep.mubr.bf16.mxu0 %v893
        %1213 = vmatmul.mubr.bf16.gmra.mrb[0].mxu0 %v892
        %v1214 = vpop.f32.mrb[0].mxu0
        %v1215 = vadd.f32 0.0, %v1214
        %v1216 = vpop.f32.mrb[0].mxu0
        %v1217 = vadd.f32 0.0, %v1216
        %v1218 = vpop.f32.mrb[0].mxu0
        %v1219 = vadd.f32 0.0, %v1218
        %v1220 = vpop.f32.mrb[0].mxu0
        %v1221 = vadd.f32 0.0, %v1220
        %1222 = vmatprep.mubr.bf16.mxu0 %v895
        %1223 = vmatmul.mubr.bf16.gmra.mrb[0].mxu0 %v894
        %v1224 = vpop.f32.mrb[0].mxu0
        %v1225 = vadd.f32 0.0, %v1224
        %v1226 = vpop.f32.mrb[0].mxu0
        %v1227 = vadd.f32 0.0, %v1226
        %v1228 = vpop.f32.mrb[0].mxu0
        %v1229 = vadd.f32 0.0, %v1228
        %v1230 = vpop.f32.mrb[0].mxu0
        %v1231 = vadd.f32 0.0, %v1230
        %1232 = vmatprep.mubr.bf16.mxu0 %v897
        %1233 = vmatmul.mubr.bf16.gmra.mrb[0].mxu0 %v896
        %v1234 = vpop.f32.mrb[0].mxu0
        %v1235 = vadd.f32 0.0, %v1234
        %v1236 = vpop.f32.mrb[0].mxu0
        %v1237 = vadd.f32 0.0, %v1236
        %v1238 = vpop.f32.mrb[0].mxu0
        %v1239 = vadd.f32 0.0, %v1238
        %v1240 = vpop.f32.mrb[0].mxu0
        %v1241 = vadd.f32 0.0, %v1240
        %1242 = vmatprep.mubr.bf16.mxu0 %v899
        %1243 = vmatmul.mubr.bf16.gmra.mrb[0].mxu0 %v898
        %v1244 = vpop.f32.mrb[0].mxu0
        %v1245 = vadd.f32 0.0, %v1244
        %v1246 = vpop.f32.mrb[0].mxu0
        %v1247 = vadd.f32 0.0, %v1246
        %v1248 = vpop.f32.mrb[0].mxu0
        %v1249 = vadd.f32 0.0, %v1248
        %v1250 = vpop.f32.mrb[0].mxu0
        %v1251 = vadd.f32 0.0, %v1250
        %1252 = vmatprep.mubr.bf16.mxu0 %v901
        %1253 = vmatmul.mubr.bf16.gmra.mrb[0].mxu0 %v900
        %v1254 = vpop.f32.mrb[0].mxu0
        %v1255 = vadd.f32 0.0, %v1254
        %v1256 = vpop.f32.mrb[0].mxu0
        %v1257 = vadd.f32 0.0, %v1256
        %v1258 = vpop.f32.mrb[0].mxu0
        %v1259 = vadd.f32 0.0, %v1258
        %v1260 = vpop.f32.mrb[0].mxu0
        %v1261 = vadd.f32 0.0, %v1260
        %1262 = vmatprep.mubr.bf16.mxu0 %v903
        %1263 = vmatmul.mubr.bf16.gmra.mrb[0].mxu0 %v902
        %v1264 = vpop.f32.mrb[0].mxu0
        %v1265 = vadd.f32 0.0, %v1264
        %v1266 = vpop.f32.mrb[0].mxu0
        %v1267 = vadd.f32 0.0, %v1266
        %v1268 = vpop.f32.mrb[0].mxu0
        %v1269 = vadd.f32 0.0, %v1268
        %v1270 = vpop.f32.mrb[0].mxu0
        %v1271 = vadd.f32 0.0, %v1270
        %1272 = vmatprep.mubr.bf16.mxu0 %v905
        %1273 = vmatmul.mubr.bf16.gmra.mrb[0].mxu0 %v904
        %v1274 = vpop.f32.mrb[0].mxu0
        %v1275 = vadd.f32 0.0, %v1274
        %v1276 = vpop.f32.mrb[0].mxu0
        %v1277 = vadd.f32 0.0, %v1276
        %v1278 = vpop.f32.mrb[0].mxu0
        %v1279 = vadd.f32 0.0, %v1278
        %v1280 = vpop.f32.mrb[0].mxu0
        %v1281 = vadd.f32 0.0, %v1280
        %1282 = vmatprep.mubr.bf16.mxu0 %v907
        %1283 = vmatmul.mubr.bf16.gmra.mrb[0].mxu0 %v906
        %v1284 = vpop.f32.mrb[0].mxu0
        %v1285 = vadd.f32 0.0, %v1284
        %v1286 = vpop.f32.mrb[0].mxu0
        %v1287 = vadd.f32 0.0, %v1286
        %v1288 = vpop.f32.mrb[0].mxu0
        %v1289 = vadd.f32 0.0, %v1288
        %v1290 = vpop.f32.mrb[0].mxu0
        %v1291 = vadd.f32 0.0, %v1290
        %1292 = vmatprep.mubr.bf16.mxu0 %v909
        %1293 = vmatmul.mubr.bf16.gmra.mrb[0].mxu0 %v908
        %v1294 = vpop.f32.mrb[0].mxu0
        %v1295 = vadd.f32 0.0, %v1294
        %v1296 = vpop.f32.mrb[0].mxu0
        %v1297 = vadd.f32 0.0, %v1296
        %v1298 = vpop.f32.mrb[0].mxu0
        %v1299 = vadd.f32 0.0, %v1298
        %v1300 = vpop.f32.mrb[0].mxu0
        %v1301 = vadd.f32 0.0, %v1300
        %1302 = vmatprep.mubr.bf16.mxu0 %v911
        %1303 = vmatmul.mubr.bf16.gmra.mrb[0].mxu0 %v910
        %v1304 = vpop.f32.mrb[0].mxu0
        %v1305 = vadd.f32 0.0, %v1304
        %v1306 = vpop.f32.mrb[0].mxu0
        %v1307 = vadd.f32 0.0, %v1306
        %v1308 = vpop.f32.mrb[0].mxu0
        %v1309 = vadd.f32 0.0, %v1308
        %v1310 = vpop.f32.mrb[0].mxu0
        %v1311 = vadd.f32 0.0, %v1310
        %1312 = vmatprep.mubr.bf16.mxu0 %v913
        %1313 = vmatmul.mubr.bf16.gmra.mrb[0].mxu0 %v912
        %v1314 = vpop.f32.mrb[0].mxu0
        %v1315 = vadd.f32 0.0, %v1314
        %v1316 = vpop.f32.mrb[0].mxu0
        %v1317 = vadd.f32 0.0, %v1316
        %v1318 = vpop.f32.mrb[0].mxu0
        %v1319 = vadd.f32 0.0, %v1318
        %v1320 = vpop.f32.mrb[0].mxu0
        %v1321 = vadd.f32 0.0, %v1320
        %1322 = vmatprep.mubr.bf16.mxu0 %v915
        %1323 = vmatmul.mubr.bf16.gmra.mrb[0].mxu0 %v914
        %v1324 = vpop.f32.mrb[0].mxu0
        %v1325 = vadd.f32 0.0, %v1324
        %v1326 = vpop.f32.mrb[0].mxu0
        %v1327 = vadd.f32 0.0, %v1326
        %v1328 = vpop.f32.mrb[0].mxu0
        %v1329 = vadd.f32 0.0, %v1328
        %v1330 = vpop.f32.mrb[0].mxu0
        %v1331 = vadd.f32 0.0, %v1330
        %1332 = vmatprep.mubr.bf16.mxu0 %v917
        %1333 = vmatmul.mubr.bf16.gmra.mrb[0].mxu0 %v916
        %v1334 = vpop.f32.mrb[0].mxu0
        %v1335 = vadd.f32 0.0, %v1334
        %v1336 = vpop.f32.mrb[0].mxu0
        %v1337 = vadd.f32 0.0, %v1336
        %v1338 = vpop.f32.mrb[0].mxu0
        %v1339 = vadd.f32 0.0, %v1338
        %v1340 = vpop.f32.mrb[0].mxu0
        %v1341 = vadd.f32 0.0, %v1340
        %1342 = vmatprep.mubr.bf16.mxu0 %v919
        %1343 = vmatmul.mubr.bf16.gmra.mrb[0].mxu0 %v918
        %v1344 = vpop.f32.mrb[0].mxu0
        %v1345 = vadd.f32 0.0, %v1344
        %v1346 = vpop.f32.mrb[0].mxu0
        %v1347 = vadd.f32 0.0, %v1346
        %v1348 = vpop.f32.mrb[0].mxu0
        %v1349 = vadd.f32 0.0, %v1348
        %v1350 = vpop.f32.mrb[0].mxu0
        %v1351 = vadd.f32 0.0, %v1350
        %1352 = vmatprep.mubr.bf16.mxu0 %v921
        %1353 = vmatmul.mubr.bf16.gmra.mrb[0].mxu0 %v920
        %v1354 = vpop.f32.mrb[0].mxu0
        %v1355 = vadd.f32 0.0, %v1354
        %v1356 = vpop.f32.mrb[0].mxu0
        %v1357 = vadd.f32 0.0, %v1356
        %v1358 = vpop.f32.mrb[0].mxu0
        %v1359 = vadd.f32 0.0, %v1358
        %v1360 = vpop.f32.mrb[0].mxu0
        %v1361 = vadd.f32 0.0, %v1360
        %1362 = vmatprep.mubr.bf16.mxu0 %v923
        %1363 = vmatmul.mubr.bf16.gmra.mrb[0].mxu0 %v922
        %v1364 = vpop.f32.mrb[0].mxu0
        %v1365 = vadd.f32 0.0, %v1364
        %v1366 = vpop.f32.mrb[0].mxu0
        %v1367 = vadd.f32 0.0, %v1366
        %v1368 = vpop.f32.mrb[0].mxu0
        %v1369 = vadd.f32 0.0, %v1368
        %v1370 = vpop.f32.mrb[0].mxu0
        %v1371 = vadd.f32 0.0, %v1370
        %1372 = vmatprep.mubr.bf16.mxu0 %v925
        %1373 = vmatmul.mubr.bf16.gmra.mrb[0].mxu0 %v924
        %v1374 = vpop.f32.mrb[0].mxu0
        %v1375 = vadd.f32 0.0, %v1374
        %v1376 = vpop.f32.mrb[0].mxu0
        %v1377 = vadd.f32 0.0, %v1376
        %v1378 = vpop.f32.mrb[0].mxu0
        %v1379 = vadd.f32 0.0, %v1378
        %v1380 = vpop.f32.mrb[0].mxu0
        %v1381 = vadd.f32 0.0, %v1380
        %1382 = vmatprep.mubr.bf16.mxu0 %v927
        %1383 = vmatmul.mubr.bf16.gmra.mrb[0].mxu0 %v926
        %v1384 = vpop.f32.mrb[0].mxu0
        %v1385 = vadd.f32 0.0, %v1384
        %v1386 = vpop.f32.mrb[0].mxu0
        %v1387 = vadd.f32 0.0, %v1386
        %v1388 = vpop.f32.mrb[0].mxu0
        %v1389 = vadd.f32 0.0, %v1388
        %v1390 = vpop.f32.mrb[0].mxu0
        %v1391 = vadd.f32 0.0, %v1390
        %1392 = vmatprep.mubr.bf16.mxu0 %v929
        %1393 = vmatmul.mubr.bf16.gmra.mrb[0].mxu0 %v928
        %v1394 = vpop.f32.mrb[0].mxu0
        %v1395 = vadd.f32 0.0, %v1394
        %v1396 = vpop.f32.mrb[0].mxu0
        %v1397 = vadd.f32 0.0, %v1396
        %v1398 = vpop.f32.mrb[0].mxu0
        %v1399 = vadd.f32 0.0, %v1398
        %v1400 = vpop.f32.mrb[0].mxu0
        %v1401 = vadd.f32 0.0, %v1400
        %1402 = vmatprep.mubr.bf16.mxu0 %v931
        %1403 = vmatmul.mubr.bf16.gmra.mrb[0].mxu0 %v930
        %v1404 = vpop.f32.mrb[0].mxu0
        %v1405 = vadd.f32 0.0, %v1404
        %v1406 = vpop.f32.mrb[0].mxu0
        %v1407 = vadd.f32 0.0, %v1406
        %v1408 = vpop.f32.mrb[0].mxu0
        %v1409 = vadd.f32 0.0, %v1408
        %v1410 = vpop.f32.mrb[0].mxu0
        %v1411 = vadd.f32 0.0, %v1410
        %1412 = vmatprep.mubr.bf16.mxu0 %v933
        %1413 = vmatmul.mubr.bf16.gmra.mrb[0].mxu0 %v932
        %v1414 = vpop.f32.mrb[0].mxu0
        %v1415 = vadd.f32 0.0, %v1414
        %v1416 = vpop.f32.mrb[0].mxu0
        %v1417 = vadd.f32 0.0, %v1416
        %v1418 = vpop.f32.mrb[0].mxu0
        %v1419 = vadd.f32 0.0, %v1418
        %v1420 = vpop.f32.mrb[0].mxu0
        %v1421 = vadd.f32 0.0, %v1420
        %1422 = vmatprep.mubr.bf16.mxu0 %v935
        %1423 = vmatmul.mubr.bf16.gmra.mrb[0].mxu0 %v934
        %v1424 = vpop.f32.mrb[0].mxu0
        %v1425 = vadd.f32 0.0, %v1424
        %v1426 = vpop.f32.mrb[0].mxu0
        %v1427 = vadd.f32 0.0, %v1426
        %v1428 = vpop.f32.mrb[0].mxu0
        %v1429 = vadd.f32 0.0, %v1428
        %v1430 = vpop.f32.mrb[0].mxu0
        %v1431 = vadd.f32 0.0, %v1430
        %1432 = vmatprep.mubr.bf16.mxu0 %v937
        %1433 = vmatmul.mubr.bf16.gmra.mrb[0].mxu0 %v936
        %v1434 = vpop.f32.mrb[0].mxu0
        %v1435 = vadd.f32 0.0, %v1434
        %v1436 = vpop.f32.mrb[0].mxu0
        %v1437 = vadd.f32 0.0, %v1436
        %v1438 = vpop.f32.mrb[0].mxu0
        %v1439 = vadd.f32 0.0, %v1438
        %v1440 = vpop.f32.mrb[0].mxu0
        %v1441 = vadd.f32 0.0, %v1440
        %1442 = vmatprep.mubr.bf16.mxu0 %v939
        %1443 = vmatmul.mubr.bf16.gmra.mrb[0].mxu0 %v938
        %v1444 = vpop.f32.mrb[0].mxu0
        %v1445 = vadd.f32 0.0, %v1444
        %v1446 = vpop.f32.mrb[0].mxu0
        %v1447 = vadd.f32 0.0, %v1446
        %v1448 = vpop.f32.mrb[0].mxu0
        %v1449 = vadd.f32 0.0, %v1448
        %v1450 = vpop.f32.mrb[0].mxu0
        %v1451 = vadd.f32 0.0, %v1450
        %1452 = vmatprep.mubr.bf16.mxu0 %v941
        %1453 = vmatmul.mubr.bf16.gmra.mrb[0].mxu0 %v940
        %v1454 = vpop.f32.mrb[0].mxu0
        %v1455 = vadd.f32 0.0, %v1454
        %v1456 = vpop.f32.mrb[0].mxu0
        %v1457 = vadd.f32 0.0, %v1456
        %v1458 = vpop.f32.mrb[0].mxu0
        %v1459 = vadd.f32 0.0, %v1458
        %v1460 = vpop.f32.mrb[0].mxu0
        %v1461 = vadd.f32 0.0, %v1460
        %1462 = vmatprep.mubr.bf16.mxu0 %v943
        %1463 = vmatmul.mubr.bf16.gmra.mrb[0].mxu0 %v942
        %v1464 = vpop.f32.mrb[0].mxu0
        %v1465 = vadd.f32 0.0, %v1464
        %v1466 = vpop.f32.mrb[0].mxu0
        %v1467 = vadd.f32 0.0, %v1466
        %v1468 = vpop.f32.mrb[0].mxu0
        %v1469 = vadd.f32 0.0, %v1468
        %v1470 = vpop.f32.mrb[0].mxu0
        %v1471 = vadd.f32 0.0, %v1470
        %1472 = vmatprep.mubr.bf16.mxu0 %v945
        %1473 = vmatmul.mubr.bf16.gmra.mrb[0].mxu0 %v944
        %v1474 = vpop.f32.mrb[0].mxu0
        %v1475 = vadd.f32 0.0, %v1474
        %v1476 = vpop.f32.mrb[0].mxu0
        %v1477 = vadd.f32 0.0, %v1476
        %v1478 = vpop.f32.mrb[0].mxu0
        %v1479 = vadd.f32 0.0, %v1478
        %v1480 = vpop.f32.mrb[0].mxu0
        %v1481 = vadd.f32 0.0, %v1480
        %1482 = vmatprep.mubr.bf16.mxu0 %v947
        %1483 = vmatmul.mubr.bf16.gmra.mrb[0].mxu0 %v946
        %v1484 = vpop.f32.mrb[0].mxu0
        %v1485 = vadd.f32 0.0, %v1484
        %v1486 = vpop.f32.mrb[0].mxu0
        %v1487 = vadd.f32 0.0, %v1486
        %v1488 = vpop.f32.mrb[0].mxu0
        %v1489 = vadd.f32 0.0, %v1488
        %v1490 = vpop.f32.mrb[0].mxu0
        %v1491 = vadd.f32 0.0, %v1490
        %1492 = vmatprep.mubr.bf16.mxu0 %v949
        %1493 = vmatmul.mubr.bf16.gmra.mrb[0].mxu0 %v948
        %v1494 = vpop.f32.mrb[0].mxu0
        %v1495 = vadd.f32 0.0, %v1494
        %v1496 = vpop.f32.mrb[0].mxu0
        %v1497 = vadd.f32 0.0, %v1496
        %v1498 = vpop.f32.mrb[0].mxu0
        %v1499 = vadd.f32 0.0, %v1498
        %v1500 = vpop.f32.mrb[0].mxu0
        %v1501 = vadd.f32 0.0, %v1500
        %1502 = vmatprep.mubr.bf16.mxu0 %v951
        %1503 = vmatmul.mubr.bf16.gmra.mrb[0].mxu0 %v950
        %v1504 = vpop.f32.mrb[0].mxu0
        %v1505 = vadd.f32 0.0, %v1504
        %v1506 = vpop.f32.mrb[0].mxu0
        %v1507 = vadd.f32 0.0, %v1506
        %v1508 = vpop.f32.mrb[0].mxu0
        %v1509 = vadd.f32 0.0, %v1508
        %v1510 = vpop.f32.mrb[0].mxu0
        %v1511 = vadd.f32 0.0, %v1510
        %1512 = vmatprep.mubr.bf16.mxu0 %v953
        %1513 = vmatmul.mubr.bf16.gmra.mrb[0].mxu0 %v952
        %v1514 = vpop.f32.mrb[0].mxu0
        %v1515 = vadd.f32 0.0, %v1514
        %v1516 = vpop.f32.mrb[0].mxu0
        %v1517 = vadd.f32 0.0, %v1516
        %v1518 = vpop.f32.mrb[0].mxu0
        %v1519 = vadd.f32 0.0, %v1518
        %v1520 = vpop.f32.mrb[0].mxu0
        %v1521 = vadd.f32 0.0, %v1520
        %1522 = vmatprep.mubr.bf16.mxu0 %v955
        %1523 = vmatmul.mubr.bf16.gmra.mrb[0].mxu0 %v954
        %v1524 = vpop.f32.mrb[0].mxu0
        %v1525 = vadd.f32 0.0, %v1524
        %v1526 = vpop.f32.mrb[0].mxu0
        %v1527 = vadd.f32 0.0, %v1526
        %v1528 = vpop.f32.mrb[0].mxu0
        %v1529 = vadd.f32 0.0, %v1528
        %v1530 = vpop.f32.mrb[0].mxu0
        %v1531 = vadd.f32 0.0, %v1530
        %1532 = vdwg.mxu0
        %v1533 = vld [vmem:[%s345] sm:$0xff]
        %v1534 = vld [vmem:[%s345 + $0x8] sm:$0xff]
        %v1535 = vld [vmem:[%s345 + $0x10] sm:$0xff]
        %v1536 = vld [vmem:[%s345 + $0x18] sm:$0xff]
        %v1537 = vld [vmem:[%s345 + $0x20] sm:$0xff]
        %v1538 = vld [vmem:[%s345 + $0x28] sm:$0xff]
        %v1539 = vld [vmem:[%s345 + $0x30] sm:$0xff]
        %v1540 = vld [vmem:[%s345 + $0x38] sm:$0xff]
        %v1541 = vld [vmem:[%s345 + $0x40] sm:$0xff]
        %v1542 = vld [vmem:[%s345 + $0x48] sm:$0xff]
        %v1543 = vld [vmem:[%s345 + $0x50] sm:$0xff]
        %v1544 = vld [vmem:[%s345 + $0x58] sm:$0xff]
        %v1545 = vld [vmem:[%s345 + $0x60] sm:$0xff]
        %v1546 = vld [vmem:[%s345 + $0x68] sm:$0xff]
        %v1547 = vld [vmem:[%s345 + $0x70] sm:$0xff]
        %v1548 = vld [vmem:[%s345 + $0x78] sm:$0xff]
        %v1549 = vld [vmem:[%s345 + $0x80] sm:$0xff]
        %v1550 = vld [vmem:[%s345 + $0x88] sm:$0xff]
        %v1551 = vld [vmem:[%s345 + $0x90] sm:$0xff]
        %v1552 = vld [vmem:[%s345 + $0x98] sm:$0xff]
        %v1553 = vld [vmem:[%s345 + $0xa0] sm:$0xff]
        %v1554 = vld [vmem:[%s345 + $0xa8] sm:$0xff]
        %v1555 = vld [vmem:[%s345 + $0xb0] sm:$0xff]
        %v1556 = vld [vmem:[%s345 + $0xb8] sm:$0xff]
        %v1557 = vld [vmem:[%s345 + $0xc0] sm:$0xff]
        %v1558 = vld [vmem:[%s345 + $0xc8] sm:$0xff]
        %v1559 = vld [vmem:[%s345 + $0xd0] sm:$0xff]
        %v1560 = vld [vmem:[%s345 + $0xd8] sm:$0xff]
        %v1561 = vld [vmem:[%s345 + $0xe0] sm:$0xff]
        %v1562 = vld [vmem:[%s345 + $0xe8] sm:$0xff]
        %v1563 = vld [vmem:[%s345 + $0xf0] sm:$0xff]
        %v1564 = vld [vmem:[%s345 + $0xf8] sm:$0xff]
        %v1597 = vunpack.c.l.b16 %v1533
        %v1598 = vunpack.c.h.b16 %v1533
        %v1599 = vunpack.c.l.b16 %v1534
        %v1600 = vunpack.c.h.b16 %v1534
        %v1601 = vunpack.c.l.b16 %v1535
        %v1602 = vunpack.c.h.b16 %v1535
        %v1603 = vunpack.c.l.b16 %v1536
        %v1604 = vunpack.c.h.b16 %v1536
        %v1605 = vunpack.c.l.b16 %v1537
        %v1606 = vunpack.c.h.b16 %v1537
        %v1607 = vunpack.c.l.b16 %v1538
        %v1608 = vunpack.c.h.b16 %v1538
        %v1609 = vunpack.c.l.b16 %v1539
        %v1610 = vunpack.c.h.b16 %v1539
        %v1611 = vunpack.c.l.b16 %v1540
        %v1612 = vunpack.c.h.b16 %v1540
        %v1613 = vunpack.c.l.b16 %v1541
        %v1614 = vunpack.c.h.b16 %v1541
        %v1615 = vunpack.c.l.b16 %v1542
        %v1616 = vunpack.c.h.b16 %v1542
        %v1617 = vunpack.c.l.b16 %v1543
        %v1618 = vunpack.c.h.b16 %v1543
        %v1619 = vunpack.c.l.b16 %v1544
        %v1620 = vunpack.c.h.b16 %v1544
        %v1621 = vunpack.c.l.b16 %v1545
        %v1622 = vunpack.c.h.b16 %v1545
        %v1623 = vunpack.c.l.b16 %v1546
        %v1624 = vunpack.c.h.b16 %v1546
        %v1625 = vunpack.c.l.b16 %v1547
        %v1626 = vunpack.c.h.b16 %v1547
        %v1627 = vunpack.c.l.b16 %v1548
        %v1628 = vunpack.c.h.b16 %v1548
        %v1629 = vunpack.c.l.b16 %v1549
        %v1630 = vunpack.c.h.b16 %v1549
        %v1631 = vunpack.c.l.b16 %v1550
        %v1632 = vunpack.c.h.b16 %v1550
        %v1633 = vunpack.c.l.b16 %v1551
        %v1634 = vunpack.c.h.b16 %v1551
        %v1635 = vunpack.c.l.b16 %v1552
        %v1636 = vunpack.c.h.b16 %v1552
        %v1637 = vunpack.c.l.b16 %v1553
        %v1638 = vunpack.c.h.b16 %v1553
        %v1639 = vunpack.c.l.b16 %v1554
        %v1640 = vunpack.c.h.b16 %v1554
        %v1641 = vunpack.c.l.b16 %v1555
        %v1642 = vunpack.c.h.b16 %v1555
        %v1643 = vunpack.c.l.b16 %v1556
        %v1644 = vunpack.c.h.b16 %v1556
        %v1645 = vunpack.c.l.b16 %v1557
        %v1646 = vunpack.c.h.b16 %v1557
        %v1647 = vunpack.c.l.b16 %v1558
        %v1648 = vunpack.c.h.b16 %v1558
        %v1649 = vunpack.c.l.b16 %v1559
        %v1650 = vunpack.c.h.b16 %v1559
        %v1651 = vunpack.c.l.b16 %v1560
        %v1652 = vunpack.c.h.b16 %v1560
        %v1653 = vunpack.c.l.b16 %v1561
        %v1654 = vunpack.c.h.b16 %v1561
        %v1655 = vunpack.c.l.b16 %v1562
        %v1656 = vunpack.c.h.b16 %v1562
        %v1657 = vunpack.c.l.b16 %v1563
        %v1658 = vunpack.c.h.b16 %v1563
        %v1659 = vunpack.c.l.b16 %v1564
        %v1660 = vunpack.c.h.b16 %v1564
        %v1661 = vpack.c.b16 %v1599, %v1597
        %v1662 = vpack.c.b16 %v1600, %v1598
        %v1663 = vpack.c.b16 %v1603, %v1601
        %v1664 = vpack.c.b16 %v1604, %v1602
        %v1665 = vpack.c.b16 %v1607, %v1605
        %v1666 = vpack.c.b16 %v1608, %v1606
        %v1667 = vpack.c.b16 %v1611, %v1609
        %v1668 = vpack.c.b16 %v1612, %v1610
        %v1669 = vpack.c.b16 %v1615, %v1613
        %v1670 = vpack.c.b16 %v1616, %v1614
        %v1671 = vpack.c.b16 %v1619, %v1617
        %v1672 = vpack.c.b16 %v1620, %v1618
        %v1673 = vpack.c.b16 %v1623, %v1621
        %v1674 = vpack.c.b16 %v1624, %v1622
        %v1675 = vpack.c.b16 %v1627, %v1625
        %v1676 = vpack.c.b16 %v1628, %v1626
        %v1677 = vpack.c.b16 %v1631, %v1629
        %v1678 = vpack.c.b16 %v1632, %v1630
        %v1679 = vpack.c.b16 %v1635, %v1633
        %v1680 = vpack.c.b16 %v1636, %v1634
        %v1681 = vpack.c.b16 %v1639, %v1637
        %v1682 = vpack.c.b16 %v1640, %v1638
        %v1683 = vpack.c.b16 %v1643, %v1641
        %v1684 = vpack.c.b16 %v1644, %v1642
        %v1685 = vpack.c.b16 %v1647, %v1645
        %v1686 = vpack.c.b16 %v1648, %v1646
        %v1687 = vpack.c.b16 %v1651, %v1649
        %v1688 = vpack.c.b16 %v1652, %v1650
        %v1689 = vpack.c.b16 %v1655, %v1653
        %v1690 = vpack.c.b16 %v1656, %v1654
        %v1691 = vpack.c.b16 %v1659, %v1657
        %v1692 = vpack.c.b16 %v1660, %v1658
        %1725 = vmatprep.subr.bf16.mxu0 %v1662
        %1726 = vmatpush1.bf16.xpose.msra.mxu0 %v1661
        %1727 = vmatprep.subr.bf16.mxu0 %v1664
        %1728 = vmatpush1.bf16.xpose.msra.mxu0 %v1663
        %1729 = vmatprep.subr.bf16.mxu0 %v1666
        %1730 = vmatpush1.bf16.xpose.msra.mxu0 %v1665
        %1731 = vmatprep.subr.bf16.mxu0 %v1668
        %1732 = vmatpush1.bf16.xpose.msra.mxu0 %v1667
        %1733 = vmatprep.subr.bf16.mxu0 %v1670
        %1734 = vmatpush1.bf16.xpose.msra.mxu0 %v1669
        %1735 = vmatprep.subr.bf16.mxu0 %v1672
        %1736 = vmatpush1.bf16.xpose.msra.mxu0 %v1671
        %1737 = vmatprep.subr.bf16.mxu0 %v1674
        %1738 = vmatpush1.bf16.xpose.msra.mxu0 %v1673
        %1739 = vmatprep.subr.bf16.mxu0 %v1676
        %1740 = vmatpush1.bf16.xpose.msra.mxu0 %v1675
        %1741 = vmatprep.subr.bf16.mxu0 %v1678
        %1742 = vmatpush1.bf16.xpose.msra.mxu0 %v1677
        %1743 = vmatprep.subr.bf16.mxu0 %v1680
        %1744 = vmatpush1.bf16.xpose.msra.mxu0 %v1679
        %1745 = vmatprep.subr.bf16.mxu0 %v1682
        %1746 = vmatpush1.bf16.xpose.msra.mxu0 %v1681
        %1747 = vmatprep.subr.bf16.mxu0 %v1684
        %1748 = vmatpush1.bf16.xpose.msra.mxu0 %v1683
        %1749 = vmatprep.subr.bf16.mxu0 %v1686
        %1750 = vmatpush1.bf16.xpose.msra.mxu0 %v1685
        %1751 = vmatprep.subr.bf16.mxu0 %v1688
        %1752 = vmatpush1.bf16.xpose.msra.mxu0 %v1687
        %1753 = vmatprep.subr.bf16.mxu0 %v1690
        %1754 = vmatpush1.bf16.xpose.msra.mxu0 %v1689
        %1755 = vmatprep.subr.bf16.mxu0 %v1692
        %1756 = vmatpush1.bf16.xpose.msra.mxu0 %v1691
        %1757 = vmatprep.mubr.bf16.mxu0 %v893
        %1758 = vmatmul.mubr.bf16.gmra.mrb[0].mxu0 %v892
        %v1759 = vpop.f32.mrb[0].mxu0
        %v1760 = vadd.f32 0.0, %v1759
        %v1761 = vpop.f32.mrb[0].mxu0
        %v1762 = vadd.f32 0.0, %v1761
        %v1763 = vpop.f32.mrb[0].mxu0
        %v1764 = vadd.f32 0.0, %v1763
        %v1765 = vpop.f32.mrb[0].mxu0
        %v1766 = vadd.f32 0.0, %v1765
        %1767 = vmatprep.mubr.bf16.mxu0 %v895
        %1768 = vmatmul.mubr.bf16.gmra.mrb[0].mxu0 %v894
        %v1769 = vpop.f32.mrb[0].mxu0
        %v1770 = vadd.f32 0.0, %v1769
        %v1771 = vpop.f32.mrb[0].mxu0
        %v1772 = vadd.f32 0.0, %v1771
        %v1773 = vpop.f32.mrb[0].mxu0
        %v1774 = vadd.f32 0.0, %v1773
        %v1775 = vpop.f32.mrb[0].mxu0
        %v1776 = vadd.f32 0.0, %v1775
        %1777 = vmatprep.mubr.bf16.mxu0 %v897
        %1778 = vmatmul.mubr.bf16.gmra.mrb[0].mxu0 %v896
        %v1779 = vpop.f32.mrb[0].mxu0
        %v1780 = vadd.f32 0.0, %v1779
        %v1781 = vpop.f32.mrb[0].mxu0
        %v1782 = vadd.f32 0.0, %v1781
        %v1783 = vpop.f32.mrb[0].mxu0
        %v1784 = vadd.f32 0.0, %v1783
        %v1785 = vpop.f32.mrb[0].mxu0
        %v1786 = vadd.f32 0.0, %v1785
        %1787 = vmatprep.mubr.bf16.mxu0 %v899
        %1788 = vmatmul.mubr.bf16.gmra.mrb[0].mxu0 %v898
        %v1789 = vpop.f32.mrb[0].mxu0
        %v1790 = vadd.f32 0.0, %v1789
        %v1791 = vpop.f32.mrb[0].mxu0
        %v1792 = vadd.f32 0.0, %v1791
        %v1793 = vpop.f32.mrb[0].mxu0
        %v1794 = vadd.f32 0.0, %v1793
        %v1795 = vpop.f32.mrb[0].mxu0
        %v1796 = vadd.f32 0.0, %v1795
        %1797 = vmatprep.mubr.bf16.mxu0 %v901
        %1798 = vmatmul.mubr.bf16.gmra.mrb[0].mxu0 %v900
        %v1799 = vpop.f32.mrb[0].mxu0
        %v1800 = vadd.f32 0.0, %v1799
        %v1801 = vpop.f32.mrb[0].mxu0
        %v1802 = vadd.f32 0.0, %v1801
        %v1803 = vpop.f32.mrb[0].mxu0
        %v1804 = vadd.f32 0.0, %v1803
        %v1805 = vpop.f32.mrb[0].mxu0
        %v1806 = vadd.f32 0.0, %v1805
        %1807 = vmatprep.mubr.bf16.mxu0 %v903
        %1808 = vmatmul.mubr.bf16.gmra.mrb[0].mxu0 %v902
        %v1809 = vpop.f32.mrb[0].mxu0
        %v1810 = vadd.f32 0.0, %v1809
        %v1811 = vpop.f32.mrb[0].mxu0
        %v1812 = vadd.f32 0.0, %v1811
        %v1813 = vpop.f32.mrb[0].mxu0
        %v1814 = vadd.f32 0.0, %v1813
        %v1815 = vpop.f32.mrb[0].mxu0
        %v1816 = vadd.f32 0.0, %v1815
        %1817 = vmatprep.mubr.bf16.mxu0 %v905
        %1818 = vmatmul.mubr.bf16.gmra.mrb[0].mxu0 %v904
        %v1819 = vpop.f32.mrb[0].mxu0
        %v1820 = vadd.f32 0.0, %v1819
        %v1821 = vpop.f32.mrb[0].mxu0
        %v1822 = vadd.f32 0.0, %v1821
        %v1823 = vpop.f32.mrb[0].mxu0
        %v1824 = vadd.f32 0.0, %v1823
        %v1825 = vpop.f32.mrb[0].mxu0
        %v1826 = vadd.f32 0.0, %v1825
        %1827 = vmatprep.mubr.bf16.mxu0 %v907
        %1828 = vmatmul.mubr.bf16.gmra.mrb[0].mxu0 %v906
        %v1829 = vpop.f32.mrb[0].mxu0
        %v1830 = vadd.f32 0.0, %v1829
        %v1831 = vpop.f32.mrb[0].mxu0
        %v1832 = vadd.f32 0.0, %v1831
        %v1833 = vpop.f32.mrb[0].mxu0
        %v1834 = vadd.f32 0.0, %v1833
        %v1835 = vpop.f32.mrb[0].mxu0
        %v1836 = vadd.f32 0.0, %v1835
        %1837 = vmatprep.mubr.bf16.mxu0 %v909
        %1838 = vmatmul.mubr.bf16.gmra.mrb[0].mxu0 %v908
        %v1839 = vpop.f32.mrb[0].mxu0
        %v1840 = vadd.f32 0.0, %v1839
        %v1841 = vpop.f32.mrb[0].mxu0
        %v1842 = vadd.f32 0.0, %v1841
        %v1843 = vpop.f32.mrb[0].mxu0
        %v1844 = vadd.f32 0.0, %v1843
        %v1845 = vpop.f32.mrb[0].mxu0
        %v1846 = vadd.f32 0.0, %v1845
        %1847 = vmatprep.mubr.bf16.mxu0 %v911
        %1848 = vmatmul.mubr.bf16.gmra.mrb[0].mxu0 %v910
        %v1849 = vpop.f32.mrb[0].mxu0
        %v1850 = vadd.f32 0.0, %v1849
        %v1851 = vpop.f32.mrb[0].mxu0
        %v1852 = vadd.f32 0.0, %v1851
        %v1853 = vpop.f32.mrb[0].mxu0
        %v1854 = vadd.f32 0.0, %v1853
        %v1855 = vpop.f32.mrb[0].mxu0
        %v1856 = vadd.f32 0.0, %v1855
        %1857 = vmatprep.mubr.bf16.mxu0 %v913
        %1858 = vmatmul.mubr.bf16.gmra.mrb[0].mxu0 %v912
        %v1859 = vpop.f32.mrb[0].mxu0
        %v1860 = vadd.f32 0.0, %v1859
        %v1861 = vpop.f32.mrb[0].mxu0
        %v1862 = vadd.f32 0.0, %v1861
        %v1863 = vpop.f32.mrb[0].mxu0
        %v1864 = vadd.f32 0.0, %v1863
        %v1865 = vpop.f32.mrb[0].mxu0
        %v1866 = vadd.f32 0.0, %v1865
        %1867 = vmatprep.mubr.bf16.mxu0 %v915
        %1868 = vmatmul.mubr.bf16.gmra.mrb[0].mxu0 %v914
        %v1869 = vpop.f32.mrb[0].mxu0
        %v1870 = vadd.f32 0.0, %v1869
        %v1871 = vpop.f32.mrb[0].mxu0
        %v1872 = vadd.f32 0.0, %v1871
        %v1873 = vpop.f32.mrb[0].mxu0
        %v1874 = vadd.f32 0.0, %v1873
        %v1875 = vpop.f32.mrb[0].mxu0
        %v1876 = vadd.f32 0.0, %v1875
        %1877 = vmatprep.mubr.bf16.mxu0 %v917
        %1878 = vmatmul.mubr.bf16.gmra.mrb[0].mxu0 %v916
        %v1879 = vpop.f32.mrb[0].mxu0
        %v1880 = vadd.f32 0.0, %v1879
        %v1881 = vpop.f32.mrb[0].mxu0
        %v1882 = vadd.f32 0.0, %v1881
        %v1883 = vpop.f32.mrb[0].mxu0
        %v1884 = vadd.f32 0.0, %v1883
        %v1885 = vpop.f32.mrb[0].mxu0
        %v1886 = vadd.f32 0.0, %v1885
        %1887 = vmatprep.mubr.bf16.mxu0 %v919
        %1888 = vmatmul.mubr.bf16.gmra.mrb[0].mxu0 %v918
        %v1889 = vpop.f32.mrb[0].mxu0
        %v1890 = vadd.f32 0.0, %v1889
        %v1891 = vpop.f32.mrb[0].mxu0
        %v1892 = vadd.f32 0.0, %v1891
        %v1893 = vpop.f32.mrb[0].mxu0
        %v1894 = vadd.f32 0.0, %v1893
        %v1895 = vpop.f32.mrb[0].mxu0
        %v1896 = vadd.f32 0.0, %v1895
        %1897 = vmatprep.mubr.bf16.mxu0 %v921
        %1898 = vmatmul.mubr.bf16.gmra.mrb[0].mxu0 %v920
        %v1899 = vpop.f32.mrb[0].mxu0
        %v1900 = vadd.f32 0.0, %v1899
        %v1901 = vpop.f32.mrb[0].mxu0
        %v1902 = vadd.f32 0.0, %v1901
        %v1903 = vpop.f32.mrb[0].mxu0
        %v1904 = vadd.f32 0.0, %v1903
        %v1905 = vpop.f32.mrb[0].mxu0
        %v1906 = vadd.f32 0.0, %v1905
        %1907 = vmatprep.mubr.bf16.mxu0 %v923
        %1908 = vmatmul.mubr.bf16.gmra.mrb[0].mxu0 %v922
        %v1909 = vpop.f32.mrb[0].mxu0
        %v1910 = vadd.f32 0.0, %v1909
        %v1911 = vpop.f32.mrb[0].mxu0
        %v1912 = vadd.f32 0.0, %v1911
        %v1913 = vpop.f32.mrb[0].mxu0
        %v1914 = vadd.f32 0.0, %v1913
        %v1915 = vpop.f32.mrb[0].mxu0
        %v1916 = vadd.f32 0.0, %v1915
        %1917 = vmatprep.mubr.bf16.mxu0 %v925
        %1918 = vmatmul.mubr.bf16.gmra.mrb[0].mxu0 %v924
        %v1919 = vpop.f32.mrb[0].mxu0
        %v1920 = vadd.f32 0.0, %v1919
        %v1921 = vpop.f32.mrb[0].mxu0
        %v1922 = vadd.f32 0.0, %v1921
        %v1923 = vpop.f32.mrb[0].mxu0
        %v1924 = vadd.f32 0.0, %v1923
        %v1925 = vpop.f32.mrb[0].mxu0
        %v1926 = vadd.f32 0.0, %v1925
        %1927 = vmatprep.mubr.bf16.mxu0 %v927
        %1928 = vmatmul.mubr.bf16.gmra.mrb[0].mxu0 %v926
        %v1929 = vpop.f32.mrb[0].mxu0
        %v1930 = vadd.f32 0.0, %v1929
        %v1931 = vpop.f32.mrb[0].mxu0
        %v1932 = vadd.f32 0.0, %v1931
        %v1933 = vpop.f32.mrb[0].mxu0
        %v1934 = vadd.f32 0.0, %v1933
        %v1935 = vpop.f32.mrb[0].mxu0
        %v1936 = vadd.f32 0.0, %v1935
        %1937 = vmatprep.mubr.bf16.mxu0 %v929
        %1938 = vmatmul.mubr.bf16.gmra.mrb[0].mxu0 %v928
        %v1939 = vpop.f32.mrb[0].mxu0
        %v1940 = vadd.f32 0.0, %v1939
        %v1941 = vpop.f32.mrb[0].mxu0
        %v1942 = vadd.f32 0.0, %v1941
        %v1943 = vpop.f32.mrb[0].mxu0
        %v1944 = vadd.f32 0.0, %v1943
        %v1945 = vpop.f32.mrb[0].mxu0
        %v1946 = vadd.f32 0.0, %v1945
        %1947 = vmatprep.mubr.bf16.mxu0 %v931
        %1948 = vmatmul.mubr.bf16.gmra.mrb[0].mxu0 %v930
        %v1949 = vpop.f32.mrb[0].mxu0
        %v1950 = vadd.f32 0.0, %v1949
        %v1951 = vpop.f32.mrb[0].mxu0
        %v1952 = vadd.f32 0.0, %v1951
        %v1953 = vpop.f32.mrb[0].mxu0
        %v1954 = vadd.f32 0.0, %v1953
        %v1955 = vpop.f32.mrb[0].mxu0
        %v1956 = vadd.f32 0.0, %v1955
        %1957 = vmatprep.mubr.bf16.mxu0 %v933
        %1958 = vmatmul.mubr.bf16.gmra.mrb[0].mxu0 %v932
        %v1959 = vpop.f32.mrb[0].mxu0
        %v1960 = vadd.f32 0.0, %v1959
        %v1961 = vpop.f32.mrb[0].mxu0
        %v1962 = vadd.f32 0.0, %v1961
        %v1963 = vpop.f32.mrb[0].mxu0
        %v1964 = vadd.f32 0.0, %v1963
        %v1965 = vpop.f32.mrb[0].mxu0
        %v1966 = vadd.f32 0.0, %v1965
        %1967 = vmatprep.mubr.bf16.mxu0 %v935
        %1968 = vmatmul.mubr.bf16.gmra.mrb[0].mxu0 %v934
        %v1969 = vpop.f32.mrb[0].mxu0
        %v1970 = vadd.f32 0.0, %v1969
        %v1971 = vpop.f32.mrb[0].mxu0
        %v1972 = vadd.f32 0.0, %v1971
        %v1973 = vpop.f32.mrb[0].mxu0
        %v1974 = vadd.f32 0.0, %v1973
        %v1975 = vpop.f32.mrb[0].mxu0
        %v1976 = vadd.f32 0.0, %v1975
        %1977 = vmatprep.mubr.bf16.mxu0 %v937
        %1978 = vmatmul.mubr.bf16.gmra.mrb[0].mxu0 %v936
        %v1979 = vpop.f32.mrb[0].mxu0
        %v1980 = vadd.f32 0.0, %v1979
        %v1981 = vpop.f32.mrb[0].mxu0
        %v1982 = vadd.f32 0.0, %v1981
        %v1983 = vpop.f32.mrb[0].mxu0
        %v1984 = vadd.f32 0.0, %v1983
        %v1985 = vpop.f32.mrb[0].mxu0
        %v1986 = vadd.f32 0.0, %v1985
        %1987 = vmatprep.mubr.bf16.mxu0 %v939
        %1988 = vmatmul.mubr.bf16.gmra.mrb[0].mxu0 %v938
        %v1989 = vpop.f32.mrb[0].mxu0
        %v1990 = vadd.f32 0.0, %v1989
        %v1991 = vpop.f32.mrb[0].mxu0
        %v1992 = vadd.f32 0.0, %v1991
        %v1993 = vpop.f32.mrb[0].mxu0
        %v1994 = vadd.f32 0.0, %v1993
        %v1995 = vpop.f32.mrb[0].mxu0
        %v1996 = vadd.f32 0.0, %v1995
        %1997 = vmatprep.mubr.bf16.mxu0 %v941
        %1998 = vmatmul.mubr.bf16.gmra.mrb[0].mxu0 %v940
        %v1999 = vpop.f32.mrb[0].mxu0
        %v2000 = vadd.f32 0.0, %v1999
        %v2001 = vpop.f32.mrb[0].mxu0
        %v2002 = vadd.f32 0.0, %v2001
        %v2003 = vpop.f32.mrb[0].mxu0
        %v2004 = vadd.f32 0.0, %v2003
        %v2005 = vpop.f32.mrb[0].mxu0
        %v2006 = vadd.f32 0.0, %v2005
        %2007 = vmatprep.mubr.bf16.mxu0 %v943
        %2008 = vmatmul.mubr.bf16.gmra.mrb[0].mxu0 %v942
        %v2009 = vpop.f32.mrb[0].mxu0
        %v2010 = vadd.f32 0.0, %v2009
        %v2011 = vpop.f32.mrb[0].mxu0
        %v2012 = vadd.f32 0.0, %v2011
        %v2013 = vpop.f32.mrb[0].mxu0
        %v2014 = vadd.f32 0.0, %v2013
        %v2015 = vpop.f32.mrb[0].mxu0
        %v2016 = vadd.f32 0.0, %v2015
        %2017 = vmatprep.mubr.bf16.mxu0 %v945
        %2018 = vmatmul.mubr.bf16.gmra.mrb[0].mxu0 %v944
        %v2019 = vpop.f32.mrb[0].mxu0
        %v2020 = vadd.f32 0.0, %v2019
        %v2021 = vpop.f32.mrb[0].mxu0
        %v2022 = vadd.f32 0.0, %v2021
        %v2023 = vpop.f32.mrb[0].mxu0
        %v2024 = vadd.f32 0.0, %v2023
        %v2025 = vpop.f32.mrb[0].mxu0
        %v2026 = vadd.f32 0.0, %v2025
        %2027 = vmatprep.mubr.bf16.mxu0 %v947
        %2028 = vmatmul.mubr.bf16.gmra.mrb[0].mxu0 %v946
        %v2029 = vpop.f32.mrb[0].mxu0
        %v2030 = vadd.f32 0.0, %v2029
        %v2031 = vpop.f32.mrb[0].mxu0
        %v2032 = vadd.f32 0.0, %v2031
        %v2033 = vpop.f32.mrb[0].mxu0
        %v2034 = vadd.f32 0.0, %v2033
        %v2035 = vpop.f32.mrb[0].mxu0
        %v2036 = vadd.f32 0.0, %v2035
        %2037 = vmatprep.mubr.bf16.mxu0 %v949
        %2038 = vmatmul.mubr.bf16.gmra.mrb[0].mxu0 %v948
        %v2039 = vpop.f32.mrb[0].mxu0
        %v2040 = vadd.f32 0.0, %v2039
        %v2041 = vpop.f32.mrb[0].mxu0
        %v2042 = vadd.f32 0.0, %v2041
        %v2043 = vpop.f32.mrb[0].mxu0
        %v2044 = vadd.f32 0.0, %v2043
        %v2045 = vpop.f32.mrb[0].mxu0
        %v2046 = vadd.f32 0.0, %v2045
        %2047 = vmatprep.mubr.bf16.mxu0 %v951
        %2048 = vmatmul.mubr.bf16.gmra.mrb[0].mxu0 %v950
        %v2049 = vpop.f32.mrb[0].mxu0
        %v2050 = vadd.f32 0.0, %v2049
        %v2051 = vpop.f32.mrb[0].mxu0
        %v2052 = vadd.f32 0.0, %v2051
        %v2053 = vpop.f32.mrb[0].mxu0
        %v2054 = vadd.f32 0.0, %v2053
        %v2055 = vpop.f32.mrb[0].mxu0
        %v2056 = vadd.f32 0.0, %v2055
        %2057 = vmatprep.mubr.bf16.mxu0 %v953
        %2058 = vmatmul.mubr.bf16.gmra.mrb[0].mxu0 %v952
        %v2059 = vpop.f32.mrb[0].mxu0
        %v2060 = vadd.f32 0.0, %v2059
        %v2061 = vpop.f32.mrb[0].mxu0
        %v2062 = vadd.f32 0.0, %v2061
        %v2063 = vpop.f32.mrb[0].mxu0
        %v2064 = vadd.f32 0.0, %v2063
        %v2065 = vpop.f32.mrb[0].mxu0
        %v2066 = vadd.f32 0.0, %v2065
        %2067 = vmatprep.mubr.bf16.mxu0 %v955
        %2068 = vmatmul.mubr.bf16.gmra.mrb[0].mxu0 %v954
        %v2069 = vpop.f32.mrb[0].mxu0
        %v2070 = vadd.f32 0.0, %v2069
        %v2071 = vpop.f32.mrb[0].mxu0
        %v2072 = vadd.f32 0.0, %v2071
        %v2073 = vpop.f32.mrb[0].mxu0
        %v2074 = vadd.f32 0.0, %v2073
        %v2075 = vpop.f32.mrb[0].mxu0
        %v2076 = vadd.f32 0.0, %v2075
        %2077 = vdwg.mxu0
        %v2078 = vxor.u32 %v1215, 2147483648
        %v2079 = vxor.u32 %v1217, 2147483648
        %v2080 = vxor.u32 %v1219, 2147483648
        %v2081 = vxor.u32 %v1221, 2147483648
        %v2082 = vxor.u32 %v1225, 2147483648
        %v2083 = vxor.u32 %v1227, 2147483648
        %v2084 = vxor.u32 %v1229, 2147483648
        %v2085 = vxor.u32 %v1231, 2147483648
        %v2086 = vxor.u32 %v1235, 2147483648
        %v2087 = vxor.u32 %v1237, 2147483648
        %v2088 = vxor.u32 %v1239, 2147483648
        %v2089 = vxor.u32 %v1241, 2147483648
        %v2090 = vxor.u32 %v1245, 2147483648
        %v2091 = vxor.u32 %v1247, 2147483648
        %v2092 = vxor.u32 %v1249, 2147483648
        %v2093 = vxor.u32 %v1251, 2147483648
        %v2094 = vxor.u32 %v1255, 2147483648
        %v2095 = vxor.u32 %v1257, 2147483648
        %v2096 = vxor.u32 %v1259, 2147483648
        %v2097 = vxor.u32 %v1261, 2147483648
        %v2098 = vxor.u32 %v1265, 2147483648
        %v2099 = vxor.u32 %v1267, 2147483648
        %v2100 = vxor.u32 %v1269, 2147483648
        %v2101 = vxor.u32 %v1271, 2147483648
        %v2102 = vxor.u32 %v1275, 2147483648
        %v2103 = vxor.u32 %v1277, 2147483648
        %v2104 = vxor.u32 %v1279, 2147483648
        %v2105 = vxor.u32 %v1281, 2147483648
        %v2106 = vxor.u32 %v1285, 2147483648
        %v2107 = vxor.u32 %v1287, 2147483648
        %v2108 = vxor.u32 %v1289, 2147483648
        %v2109 = vxor.u32 %v1291, 2147483648
        %v2110 = vxor.u32 %v1295, 2147483648
        %v2111 = vxor.u32 %v1297, 2147483648
        %v2112 = vxor.u32 %v1299, 2147483648
        %v2113 = vxor.u32 %v1301, 2147483648
        %v2114 = vxor.u32 %v1305, 2147483648
        %v2115 = vxor.u32 %v1307, 2147483648
        %v2116 = vxor.u32 %v1309, 2147483648
        %v2117 = vxor.u32 %v1311, 2147483648
        %v2118 = vxor.u32 %v1315, 2147483648
        %v2119 = vxor.u32 %v1317, 2147483648
        %v2120 = vxor.u32 %v1319, 2147483648
        %v2121 = vxor.u32 %v1321, 2147483648
        %v2122 = vxor.u32 %v1325, 2147483648
        %v2123 = vxor.u32 %v1327, 2147483648
        %v2124 = vxor.u32 %v1329, 2147483648
        %v2125 = vxor.u32 %v1331, 2147483648
        %v2126 = vxor.u32 %v1335, 2147483648
        %v2127 = vxor.u32 %v1337, 2147483648
        %v2128 = vxor.u32 %v1339, 2147483648
        %v2129 = vxor.u32 %v1341, 2147483648
        %v2130 = vxor.u32 %v1345, 2147483648
        %v2131 = vxor.u32 %v1347, 2147483648
        %v2132 = vxor.u32 %v1349, 2147483648
        %v2133 = vxor.u32 %v1351, 2147483648
        %v2134 = vxor.u32 %v1355, 2147483648
        %v2135 = vxor.u32 %v1357, 2147483648
        %v2136 = vxor.u32 %v1359, 2147483648
        %v2137 = vxor.u32 %v1361, 2147483648
        %v2138 = vxor.u32 %v1365, 2147483648
        %v2139 = vxor.u32 %v1367, 2147483648
        %v2140 = vxor.u32 %v1369, 2147483648
        %v2141 = vxor.u32 %v1371, 2147483648
        %v2142 = vxor.u32 %v1375, 2147483648
        %v2143 = vxor.u32 %v1377, 2147483648
        %v2144 = vxor.u32 %v1379, 2147483648
        %v2145 = vxor.u32 %v1381, 2147483648
        %v2146 = vxor.u32 %v1385, 2147483648
        %v2147 = vxor.u32 %v1387, 2147483648
        %v2148 = vxor.u32 %v1389, 2147483648
        %v2149 = vxor.u32 %v1391, 2147483648
        %v2150 = vxor.u32 %v1395, 2147483648
        %v2151 = vxor.u32 %v1397, 2147483648
        %v2152 = vxor.u32 %v1399, 2147483648
        %v2153 = vxor.u32 %v1401, 2147483648
        %v2154 = vxor.u32 %v1405, 2147483648
        %v2155 = vxor.u32 %v1407, 2147483648
        %v2156 = vxor.u32 %v1409, 2147483648
        %v2157 = vxor.u32 %v1411, 2147483648
        %v2158 = vxor.u32 %v1415, 2147483648
        %v2159 = vxor.u32 %v1417, 2147483648
        %v2160 = vxor.u32 %v1419, 2147483648
        %v2161 = vxor.u32 %v1421, 2147483648
        %v2162 = vxor.u32 %v1425, 2147483648
        %v2163 = vxor.u32 %v1427, 2147483648
        %v2164 = vxor.u32 %v1429, 2147483648
        %v2165 = vxor.u32 %v1431, 2147483648
        %v2166 = vxor.u32 %v1435, 2147483648
        %v2167 = vxor.u32 %v1437, 2147483648
        %v2168 = vxor.u32 %v1439, 2147483648
        %v2169 = vxor.u32 %v1441, 2147483648
        %v2170 = vxor.u32 %v1445, 2147483648
        %v2171 = vxor.u32 %v1447, 2147483648
        %v2172 = vxor.u32 %v1449, 2147483648
        %v2173 = vxor.u32 %v1451, 2147483648
        %v2174 = vxor.u32 %v1455, 2147483648
        %v2175 = vxor.u32 %v1457, 2147483648
        %v2176 = vxor.u32 %v1459, 2147483648
        %v2177 = vxor.u32 %v1461, 2147483648
        %v2178 = vxor.u32 %v1465, 2147483648
        %v2179 = vxor.u32 %v1467, 2147483648
        %v2180 = vxor.u32 %v1469, 2147483648
        %v2181 = vxor.u32 %v1471, 2147483648
        %v2182 = vxor.u32 %v1475, 2147483648
        %v2183 = vxor.u32 %v1477, 2147483648
        %v2184 = vxor.u32 %v1479, 2147483648
        %v2185 = vxor.u32 %v1481, 2147483648
        %v2186 = vxor.u32 %v1485, 2147483648
        %v2187 = vxor.u32 %v1487, 2147483648
        %v2188 = vxor.u32 %v1489, 2147483648
        %v2189 = vxor.u32 %v1491, 2147483648
        %v2190 = vxor.u32 %v1495, 2147483648
        %v2191 = vxor.u32 %v1497, 2147483648
        %v2192 = vxor.u32 %v1499, 2147483648
        %v2193 = vxor.u32 %v1501, 2147483648
        %v2194 = vxor.u32 %v1505, 2147483648
        %v2195 = vxor.u32 %v1507, 2147483648
        %v2196 = vxor.u32 %v1509, 2147483648
        %v2197 = vxor.u32 %v1511, 2147483648
        %v2198 = vxor.u32 %v1515, 2147483648
        %v2199 = vxor.u32 %v1517, 2147483648
        %v2200 = vxor.u32 %v1519, 2147483648
        %v2201 = vxor.u32 %v1521, 2147483648
        %v2202 = vxor.u32 %v1525, 2147483648
        %v2203 = vxor.u32 %v1527, 2147483648
        %v2204 = vxor.u32 %v1529, 2147483648
        %v2205 = vxor.u32 %v1531, 2147483648
        %v2206 = vmul.f32 %v2078, 1.442695
        %v2207 = vpow.pop %v2206
        %v2208 = vmul.f32 %v2079, 1.442695
        %v2209 = vpow.pop %v2208
        %v2210 = vmul.f32 %v2080, 1.442695
        %v2211 = vpow.pop %v2210
        %v2212 = vmul.f32 %v2081, 1.442695
        %v2213 = vpow.pop %v2212
        %v2214 = vmul.f32 %v2082, 1.442695
        %v2215 = vpow.pop %v2214
        %v2216 = vmul.f32 %v2083, 1.442695
        %v2217 = vpow.pop %v2216
        %v2218 = vmul.f32 %v2084, 1.442695
        %v2219 = vpow.pop %v2218
        %v2220 = vmul.f32 %v2085, 1.442695
        %v2221 = vpow.pop %v2220
        %v2222 = vmul.f32 %v2086, 1.442695
        %v2223 = vpow.pop %v2222
        %v2224 = vmul.f32 %v2087, 1.442695
        %v2225 = vpow.pop %v2224
        %v2226 = vmul.f32 %v2088, 1.442695
        %v2227 = vpow.pop %v2226
        %v2228 = vmul.f32 %v2089, 1.442695
        %v2229 = vpow.pop %v2228
        %v2230 = vmul.f32 %v2090, 1.442695
        %v2231 = vpow.pop %v2230
        %v2232 = vmul.f32 %v2091, 1.442695
        %v2233 = vpow.pop %v2232
        %v2234 = vmul.f32 %v2092, 1.442695
        %v2235 = vpow.pop %v2234
        %v2236 = vmul.f32 %v2093, 1.442695
        %v2237 = vpow.pop %v2236
        %v2238 = vmul.f32 %v2094, 1.442695
        %v2239 = vpow.pop %v2238
        %v2240 = vmul.f32 %v2095, 1.442695
        %v2241 = vpow.pop %v2240
        %v2242 = vmul.f32 %v2096, 1.442695
        %v2243 = vpow.pop %v2242
        %v2244 = vmul.f32 %v2097, 1.442695
        %v2245 = vpow.pop %v2244
        %v2246 = vmul.f32 %v2098, 1.442695
        %v2247 = vpow.pop %v2246
        %v2248 = vmul.f32 %v2099, 1.442695
        %v2249 = vpow.pop %v2248
        %v2250 = vmul.f32 %v2100, 1.442695
        %v2251 = vpow.pop %v2250
        %v2252 = vmul.f32 %v2101, 1.442695
        %v2253 = vpow.pop %v2252
        %v2254 = vmul.f32 %v2102, 1.442695
        %v2255 = vpow.pop %v2254
        %v2256 = vmul.f32 %v2103, 1.442695
        %v2257 = vpow.pop %v2256
        %v2258 = vmul.f32 %v2104, 1.442695
        %v2259 = vpow.pop %v2258
        %v2260 = vmul.f32 %v2105, 1.442695
        %v2261 = vpow.pop %v2260
        %v2262 = vmul.f32 %v2106, 1.442695
        %v2263 = vpow.pop %v2262
        %v2264 = vmul.f32 %v2107, 1.442695
        %v2265 = vpow.pop %v2264
        %v2266 = vmul.f32 %v2108, 1.442695
        %v2267 = vpow.pop %v2266
        %v2268 = vmul.f32 %v2109, 1.442695
        %v2269 = vpow.pop %v2268
        %v2270 = vmul.f32 %v2110, 1.442695
        %v2271 = vpow.pop %v2270
        %v2272 = vmul.f32 %v2111, 1.442695
        %v2273 = vpow.pop %v2272
        %v2274 = vmul.f32 %v2112, 1.442695
        %v2275 = vpow.pop %v2274
        %v2276 = vmul.f32 %v2113, 1.442695
        %v2277 = vpow.pop %v2276
        %v2278 = vmul.f32 %v2114, 1.442695
        %v2279 = vpow.pop %v2278
        %v2280 = vmul.f32 %v2115, 1.442695
        %v2281 = vpow.pop %v2280
        %v2282 = vmul.f32 %v2116, 1.442695
        %v2283 = vpow.pop %v2282
        %v2284 = vmul.f32 %v2117, 1.442695
        %v2285 = vpow.pop %v2284
        %v2286 = vmul.f32 %v2118, 1.442695
        %v2287 = vpow.pop %v2286
        %v2288 = vmul.f32 %v2119, 1.442695
        %v2289 = vpow.pop %v2288
        %v2290 = vmul.f32 %v2120, 1.442695
        %v2291 = vpow.pop %v2290
        %v2292 = vmul.f32 %v2121, 1.442695
        %v2293 = vpow.pop %v2292
        %v2294 = vmul.f32 %v2122, 1.442695
        %v2295 = vpow.pop %v2294
        %v2296 = vmul.f32 %v2123, 1.442695
        %v2297 = vpow.pop %v2296
        %v2298 = vmul.f32 %v2124, 1.442695
        %v2299 = vpow.pop %v2298
        %v2300 = vmul.f32 %v2125, 1.442695
        %v2301 = vpow.pop %v2300
        %v2302 = vmul.f32 %v2126, 1.442695
        %v2303 = vpow.pop %v2302
        %v2304 = vmul.f32 %v2127, 1.442695
        %v2305 = vpow.pop %v2304
        %v2306 = vmul.f32 %v2128, 1.442695
        %v2307 = vpow.pop %v2306
        %v2308 = vmul.f32 %v2129, 1.442695
        %v2309 = vpow.pop %v2308
        %v2310 = vmul.f32 %v2130, 1.442695
        %v2311 = vpow.pop %v2310
        %v2312 = vmul.f32 %v2131, 1.442695
        %v2313 = vpow.pop %v2312
        %v2314 = vmul.f32 %v2132, 1.442695
        %v2315 = vpow.pop %v2314
        %v2316 = vmul.f32 %v2133, 1.442695
        %v2317 = vpow.pop %v2316
        %v2318 = vmul.f32 %v2134, 1.442695
        %v2319 = vpow.pop %v2318
        %v2320 = vmul.f32 %v2135, 1.442695
        %v2321 = vpow.pop %v2320
        %v2322 = vmul.f32 %v2136, 1.442695
        %v2323 = vpow.pop %v2322
        %v2324 = vmul.f32 %v2137, 1.442695
        %v2325 = vpow.pop %v2324
        %v2326 = vmul.f32 %v2138, 1.442695
        %v2327 = vpow.pop %v2326
        %v2328 = vmul.f32 %v2139, 1.442695
        %v2329 = vpow.pop %v2328
        %v2330 = vmul.f32 %v2140, 1.442695
        %v2331 = vpow.pop %v2330
        %v2332 = vmul.f32 %v2141, 1.442695
        %v2333 = vpow.pop %v2332
        %v2334 = vmul.f32 %v2142, 1.442695
        %v2335 = vpow.pop %v2334
        %v2336 = vmul.f32 %v2143, 1.442695
        %v2337 = vpow.pop %v2336
        %v2338 = vmul.f32 %v2144, 1.442695
        %v2339 = vpow.pop %v2338
        %v2340 = vmul.f32 %v2145, 1.442695
        %v2341 = vpow.pop %v2340
        %v2342 = vmul.f32 %v2146, 1.442695
        %v2343 = vpow.pop %v2342
        %v2344 = vmul.f32 %v2147, 1.442695
        %v2345 = vpow.pop %v2344
        %v2346 = vmul.f32 %v2148, 1.442695
        %v2347 = vpow.pop %v2346
        %v2348 = vmul.f32 %v2149, 1.442695
        %v2349 = vpow.pop %v2348
        %v2350 = vmul.f32 %v2150, 1.442695
        %v2351 = vpow.pop %v2350
        %v2352 = vmul.f32 %v2151, 1.442695
        %v2353 = vpow.pop %v2352
        %v2354 = vmul.f32 %v2152, 1.442695
        %v2355 = vpow.pop %v2354
        %v2356 = vmul.f32 %v2153, 1.442695
        %v2357 = vpow.pop %v2356
        %v2358 = vmul.f32 %v2154, 1.442695
        %v2359 = vpow.pop %v2358
        %v2360 = vmul.f32 %v2155, 1.442695
        %v2361 = vpow.pop %v2360
        %v2362 = vmul.f32 %v2156, 1.442695
        %v2363 = vpow.pop %v2362
        %v2364 = vmul.f32 %v2157, 1.442695
        %v2365 = vpow.pop %v2364
        %v2366 = vmul.f32 %v2158, 1.442695
        %v2367 = vpow.pop %v2366
        %v2368 = vmul.f32 %v2159, 1.442695
        %v2369 = vpow.pop %v2368
        %v2370 = vmul.f32 %v2160, 1.442695
        %v2371 = vpow.pop %v2370
        %v2372 = vmul.f32 %v2161, 1.442695
        %v2373 = vpow.pop %v2372
        %v2374 = vmul.f32 %v2162, 1.442695
        %v2375 = vpow.pop %v2374
        %v2376 = vmul.f32 %v2163, 1.442695
        %v2377 = vpow.pop %v2376
        %v2378 = vmul.f32 %v2164, 1.442695
        %v2379 = vpow.pop %v2378
        %v2380 = vmul.f32 %v2165, 1.442695
        %v2381 = vpow.pop %v2380
        %v2382 = vmul.f32 %v2166, 1.442695
        %v2383 = vpow.pop %v2382
        %v2384 = vmul.f32 %v2167, 1.442695
        %v2385 = vpow.pop %v2384
        %v2386 = vmul.f32 %v2168, 1.442695
        %v2387 = vpow.pop %v2386
        %v2388 = vmul.f32 %v2169, 1.442695
        %v2389 = vpow.pop %v2388
        %v2390 = vmul.f32 %v2170, 1.442695
        %v2391 = vpow.pop %v2390
        %v2392 = vmul.f32 %v2171, 1.442695
        %v2393 = vpow.pop %v2392
        %v2394 = vmul.f32 %v2172, 1.442695
        %v2395 = vpow.pop %v2394
        %v2396 = vmul.f32 %v2173, 1.442695
        %v2397 = vpow.pop %v2396
        %v2398 = vmul.f32 %v2174, 1.442695
        %v2399 = vpow.pop %v2398
        %v2400 = vmul.f32 %v2175, 1.442695
        %v2401 = vpow.pop %v2400
        %v2402 = vmul.f32 %v2176, 1.442695
        %v2403 = vpow.pop %v2402
        %v2404 = vmul.f32 %v2177, 1.442695
        %v2405 = vpow.pop %v2404
        %v2406 = vmul.f32 %v2178, 1.442695
        %v2407 = vpow.pop %v2406
        %v2408 = vmul.f32 %v2179, 1.442695
        %v2409 = vpow.pop %v2408
        %v2410 = vmul.f32 %v2180, 1.442695
        %v2411 = vpow.pop %v2410
        %v2412 = vmul.f32 %v2181, 1.442695
        %v2413 = vpow.pop %v2412
        %v2414 = vmul.f32 %v2182, 1.442695
        %v2415 = vpow.pop %v2414
        %v2416 = vmul.f32 %v2183, 1.442695
        %v2417 = vpow.pop %v2416
        %v2418 = vmul.f32 %v2184, 1.442695
        %v2419 = vpow.pop %v2418
        %v2420 = vmul.f32 %v2185, 1.442695
        %v2421 = vpow.pop %v2420
        %v2422 = vmul.f32 %v2186, 1.442695
        %v2423 = vpow.pop %v2422
        %v2424 = vmul.f32 %v2187, 1.442695
        %v2425 = vpow.pop %v2424
        %v2426 = vmul.f32 %v2188, 1.442695
        %v2427 = vpow.pop %v2426
        %v2428 = vmul.f32 %v2189, 1.442695
        %v2429 = vpow.pop %v2428
        %v2430 = vmul.f32 %v2190, 1.442695
        %v2431 = vpow.pop %v2430
        %v2432 = vmul.f32 %v2191, 1.442695
        %v2433 = vpow.pop %v2432
        %v2434 = vmul.f32 %v2192, 1.442695
        %v2435 = vpow.pop %v2434
        %v2436 = vmul.f32 %v2193, 1.442695
        %v2437 = vpow.pop %v2436
        %v2438 = vmul.f32 %v2194, 1.442695
        %v2439 = vpow.pop %v2438
        %v2440 = vmul.f32 %v2195, 1.442695
        %v2441 = vpow.pop %v2440
        %v2442 = vmul.f32 %v2196, 1.442695
        %v2443 = vpow.pop %v2442
        %v2444 = vmul.f32 %v2197, 1.442695
        %v2445 = vpow.pop %v2444
        %v2446 = vmul.f32 %v2198, 1.442695
        %v2447 = vpow.pop %v2446
        %v2448 = vmul.f32 %v2199, 1.442695
        %v2449 = vpow.pop %v2448
        %v2450 = vmul.f32 %v2200, 1.442695
        %v2451 = vpow.pop %v2450
        %v2452 = vmul.f32 %v2201, 1.442695
        %v2453 = vpow.pop %v2452
        %v2454 = vmul.f32 %v2202, 1.442695
        %v2455 = vpow.pop %v2454
        %v2456 = vmul.f32 %v2203, 1.442695
        %v2457 = vpow.pop %v2456
        %v2458 = vmul.f32 %v2204, 1.442695
        %v2459 = vpow.pop %v2458
        %v2460 = vmul.f32 %v2205, 1.442695
        %v2461 = vpow.pop %v2460
        %v2462 = vadd.f32 %v2207, 1.0
        %v2463 = vadd.f32 %v2209, 1.0
        %v2464 = vadd.f32 %v2211, 1.0
        %v2465 = vadd.f32 %v2213, 1.0
        %v2466 = vadd.f32 %v2215, 1.0
        %v2467 = vadd.f32 %v2217, 1.0
        %v2468 = vadd.f32 %v2219, 1.0
        %v2469 = vadd.f32 %v2221, 1.0
        %v2470 = vadd.f32 %v2223, 1.0
        %v2471 = vadd.f32 %v2225, 1.0
        %v2472 = vadd.f32 %v2227, 1.0
        %v2473 = vadd.f32 %v2229, 1.0
        %v2474 = vadd.f32 %v2231, 1.0
        %v2475 = vadd.f32 %v2233, 1.0
        %v2476 = vadd.f32 %v2235, 1.0
        %v2477 = vadd.f32 %v2237, 1.0
        %v2478 = vadd.f32 %v2239, 1.0
        %v2479 = vadd.f32 %v2241, 1.0
        %v2480 = vadd.f32 %v2243, 1.0
        %v2481 = vadd.f32 %v2245, 1.0
        %v2482 = vadd.f32 %v2247, 1.0
        %v2483 = vadd.f32 %v2249, 1.0
        %v2484 = vadd.f32 %v2251, 1.0
        %v2485 = vadd.f32 %v2253, 1.0
        %v2486 = vadd.f32 %v2255, 1.0
        %v2487 = vadd.f32 %v2257, 1.0
        %v2488 = vadd.f32 %v2259, 1.0
        %v2489 = vadd.f32 %v2261, 1.0
        %v2490 = vadd.f32 %v2263, 1.0
        %v2491 = vadd.f32 %v2265, 1.0
        %v2492 = vadd.f32 %v2267, 1.0
        %v2493 = vadd.f32 %v2269, 1.0
        %v2494 = vadd.f32 %v2271, 1.0
        %v2495 = vadd.f32 %v2273, 1.0
        %v2496 = vadd.f32 %v2275, 1.0
        %v2497 = vadd.f32 %v2277, 1.0
        %v2498 = vadd.f32 %v2279, 1.0
        %v2499 = vadd.f32 %v2281, 1.0
        %v2500 = vadd.f32 %v2283, 1.0
        %v2501 = vadd.f32 %v2285, 1.0
        %v2502 = vadd.f32 %v2287, 1.0
        %v2503 = vadd.f32 %v2289, 1.0
        %v2504 = vadd.f32 %v2291, 1.0
        %v2505 = vadd.f32 %v2293, 1.0
        %v2506 = vadd.f32 %v2295, 1.0
        %v2507 = vadd.f32 %v2297, 1.0
        %v2508 = vadd.f32 %v2299, 1.0
        %v2509 = vadd.f32 %v2301, 1.0
        %v2510 = vadd.f32 %v2303, 1.0
        %v2511 = vadd.f32 %v2305, 1.0
        %v2512 = vadd.f32 %v2307, 1.0
        %v2513 = vadd.f32 %v2309, 1.0
        %v2514 = vadd.f32 %v2311, 1.0
        %v2515 = vadd.f32 %v2313, 1.0
        %v2516 = vadd.f32 %v2315, 1.0
        %v2517 = vadd.f32 %v2317, 1.0
        %v2518 = vadd.f32 %v2319, 1.0
        %v2519 = vadd.f32 %v2321, 1.0
        %v2520 = vadd.f32 %v2323, 1.0
        %v2521 = vadd.f32 %v2325, 1.0
        %v2522 = vadd.f32 %v2327, 1.0
        %v2523 = vadd.f32 %v2329, 1.0
        %v2524 = vadd.f32 %v2331, 1.0
        %v2525 = vadd.f32 %v2333, 1.0
        %v2526 = vadd.f32 %v2335, 1.0
        %v2527 = vadd.f32 %v2337, 1.0
        %v2528 = vadd.f32 %v2339, 1.0
        %v2529 = vadd.f32 %v2341, 1.0
        %v2530 = vadd.f32 %v2343, 1.0
        %v2531 = vadd.f32 %v2345, 1.0
        %v2532 = vadd.f32 %v2347, 1.0
        %v2533 = vadd.f32 %v2349, 1.0
        %v2534 = vadd.f32 %v2351, 1.0
        %v2535 = vadd.f32 %v2353, 1.0
        %v2536 = vadd.f32 %v2355, 1.0
        %v2537 = vadd.f32 %v2357, 1.0
        %v2538 = vadd.f32 %v2359, 1.0
        %v2539 = vadd.f32 %v2361, 1.0
        %v2540 = vadd.f32 %v2363, 1.0
        %v2541 = vadd.f32 %v2365, 1.0
        %v2542 = vadd.f32 %v2367, 1.0
        %v2543 = vadd.f32 %v2369, 1.0
        %v2544 = vadd.f32 %v2371, 1.0
        %v2545 = vadd.f32 %v2373, 1.0
        %v2546 = vadd.f32 %v2375, 1.0
        %v2547 = vadd.f32 %v2377, 1.0
        %v2548 = vadd.f32 %v2379, 1.0
        %v2549 = vadd.f32 %v2381, 1.0
        %v2550 = vadd.f32 %v2383, 1.0
        %v2551 = vadd.f32 %v2385, 1.0
        %v2552 = vadd.f32 %v2387, 1.0
        %v2553 = vadd.f32 %v2389, 1.0
        %v2554 = vadd.f32 %v2391, 1.0
        %v2555 = vadd.f32 %v2393, 1.0
        %v2556 = vadd.f32 %v2395, 1.0
        %v2557 = vadd.f32 %v2397, 1.0
        %v2558 = vadd.f32 %v2399, 1.0
        %v2559 = vadd.f32 %v2401, 1.0
        %v2560 = vadd.f32 %v2403, 1.0
        %v2561 = vadd.f32 %v2405, 1.0
        %v2562 = vadd.f32 %v2407, 1.0
        %v2563 = vadd.f32 %v2409, 1.0
        %v2564 = vadd.f32 %v2411, 1.0
        %v2565 = vadd.f32 %v2413, 1.0
        %v2566 = vadd.f32 %v2415, 1.0
        %v2567 = vadd.f32 %v2417, 1.0
        %v2568 = vadd.f32 %v2419, 1.0
        %v2569 = vadd.f32 %v2421, 1.0
        %v2570 = vadd.f32 %v2423, 1.0
        %v2571 = vadd.f32 %v2425, 1.0
        %v2572 = vadd.f32 %v2427, 1.0
        %v2573 = vadd.f32 %v2429, 1.0
        %v2574 = vadd.f32 %v2431, 1.0
        %v2575 = vadd.f32 %v2433, 1.0
        %v2576 = vadd.f32 %v2435, 1.0
        %v2577 = vadd.f32 %v2437, 1.0
        %v2578 = vadd.f32 %v2439, 1.0
        %v2579 = vadd.f32 %v2441, 1.0
        %v2580 = vadd.f32 %v2443, 1.0
        %v2581 = vadd.f32 %v2445, 1.0
        %v2582 = vadd.f32 %v2447, 1.0
        %v2583 = vadd.f32 %v2449, 1.0
        %v2584 = vadd.f32 %v2451, 1.0
        %v2585 = vadd.f32 %v2453, 1.0
        %v2586 = vadd.f32 %v2455, 1.0
        %v2587 = vadd.f32 %v2457, 1.0
        %v2588 = vadd.f32 %v2459, 1.0
        %v2589 = vadd.f32 %v2461, 1.0
        %v2590 = vrcp.pop %v2462
        %v2591 = vmul.f32 1.0, %v2590
        %v2592 = vrcp.pop %v2463
        %v2593 = vmul.f32 1.0, %v2592
        %v2594 = vrcp.pop %v2464
        %v2595 = vmul.f32 1.0, %v2594
        %v2596 = vrcp.pop %v2465
        %v2597 = vmul.f32 1.0, %v2596
        %v2598 = vrcp.pop %v2466
        %v2599 = vmul.f32 1.0, %v2598
        %v2600 = vrcp.pop %v2467
        %v2601 = vmul.f32 1.0, %v2600
        %v2602 = vrcp.pop %v2468
        %v2603 = vmul.f32 1.0, %v2602
        %v2604 = vrcp.pop %v2469
        %v2605 = vmul.f32 1.0, %v2604
        %v2606 = vrcp.pop %v2470
        %v2607 = vmul.f32 1.0, %v2606
        %v2608 = vrcp.pop %v2471
        %v2609 = vmul.f32 1.0, %v2608
        %v2610 = vrcp.pop %v2472
        %v2611 = vmul.f32 1.0, %v2610
        %v2612 = vrcp.pop %v2473
        %v2613 = vmul.f32 1.0, %v2612
        %v2614 = vrcp.pop %v2474
        %v2615 = vmul.f32 1.0, %v2614
        %v2616 = vrcp.pop %v2475
        %v2617 = vmul.f32 1.0, %v2616
        %v2618 = vrcp.pop %v2476
        %v2619 = vmul.f32 1.0, %v2618
        %v2620 = vrcp.pop %v2477
        %v2621 = vmul.f32 1.0, %v2620
        %v2622 = vrcp.pop %v2478
        %v2623 = vmul.f32 1.0, %v2622
        %v2624 = vrcp.pop %v2479
        %v2625 = vmul.f32 1.0, %v2624
        %v2626 = vrcp.pop %v2480
        %v2627 = vmul.f32 1.0, %v2626
        %v2628 = vrcp.pop %v2481
        %v2629 = vmul.f32 1.0, %v2628
        %v2630 = vrcp.pop %v2482
        %v2631 = vmul.f32 1.0, %v2630
        %v2632 = vrcp.pop %v2483
        %v2633 = vmul.f32 1.0, %v2632
        %v2634 = vrcp.pop %v2484
        %v2635 = vmul.f32 1.0, %v2634
        %v2636 = vrcp.pop %v2485
        %v2637 = vmul.f32 1.0, %v2636
        %v2638 = vrcp.pop %v2486
        %v2639 = vmul.f32 1.0, %v2638
        %v2640 = vrcp.pop %v2487
        %v2641 = vmul.f32 1.0, %v2640
        %v2642 = vrcp.pop %v2488
        %v2643 = vmul.f32 1.0, %v2642
        %v2644 = vrcp.pop %v2489
        %v2645 = vmul.f32 1.0, %v2644
        %v2646 = vrcp.pop %v2490
        %v2647 = vmul.f32 1.0, %v2646
        %v2648 = vrcp.pop %v2491
        %v2649 = vmul.f32 1.0, %v2648
        %v2650 = vrcp.pop %v2492
        %v2651 = vmul.f32 1.0, %v2650
        %v2652 = vrcp.pop %v2493
        %v2653 = vmul.f32 1.0, %v2652
        %v2654 = vrcp.pop %v2494
        %v2655 = vmul.f32 1.0, %v2654
        %v2656 = vrcp.pop %v2495
        %v2657 = vmul.f32 1.0, %v2656
        %v2658 = vrcp.pop %v2496
        %v2659 = vmul.f32 1.0, %v2658
        %v2660 = vrcp.pop %v2497
        %v2661 = vmul.f32 1.0, %v2660
        %v2662 = vrcp.pop %v2498
        %v2663 = vmul.f32 1.0, %v2662
        %v2664 = vrcp.pop %v2499
        %v2665 = vmul.f32 1.0, %v2664
        %v2666 = vrcp.pop %v2500
        %v2667 = vmul.f32 1.0, %v2666
        %v2668 = vrcp.pop %v2501
        %v2669 = vmul.f32 1.0, %v2668
        %v2670 = vrcp.pop %v2502
        %v2671 = vmul.f32 1.0, %v2670
        %v2672 = vrcp.pop %v2503
        %v2673 = vmul.f32 1.0, %v2672
        %v2674 = vrcp.pop %v2504
        %v2675 = vmul.f32 1.0, %v2674
        %v2676 = vrcp.pop %v2505
        %v2677 = vmul.f32 1.0, %v2676
        %v2678 = vrcp.pop %v2506
        %v2679 = vmul.f32 1.0, %v2678
        %v2680 = vrcp.pop %v2507
        %v2681 = vmul.f32 1.0, %v2680
        %v2682 = vrcp.pop %v2508
        %v2683 = vmul.f32 1.0, %v2682
        %v2684 = vrcp.pop %v2509
        %v2685 = vmul.f32 1.0, %v2684
        %v2686 = vrcp.pop %v2510
        %v2687 = vmul.f32 1.0, %v2686
        %v2688 = vrcp.pop %v2511
        %v2689 = vmul.f32 1.0, %v2688
        %v2690 = vrcp.pop %v2512
        %v2691 = vmul.f32 1.0, %v2690
        %v2692 = vrcp.pop %v2513
        %v2693 = vmul.f32 1.0, %v2692
        %v2694 = vrcp.pop %v2514
        %v2695 = vmul.f32 1.0, %v2694
        %v2696 = vrcp.pop %v2515
        %v2697 = vmul.f32 1.0, %v2696
        %v2698 = vrcp.pop %v2516
        %v2699 = vmul.f32 1.0, %v2698
        %v2700 = vrcp.pop %v2517
        %v2701 = vmul.f32 1.0, %v2700
        %v2702 = vrcp.pop %v2518
        %v2703 = vmul.f32 1.0, %v2702
        %v2704 = vrcp.pop %v2519
        %v2705 = vmul.f32 1.0, %v2704
        %v2706 = vrcp.pop %v2520
        %v2707 = vmul.f32 1.0, %v2706
        %v2708 = vrcp.pop %v2521
        %v2709 = vmul.f32 1.0, %v2708
        %v2710 = vrcp.pop %v2522
        %v2711 = vmul.f32 1.0, %v2710
        %v2712 = vrcp.pop %v2523
        %v2713 = vmul.f32 1.0, %v2712
        %v2714 = vrcp.pop %v2524
        %v2715 = vmul.f32 1.0, %v2714
        %v2716 = vrcp.pop %v2525
        %v2717 = vmul.f32 1.0, %v2716
        %v2718 = vrcp.pop %v2526
        %v2719 = vmul.f32 1.0, %v2718
        %v2720 = vrcp.pop %v2527
        %v2721 = vmul.f32 1.0, %v2720
        %v2722 = vrcp.pop %v2528
        %v2723 = vmul.f32 1.0, %v2722
        %v2724 = vrcp.pop %v2529
        %v2725 = vmul.f32 1.0, %v2724
        %v2726 = vrcp.pop %v2530
        %v2727 = vmul.f32 1.0, %v2726
        %v2728 = vrcp.pop %v2531
        %v2729 = vmul.f32 1.0, %v2728
        %v2730 = vrcp.pop %v2532
        %v2731 = vmul.f32 1.0, %v2730
        %v2732 = vrcp.pop %v2533
        %v2733 = vmul.f32 1.0, %v2732
        %v2734 = vrcp.pop %v2534
        %v2735 = vmul.f32 1.0, %v2734
        %v2736 = vrcp.pop %v2535
        %v2737 = vmul.f32 1.0, %v2736
        %v2738 = vrcp.pop %v2536
        %v2739 = vmul.f32 1.0, %v2738
        %v2740 = vrcp.pop %v2537
        %v2741 = vmul.f32 1.0, %v2740
        %v2742 = vrcp.pop %v2538
        %v2743 = vmul.f32 1.0, %v2742
        %v2744 = vrcp.pop %v2539
        %v2745 = vmul.f32 1.0, %v2744
        %v2746 = vrcp.pop %v2540
        %v2747 = vmul.f32 1.0, %v2746
        %v2748 = vrcp.pop %v2541
        %v2749 = vmul.f32 1.0, %v2748
        %v2750 = vrcp.pop %v2542
        %v2751 = vmul.f32 1.0, %v2750
        %v2752 = vrcp.pop %v2543
        %v2753 = vmul.f32 1.0, %v2752
        %v2754 = vrcp.pop %v2544
        %v2755 = vmul.f32 1.0, %v2754
        %v2756 = vrcp.pop %v2545
        %v2757 = vmul.f32 1.0, %v2756
        %v2758 = vrcp.pop %v2546
        %v2759 = vmul.f32 1.0, %v2758
        %v2760 = vrcp.pop %v2547
        %v2761 = vmul.f32 1.0, %v2760
        %v2762 = vrcp.pop %v2548
        %v2763 = vmul.f32 1.0, %v2762
        %v2764 = vrcp.pop %v2549
        %v2765 = vmul.f32 1.0, %v2764
        %v2766 = vrcp.pop %v2550
        %v2767 = vmul.f32 1.0, %v2766
        %v2768 = vrcp.pop %v2551
        %v2769 = vmul.f32 1.0, %v2768
        %v2770 = vrcp.pop %v2552
        %v2771 = vmul.f32 1.0, %v2770
        %v2772 = vrcp.pop %v2553
        %v2773 = vmul.f32 1.0, %v2772
        %v2774 = vrcp.pop %v2554
        %v2775 = vmul.f32 1.0, %v2774
        %v2776 = vrcp.pop %v2555
        %v2777 = vmul.f32 1.0, %v2776
        %v2778 = vrcp.pop %v2556
        %v2779 = vmul.f32 1.0, %v2778
        %v2780 = vrcp.pop %v2557
        %v2781 = vmul.f32 1.0, %v2780
        %v2782 = vrcp.pop %v2558
        %v2783 = vmul.f32 1.0, %v2782
        %v2784 = vrcp.pop %v2559
        %v2785 = vmul.f32 1.0, %v2784
        %v2786 = vrcp.pop %v2560
        %v2787 = vmul.f32 1.0, %v2786
        %v2788 = vrcp.pop %v2561
        %v2789 = vmul.f32 1.0, %v2788
        %v2790 = vrcp.pop %v2562
        %v2791 = vmul.f32 1.0, %v2790
        %v2792 = vrcp.pop %v2563
        %v2793 = vmul.f32 1.0, %v2792
        %v2794 = vrcp.pop %v2564
        %v2795 = vmul.f32 1.0, %v2794
        %v2796 = vrcp.pop %v2565
        %v2797 = vmul.f32 1.0, %v2796
        %v2798 = vrcp.pop %v2566
        %v2799 = vmul.f32 1.0, %v2798
        %v2800 = vrcp.pop %v2567
        %v2801 = vmul.f32 1.0, %v2800
        %v2802 = vrcp.pop %v2568
        %v2803 = vmul.f32 1.0, %v2802
        %v2804 = vrcp.pop %v2569
        %v2805 = vmul.f32 1.0, %v2804
        %v2806 = vrcp.pop %v2570
        %v2807 = vmul.f32 1.0, %v2806
        %v2808 = vrcp.pop %v2571
        %v2809 = vmul.f32 1.0, %v2808
        %v2810 = vrcp.pop %v2572
        %v2811 = vmul.f32 1.0, %v2810
        %v2812 = vrcp.pop %v2573
        %v2813 = vmul.f32 1.0, %v2812
        %v2814 = vrcp.pop %v2574
        %v2815 = vmul.f32 1.0, %v2814
        %v2816 = vrcp.pop %v2575
        %v2817 = vmul.f32 1.0, %v2816
        %v2818 = vrcp.pop %v2576
        %v2819 = vmul.f32 1.0, %v2818
        %v2820 = vrcp.pop %v2577
        %v2821 = vmul.f32 1.0, %v2820
        %v2822 = vrcp.pop %v2578
        %v2823 = vmul.f32 1.0, %v2822
        %v2824 = vrcp.pop %v2579
        %v2825 = vmul.f32 1.0, %v2824
        %v2826 = vrcp.pop %v2580
        %v2827 = vmul.f32 1.0, %v2826
        %v2828 = vrcp.pop %v2581
        %v2829 = vmul.f32 1.0, %v2828
        %v2830 = vrcp.pop %v2582
        %v2831 = vmul.f32 1.0, %v2830
        %v2832 = vrcp.pop %v2583
        %v2833 = vmul.f32 1.0, %v2832
        %v2834 = vrcp.pop %v2584
        %v2835 = vmul.f32 1.0, %v2834
        %v2836 = vrcp.pop %v2585
        %v2837 = vmul.f32 1.0, %v2836
        %v2838 = vrcp.pop %v2586
        %v2839 = vmul.f32 1.0, %v2838
        %v2840 = vrcp.pop %v2587
        %v2841 = vmul.f32 1.0, %v2840
        %v2842 = vrcp.pop %v2588
        %v2843 = vmul.f32 1.0, %v2842
        %v2844 = vrcp.pop %v2589
        %v2845 = vmul.f32 1.0, %v2844
        %v2846 = vmul.f32 %v1215, %v2591
        %v2847 = vmul.f32 %v1217, %v2593
        %v2848 = vmul.f32 %v1219, %v2595
        %v2849 = vmul.f32 %v1221, %v2597
        %v2850 = vmul.f32 %v1225, %v2599
        %v2851 = vmul.f32 %v1227, %v2601
        %v2852 = vmul.f32 %v1229, %v2603
        %v2853 = vmul.f32 %v1231, %v2605
        %v2854 = vmul.f32 %v1235, %v2607
        %v2855 = vmul.f32 %v1237, %v2609
        %v2856 = vmul.f32 %v1239, %v2611
        %v2857 = vmul.f32 %v1241, %v2613
        %v2858 = vmul.f32 %v1245, %v2615
        %v2859 = vmul.f32 %v1247, %v2617
        %v2860 = vmul.f32 %v1249, %v2619
        %v2861 = vmul.f32 %v1251, %v2621
        %v2862 = vmul.f32 %v1255, %v2623
        %v2863 = vmul.f32 %v1257, %v2625
        %v2864 = vmul.f32 %v1259, %v2627
        %v2865 = vmul.f32 %v1261, %v2629
        %v2866 = vmul.f32 %v1265, %v2631
        %v2867 = vmul.f32 %v1267, %v2633
        %v2868 = vmul.f32 %v1269, %v2635
        %v2869 = vmul.f32 %v1271, %v2637
        %v2870 = vmul.f32 %v1275, %v2639
        %v2871 = vmul.f32 %v1277, %v2641
        %v2872 = vmul.f32 %v1279, %v2643
        %v2873 = vmul.f32 %v1281, %v2645
        %v2874 = vmul.f32 %v1285, %v2647
        %v2875 = vmul.f32 %v1287, %v2649
        %v2876 = vmul.f32 %v1289, %v2651
        %v2877 = vmul.f32 %v1291, %v2653
        %v2878 = vmul.f32 %v1295, %v2655
        %v2879 = vmul.f32 %v1297, %v2657
        %v2880 = vmul.f32 %v1299, %v2659
        %v2881 = vmul.f32 %v1301, %v2661
        %v2882 = vmul.f32 %v1305, %v2663
        %v2883 = vmul.f32 %v1307, %v2665
        %v2884 = vmul.f32 %v1309, %v2667
        %v2885 = vmul.f32 %v1311, %v2669
        %v2886 = vmul.f32 %v1315, %v2671
        %v2887 = vmul.f32 %v1317, %v2673
        %v2888 = vmul.f32 %v1319, %v2675
        %v2889 = vmul.f32 %v1321, %v2677
        %v2890 = vmul.f32 %v1325, %v2679
        %v2891 = vmul.f32 %v1327, %v2681
        %v2892 = vmul.f32 %v1329, %v2683
        %v2893 = vmul.f32 %v1331, %v2685
        %v2894 = vmul.f32 %v1335, %v2687
        %v2895 = vmul.f32 %v1337, %v2689
        %v2896 = vmul.f32 %v1339, %v2691
        %v2897 = vmul.f32 %v1341, %v2693
        %v2898 = vmul.f32 %v1345, %v2695
        %v2899 = vmul.f32 %v1347, %v2697
        %v2900 = vmul.f32 %v1349, %v2699
        %v2901 = vmul.f32 %v1351, %v2701
        %v2902 = vmul.f32 %v1355, %v2703
        %v2903 = vmul.f32 %v1357, %v2705
        %v2904 = vmul.f32 %v1359, %v2707
        %v2905 = vmul.f32 %v1361, %v2709
        %v2906 = vmul.f32 %v1365, %v2711
        %v2907 = vmul.f32 %v1367, %v2713
        %v2908 = vmul.f32 %v1369, %v2715
        %v2909 = vmul.f32 %v1371, %v2717
        %v2910 = vmul.f32 %v1375, %v2719
        %v2911 = vmul.f32 %v1377, %v2721
        %v2912 = vmul.f32 %v1379, %v2723
        %v2913 = vmul.f32 %v1381, %v2725
        %v2914 = vmul.f32 %v1385, %v2727
        %v2915 = vmul.f32 %v1387, %v2729
        %v2916 = vmul.f32 %v1389, %v2731
        %v2917 = vmul.f32 %v1391, %v2733
        %v2918 = vmul.f32 %v1395, %v2735
        %v2919 = vmul.f32 %v1397, %v2737
        %v2920 = vmul.f32 %v1399, %v2739
        %v2921 = vmul.f32 %v1401, %v2741
        %v2922 = vmul.f32 %v1405, %v2743
        %v2923 = vmul.f32 %v1407, %v2745
        %v2924 = vmul.f32 %v1409, %v2747
        %v2925 = vmul.f32 %v1411, %v2749
        %v2926 = vmul.f32 %v1415, %v2751
        %v2927 = vmul.f32 %v1417, %v2753
        %v2928 = vmul.f32 %v1419, %v2755
        %v2929 = vmul.f32 %v1421, %v2757
        %v2930 = vmul.f32 %v1425, %v2759
        %v2931 = vmul.f32 %v1427, %v2761
        %v2932 = vmul.f32 %v1429, %v2763
        %v2933 = vmul.f32 %v1431, %v2765
        %v2934 = vmul.f32 %v1435, %v2767
        %v2935 = vmul.f32 %v1437, %v2769
        %v2936 = vmul.f32 %v1439, %v2771
        %v2937 = vmul.f32 %v1441, %v2773
        %v2938 = vmul.f32 %v1445, %v2775
        %v2939 = vmul.f32 %v1447, %v2777
        %v2940 = vmul.f32 %v1449, %v2779
        %v2941 = vmul.f32 %v1451, %v2781
        %v2942 = vmul.f32 %v1455, %v2783
        %v2943 = vmul.f32 %v1457, %v2785
        %v2944 = vmul.f32 %v1459, %v2787
        %v2945 = vmul.f32 %v1461, %v2789
        %v2946 = vmul.f32 %v1465, %v2791
        %v2947 = vmul.f32 %v1467, %v2793
        %v2948 = vmul.f32 %v1469, %v2795
        %v2949 = vmul.f32 %v1471, %v2797
        %v2950 = vmul.f32 %v1475, %v2799
        %v2951 = vmul.f32 %v1477, %v2801
        %v2952 = vmul.f32 %v1479, %v2803
        %v2953 = vmul.f32 %v1481, %v2805
        %v2954 = vmul.f32 %v1485, %v2807
        %v2955 = vmul.f32 %v1487, %v2809
        %v2956 = vmul.f32 %v1489, %v2811
        %v2957 = vmul.f32 %v1491, %v2813
        %v2958 = vmul.f32 %v1495, %v2815
        %v2959 = vmul.f32 %v1497, %v2817
        %v2960 = vmul.f32 %v1499, %v2819
        %v2961 = vmul.f32 %v1501, %v2821
        %v2962 = vmul.f32 %v1505, %v2823
        %v2963 = vmul.f32 %v1507, %v2825
        %v2964 = vmul.f32 %v1509, %v2827
        %v2965 = vmul.f32 %v1511, %v2829
        %v2966 = vmul.f32 %v1515, %v2831
        %v2967 = vmul.f32 %v1517, %v2833
        %v2968 = vmul.f32 %v1519, %v2835
        %v2969 = vmul.f32 %v1521, %v2837
        %v2970 = vmul.f32 %v1525, %v2839
        %v2971 = vmul.f32 %v1527, %v2841
        %v2972 = vmul.f32 %v1529, %v2843
        %v2973 = vmul.f32 %v1531, %v2845
        %v2974 = vmul.f32 %v2846, %v1760
        %v2975 = vmul.f32 %v2847, %v1762
        %v2976 = vmul.f32 %v2848, %v1764
        %v2977 = vmul.f32 %v2849, %v1766
        %v2978 = vmul.f32 %v2850, %v1770
        %v2979 = vmul.f32 %v2851, %v1772
        %v2980 = vmul.f32 %v2852, %v1774
        %v2981 = vmul.f32 %v2853, %v1776
        %v2982 = vmul.f32 %v2854, %v1780
        %v2983 = vmul.f32 %v2855, %v1782
        %v2984 = vmul.f32 %v2856, %v1784
        %v2985 = vmul.f32 %v2857, %v1786
        %v2986 = vmul.f32 %v2858, %v1790
        %v2987 = vmul.f32 %v2859, %v1792
        %v2988 = vmul.f32 %v2860, %v1794
        %v2989 = vmul.f32 %v2861, %v1796
        %v2990 = vmul.f32 %v2862, %v1800
        %v2991 = vmul.f32 %v2863, %v1802
        %v2992 = vmul.f32 %v2864, %v1804
        %v2993 = vmul.f32 %v2865, %v1806
        %v2994 = vmul.f32 %v2866, %v1810
        %v2995 = vmul.f32 %v2867, %v1812
        %v2996 = vmul.f32 %v2868, %v1814
        %v2997 = vmul.f32 %v2869, %v1816
        %v2998 = vmul.f32 %v2870, %v1820
        %v2999 = vmul.f32 %v2871, %v1822
        %v3000 = vmul.f32 %v2872, %v1824
        %v3001 = vmul.f32 %v2873, %v1826
        %v3002 = vmul.f32 %v2874, %v1830
        %v3003 = vmul.f32 %v2875, %v1832
        %v3004 = vmul.f32 %v2876, %v1834
        %v3005 = vmul.f32 %v2877, %v1836
        %v3006 = vmul.f32 %v2878, %v1840
        %v3007 = vmul.f32 %v2879, %v1842
        %v3008 = vmul.f32 %v2880, %v1844
        %v3009 = vmul.f32 %v2881, %v1846
        %v3010 = vmul.f32 %v2882, %v1850
        %v3011 = vmul.f32 %v2883, %v1852
        %v3012 = vmul.f32 %v2884, %v1854
        %v3013 = vmul.f32 %v2885, %v1856
        %v3014 = vmul.f32 %v2886, %v1860
        %v3015 = vmul.f32 %v2887, %v1862
        %v3016 = vmul.f32 %v2888, %v1864
        %v3017 = vmul.f32 %v2889, %v1866
        %v3018 = vmul.f32 %v2890, %v1870
        %v3019 = vmul.f32 %v2891, %v1872
        %v3020 = vmul.f32 %v2892, %v1874
        %v3021 = vmul.f32 %v2893, %v1876
        %v3022 = vmul.f32 %v2894, %v1880
        %v3023 = vmul.f32 %v2895, %v1882
        %v3024 = vmul.f32 %v2896, %v1884
        %v3025 = vmul.f32 %v2897, %v1886
        %v3026 = vmul.f32 %v2898, %v1890
        %v3027 = vmul.f32 %v2899, %v1892
        %v3028 = vmul.f32 %v2900, %v1894
        %v3029 = vmul.f32 %v2901, %v1896
        %v3030 = vmul.f32 %v2902, %v1900
        %v3031 = vmul.f32 %v2903, %v1902
        %v3032 = vmul.f32 %v2904, %v1904
        %v3033 = vmul.f32 %v2905, %v1906
        %v3034 = vmul.f32 %v2906, %v1910
        %v3035 = vmul.f32 %v2907, %v1912
        %v3036 = vmul.f32 %v2908, %v1914
        %v3037 = vmul.f32 %v2909, %v1916
        %v3038 = vmul.f32 %v2910, %v1920
        %v3039 = vmul.f32 %v2911, %v1922
        %v3040 = vmul.f32 %v2912, %v1924
        %v3041 = vmul.f32 %v2913, %v1926
        %v3042 = vmul.f32 %v2914, %v1930
        %v3043 = vmul.f32 %v2915, %v1932
        %v3044 = vmul.f32 %v2916, %v1934
        %v3045 = vmul.f32 %v2917, %v1936
        %v3046 = vmul.f32 %v2918, %v1940
        %v3047 = vmul.f32 %v2919, %v1942
        %v3048 = vmul.f32 %v2920, %v1944
        %v3049 = vmul.f32 %v2921, %v1946
        %v3050 = vmul.f32 %v2922, %v1950
        %v3051 = vmul.f32 %v2923, %v1952
        %v3052 = vmul.f32 %v2924, %v1954
        %v3053 = vmul.f32 %v2925, %v1956
        %v3054 = vmul.f32 %v2926, %v1960
        %v3055 = vmul.f32 %v2927, %v1962
        %v3056 = vmul.f32 %v2928, %v1964
        %v3057 = vmul.f32 %v2929, %v1966
        %v3058 = vmul.f32 %v2930, %v1970
        %v3059 = vmul.f32 %v2931, %v1972
        %v3060 = vmul.f32 %v2932, %v1974
        %v3061 = vmul.f32 %v2933, %v1976
        %v3062 = vmul.f32 %v2934, %v1980
        %v3063 = vmul.f32 %v2935, %v1982
        %v3064 = vmul.f32 %v2936, %v1984
        %v3065 = vmul.f32 %v2937, %v1986
        %v3066 = vmul.f32 %v2938, %v1990
        %v3067 = vmul.f32 %v2939, %v1992
        %v3068 = vmul.f32 %v2940, %v1994
        %v3069 = vmul.f32 %v2941, %v1996
        %v3070 = vmul.f32 %v2942, %v2000
        %v3071 = vmul.f32 %v2943, %v2002
        %v3072 = vmul.f32 %v2944, %v2004
        %v3073 = vmul.f32 %v2945, %v2006
        %v3074 = vmul.f32 %v2946, %v2010
        %v3075 = vmul.f32 %v2947, %v2012
        %v3076 = vmul.f32 %v2948, %v2014
        %v3077 = vmul.f32 %v2949, %v2016
        %v3078 = vmul.f32 %v2950, %v2020
        %v3079 = vmul.f32 %v2951, %v2022
        %v3080 = vmul.f32 %v2952, %v2024
        %v3081 = vmul.f32 %v2953, %v2026
        %v3082 = vmul.f32 %v2954, %v2030
        %v3083 = vmul.f32 %v2955, %v2032
        %v3084 = vmul.f32 %v2956, %v2034
        %v3085 = vmul.f32 %v2957, %v2036
        %v3086 = vmul.f32 %v2958, %v2040
        %v3087 = vmul.f32 %v2959, %v2042
        %v3088 = vmul.f32 %v2960, %v2044
        %v3089 = vmul.f32 %v2961, %v2046
        %v3090 = vmul.f32 %v2962, %v2050
        %v3091 = vmul.f32 %v2963, %v2052
        %v3092 = vmul.f32 %v2964, %v2054
        %v3093 = vmul.f32 %v2965, %v2056
        %v3094 = vmul.f32 %v2966, %v2060
        %v3095 = vmul.f32 %v2967, %v2062
        %v3096 = vmul.f32 %v2968, %v2064
        %v3097 = vmul.f32 %v2969, %v2066
        %v3098 = vmul.f32 %v2970, %v2070
        %v3099 = vmul.f32 %v2971, %v2072
        %v3100 = vmul.f32 %v2972, %v2074
        %v3101 = vmul.f32 %v2973, %v2076
        %v3102 = vmul.f32 %v2974, %v2974
        %v3103 = vmul.f32 %v2975, %v2975
        %v3104 = vmul.f32 %v2976, %v2976
        %v3105 = vmul.f32 %v2977, %v2977
        %v3106 = vmul.f32 %v2978, %v2978
        %v3107 = vmul.f32 %v2979, %v2979
        %v3108 = vmul.f32 %v2980, %v2980
        %v3109 = vmul.f32 %v2981, %v2981
        %v3110 = vmul.f32 %v2982, %v2982
        %v3111 = vmul.f32 %v2983, %v2983
        %v3112 = vmul.f32 %v2984, %v2984
        %v3113 = vmul.f32 %v2985, %v2985
        %v3114 = vmul.f32 %v2986, %v2986
        %v3115 = vmul.f32 %v2987, %v2987
        %v3116 = vmul.f32 %v2988, %v2988
        %v3117 = vmul.f32 %v2989, %v2989
        %v3118 = vmul.f32 %v2990, %v2990
        %v3119 = vmul.f32 %v2991, %v2991
        %v3120 = vmul.f32 %v2992, %v2992
        %v3121 = vmul.f32 %v2993, %v2993
        %v3122 = vmul.f32 %v2994, %v2994
        %v3123 = vmul.f32 %v2995, %v2995
        %v3124 = vmul.f32 %v2996, %v2996
        %v3125 = vmul.f32 %v2997, %v2997
        %v3126 = vmul.f32 %v2998, %v2998
        %v3127 = vmul.f32 %v2999, %v2999
        %v3128 = vmul.f32 %v3000, %v3000
        %v3129 = vmul.f32 %v3001, %v3001
        %v3130 = vmul.f32 %v3002, %v3002
        %v3131 = vmul.f32 %v3003, %v3003
        %v3132 = vmul.f32 %v3004, %v3004
        %v3133 = vmul.f32 %v3005, %v3005
        %v3134 = vmul.f32 %v3006, %v3006
        %v3135 = vmul.f32 %v3007, %v3007
        %v3136 = vmul.f32 %v3008, %v3008
        %v3137 = vmul.f32 %v3009, %v3009
        %v3138 = vmul.f32 %v3010, %v3010
        %v3139 = vmul.f32 %v3011, %v3011
        %v3140 = vmul.f32 %v3012, %v3012
        %v3141 = vmul.f32 %v3013, %v3013
        %v3142 = vmul.f32 %v3014, %v3014
        %v3143 = vmul.f32 %v3015, %v3015
        %v3144 = vmul.f32 %v3016, %v3016
        %v3145 = vmul.f32 %v3017, %v3017
        %v3146 = vmul.f32 %v3018, %v3018
        %v3147 = vmul.f32 %v3019, %v3019
        %v3148 = vmul.f32 %v3020, %v3020
        %v3149 = vmul.f32 %v3021, %v3021
        %v3150 = vmul.f32 %v3022, %v3022
        %v3151 = vmul.f32 %v3023, %v3023
        %v3152 = vmul.f32 %v3024, %v3024
        %v3153 = vmul.f32 %v3025, %v3025
        %v3154 = vmul.f32 %v3026, %v3026
        %v3155 = vmul.f32 %v3027, %v3027
        %v3156 = vmul.f32 %v3028, %v3028
        %v3157 = vmul.f32 %v3029, %v3029
        %v3158 = vmul.f32 %v3030, %v3030
        %v3159 = vmul.f32 %v3031, %v3031
        %v3160 = vmul.f32 %v3032, %v3032
        %v3161 = vmul.f32 %v3033, %v3033
        %v3162 = vmul.f32 %v3034, %v3034
        %v3163 = vmul.f32 %v3035, %v3035
        %v3164 = vmul.f32 %v3036, %v3036
        %v3165 = vmul.f32 %v3037, %v3037
        %v3166 = vmul.f32 %v3038, %v3038
        %v3167 = vmul.f32 %v3039, %v3039
        %v3168 = vmul.f32 %v3040, %v3040
        %v3169 = vmul.f32 %v3041, %v3041
        %v3170 = vmul.f32 %v3042, %v3042
        %v3171 = vmul.f32 %v3043, %v3043
        %v3172 = vmul.f32 %v3044, %v3044
        %v3173 = vmul.f32 %v3045, %v3045
        %v3174 = vmul.f32 %v3046, %v3046
        %v3175 = vmul.f32 %v3047, %v3047
        %v3176 = vmul.f32 %v3048, %v3048
        %v3177 = vmul.f32 %v3049, %v3049
        %v3178 = vmul.f32 %v3050, %v3050
        %v3179 = vmul.f32 %v3051, %v3051
        %v3180 = vmul.f32 %v3052, %v3052
        %v3181 = vmul.f32 %v3053, %v3053
        %v3182 = vmul.f32 %v3054, %v3054
        %v3183 = vmul.f32 %v3055, %v3055
        %v3184 = vmul.f32 %v3056, %v3056
        %v3185 = vmul.f32 %v3057, %v3057
        %v3186 = vmul.f32 %v3058, %v3058
        %v3187 = vmul.f32 %v3059, %v3059
        %v3188 = vmul.f32 %v3060, %v3060
        %v3189 = vmul.f32 %v3061, %v3061
        %v3190 = vmul.f32 %v3062, %v3062
        %v3191 = vmul.f32 %v3063, %v3063
        %v3192 = vmul.f32 %v3064, %v3064
        %v3193 = vmul.f32 %v3065, %v3065
        %v3194 = vmul.f32 %v3066, %v3066
        %v3195 = vmul.f32 %v3067, %v3067
        %v3196 = vmul.f32 %v3068, %v3068
        %v3197 = vmul.f32 %v3069, %v3069
        %v3198 = vmul.f32 %v3070, %v3070
        %v3199 = vmul.f32 %v3071, %v3071
        %v3200 = vmul.f32 %v3072, %v3072
        %v3201 = vmul.f32 %v3073, %v3073
        %v3202 = vmul.f32 %v3074, %v3074
        %v3203 = vmul.f32 %v3075, %v3075
        %v3204 = vmul.f32 %v3076, %v3076
        %v3205 = vmul.f32 %v3077, %v3077
        %v3206 = vmul.f32 %v3078, %v3078
        %v3207 = vmul.f32 %v3079, %v3079
        %v3208 = vmul.f32 %v3080, %v3080
        %v3209 = vmul.f32 %v3081, %v3081
        %v3210 = vmul.f32 %v3082, %v3082
        %v3211 = vmul.f32 %v3083, %v3083
        %v3212 = vmul.f32 %v3084, %v3084
        %v3213 = vmul.f32 %v3085, %v3085
        %v3214 = vmul.f32 %v3086, %v3086
        %v3215 = vmul.f32 %v3087, %v3087
        %v3216 = vmul.f32 %v3088, %v3088
        %v3217 = vmul.f32 %v3089, %v3089
        %v3218 = vmul.f32 %v3090, %v3090
        %v3219 = vmul.f32 %v3091, %v3091
        %v3220 = vmul.f32 %v3092, %v3092
        %v3221 = vmul.f32 %v3093, %v3093
        %v3222 = vmul.f32 %v3094, %v3094
        %v3223 = vmul.f32 %v3095, %v3095
        %v3224 = vmul.f32 %v3096, %v3096
        %v3225 = vmul.f32 %v3097, %v3097
        %v3226 = vmul.f32 %v3098, %v3098
        %v3227 = vmul.f32 %v3099, %v3099
        %v3228 = vmul.f32 %v3100, %v3100
        %v3229 = vmul.f32 %v3101, %v3101
        %v3230 = vld [vmem:[#allocation2] sm:$0xff]
        %v3231 = vld [vmem:[#allocation2 + $0x8] sm:$0xff]
        %v3232 = vld [vmem:[#allocation2 + $0x10] sm:$0xff]
        %v3233 = vld [vmem:[#allocation2 + $0x18] sm:$0xff]
        %v3234 = vld [vmem:[#allocation2 + $0x20] sm:$0xff]
        %v3235 = vld [vmem:[#allocation2 + $0x28] sm:$0xff]
        %v3236 = vld [vmem:[#allocation2 + $0x30] sm:$0xff]
        %v3237 = vld [vmem:[#allocation2 + $0x38] sm:$0xff]
        %v3238 = vld [vmem:[#allocation2 + $0x40] sm:$0xff]
        %v3239 = vld [vmem:[#allocation2 + $0x48] sm:$0xff]
        %v3240 = vld [vmem:[#allocation2 + $0x50] sm:$0xff]
        %v3241 = vld [vmem:[#allocation2 + $0x58] sm:$0xff]
        %v3242 = vld [vmem:[#allocation2 + $0x60] sm:$0xff]
        %v3243 = vld [vmem:[#allocation2 + $0x68] sm:$0xff]
        %v3244 = vld [vmem:[#allocation2 + $0x70] sm:$0xff]
        %v3245 = vld [vmem:[#allocation2 + $0x78] sm:$0xff]
        %v3246 = vld [vmem:[#allocation2 + $0x80] sm:$0xff]
        %v3247 = vld [vmem:[#allocation2 + $0x88] sm:$0xff]
        %v3248 = vld [vmem:[#allocation2 + $0x90] sm:$0xff]
        %v3249 = vld [vmem:[#allocation2 + $0x98] sm:$0xff]
        %v3250 = vld [vmem:[#allocation2 + $0xa0] sm:$0xff]
        %v3251 = vld [vmem:[#allocation2 + $0xa8] sm:$0xff]
        %v3252 = vld [vmem:[#allocation2 + $0xb0] sm:$0xff]
        %v3253 = vld [vmem:[#allocation2 + $0xb8] sm:$0xff]
        %v3254 = vld [vmem:[#allocation2 + $0xc0] sm:$0xff]
        %v3255 = vld [vmem:[#allocation2 + $0xc8] sm:$0xff]
        %v3256 = vld [vmem:[#allocation2 + $0xd0] sm:$0xff]
        %v3257 = vld [vmem:[#allocation2 + $0xd8] sm:$0xff]
        %v3258 = vld [vmem:[#allocation2 + $0xe0] sm:$0xff]
        %v3259 = vld [vmem:[#allocation2 + $0xe8] sm:$0xff]
        %v3260 = vld [vmem:[#allocation2 + $0xf0] sm:$0xff]
        %v3261 = vld [vmem:[#allocation2 + $0xf8] sm:$0xff]
        %v3262 = vld [vmem:[#allocation2 + $0x100] sm:$0xff]
        %v3263 = vld [vmem:[#allocation2 + $0x108] sm:$0xff]
        %v3264 = vld [vmem:[#allocation2 + $0x110] sm:$0xff]
        %v3265 = vld [vmem:[#allocation2 + $0x118] sm:$0xff]
        %v3266 = vld [vmem:[#allocation2 + $0x120] sm:$0xff]
        %v3267 = vld [vmem:[#allocation2 + $0x128] sm:$0xff]
        %v3268 = vld [vmem:[#allocation2 + $0x130] sm:$0xff]
        %v3269 = vld [vmem:[#allocation2 + $0x138] sm:$0xff]
        %v3270 = vld [vmem:[#allocation2 + $0x140] sm:$0xff]
        %v3271 = vld [vmem:[#allocation2 + $0x148] sm:$0xff]
        %v3272 = vld [vmem:[#allocation2 + $0x150] sm:$0xff]
        %v3273 = vld [vmem:[#allocation2 + $0x158] sm:$0xff]
        %v3274 = vld [vmem:[#allocation2 + $0x160] sm:$0xff]
        %v3275 = vld [vmem:[#allocation2 + $0x168] sm:$0xff]
        %v3276 = vld [vmem:[#allocation2 + $0x170] sm:$0xff]
        %v3277 = vld [vmem:[#allocation2 + $0x178] sm:$0xff]
        %v3278 = vld [vmem:[#allocation2 + $0x180] sm:$0xff]
        %v3279 = vld [vmem:[#allocation2 + $0x188] sm:$0xff]
        %v3280 = vld [vmem:[#allocation2 + $0x190] sm:$0xff]
        %v3281 = vld [vmem:[#allocation2 + $0x198] sm:$0xff]
        %v3282 = vld [vmem:[#allocation2 + $0x1a0] sm:$0xff]
        %v3283 = vld [vmem:[#allocation2 + $0x1a8] sm:$0xff]
        %v3284 = vld [vmem:[#allocation2 + $0x1b0] sm:$0xff]
        %v3285 = vld [vmem:[#allocation2 + $0x1b8] sm:$0xff]
        %v3286 = vld [vmem:[#allocation2 + $0x1c0] sm:$0xff]
        %v3287 = vld [vmem:[#allocation2 + $0x1c8] sm:$0xff]
        %v3288 = vld [vmem:[#allocation2 + $0x1d0] sm:$0xff]
        %v3289 = vld [vmem:[#allocation2 + $0x1d8] sm:$0xff]
        %v3290 = vld [vmem:[#allocation2 + $0x1e0] sm:$0xff]
        %v3291 = vld [vmem:[#allocation2 + $0x1e8] sm:$0xff]
        %v3292 = vld [vmem:[#allocation2 + $0x1f0] sm:$0xff]
        %v3293 = vld [vmem:[#allocation2 + $0x1f8] sm:$0xff]
        %v3294 = vadd.f32 %v3102, %v3103
        %3295 = vadd.xlane.f32.xlu0 %v3294
        %v3296 = vpop.xlane.xlu0 %3295
        %v3297 = vadd.f32 %v3104, %v3105
        %3298 = vadd.xlane.f32.xlu0 %v3297
        %v3299 = vpop.xlane.xlu0 %3298
        %v3300 = vadd.f32 %v3106, %v3107
        %3301 = vadd.xlane.f32.xlu0 %v3300
        %v3302 = vpop.xlane.xlu0 %3301
        %v3303 = vadd.f32 %v3108, %v3109
        %3304 = vadd.xlane.f32.xlu0 %v3303
        %v3305 = vpop.xlane.xlu0 %3304
        %v3306 = vadd.f32 %v3110, %v3111
        %3307 = vadd.xlane.f32.xlu0 %v3306
        %v3308 = vpop.xlane.xlu0 %3307
        %v3309 = vadd.f32 %v3112, %v3113
        %3310 = vadd.xlane.f32.xlu0 %v3309
        %v3311 = vpop.xlane.xlu0 %3310
        %v3312 = vadd.f32 %v3114, %v3115
        %3313 = vadd.xlane.f32.xlu0 %v3312
        %v3314 = vpop.xlane.xlu0 %3313
        %v3315 = vadd.f32 %v3116, %v3117
        %3316 = vadd.xlane.f32.xlu0 %v3315
        %v3317 = vpop.xlane.xlu0 %3316
        %v3318 = vadd.f32 %v3118, %v3119
        %3319 = vadd.xlane.f32.xlu0 %v3318
        %v3320 = vpop.xlane.xlu0 %3319
        %v3321 = vadd.f32 %v3120, %v3121
        %3322 = vadd.xlane.f32.xlu0 %v3321
        %v3323 = vpop.xlane.xlu0 %3322
        %v3324 = vadd.f32 %v3122, %v3123
        %3325 = vadd.xlane.f32.xlu0 %v3324
        %v3326 = vpop.xlane.xlu0 %3325
        %v3327 = vadd.f32 %v3124, %v3125
        %3328 = vadd.xlane.f32.xlu0 %v3327
        %v3329 = vpop.xlane.xlu0 %3328
        %v3330 = vadd.f32 %v3126, %v3127
        %3331 = vadd.xlane.f32.xlu0 %v3330
        %v3332 = vpop.xlane.xlu0 %3331
        %v3333 = vadd.f32 %v3128, %v3129
        %3334 = vadd.xlane.f32.xlu0 %v3333
        %v3335 = vpop.xlane.xlu0 %3334
        %v3336 = vadd.f32 %v3130, %v3131
        %3337 = vadd.xlane.f32.xlu0 %v3336
        %v3338 = vpop.xlane.xlu0 %3337
        %v3339 = vadd.f32 %v3132, %v3133
        %3340 = vadd.xlane.f32.xlu0 %v3339
        %v3341 = vpop.xlane.xlu0 %3340
        %v3342 = vadd.f32 %v3134, %v3135
        %3343 = vadd.xlane.f32.xlu0 %v3342
        %v3344 = vpop.xlane.xlu0 %3343
        %v3345 = vadd.f32 %v3136, %v3137
        %3346 = vadd.xlane.f32.xlu0 %v3345
        %v3347 = vpop.xlane.xlu0 %3346
        %v3348 = vadd.f32 %v3138, %v3139
        %3349 = vadd.xlane.f32.xlu0 %v3348
        %v3350 = vpop.xlane.xlu0 %3349
        %v3351 = vadd.f32 %v3140, %v3141
        %3352 = vadd.xlane.f32.xlu0 %v3351
        %v3353 = vpop.xlane.xlu0 %3352
        %v3354 = vadd.f32 %v3142, %v3143
        %3355 = vadd.xlane.f32.xlu0 %v3354
        %v3356 = vpop.xlane.xlu0 %3355
        %v3357 = vadd.f32 %v3144, %v3145
        %3358 = vadd.xlane.f32.xlu0 %v3357
        %v3359 = vpop.xlane.xlu0 %3358
        %v3360 = vadd.f32 %v3146, %v3147
        %3361 = vadd.xlane.f32.xlu0 %v3360
        %v3362 = vpop.xlane.xlu0 %3361
        %v3363 = vadd.f32 %v3148, %v3149
        %3364 = vadd.xlane.f32.xlu0 %v3363
        %v3365 = vpop.xlane.xlu0 %3364
        %v3366 = vadd.f32 %v3150, %v3151
        %3367 = vadd.xlane.f32.xlu0 %v3366
        %v3368 = vpop.xlane.xlu0 %3367
        %v3369 = vadd.f32 %v3152, %v3153
        %3370 = vadd.xlane.f32.xlu0 %v3369
        %v3371 = vpop.xlane.xlu0 %3370
        %v3372 = vadd.f32 %v3154, %v3155
        %3373 = vadd.xlane.f32.xlu0 %v3372
        %v3374 = vpop.xlane.xlu0 %3373
        %v3375 = vadd.f32 %v3156, %v3157
        %3376 = vadd.xlane.f32.xlu0 %v3375
        %v3377 = vpop.xlane.xlu0 %3376
        %v3378 = vadd.f32 %v3158, %v3159
        %3379 = vadd.xlane.f32.xlu0 %v3378
        %v3380 = vpop.xlane.xlu0 %3379
        %v3381 = vadd.f32 %v3160, %v3161
        %3382 = vadd.xlane.f32.xlu0 %v3381
        %v3383 = vpop.xlane.xlu0 %3382
        %v3384 = vadd.f32 %v3162, %v3163
        %3385 = vadd.xlane.f32.xlu0 %v3384
        %v3386 = vpop.xlane.xlu0 %3385
        %v3387 = vadd.f32 %v3164, %v3165
        %3388 = vadd.xlane.f32.xlu0 %v3387
        %v3389 = vpop.xlane.xlu0 %3388
        %v3390 = vadd.f32 %v3166, %v3167
        %3391 = vadd.xlane.f32.xlu0 %v3390
        %v3392 = vpop.xlane.xlu0 %3391
        %v3393 = vadd.f32 %v3168, %v3169
        %3394 = vadd.xlane.f32.xlu0 %v3393
        %v3395 = vpop.xlane.xlu0 %3394
        %v3396 = vadd.f32 %v3170, %v3171
        %3397 = vadd.xlane.f32.xlu0 %v3396
        %v3398 = vpop.xlane.xlu0 %3397
        %v3399 = vadd.f32 %v3172, %v3173
        %3400 = vadd.xlane.f32.xlu0 %v3399
        %v3401 = vpop.xlane.xlu0 %3400
        %v3402 = vadd.f32 %v3174, %v3175
        %3403 = vadd.xlane.f32.xlu0 %v3402
        %v3404 = vpop.xlane.xlu0 %3403
        %v3405 = vadd.f32 %v3176, %v3177
        %3406 = vadd.xlane.f32.xlu0 %v3405
        %v3407 = vpop.xlane.xlu0 %3406
        %v3408 = vadd.f32 %v3178, %v3179
        %3409 = vadd.xlane.f32.xlu0 %v3408
        %v3410 = vpop.xlane.xlu0 %3409
        %v3411 = vadd.f32 %v3180, %v3181
        %3412 = vadd.xlane.f32.xlu0 %v3411
        %v3413 = vpop.xlane.xlu0 %3412
        %v3414 = vadd.f32 %v3182, %v3183
        %3415 = vadd.xlane.f32.xlu0 %v3414
        %v3416 = vpop.xlane.xlu0 %3415
        %v3417 = vadd.f32 %v3184, %v3185
        %3418 = vadd.xlane.f32.xlu0 %v3417
        %v3419 = vpop.xlane.xlu0 %3418
        %v3420 = vadd.f32 %v3186, %v3187
        %3421 = vadd.xlane.f32.xlu0 %v3420
        %v3422 = vpop.xlane.xlu0 %3421
        %v3423 = vadd.f32 %v3188, %v3189
        %3424 = vadd.xlane.f32.xlu0 %v3423
        %v3425 = vpop.xlane.xlu0 %3424
        %v3426 = vadd.f32 %v3190, %v3191
        %3427 = vadd.xlane.f32.xlu0 %v3426
        %v3428 = vpop.xlane.xlu0 %3427
        %v3429 = vadd.f32 %v3192, %v3193
        %3430 = vadd.xlane.f32.xlu0 %v3429
        %v3431 = vpop.xlane.xlu0 %3430
        %v3432 = vadd.f32 %v3194, %v3195
        %3433 = vadd.xlane.f32.xlu0 %v3432
        %v3434 = vpop.xlane.xlu0 %3433
        %v3435 = vadd.f32 %v3196, %v3197
        %3436 = vadd.xlane.f32.xlu0 %v3435
        %v3437 = vpop.xlane.xlu0 %3436
        %v3438 = vadd.f32 %v3198, %v3199
        %3439 = vadd.xlane.f32.xlu0 %v3438
        %v3440 = vpop.xlane.xlu0 %3439
        %v3441 = vadd.f32 %v3200, %v3201
        %3442 = vadd.xlane.f32.xlu0 %v3441
        %v3443 = vpop.xlane.xlu0 %3442
        %v3444 = vadd.f32 %v3202, %v3203
        %3445 = vadd.xlane.f32.xlu0 %v3444
        %v3446 = vpop.xlane.xlu0 %3445
        %v3447 = vadd.f32 %v3204, %v3205
        %3448 = vadd.xlane.f32.xlu0 %v3447
        %v3449 = vpop.xlane.xlu0 %3448
        %v3450 = vadd.f32 %v3206, %v3207
        %3451 = vadd.xlane.f32.xlu0 %v3450
        %v3452 = vpop.xlane.xlu0 %3451
        %v3453 = vadd.f32 %v3208, %v3209
        %3454 = vadd.xlane.f32.xlu0 %v3453
        %v3455 = vpop.xlane.xlu0 %3454
        %v3456 = vadd.f32 %v3210, %v3211
        %3457 = vadd.xlane.f32.xlu0 %v3456
        %v3458 = vpop.xlane.xlu0 %3457
        %v3459 = vadd.f32 %v3212, %v3213
        %3460 = vadd.xlane.f32.xlu0 %v3459
        %v3461 = vpop.xlane.xlu0 %3460
        %v3462 = vadd.f32 %v3214, %v3215
        %3463 = vadd.xlane.f32.xlu0 %v3462
        %v3464 = vpop.xlane.xlu0 %3463
        %v3465 = vadd.f32 %v3216, %v3217
        %3466 = vadd.xlane.f32.xlu0 %v3465
        %v3467 = vpop.xlane.xlu0 %3466
        %v3468 = vadd.f32 %v3218, %v3219
        %3469 = vadd.xlane.f32.xlu0 %v3468
        %v3470 = vpop.xlane.xlu0 %3469
        %v3471 = vadd.f32 %v3220, %v3221
        %3472 = vadd.xlane.f32.xlu0 %v3471
        %v3473 = vpop.xlane.xlu0 %3472
        %v3474 = vadd.f32 %v3222, %v3223
        %3475 = vadd.xlane.f32.xlu0 %v3474
        %v3476 = vpop.xlane.xlu0 %3475
        %v3477 = vadd.f32 %v3224, %v3225
        %3478 = vadd.xlane.f32.xlu0 %v3477
        %v3479 = vpop.xlane.xlu0 %3478
        %v3480 = vadd.f32 %v3226, %v3227
        %3481 = vadd.xlane.f32.xlu0 %v3480
        %v3482 = vpop.xlane.xlu0 %3481
        %v3483 = vadd.f32 %v3228, %v3229
        %3484 = vadd.xlane.f32.xlu0 %v3483
        %v3485 = vpop.xlane.xlu0 %3484
        %v3486 = vadd.f32 %v3230, %v3296
        %v3487 = vadd.f32 %v3231, %v3299
        %v3488 = vadd.f32 %v3232, %v3302
        %v3489 = vadd.f32 %v3233, %v3305
        %v3490 = vadd.f32 %v3234, %v3308
        %v3491 = vadd.f32 %v3235, %v3311
        %v3492 = vadd.f32 %v3236, %v3314
        %v3493 = vadd.f32 %v3237, %v3317
        %v3494 = vadd.f32 %v3238, %v3320
        %v3495 = vadd.f32 %v3239, %v3323
        %v3496 = vadd.f32 %v3240, %v3326
        %v3497 = vadd.f32 %v3241, %v3329
        %v3498 = vadd.f32 %v3242, %v3332
        %v3499 = vadd.f32 %v3243, %v3335
        %v3500 = vadd.f32 %v3244, %v3338
        %v3501 = vadd.f32 %v3245, %v3341
        %v3502 = vadd.f32 %v3246, %v3344
        %v3503 = vadd.f32 %v3247, %v3347
        %v3504 = vadd.f32 %v3248, %v3350
        %v3505 = vadd.f32 %v3249, %v3353
        %v3506 = vadd.f32 %v3250, %v3356
        %v3507 = vadd.f32 %v3251, %v3359
        %v3508 = vadd.f32 %v3252, %v3362
        %v3509 = vadd.f32 %v3253, %v3365
        %v3510 = vadd.f32 %v3254, %v3368
        %v3511 = vadd.f32 %v3255, %v3371
        %v3512 = vadd.f32 %v3256, %v3374
        %v3513 = vadd.f32 %v3257, %v3377
        %v3514 = vadd.f32 %v3258, %v3380
        %v3515 = vadd.f32 %v3259, %v3383
        %v3516 = vadd.f32 %v3260, %v3386
        %v3517 = vadd.f32 %v3261, %v3389
        %v3518 = vadd.f32 %v3262, %v3392
        %v3519 = vadd.f32 %v3263, %v3395
        %v3520 = vadd.f32 %v3264, %v3398
        %v3521 = vadd.f32 %v3265, %v3401
        %v3522 = vadd.f32 %v3266, %v3404
        %v3523 = vadd.f32 %v3267, %v3407
        %v3524 = vadd.f32 %v3268, %v3410
        %v3525 = vadd.f32 %v3269, %v3413
        %v3526 = vadd.f32 %v3270, %v3416
        %v3527 = vadd.f32 %v3271, %v3419
        %v3528 = vadd.f32 %v3272, %v3422
        %v3529 = vadd.f32 %v3273, %v3425
        %v3530 = vadd.f32 %v3274, %v3428
        %v3531 = vadd.f32 %v3275, %v3431
        %v3532 = vadd.f32 %v3276, %v3434
        %v3533 = vadd.f32 %v3277, %v3437
        %v3534 = vadd.f32 %v3278, %v3440
        %v3535 = vadd.f32 %v3279, %v3443
        %v3536 = vadd.f32 %v3280, %v3446
        %v3537 = vadd.f32 %v3281, %v3449
        %v3538 = vadd.f32 %v3282, %v3452
        %v3539 = vadd.f32 %v3283, %v3455
        %v3540 = vadd.f32 %v3284, %v3458
        %v3541 = vadd.f32 %v3285, %v3461
        %v3542 = vadd.f32 %v3286, %v3464
        %v3543 = vadd.f32 %v3287, %v3467
        %v3544 = vadd.f32 %v3288, %v3470
        %v3545 = vadd.f32 %v3289, %v3473
        %v3546 = vadd.f32 %v3290, %v3476
        %v3547 = vadd.f32 %v3291, %v3479
        %v3548 = vadd.f32 %v3292, %v3482
        %v3549 = vadd.f32 %v3293, %v3485
        %vm3550 = vcmask 7168
        %3551 = vst.msk [vmem:[#allocation2] sm:$0xff] %vm3550, %v3486
        %3552 = vst.msk [vmem:[#allocation2 + $0x8] sm:$0xff] %vm3550, %v3487
        %3553 = vst.msk [vmem:[#allocation2 + $0x10] sm:$0xff] %vm3550, %v3488
        %3554 = vst.msk [vmem:[#allocation2 + $0x18] sm:$0xff] %vm3550, %v3489
        %3555 = vst.msk [vmem:[#allocation2 + $0x20] sm:$0xff] %vm3550, %v3490
        %3556 = vst.msk [vmem:[#allocation2 + $0x28] sm:$0xff] %vm3550, %v3491
        %3557 = vst.msk [vmem:[#allocation2 + $0x30] sm:$0xff] %vm3550, %v3492
        %3558 = vst.msk [vmem:[#allocation2 + $0x38] sm:$0xff] %vm3550, %v3493
        %3559 = vst.msk [vmem:[#allocation2 + $0x40] sm:$0xff] %vm3550, %v3494
        %3560 = vst.msk [vmem:[#allocation2 + $0x48] sm:$0xff] %vm3550, %v3495
        %3561 = vst.msk [vmem:[#allocation2 + $0x50] sm:$0xff] %vm3550, %v3496
        %3562 = vst.msk [vmem:[#allocation2 + $0x58] sm:$0xff] %vm3550, %v3497
        %3563 = vst.msk [vmem:[#allocation2 + $0x60] sm:$0xff] %vm3550, %v3498
        %3564 = vst.msk [vmem:[#allocation2 + $0x68] sm:$0xff] %vm3550, %v3499
        %3565 = vst.msk [vmem:[#allocation2 + $0x70] sm:$0xff] %vm3550, %v3500
        %3566 = vst.msk [vmem:[#allocation2 + $0x78] sm:$0xff] %vm3550, %v3501
        %3567 = vst.msk [vmem:[#allocation2 + $0x80] sm:$0xff] %vm3550, %v3502
        %3568 = vst.msk [vmem:[#allocation2 + $0x88] sm:$0xff] %vm3550, %v3503
        %3569 = vst.msk [vmem:[#allocation2 + $0x90] sm:$0xff] %vm3550, %v3504
        %3570 = vst.msk [vmem:[#allocation2 + $0x98] sm:$0xff] %vm3550, %v3505
        %3571 = vst.msk [vmem:[#allocation2 + $0xa0] sm:$0xff] %vm3550, %v3506
        %3572 = vst.msk [vmem:[#allocation2 + $0xa8] sm:$0xff] %vm3550, %v3507
        %3573 = vst.msk [vmem:[#allocation2 + $0xb0] sm:$0xff] %vm3550, %v3508
        %3574 = vst.msk [vmem:[#allocation2 + $0xb8] sm:$0xff] %vm3550, %v3509
        %3575 = vst.msk [vmem:[#allocation2 + $0xc0] sm:$0xff] %vm3550, %v3510
        %3576 = vst.msk [vmem:[#allocation2 + $0xc8] sm:$0xff] %vm3550, %v3511
        %3577 = vst.msk [vmem:[#allocation2 + $0xd0] sm:$0xff] %vm3550, %v3512
        %3578 = vst.msk [vmem:[#allocation2 + $0xd8] sm:$0xff] %vm3550, %v3513
        %3579 = vst.msk [vmem:[#allocation2 + $0xe0] sm:$0xff] %vm3550, %v3514
        %3580 = vst.msk [vmem:[#allocation2 + $0xe8] sm:$0xff] %vm3550, %v3515
        %3581 = vst.msk [vmem:[#allocation2 + $0xf0] sm:$0xff] %vm3550, %v3516
        %3582 = vst.msk [vmem:[#allocation2 + $0xf8] sm:$0xff] %vm3550, %v3517
        %3583 = vst.msk [vmem:[#allocation2 + $0x100] sm:$0xff] %vm3550, %v3518
        %3584 = vst.msk [vmem:[#allocation2 + $0x108] sm:$0xff] %vm3550, %v3519
        %3585 = vst.msk [vmem:[#allocation2 + $0x110] sm:$0xff] %vm3550, %v3520
        %3586 = vst.msk [vmem:[#allocation2 + $0x118] sm:$0xff] %vm3550, %v3521
        %3587 = vst.msk [vmem:[#allocation2 + $0x120] sm:$0xff] %vm3550, %v3522
        %3588 = vst.msk [vmem:[#allocation2 + $0x128] sm:$0xff] %vm3550, %v3523
        %3589 = vst.msk [vmem:[#allocation2 + $0x130] sm:$0xff] %vm3550, %v3524
        %3590 = vst.msk [vmem:[#allocation2 + $0x138] sm:$0xff] %vm3550, %v3525
        %3591 = vst.msk [vmem:[#allocation2 + $0x140] sm:$0xff] %vm3550, %v3526
        %3592 = vst.msk [vmem:[#allocation2 + $0x148] sm:$0xff] %vm3550, %v3527
        %3593 = vst.msk [vmem:[#allocation2 + $0x150] sm:$0xff] %vm3550, %v3528
        %3594 = vst.msk [vmem:[#allocation2 + $0x158] sm:$0xff] %vm3550, %v3529
        %3595 = vst.msk [vmem:[#allocation2 + $0x160] sm:$0xff] %vm3550, %v3530
        %3596 = vst.msk [vmem:[#allocation2 + $0x168] sm:$0xff] %vm3550, %v3531
        %3597 = vst.msk [vmem:[#allocation2 + $0x170] sm:$0xff] %vm3550, %v3532
        %3598 = vst.msk [vmem:[#allocation2 + $0x178] sm:$0xff] %vm3550, %v3533
        %3599 = vst.msk [vmem:[#allocation2 + $0x180] sm:$0xff] %vm3550, %v3534
        %3600 = vst.msk [vmem:[#allocation2 + $0x188] sm:$0xff] %vm3550, %v3535
        %3601 = vst.msk [vmem:[#allocation2 + $0x190] sm:$0xff] %vm3550, %v3536
        %3602 = vst.msk [vmem:[#allocation2 + $0x198] sm:$0xff] %vm3550, %v3537
        %3603 = vst.msk [vmem:[#allocation2 + $0x1a0] sm:$0xff] %vm3550, %v3538
        %3604 = vst.msk [vmem:[#allocation2 + $0x1a8] sm:$0xff] %vm3550, %v3539
        %3605 = vst.msk [vmem:[#allocation2 + $0x1b0] sm:$0xff] %vm3550, %v3540
        %3606 = vst.msk [vmem:[#allocation2 + $0x1b8] sm:$0xff] %vm3550, %v3541
        %3607 = vst.msk [vmem:[#allocation2 + $0x1c0] sm:$0xff] %vm3550, %v3542
        %3608 = vst.msk [vmem:[#allocation2 + $0x1c8] sm:$0xff] %vm3550, %v3543
        %3609 = vst.msk [vmem:[#allocation2 + $0x1d0] sm:$0xff] %vm3550, %v3544
        %3610 = vst.msk [vmem:[#allocation2 + $0x1d8] sm:$0xff] %vm3550, %v3545
        %3611 = vst.msk [vmem:[#allocation2 + $0x1e0] sm:$0xff] %vm3550, %v3546
        %3612 = vst.msk [vmem:[#allocation2 + $0x1e8] sm:$0xff] %vm3550, %v3547
        %3613 = vst.msk [vmem:[#allocation2 + $0x1f0] sm:$0xff] %vm3550, %v3548
        %3614 = vst.msk [vmem:[#allocation2 + $0x1f8] sm:$0xff] %vm3550, %v3549
        %s3615 = smul.u32 %s39, 256
        %v3616 = vpack.c.bf16 %v3104, %v3102
        %v3617 = vpack.c.bf16 %v3105, %v3103
        %v3618 = vpack.c.bf16 %v3108, %v3106
        %v3619 = vpack.c.bf16 %v3109, %v3107
        %v3620 = vpack.c.bf16 %v3112, %v3110
        %v3621 = vpack.c.bf16 %v3113, %v3111
        %v3622 = vpack.c.bf16 %v3116, %v3114
        %v3623 = vpack.c.bf16 %v3117, %v3115
        %v3624 = vpack.c.bf16 %v3120, %v3118
        %v3625 = vpack.c.bf16 %v3121, %v3119
        %v3626 = vpack.c.bf16 %v3124, %v3122
        %v3627 = vpack.c.bf16 %v3125, %v3123
        %v3628 = vpack.c.bf16 %v3128, %v3126
        %v3629 = vpack.c.bf16 %v3129, %v3127
        %v3630 = vpack.c.bf16 %v3132, %v3130
        %v3631 = vpack.c.bf16 %v3133, %v3131
        %v3632 = vpack.c.bf16 %v3136, %v3134
        %v3633 = vpack.c.bf16 %v3137, %v3135
        %v3634 = vpack.c.bf16 %v3140, %v3138
        %v3635 = vpack.c.bf16 %v3141, %v3139
        %v3636 = vpack.c.bf16 %v3144, %v3142
        %v3637 = vpack.c.bf16 %v3145, %v3143
        %v3638 = vpack.c.bf16 %v3148, %v3146
        %v3639 = vpack.c.bf16 %v3149, %v3147
        %v3640 = vpack.c.bf16 %v3152, %v3150
        %v3641 = vpack.c.bf16 %v3153, %v3151
        %v3642 = vpack.c.bf16 %v3156, %v3154
        %v3643 = vpack.c.bf16 %v3157, %v3155
        %v3644 = vpack.c.bf16 %v3160, %v3158
        %v3645 = vpack.c.bf16 %v3161, %v3159
        %v3646 = vpack.c.bf16 %v3164, %v3162
        %v3647 = vpack.c.bf16 %v3165, %v3163
        %v3648 = vpack.c.bf16 %v3168, %v3166
        %v3649 = vpack.c.bf16 %v3169, %v3167
        %v3650 = vpack.c.bf16 %v3172, %v3170
        %v3651 = vpack.c.bf16 %v3173, %v3171
        %v3652 = vpack.c.bf16 %v3176, %v3174
        %v3653 = vpack.c.bf16 %v3177, %v3175
        %v3654 = vpack.c.bf16 %v3180, %v3178
        %v3655 = vpack.c.bf16 %v3181, %v3179
        %v3656 = vpack.c.bf16 %v3184, %v3182
        %v3657 = vpack.c.bf16 %v3185, %v3183
        %v3658 = vpack.c.bf16 %v3188, %v3186
        %v3659 = vpack.c.bf16 %v3189, %v3187
        %v3660 = vpack.c.bf16 %v3192, %v3190
        %v3661 = vpack.c.bf16 %v3193, %v3191
        %v3662 = vpack.c.bf16 %v3196, %v3194
        %v3663 = vpack.c.bf16 %v3197, %v3195
        %v3664 = vpack.c.bf16 %v3200, %v3198
        %v3665 = vpack.c.bf16 %v3201, %v3199
        %v3666 = vpack.c.bf16 %v3204, %v3202
        %v3667 = vpack.c.bf16 %v3205, %v3203
        %v3668 = vpack.c.bf16 %v3208, %v3206
        %v3669 = vpack.c.bf16 %v3209, %v3207
        %v3670 = vpack.c.bf16 %v3212, %v3210
        %v3671 = vpack.c.bf16 %v3213, %v3211
        %v3672 = vpack.c.bf16 %v3216, %v3214
        %v3673 = vpack.c.bf16 %v3217, %v3215
        %v3674 = vpack.c.bf16 %v3220, %v3218
        %v3675 = vpack.c.bf16 %v3221, %v3219
        %v3676 = vpack.c.bf16 %v3224, %v3222
        %v3677 = vpack.c.bf16 %v3225, %v3223
        %v3678 = vpack.c.bf16 %v3228, %v3226
        %v3679 = vpack.c.bf16 %v3229, %v3227
        %s3680 = sshra.s32 %s3615, 7
        %s3681 = sand.u32 %s3615, 127
        %s3682 = smul.addr %s3680, 8
        %s3683 = scalar_lea.vmem [#allocation3], %s3682
        %3684 = vst [vmem:[%s3683] sm:$0xff] %v3616
        %3685 = vst [vmem:[%s3683 + $0x8] sm:$0xff] %v3617
        %3686 = vst [vmem:[%s3683 + $0x40] sm:$0xff] %v3618
        %3687 = vst [vmem:[%s3683 + $0x48] sm:$0xff] %v3619
        %3688 = vst [vmem:[%s3683 + $0x80] sm:$0xff] %v3620
        %3689 = vst [vmem:[%s3683 + $0x88] sm:$0xff] %v3621
        %3690 = vst [vmem:[%s3683 + $0xc0] sm:$0xff] %v3622
        %3691 = vst [vmem:[%s3683 + $0xc8] sm:$0xff] %v3623
        %3692 = vst [vmem:[%s3683 + $0x100] sm:$0xff] %v3624
        %3693 = vst [vmem:[%s3683 + $0x108] sm:$0xff] %v3625
        %3694 = vst [vmem:[%s3683 + $0x140] sm:$0xff] %v3626
        %3695 = vst [vmem:[%s3683 + $0x148] sm:$0xff] %v3627
        %3696 = vst [vmem:[%s3683 + $0x180] sm:$0xff] %v3628
        %3697 = vst [vmem:[%s3683 + $0x188] sm:$0xff] %v3629
        %3698 = vst [vmem:[%s3683 + $0x1c0] sm:$0xff] %v3630
        %3699 = vst [vmem:[%s3683 + $0x1c8] sm:$0xff] %v3631
        %3700 = vst [vmem:[%s3683 + $0x200] sm:$0xff] %v3632
        %3701 = vst [vmem:[%s3683 + $0x208] sm:$0xff] %v3633
        %3702 = vst [vmem:[%s3683 + $0x240] sm:$0xff] %v3634
        %3703 = vst [vmem:[%s3683 + $0x248] sm:$0xff] %v3635
        %3704 = vst [vmem:[%s3683 + $0x280] sm:$0xff] %v3636
        %3705 = vst [vmem:[%s3683 + $0x288] sm:$0xff] %v3637
        %3706 = vst [vmem:[%s3683 + $0x2c0] sm:$0xff] %v3638
        %3707 = vst [vmem:[%s3683 + $0x2c8] sm:$0xff] %v3639
        %3708 = vst [vmem:[%s3683 + $0x300] sm:$0xff] %v3640
        %3709 = vst [vmem:[%s3683 + $0x308] sm:$0xff] %v3641
        %3710 = vst [vmem:[%s3683 + $0x340] sm:$0xff] %v3642
        %3711 = vst [vmem:[%s3683 + $0x348] sm:$0xff] %v3643
        %3712 = vst [vmem:[%s3683 + $0x380] sm:$0xff] %v3644
        %3713 = vst [vmem:[%s3683 + $0x388] sm:$0xff] %v3645
        %3714 = vst [vmem:[%s3683 + $0x3c0] sm:$0xff] %v3646
        %3715 = vst [vmem:[%s3683 + $0x3c8] sm:$0xff] %v3647
        %3716 = vst [vmem:[%s3683 + $0x400] sm:$0xff] %v3648
        %3717 = vst [vmem:[%s3683 + $0x408] sm:$0xff] %v3649
        %3718 = vst [vmem:[%s3683 + $0x440] sm:$0xff] %v3650
        %3719 = vst [vmem:[%s3683 + $0x448] sm:$0xff] %v3651
        %3720 = vst [vmem:[%s3683 + $0x480] sm:$0xff] %v3652
        %3721 = vst [vmem:[%s3683 + $0x488] sm:$0xff] %v3653
        %3722 = vst [vmem:[%s3683 + $0x4c0] sm:$0xff] %v3654
        %3723 = vst [vmem:[%s3683 + $0x4c8] sm:$0xff] %v3655
        %3724 = vst [vmem:[%s3683 + $0x500] sm:$0xff] %v3656
        %3725 = vst [vmem:[%s3683 + $0x508] sm:$0xff] %v3657
        %3726 = vst [vmem:[%s3683 + $0x540] sm:$0xff] %v3658
        %3727 = vst [vmem:[%s3683 + $0x548] sm:$0xff] %v3659
        %3728 = vst [vmem:[%s3683 + $0x580] sm:$0xff] %v3660
        %3729 = vst [vmem:[%s3683 + $0x588] sm:$0xff] %v3661
        %3730 = vst [vmem:[%s3683 + $0x5c0] sm:$0xff] %v3662
        %3731 = vst [vmem:[%s3683 + $0x5c8] sm:$0xff] %v3663
        %3732 = vst [vmem:[%s3683 + $0x600] sm:$0xff] %v3664
        %3733 = vst [vmem:[%s3683 + $0x608] sm:$0xff] %v3665
        %3734 = vst [vmem:[%s3683 + $0x640] sm:$0xff] %v3666
        %3735 = vst [vmem:[%s3683 + $0x648] sm:$0xff] %v3667
        %3736 = vst [vmem:[%s3683 + $0x680] sm:$0xff] %v3668
        %3737 = vst [vmem:[%s3683 + $0x688] sm:$0xff] %v3669
        %3738 = vst [vmem:[%s3683 + $0x6c0] sm:$0xff] %v3670
        %3739 = vst [vmem:[%s3683 + $0x6c8] sm:$0xff] %v3671
        %3740 = vst [vmem:[%s3683 + $0x700] sm:$0xff] %v3672
        %3741 = vst [vmem:[%s3683 + $0x708] sm:$0xff] %v3673
        %3742 = vst [vmem:[%s3683 + $0x740] sm:$0xff] %v3674
        %3743 = vst [vmem:[%s3683 + $0x748] sm:$0xff] %v3675
        %3744 = vst [vmem:[%s3683 + $0x780] sm:$0xff] %v3676
        %3745 = vst [vmem:[%s3683 + $0x788] sm:$0xff] %v3677
        %3746 = vst [vmem:[%s3683 + $0x7c0] sm:$0xff] %v3678
        %3747 = vst [vmem:[%s3683 + $0x7c8] sm:$0xff] %v3679
        %v3748 = vld [vmem:[%s393] sm:$0xff]
        %v3749 = vld [vmem:[%s393 + $0x8] sm:$0xff]
        %v3750 = vld [vmem:[%s393 + $0x10] sm:$0xff]
        %v3751 = vld [vmem:[%s393 + $0x18] sm:$0xff]
        %v3752 = vld [vmem:[%s393 + $0x20] sm:$0xff]
        %v3753 = vld [vmem:[%s393 + $0x28] sm:$0xff]
        %v3754 = vld [vmem:[%s393 + $0x30] sm:$0xff]
        %v3755 = vld [vmem:[%s393 + $0x38] sm:$0xff]
        %v3756 = vld [vmem:[%s393 + $0x40] sm:$0xff]
        %v3757 = vld [vmem:[%s393 + $0x48] sm:$0xff]
        %v3758 = vld [vmem:[%s393 + $0x50] sm:$0xff]
        %v3759 = vld [vmem:[%s393 + $0x58] sm:$0xff]
        %v3760 = vld [vmem:[%s393 + $0x60] sm:$0xff]
        %v3761 = vld [vmem:[%s393 + $0x68] sm:$0xff]
        %v3762 = vld [vmem:[%s393 + $0x70] sm:$0xff]
        %v3763 = vld [vmem:[%s393 + $0x78] sm:$0xff]
        %v3764 = vld [vmem:[%s393 + $0x80] sm:$0xff]
        %v3765 = vld [vmem:[%s393 + $0x88] sm:$0xff]
        %v3766 = vld [vmem:[%s393 + $0x90] sm:$0xff]
        %v3767 = vld [vmem:[%s393 + $0x98] sm:$0xff]
        %v3768 = vld [vmem:[%s393 + $0xa0] sm:$0xff]
        %v3769 = vld [vmem:[%s393 + $0xa8] sm:$0xff]
        %v3770 = vld [vmem:[%s393 + $0xb0] sm:$0xff]
        %v3771 = vld [vmem:[%s393 + $0xb8] sm:$0xff]
        %v3772 = vld [vmem:[%s393 + $0xc0] sm:$0xff]
        %v3773 = vld [vmem:[%s393 + $0xc8] sm:$0xff]
        %v3774 = vld [vmem:[%s393 + $0xd0] sm:$0xff]
        %v3775 = vld [vmem:[%s393 + $0xd8] sm:$0xff]
        %v3776 = vld [vmem:[%s393 + $0xe0] sm:$0xff]
        %v3777 = vld [vmem:[%s393 + $0xe8] sm:$0xff]
        %v3778 = vld [vmem:[%s393 + $0xf0] sm:$0xff]
        %v3779 = vld [vmem:[%s393 + $0xf8] sm:$0xff]
        %v3780 = vld [vmem:[%s393 + $0x100] sm:$0xff]
        %v3781 = vld [vmem:[%s393 + $0x108] sm:$0xff]
        %v3782 = vld [vmem:[%s393 + $0x110] sm:$0xff]
        %v3783 = vld [vmem:[%s393 + $0x118] sm:$0xff]
        %v3784 = vld [vmem:[%s393 + $0x120] sm:$0xff]
        %v3785 = vld [vmem:[%s393 + $0x128] sm:$0xff]
        %v3786 = vld [vmem:[%s393 + $0x130] sm:$0xff]
        %v3787 = vld [vmem:[%s393 + $0x138] sm:$0xff]
        %v3788 = vld [vmem:[%s393 + $0x140] sm:$0xff]
        %v3789 = vld [vmem:[%s393 + $0x148] sm:$0xff]
        %v3790 = vld [vmem:[%s393 + $0x150] sm:$0xff]
        %v3791 = vld [vmem:[%s393 + $0x158] sm:$0xff]
        %v3792 = vld [vmem:[%s393 + $0x160] sm:$0xff]
        %v3793 = vld [vmem:[%s393 + $0x168] sm:$0xff]
        %v3794 = vld [vmem:[%s393 + $0x170] sm:$0xff]
        %v3795 = vld [vmem:[%s393 + $0x178] sm:$0xff]
        %v3796 = vld [vmem:[%s393 + $0x180] sm:$0xff]
        %v3797 = vld [vmem:[%s393 + $0x188] sm:$0xff]
        %v3798 = vld [vmem:[%s393 + $0x190] sm:$0xff]
        %v3799 = vld [vmem:[%s393 + $0x198] sm:$0xff]
        %v3800 = vld [vmem:[%s393 + $0x1a0] sm:$0xff]
        %v3801 = vld [vmem:[%s393 + $0x1a8] sm:$0xff]
        %v3802 = vld [vmem:[%s393 + $0x1b0] sm:$0xff]
        %v3803 = vld [vmem:[%s393 + $0x1b8] sm:$0xff]
        %v3804 = vld [vmem:[%s393 + $0x1c0] sm:$0xff]
        %v3805 = vld [vmem:[%s393 + $0x1c8] sm:$0xff]
        %v3806 = vld [vmem:[%s393 + $0x1d0] sm:$0xff]
        %v3807 = vld [vmem:[%s393 + $0x1d8] sm:$0xff]
        %v3808 = vld [vmem:[%s393 + $0x1e0] sm:$0xff]
        %v3809 = vld [vmem:[%s393 + $0x1e8] sm:$0xff]
        %v3810 = vld [vmem:[%s393 + $0x1f0] sm:$0xff]
        %v3811 = vld [vmem:[%s393 + $0x1f8] sm:$0xff]
        %v3812 = vld [vmem:[%s393 + $0x200] sm:$0xff]
        %v3813 = vld [vmem:[%s393 + $0x208] sm:$0xff]
        %v3814 = vld [vmem:[%s393 + $0x210] sm:$0xff]
        %v3815 = vld [vmem:[%s393 + $0x218] sm:$0xff]
        %v3816 = vld [vmem:[%s393 + $0x220] sm:$0xff]
        %v3817 = vld [vmem:[%s393 + $0x228] sm:$0xff]
        %v3818 = vld [vmem:[%s393 + $0x230] sm:$0xff]
        %v3819 = vld [vmem:[%s393 + $0x238] sm:$0xff]
        %v3820 = vld [vmem:[%s393 + $0x240] sm:$0xff]
        %v3821 = vld [vmem:[%s393 + $0x248] sm:$0xff]
        %v3822 = vld [vmem:[%s393 + $0x250] sm:$0xff]
        %v3823 = vld [vmem:[%s393 + $0x258] sm:$0xff]
        %v3824 = vld [vmem:[%s393 + $0x260] sm:$0xff]
        %v3825 = vld [vmem:[%s393 + $0x268] sm:$0xff]
        %v3826 = vld [vmem:[%s393 + $0x270] sm:$0xff]
        %v3827 = vld [vmem:[%s393 + $0x278] sm:$0xff]
        %v3828 = vld [vmem:[%s393 + $0x280] sm:$0xff]
        %v3829 = vld [vmem:[%s393 + $0x288] sm:$0xff]
        %v3830 = vld [vmem:[%s393 + $0x290] sm:$0xff]
        %v3831 = vld [vmem:[%s393 + $0x298] sm:$0xff]
        %v3832 = vld [vmem:[%s393 + $0x2a0] sm:$0xff]
        %v3833 = vld [vmem:[%s393 + $0x2a8] sm:$0xff]
        %v3834 = vld [vmem:[%s393 + $0x2b0] sm:$0xff]
        %v3835 = vld [vmem:[%s393 + $0x2b8] sm:$0xff]
        %v3836 = vld [vmem:[%s393 + $0x2c0] sm:$0xff]
        %v3837 = vld [vmem:[%s393 + $0x2c8] sm:$0xff]
        %v3838 = vld [vmem:[%s393 + $0x2d0] sm:$0xff]
        %v3839 = vld [vmem:[%s393 + $0x2d8] sm:$0xff]
        %v3840 = vld [vmem:[%s393 + $0x2e0] sm:$0xff]
        %v3841 = vld [vmem:[%s393 + $0x2e8] sm:$0xff]
        %v3842 = vld [vmem:[%s393 + $0x2f0] sm:$0xff]
        %v3843 = vld [vmem:[%s393 + $0x2f8] sm:$0xff]
        %v3844 = vld [vmem:[%s393 + $0x300] sm:$0xff]
        %v3845 = vld [vmem:[%s393 + $0x308] sm:$0xff]
        %v3846 = vld [vmem:[%s393 + $0x310] sm:$0xff]
        %v3847 = vld [vmem:[%s393 + $0x318] sm:$0xff]
        %v3848 = vld [vmem:[%s393 + $0x320] sm:$0xff]
        %v3849 = vld [vmem:[%s393 + $0x328] sm:$0xff]
        %v3850 = vld [vmem:[%s393 + $0x330] sm:$0xff]
        %v3851 = vld [vmem:[%s393 + $0x338] sm:$0xff]
        %v3852 = vld [vmem:[%s393 + $0x340] sm:$0xff]
        %v3853 = vld [vmem:[%s393 + $0x348] sm:$0xff]
        %v3854 = vld [vmem:[%s393 + $0x350] sm:$0xff]
        %v3855 = vld [vmem:[%s393 + $0x358] sm:$0xff]
        %v3856 = vld [vmem:[%s393 + $0x360] sm:$0xff]
        %v3857 = vld [vmem:[%s393 + $0x368] sm:$0xff]
        %v3858 = vld [vmem:[%s393 + $0x370] sm:$0xff]
        %v3859 = vld [vmem:[%s393 + $0x378] sm:$0xff]
        %v3860 = vld [vmem:[%s393 + $0x380] sm:$0xff]
        %v3861 = vld [vmem:[%s393 + $0x388] sm:$0xff]
        %v3862 = vld [vmem:[%s393 + $0x390] sm:$0xff]
        %v3863 = vld [vmem:[%s393 + $0x398] sm:$0xff]
        %v3864 = vld [vmem:[%s393 + $0x3a0] sm:$0xff]
        %v3865 = vld [vmem:[%s393 + $0x3a8] sm:$0xff]
        %v3866 = vld [vmem:[%s393 + $0x3b0] sm:$0xff]
        %v3867 = vld [vmem:[%s393 + $0x3b8] sm:$0xff]
        %v3868 = vld [vmem:[%s393 + $0x3c0] sm:$0xff]
        %v3869 = vld [vmem:[%s393 + $0x3c8] sm:$0xff]
        %v3870 = vld [vmem:[%s393 + $0x3d0] sm:$0xff]
        %v3871 = vld [vmem:[%s393 + $0x3d8] sm:$0xff]
        %v3872 = vld [vmem:[%s393 + $0x3e0] sm:$0xff]
        %v3873 = vld [vmem:[%s393 + $0x3e8] sm:$0xff]
        %v3874 = vld [vmem:[%s393 + $0x3f0] sm:$0xff]
        %v3875 = vld [vmem:[%s393 + $0x3f8] sm:$0xff]
        %v3876 = vpack.c.bf16 %v2976, %v2974
        %v3877 = vpack.c.bf16 %v2977, %v2975
        %v3878 = vpack.c.bf16 %v2980, %v2978
        %v3879 = vpack.c.bf16 %v2981, %v2979
        %v3880 = vpack.c.bf16 %v2984, %v2982
        %v3881 = vpack.c.bf16 %v2985, %v2983
        %v3882 = vpack.c.bf16 %v2988, %v2986
        %v3883 = vpack.c.bf16 %v2989, %v2987
        %v3884 = vpack.c.bf16 %v2992, %v2990
        %v3885 = vpack.c.bf16 %v2993, %v2991
        %v3886 = vpack.c.bf16 %v2996, %v2994
        %v3887 = vpack.c.bf16 %v2997, %v2995
        %v3888 = vpack.c.bf16 %v3000, %v2998
        %v3889 = vpack.c.bf16 %v3001, %v2999
        %v3890 = vpack.c.bf16 %v3004, %v3002
        %v3891 = vpack.c.bf16 %v3005, %v3003
        %v3892 = vpack.c.bf16 %v3008, %v3006
        %v3893 = vpack.c.bf16 %v3009, %v3007
        %v3894 = vpack.c.bf16 %v3012, %v3010
        %v3895 = vpack.c.bf16 %v3013, %v3011
        %v3896 = vpack.c.bf16 %v3016, %v3014
        %v3897 = vpack.c.bf16 %v3017, %v3015
        %v3898 = vpack.c.bf16 %v3020, %v3018
        %v3899 = vpack.c.bf16 %v3021, %v3019
        %v3900 = vpack.c.bf16 %v3024, %v3022
        %v3901 = vpack.c.bf16 %v3025, %v3023
        %v3902 = vpack.c.bf16 %v3028, %v3026
        %v3903 = vpack.c.bf16 %v3029, %v3027
        %v3904 = vpack.c.bf16 %v3032, %v3030
        %v3905 = vpack.c.bf16 %v3033, %v3031
        %v3906 = vpack.c.bf16 %v3036, %v3034
        %v3907 = vpack.c.bf16 %v3037, %v3035
        %v3908 = vpack.c.bf16 %v3040, %v3038
        %v3909 = vpack.c.bf16 %v3041, %v3039
        %v3910 = vpack.c.bf16 %v3044, %v3042
        %v3911 = vpack.c.bf16 %v3045, %v3043
        %v3912 = vpack.c.bf16 %v3048, %v3046
        %v3913 = vpack.c.bf16 %v3049, %v3047
        %v3914 = vpack.c.bf16 %v3052, %v3050
        %v3915 = vpack.c.bf16 %v3053, %v3051
        %v3916 = vpack.c.bf16 %v3056, %v3054
        %v3917 = vpack.c.bf16 %v3057, %v3055
        %v3918 = vpack.c.bf16 %v3060, %v3058
        %v3919 = vpack.c.bf16 %v3061, %v3059
        %v3920 = vpack.c.bf16 %v3064, %v3062
        %v3921 = vpack.c.bf16 %v3065, %v3063
        %v3922 = vpack.c.bf16 %v3068, %v3066
        %v3923 = vpack.c.bf16 %v3069, %v3067
        %v3924 = vpack.c.bf16 %v3072, %v3070
        %v3925 = vpack.c.bf16 %v3073, %v3071
        %v3926 = vpack.c.bf16 %v3076, %v3074
        %v3927 = vpack.c.bf16 %v3077, %v3075
        %v3928 = vpack.c.bf16 %v3080, %v3078
        %v3929 = vpack.c.bf16 %v3081, %v3079
        %v3930 = vpack.c.bf16 %v3084, %v3082
        %v3931 = vpack.c.bf16 %v3085, %v3083
        %v3932 = vpack.c.bf16 %v3088, %v3086
        %v3933 = vpack.c.bf16 %v3089, %v3087
        %v3934 = vpack.c.bf16 %v3092, %v3090
        %v3935 = vpack.c.bf16 %v3093, %v3091
        %v3936 = vpack.c.bf16 %v3096, %v3094
        %v3937 = vpack.c.bf16 %v3097, %v3095
        %v3938 = vpack.c.bf16 %v3100, %v3098
        %v3939 = vpack.c.bf16 %v3101, %v3099
        %v3940 = vld [vmem:[%s354] sm:$0xff]
        %v3941 = vld [vmem:[%s354 + $0x8] sm:$0xff]
        %v3942 = vld [vmem:[%s354 + $0x10] sm:$0xff]
        %v3943 = vld [vmem:[%s354 + $0x18] sm:$0xff]
        %v3944 = vld [vmem:[%s354 + $0x20] sm:$0xff]
        %v3945 = vld [vmem:[%s354 + $0x28] sm:$0xff]
        %v3946 = vld [vmem:[%s354 + $0x30] sm:$0xff]
        %v3947 = vld [vmem:[%s354 + $0x38] sm:$0xff]
        %v3948 = vld [vmem:[%s354 + $0x40] sm:$0xff]
        %v3949 = vld [vmem:[%s354 + $0x48] sm:$0xff]
        %v3950 = vld [vmem:[%s354 + $0x50] sm:$0xff]
        %v3951 = vld [vmem:[%s354 + $0x58] sm:$0xff]
        %v3952 = vld [vmem:[%s354 + $0x60] sm:$0xff]
        %v3953 = vld [vmem:[%s354 + $0x68] sm:$0xff]
        %v3954 = vld [vmem:[%s354 + $0x70] sm:$0xff]
        %v3955 = vld [vmem:[%s354 + $0x78] sm:$0xff]
        %v3956 = vld [vmem:[%s354 + $0x80] sm:$0xff]
        %v3957 = vld [vmem:[%s354 + $0x88] sm:$0xff]
        %v3958 = vld [vmem:[%s354 + $0x90] sm:$0xff]
        %v3959 = vld [vmem:[%s354 + $0x98] sm:$0xff]
        %v3960 = vld [vmem:[%s354 + $0xa0] sm:$0xff]
        %v3961 = vld [vmem:[%s354 + $0xa8] sm:$0xff]
        %v3962 = vld [vmem:[%s354 + $0xb0] sm:$0xff]
        %v3963 = vld [vmem:[%s354 + $0xb8] sm:$0xff]
        %v3964 = vld [vmem:[%s354 + $0xc0] sm:$0xff]
        %v3965 = vld [vmem:[%s354 + $0xc8] sm:$0xff]
        %v3966 = vld [vmem:[%s354 + $0xd0] sm:$0xff]
        %v3967 = vld [vmem:[%s354 + $0xd8] sm:$0xff]
        %v3968 = vld [vmem:[%s354 + $0xe0] sm:$0xff]
        %v3969 = vld [vmem:[%s354 + $0xe8] sm:$0xff]
        %v3970 = vld [vmem:[%s354 + $0xf0] sm:$0xff]
        %v3971 = vld [vmem:[%s354 + $0xf8] sm:$0xff]
        %v4004 = vunpack.c.l.b16 %v3940
        %v4005 = vunpack.c.h.b16 %v3940
        %v4006 = vunpack.c.l.b16 %v3941
        %v4007 = vunpack.c.h.b16 %v3941
        %v4008 = vunpack.c.l.b16 %v3942
        %v4009 = vunpack.c.h.b16 %v3942
        %v4010 = vunpack.c.l.b16 %v3943
        %v4011 = vunpack.c.h.b16 %v3943
        %v4012 = vunpack.c.l.b16 %v3944
        %v4013 = vunpack.c.h.b16 %v3944
        %v4014 = vunpack.c.l.b16 %v3945
        %v4015 = vunpack.c.h.b16 %v3945
        %v4016 = vunpack.c.l.b16 %v3946
        %v4017 = vunpack.c.h.b16 %v3946
        %v4018 = vunpack.c.l.b16 %v3947
        %v4019 = vunpack.c.h.b16 %v3947
        %v4020 = vunpack.c.l.b16 %v3948
        %v4021 = vunpack.c.h.b16 %v3948
        %v4022 = vunpack.c.l.b16 %v3949
        %v4023 = vunpack.c.h.b16 %v3949
        %v4024 = vunpack.c.l.b16 %v3950
        %v4025 = vunpack.c.h.b16 %v3950
        %v4026 = vunpack.c.l.b16 %v3951
        %v4027 = vunpack.c.h.b16 %v3951
        %v4028 = vunpack.c.l.b16 %v3952
        %v4029 = vunpack.c.h.b16 %v3952
        %v4030 = vunpack.c.l.b16 %v3953
        %v4031 = vunpack.c.h.b16 %v3953
        %v4032 = vunpack.c.l.b16 %v3954
        %v4033 = vunpack.c.h.b16 %v3954
        %v4034 = vunpack.c.l.b16 %v3955
        %v4035 = vunpack.c.h.b16 %v3955
        %v4036 = vunpack.c.l.b16 %v3956
        %v4037 = vunpack.c.h.b16 %v3956
        %v4038 = vunpack.c.l.b16 %v3957
        %v4039 = vunpack.c.h.b16 %v3957
        %v4040 = vunpack.c.l.b16 %v3958
        %v4041 = vunpack.c.h.b16 %v3958
        %v4042 = vunpack.c.l.b16 %v3959
        %v4043 = vunpack.c.h.b16 %v3959
        %v4044 = vunpack.c.l.b16 %v3960
        %v4045 = vunpack.c.h.b16 %v3960
        %v4046 = vunpack.c.l.b16 %v3961
        %v4047 = vunpack.c.h.b16 %v3961
        %v4048 = vunpack.c.l.b16 %v3962
        %v4049 = vunpack.c.h.b16 %v3962
        %v4050 = vunpack.c.l.b16 %v3963
        %v4051 = vunpack.c.h.b16 %v3963
        %v4052 = vunpack.c.l.b16 %v3964
        %v4053 = vunpack.c.h.b16 %v3964
        %v4054 = vunpack.c.l.b16 %v3965
        %v4055 = vunpack.c.h.b16 %v3965
        %v4056 = vunpack.c.l.b16 %v3966
        %v4057 = vunpack.c.h.b16 %v3966
        %v4058 = vunpack.c.l.b16 %v3967
        %v4059 = vunpack.c.h.b16 %v3967
        %v4060 = vunpack.c.l.b16 %v3968
        %v4061 = vunpack.c.h.b16 %v3968
        %v4062 = vunpack.c.l.b16 %v3969
        %v4063 = vunpack.c.h.b16 %v3969
        %v4064 = vunpack.c.l.b16 %v3970
        %v4065 = vunpack.c.h.b16 %v3970
        %v4066 = vunpack.c.l.b16 %v3971
        %v4067 = vunpack.c.h.b16 %v3971
        %v4068 = vpack.c.b16 %v4006, %v4004
        %v4069 = vpack.c.b16 %v4007, %v4005
        %v4070 = vpack.c.b16 %v4010, %v4008
        %v4071 = vpack.c.b16 %v4011, %v4009
        %v4072 = vpack.c.b16 %v4014, %v4012
        %v4073 = vpack.c.b16 %v4015, %v4013
        %v4074 = vpack.c.b16 %v4018, %v4016
        %v4075 = vpack.c.b16 %v4019, %v4017
        %v4076 = vpack.c.b16 %v4022, %v4020
        %v4077 = vpack.c.b16 %v4023, %v4021
        %v4078 = vpack.c.b16 %v4026, %v4024
        %v4079 = vpack.c.b16 %v4027, %v4025
        %v4080 = vpack.c.b16 %v4030, %v4028
        %v4081 = vpack.c.b16 %v4031, %v4029
        %v4082 = vpack.c.b16 %v4034, %v4032
        %v4083 = vpack.c.b16 %v4035, %v4033
        %v4084 = vpack.c.b16 %v4038, %v4036
        %v4085 = vpack.c.b16 %v4039, %v4037
        %v4086 = vpack.c.b16 %v4042, %v4040
        %v4087 = vpack.c.b16 %v4043, %v4041
        %v4088 = vpack.c.b16 %v4046, %v4044
        %v4089 = vpack.c.b16 %v4047, %v4045
        %v4090 = vpack.c.b16 %v4050, %v4048
        %v4091 = vpack.c.b16 %v4051, %v4049
        %v4092 = vpack.c.b16 %v4054, %v4052
        %v4093 = vpack.c.b16 %v4055, %v4053
        %v4094 = vpack.c.b16 %v4058, %v4056
        %v4095 = vpack.c.b16 %v4059, %v4057
        %v4096 = vpack.c.b16 %v4062, %v4060
        %v4097 = vpack.c.b16 %v4063, %v4061
        %v4098 = vpack.c.b16 %v4066, %v4064
        %v4099 = vpack.c.b16 %v4067, %v4065
        %4132 = vmatprep.subr.bf16.mxu0 %v4069
        %4133 = vmatpush1.bf16.xpose.msra.mxu0 %v4068
        %4134 = vmatprep.subr.bf16.mxu0 %v4071
        %4135 = vmatpush1.bf16.xpose.msra.mxu0 %v4070
        %4136 = vmatprep.subr.bf16.mxu0 %v4073
        %4137 = vmatpush1.bf16.xpose.msra.mxu0 %v4072
        %4138 = vmatprep.subr.bf16.mxu0 %v4075
        %4139 = vmatpush1.bf16.xpose.msra.mxu0 %v4074
        %4140 = vmatprep.subr.bf16.mxu0 %v4077
        %4141 = vmatpush1.bf16.xpose.msra.mxu0 %v4076
        %4142 = vmatprep.subr.bf16.mxu0 %v4079
        %4143 = vmatpush1.bf16.xpose.msra.mxu0 %v4078
        %4144 = vmatprep.subr.bf16.mxu0 %v4081
        %4145 = vmatpush1.bf16.xpose.msra.mxu0 %v4080
        %4146 = vmatprep.subr.bf16.mxu0 %v4083
        %4147 = vmatpush1.bf16.xpose.msra.mxu0 %v4082
        %4148 = vmatprep.subr.bf16.mxu0 %v4085
        %4149 = vmatpush1.bf16.xpose.msra.mxu0 %v4084
        %4150 = vmatprep.subr.bf16.mxu0 %v4087
        %4151 = vmatpush1.bf16.xpose.msra.mxu0 %v4086
        %4152 = vmatprep.subr.bf16.mxu0 %v4089
        %4153 = vmatpush1.bf16.xpose.msra.mxu0 %v4088
        %4154 = vmatprep.subr.bf16.mxu0 %v4091
        %4155 = vmatpush1.bf16.xpose.msra.mxu0 %v4090
        %4156 = vmatprep.subr.bf16.mxu0 %v4093
        %4157 = vmatpush1.bf16.xpose.msra.mxu0 %v4092
        %4158 = vmatprep.subr.bf16.mxu0 %v4095
        %4159 = vmatpush1.bf16.xpose.msra.mxu0 %v4094
        %4160 = vmatprep.subr.bf16.mxu0 %v4097
        %4161 = vmatpush1.bf16.xpose.msra.mxu0 %v4096
        %4162 = vmatprep.subr.bf16.mxu0 %v4099
        %4163 = vmatpush1.bf16.xpose.msra.mxu0 %v4098
        %4164 = vmatprep.mubr.bf16.mxu0 %v3877
        %4165 = vmatmul.mubr.bf16.gmra.mrb[0].mxu0 %v3876
        %v4166 = vpop.f32.mrb[0].mxu0
        %v4167 = vadd.f32 0.0, %v4166
        %v4168 = vpop.f32.mrb[0].mxu0
        %v4169 = vadd.f32 0.0, %v4168
        %v4170 = vpop.f32.mrb[0].mxu0
        %v4171 = vadd.f32 0.0, %v4170
        %v4172 = vpop.f32.mrb[0].mxu0
        %v4173 = vadd.f32 0.0, %v4172
        %4174 = vmatprep.mubr.bf16.mxu0 %v3879
        %4175 = vmatmul.mubr.bf16.gmra.mrb[0].mxu0 %v3878
        %v4176 = vpop.f32.mrb[0].mxu0
        %v4177 = vadd.f32 0.0, %v4176
        %v4178 = vpop.f32.mrb[0].mxu0
        %v4179 = vadd.f32 0.0, %v4178
        %v4180 = vpop.f32.mrb[0].mxu0
        %v4181 = vadd.f32 0.0, %v4180
        %v4182 = vpop.f32.mrb[0].mxu0
        %v4183 = vadd.f32 0.0, %v4182
        %4184 = vmatprep.mubr.bf16.mxu0 %v3881
        %4185 = vmatmul.mubr.bf16.gmra.mrb[0].mxu0 %v3880
        %v4186 = vpop.f32.mrb[0].mxu0
        %v4187 = vadd.f32 0.0, %v4186
        %v4188 = vpop.f32.mrb[0].mxu0
        %v4189 = vadd.f32 0.0, %v4188
        %v4190 = vpop.f32.mrb[0].mxu0
        %v4191 = vadd.f32 0.0, %v4190
        %v4192 = vpop.f32.mrb[0].mxu0
        %v4193 = vadd.f32 0.0, %v4192
        %4194 = vmatprep.mubr.bf16.mxu0 %v3883
        %4195 = vmatmul.mubr.bf16.gmra.mrb[0].mxu0 %v3882
        %v4196 = vpop.f32.mrb[0].mxu0
        %v4197 = vadd.f32 0.0, %v4196
        %v4198 = vpop.f32.mrb[0].mxu0
        %v4199 = vadd.f32 0.0, %v4198
        %v4200 = vpop.f32.mrb[0].mxu0
        %v4201 = vadd.f32 0.0, %v4200
        %v4202 = vpop.f32.mrb[0].mxu0
        %v4203 = vadd.f32 0.0, %v4202
        %4204 = vmatprep.mubr.bf16.mxu0 %v3885
        %4205 = vmatmul.mubr.bf16.gmra.mrb[0].mxu0 %v3884
        %v4206 = vpop.f32.mrb[0].mxu0
        %v4207 = vadd.f32 0.0, %v4206
        %v4208 = vpop.f32.mrb[0].mxu0
        %v4209 = vadd.f32 0.0, %v4208
        %v4210 = vpop.f32.mrb[0].mxu0
        %v4211 = vadd.f32 0.0, %v4210
        %v4212 = vpop.f32.mrb[0].mxu0
        %v4213 = vadd.f32 0.0, %v4212
        %4214 = vmatprep.mubr.bf16.mxu0 %v3887
        %4215 = vmatmul.mubr.bf16.gmra.mrb[0].mxu0 %v3886
        %v4216 = vpop.f32.mrb[0].mxu0
        %v4217 = vadd.f32 0.0, %v4216
        %v4218 = vpop.f32.mrb[0].mxu0
        %v4219 = vadd.f32 0.0, %v4218
        %v4220 = vpop.f32.mrb[0].mxu0
        %v4221 = vadd.f32 0.0, %v4220
        %v4222 = vpop.f32.mrb[0].mxu0
        %v4223 = vadd.f32 0.0, %v4222
        %4224 = vmatprep.mubr.bf16.mxu0 %v3889
        %4225 = vmatmul.mubr.bf16.gmra.mrb[0].mxu0 %v3888
        %v4226 = vpop.f32.mrb[0].mxu0
        %v4227 = vadd.f32 0.0, %v4226
        %v4228 = vpop.f32.mrb[0].mxu0
        %v4229 = vadd.f32 0.0, %v4228
        %v4230 = vpop.f32.mrb[0].mxu0
        %v4231 = vadd.f32 0.0, %v4230
        %v4232 = vpop.f32.mrb[0].mxu0
        %v4233 = vadd.f32 0.0, %v4232
        %4234 = vmatprep.mubr.bf16.mxu0 %v3891
        %4235 = vmatmul.mubr.bf16.gmra.mrb[0].mxu0 %v3890
        %v4236 = vpop.f32.mrb[0].mxu0
        %v4237 = vadd.f32 0.0, %v4236
        %v4238 = vpop.f32.mrb[0].mxu0
        %v4239 = vadd.f32 0.0, %v4238
        %v4240 = vpop.f32.mrb[0].mxu0
        %v4241 = vadd.f32 0.0, %v4240
        %v4242 = vpop.f32.mrb[0].mxu0
        %v4243 = vadd.f32 0.0, %v4242
        %4244 = vmatprep.mubr.bf16.mxu0 %v3893
        %4245 = vmatmul.mubr.bf16.gmra.mrb[0].mxu0 %v3892
        %v4246 = vpop.f32.mrb[0].mxu0
        %v4247 = vadd.f32 0.0, %v4246
        %v4248 = vpop.f32.mrb[0].mxu0
        %v4249 = vadd.f32 0.0, %v4248
        %v4250 = vpop.f32.mrb[0].mxu0
        %v4251 = vadd.f32 0.0, %v4250
        %v4252 = vpop.f32.mrb[0].mxu0
        %v4253 = vadd.f32 0.0, %v4252
        %4254 = vmatprep.mubr.bf16.mxu0 %v3895
        %4255 = vmatmul.mubr.bf16.gmra.mrb[0].mxu0 %v3894
        %v4256 = vpop.f32.mrb[0].mxu0
        %v4257 = vadd.f32 0.0, %v4256
        %v4258 = vpop.f32.mrb[0].mxu0
        %v4259 = vadd.f32 0.0, %v4258
        %v4260 = vpop.f32.mrb[0].mxu0
        %v4261 = vadd.f32 0.0, %v4260
        %v4262 = vpop.f32.mrb[0].mxu0
        %v4263 = vadd.f32 0.0, %v4262
        %4264 = vmatprep.mubr.bf16.mxu0 %v3897
        %4265 = vmatmul.mubr.bf16.gmra.mrb[0].mxu0 %v3896
        %v4266 = vpop.f32.mrb[0].mxu0
        %v4267 = vadd.f32 0.0, %v4266
        %v4268 = vpop.f32.mrb[0].mxu0
        %v4269 = vadd.f32 0.0, %v4268
        %v4270 = vpop.f32.mrb[0].mxu0
        %v4271 = vadd.f32 0.0, %v4270
        %v4272 = vpop.f32.mrb[0].mxu0
        %v4273 = vadd.f32 0.0, %v4272
        %4274 = vmatprep.mubr.bf16.mxu0 %v3899
        %4275 = vmatmul.mubr.bf16.gmra.mrb[0].mxu0 %v3898
        %v4276 = vpop.f32.mrb[0].mxu0
        %v4277 = vadd.f32 0.0, %v4276
        %v4278 = vpop.f32.mrb[0].mxu0
        %v4279 = vadd.f32 0.0, %v4278
        %v4280 = vpop.f32.mrb[0].mxu0
        %v4281 = vadd.f32 0.0, %v4280
        %v4282 = vpop.f32.mrb[0].mxu0
        %v4283 = vadd.f32 0.0, %v4282
        %4284 = vmatprep.mubr.bf16.mxu0 %v3901
        %4285 = vmatmul.mubr.bf16.gmra.mrb[0].mxu0 %v3900
        %v4286 = vpop.f32.mrb[0].mxu0
        %v4287 = vadd.f32 0.0, %v4286
        %v4288 = vpop.f32.mrb[0].mxu0
        %v4289 = vadd.f32 0.0, %v4288
        %v4290 = vpop.f32.mrb[0].mxu0
        %v4291 = vadd.f32 0.0, %v4290
        %v4292 = vpop.f32.mrb[0].mxu0
        %v4293 = vadd.f32 0.0, %v4292
        %4294 = vmatprep.mubr.bf16.mxu0 %v3903
        %4295 = vmatmul.mubr.bf16.gmra.mrb[0].mxu0 %v3902
        %v4296 = vpop.f32.mrb[0].mxu0
        %v4297 = vadd.f32 0.0, %v4296
        %v4298 = vpop.f32.mrb[0].mxu0
        %v4299 = vadd.f32 0.0, %v4298
        %v4300 = vpop.f32.mrb[0].mxu0
        %v4301 = vadd.f32 0.0, %v4300
        %v4302 = vpop.f32.mrb[0].mxu0
        %v4303 = vadd.f32 0.0, %v4302
        %4304 = vmatprep.mubr.bf16.mxu0 %v3905
        %4305 = vmatmul.mubr.bf16.gmra.mrb[0].mxu0 %v3904
        %v4306 = vpop.f32.mrb[0].mxu0
        %v4307 = vadd.f32 0.0, %v4306
        %v4308 = vpop.f32.mrb[0].mxu0
        %v4309 = vadd.f32 0.0, %v4308
        %v4310 = vpop.f32.mrb[0].mxu0
        %v4311 = vadd.f32 0.0, %v4310
        %v4312 = vpop.f32.mrb[0].mxu0
        %v4313 = vadd.f32 0.0, %v4312
        %4314 = vmatprep.mubr.bf16.mxu0 %v3907
        %4315 = vmatmul.mubr.bf16.gmra.mrb[0].mxu0 %v3906
        %v4316 = vpop.f32.mrb[0].mxu0
        %v4317 = vadd.f32 0.0, %v4316
        %v4318 = vpop.f32.mrb[0].mxu0
        %v4319 = vadd.f32 0.0, %v4318
        %v4320 = vpop.f32.mrb[0].mxu0
        %v4321 = vadd.f32 0.0, %v4320
        %v4322 = vpop.f32.mrb[0].mxu0
        %v4323 = vadd.f32 0.0, %v4322
        %4324 = vmatprep.mubr.bf16.mxu0 %v3909
        %4325 = vmatmul.mubr.bf16.gmra.mrb[0].mxu0 %v3908
        %v4326 = vpop.f32.mrb[0].mxu0
        %v4327 = vadd.f32 0.0, %v4326
        %v4328 = vpop.f32.mrb[0].mxu0
        %v4329 = vadd.f32 0.0, %v4328
        %v4330 = vpop.f32.mrb[0].mxu0
        %v4331 = vadd.f32 0.0, %v4330
        %v4332 = vpop.f32.mrb[0].mxu0
        %v4333 = vadd.f32 0.0, %v4332
        %4334 = vmatprep.mubr.bf16.mxu0 %v3911
        %4335 = vmatmul.mubr.bf16.gmra.mrb[0].mxu0 %v3910
        %v4336 = vpop.f32.mrb[0].mxu0
        %v4337 = vadd.f32 0.0, %v4336
        %v4338 = vpop.f32.mrb[0].mxu0
        %v4339 = vadd.f32 0.0, %v4338
        %v4340 = vpop.f32.mrb[0].mxu0
        %v4341 = vadd.f32 0.0, %v4340
        %v4342 = vpop.f32.mrb[0].mxu0
        %v4343 = vadd.f32 0.0, %v4342
        %4344 = vmatprep.mubr.bf16.mxu0 %v3913
        %4345 = vmatmul.mubr.bf16.gmra.mrb[0].mxu0 %v3912
        %v4346 = vpop.f32.mrb[0].mxu0
        %v4347 = vadd.f32 0.0, %v4346
        %v4348 = vpop.f32.mrb[0].mxu0
        %v4349 = vadd.f32 0.0, %v4348
        %v4350 = vpop.f32.mrb[0].mxu0
        %v4351 = vadd.f32 0.0, %v4350
        %v4352 = vpop.f32.mrb[0].mxu0
        %v4353 = vadd.f32 0.0, %v4352
        %4354 = vmatprep.mubr.bf16.mxu0 %v3915
        %4355 = vmatmul.mubr.bf16.gmra.mrb[0].mxu0 %v3914
        %v4356 = vpop.f32.mrb[0].mxu0
        %v4357 = vadd.f32 0.0, %v4356
        %v4358 = vpop.f32.mrb[0].mxu0
        %v4359 = vadd.f32 0.0, %v4358
        %v4360 = vpop.f32.mrb[0].mxu0
        %v4361 = vadd.f32 0.0, %v4360
        %v4362 = vpop.f32.mrb[0].mxu0
        %v4363 = vadd.f32 0.0, %v4362
        %4364 = vmatprep.mubr.bf16.mxu0 %v3917
        %4365 = vmatmul.mubr.bf16.gmra.mrb[0].mxu0 %v3916
        %v4366 = vpop.f32.mrb[0].mxu0
        %v4367 = vadd.f32 0.0, %v4366
        %v4368 = vpop.f32.mrb[0].mxu0
        %v4369 = vadd.f32 0.0, %v4368
        %v4370 = vpop.f32.mrb[0].mxu0
        %v4371 = vadd.f32 0.0, %v4370
        %v4372 = vpop.f32.mrb[0].mxu0
        %v4373 = vadd.f32 0.0, %v4372
        %4374 = vmatprep.mubr.bf16.mxu0 %v3919
        %4375 = vmatmul.mubr.bf16.gmra.mrb[0].mxu0 %v3918
        %v4376 = vpop.f32.mrb[0].mxu0
        %v4377 = vadd.f32 0.0, %v4376
        %v4378 = vpop.f32.mrb[0].mxu0
        %v4379 = vadd.f32 0.0, %v4378
        %v4380 = vpop.f32.mrb[0].mxu0
        %v4381 = vadd.f32 0.0, %v4380
        %v4382 = vpop.f32.mrb[0].mxu0
        %v4383 = vadd.f32 0.0, %v4382
        %4384 = vmatprep.mubr.bf16.mxu0 %v3921
        %4385 = vmatmul.mubr.bf16.gmra.mrb[0].mxu0 %v3920
        %v4386 = vpop.f32.mrb[0].mxu0
        %v4387 = vadd.f32 0.0, %v4386
        %v4388 = vpop.f32.mrb[0].mxu0
        %v4389 = vadd.f32 0.0, %v4388
        %v4390 = vpop.f32.mrb[0].mxu0
        %v4391 = vadd.f32 0.0, %v4390
        %v4392 = vpop.f32.mrb[0].mxu0
        %v4393 = vadd.f32 0.0, %v4392
        %4394 = vmatprep.mubr.bf16.mxu0 %v3923
        %4395 = vmatmul.mubr.bf16.gmra.mrb[0].mxu0 %v3922
        %v4396 = vpop.f32.mrb[0].mxu0
        %v4397 = vadd.f32 0.0, %v4396
        %v4398 = vpop.f32.mrb[0].mxu0
        %v4399 = vadd.f32 0.0, %v4398
        %v4400 = vpop.f32.mrb[0].mxu0
        %v4401 = vadd.f32 0.0, %v4400
        %v4402 = vpop.f32.mrb[0].mxu0
        %v4403 = vadd.f32 0.0, %v4402
        %4404 = vmatprep.mubr.bf16.mxu0 %v3925
        %4405 = vmatmul.mubr.bf16.gmra.mrb[0].mxu0 %v3924
        %v4406 = vpop.f32.mrb[0].mxu0
        %v4407 = vadd.f32 0.0, %v4406
        %v4408 = vpop.f32.mrb[0].mxu0
        %v4409 = vadd.f32 0.0, %v4408
        %v4410 = vpop.f32.mrb[0].mxu0
        %v4411 = vadd.f32 0.0, %v4410
        %v4412 = vpop.f32.mrb[0].mxu0
        %v4413 = vadd.f32 0.0, %v4412
        %4414 = vmatprep.mubr.bf16.mxu0 %v3927
        %4415 = vmatmul.mubr.bf16.gmra.mrb[0].mxu0 %v3926
        %v4416 = vpop.f32.mrb[0].mxu0
        %v4417 = vadd.f32 0.0, %v4416
        %v4418 = vpop.f32.mrb[0].mxu0
        %v4419 = vadd.f32 0.0, %v4418
        %v4420 = vpop.f32.mrb[0].mxu0
        %v4421 = vadd.f32 0.0, %v4420
        %v4422 = vpop.f32.mrb[0].mxu0
        %v4423 = vadd.f32 0.0, %v4422
        %4424 = vmatprep.mubr.bf16.mxu0 %v3929
        %4425 = vmatmul.mubr.bf16.gmra.mrb[0].mxu0 %v3928
        %v4426 = vpop.f32.mrb[0].mxu0
        %v4427 = vadd.f32 0.0, %v4426
        %v4428 = vpop.f32.mrb[0].mxu0
        %v4429 = vadd.f32 0.0, %v4428
        %v4430 = vpop.f32.mrb[0].mxu0
        %v4431 = vadd.f32 0.0, %v4430
        %v4432 = vpop.f32.mrb[0].mxu0
        %v4433 = vadd.f32 0.0, %v4432
        %4434 = vmatprep.mubr.bf16.mxu0 %v3931
        %4435 = vmatmul.mubr.bf16.gmra.mrb[0].mxu0 %v3930
        %v4436 = vpop.f32.mrb[0].mxu0
        %v4437 = vadd.f32 0.0, %v4436
        %v4438 = vpop.f32.mrb[0].mxu0
        %v4439 = vadd.f32 0.0, %v4438
        %v4440 = vpop.f32.mrb[0].mxu0
        %v4441 = vadd.f32 0.0, %v4440
        %v4442 = vpop.f32.mrb[0].mxu0
        %v4443 = vadd.f32 0.0, %v4442
        %4444 = vmatprep.mubr.bf16.mxu0 %v3933
        %4445 = vmatmul.mubr.bf16.gmra.mrb[0].mxu0 %v3932
        %v4446 = vpop.f32.mrb[0].mxu0
        %v4447 = vadd.f32 0.0, %v4446
        %v4448 = vpop.f32.mrb[0].mxu0
        %v4449 = vadd.f32 0.0, %v4448
        %v4450 = vpop.f32.mrb[0].mxu0
        %v4451 = vadd.f32 0.0, %v4450
        %v4452 = vpop.f32.mrb[0].mxu0
        %v4453 = vadd.f32 0.0, %v4452
        %4454 = vmatprep.mubr.bf16.mxu0 %v3935
        %4455 = vmatmul.mubr.bf16.gmra.mrb[0].mxu0 %v3934
        %v4456 = vpop.f32.mrb[0].mxu0
        %v4457 = vadd.f32 0.0, %v4456
        %v4458 = vpop.f32.mrb[0].mxu0
        %v4459 = vadd.f32 0.0, %v4458
        %v4460 = vpop.f32.mrb[0].mxu0
        %v4461 = vadd.f32 0.0, %v4460
        %v4462 = vpop.f32.mrb[0].mxu0
        %v4463 = vadd.f32 0.0, %v4462
        %4464 = vmatprep.mubr.bf16.mxu0 %v3937
        %4465 = vmatmul.mubr.bf16.gmra.mrb[0].mxu0 %v3936
        %v4466 = vpop.f32.mrb[0].mxu0
        %v4467 = vadd.f32 0.0, %v4466
        %v4468 = vpop.f32.mrb[0].mxu0
        %v4469 = vadd.f32 0.0, %v4468
        %v4470 = vpop.f32.mrb[0].mxu0
        %v4471 = vadd.f32 0.0, %v4470
        %v4472 = vpop.f32.mrb[0].mxu0
        %v4473 = vadd.f32 0.0, %v4472
        %4474 = vmatprep.mubr.bf16.mxu0 %v3939
        %4475 = vmatmul.mubr.bf16.gmra.mrb[0].mxu0 %v3938
        %v4476 = vpop.f32.mrb[0].mxu0
        %v4477 = vadd.f32 0.0, %v4476
        %v4478 = vpop.f32.mrb[0].mxu0
        %v4479 = vadd.f32 0.0, %v4478
        %v4480 = vpop.f32.mrb[0].mxu0
        %v4481 = vadd.f32 0.0, %v4480
        %v4482 = vpop.f32.mrb[0].mxu0
        %v4483 = vadd.f32 0.0, %v4482
        %4484 = vdwg.mxu0
        %v4485 = vadd.f32 %v3748, %v4167
        %v4486 = vadd.f32 %v3749, %v4169
        %v4487 = vadd.f32 %v3750, %v4171
        %v4488 = vadd.f32 %v3751, %v4173
        %v4489 = vadd.f32 %v3752, %v4177
        %v4490 = vadd.f32 %v3753, %v4179
        %v4491 = vadd.f32 %v3754, %v4181
        %v4492 = vadd.f32 %v3755, %v4183
        %v4493 = vadd.f32 %v3756, %v4187
        %v4494 = vadd.f32 %v3757, %v4189
        %v4495 = vadd.f32 %v3758, %v4191
        %v4496 = vadd.f32 %v3759, %v4193
        %v4497 = vadd.f32 %v3760, %v4197
        %v4498 = vadd.f32 %v3761, %v4199
        %v4499 = vadd.f32 %v3762, %v4201
        %v4500 = vadd.f32 %v3763, %v4203
        %v4501 = vadd.f32 %v3764, %v4207
        %v4502 = vadd.f32 %v3765, %v4209
        %v4503 = vadd.f32 %v3766, %v4211
        %v4504 = vadd.f32 %v3767, %v4213
        %v4505 = vadd.f32 %v3768, %v4217
        %v4506 = vadd.f32 %v3769, %v4219
        %v4507 = vadd.f32 %v3770, %v4221
        %v4508 = vadd.f32 %v3771, %v4223
        %v4509 = vadd.f32 %v3772, %v4227
        %v4510 = vadd.f32 %v3773, %v4229
        %v4511 = vadd.f32 %v3774, %v4231
        %v4512 = vadd.f32 %v3775, %v4233
        %v4513 = vadd.f32 %v3776, %v4237
        %v4514 = vadd.f32 %v3777, %v4239
        %v4515 = vadd.f32 %v3778, %v4241
        %v4516 = vadd.f32 %v3779, %v4243
        %v4517 = vadd.f32 %v3780, %v4247
        %v4518 = vadd.f32 %v3781, %v4249
        %v4519 = vadd.f32 %v3782, %v4251
        %v4520 = vadd.f32 %v3783, %v4253
        %v4521 = vadd.f32 %v3784, %v4257
        %v4522 = vadd.f32 %v3785, %v4259
        %v4523 = vadd.f32 %v3786, %v4261
        %v4524 = vadd.f32 %v3787, %v4263
        %v4525 = vadd.f32 %v3788, %v4267
        %v4526 = vadd.f32 %v3789, %v4269
        %v4527 = vadd.f32 %v3790, %v4271
        %v4528 = vadd.f32 %v3791, %v4273
        %v4529 = vadd.f32 %v3792, %v4277
        %v4530 = vadd.f32 %v3793, %v4279
        %v4531 = vadd.f32 %v3794, %v4281
        %v4532 = vadd.f32 %v3795, %v4283
        %v4533 = vadd.f32 %v3796, %v4287
        %v4534 = vadd.f32 %v3797, %v4289
        %v4535 = vadd.f32 %v3798, %v4291
        %v4536 = vadd.f32 %v3799, %v4293
        %v4537 = vadd.f32 %v3800, %v4297
        %v4538 = vadd.f32 %v3801, %v4299
        %v4539 = vadd.f32 %v3802, %v4301
        %v4540 = vadd.f32 %v3803, %v4303
        %v4541 = vadd.f32 %v3804, %v4307
        %v4542 = vadd.f32 %v3805, %v4309
        %v4543 = vadd.f32 %v3806, %v4311
        %v4544 = vadd.f32 %v3807, %v4313
        %v4545 = vadd.f32 %v3808, %v4317
        %v4546 = vadd.f32 %v3809, %v4319
        %v4547 = vadd.f32 %v3810, %v4321
        %v4548 = vadd.f32 %v3811, %v4323
        %v4549 = vadd.f32 %v3812, %v4327
        %v4550 = vadd.f32 %v3813, %v4329
        %v4551 = vadd.f32 %v3814, %v4331
        %v4552 = vadd.f32 %v3815, %v4333
        %v4553 = vadd.f32 %v3816, %v4337
        %v4554 = vadd.f32 %v3817, %v4339
        %v4555 = vadd.f32 %v3818, %v4341
        %v4556 = vadd.f32 %v3819, %v4343
        %v4557 = vadd.f32 %v3820, %v4347
        %v4558 = vadd.f32 %v3821, %v4349
        %v4559 = vadd.f32 %v3822, %v4351
        %v4560 = vadd.f32 %v3823, %v4353
        %v4561 = vadd.f32 %v3824, %v4357
        %v4562 = vadd.f32 %v3825, %v4359
        %v4563 = vadd.f32 %v3826, %v4361
        %v4564 = vadd.f32 %v3827, %v4363
        %v4565 = vadd.f32 %v3828, %v4367
        %v4566 = vadd.f32 %v3829, %v4369
        %v4567 = vadd.f32 %v3830, %v4371
        %v4568 = vadd.f32 %v3831, %v4373
        %v4569 = vadd.f32 %v3832, %v4377
        %v4570 = vadd.f32 %v3833, %v4379
        %v4571 = vadd.f32 %v3834, %v4381
        %v4572 = vadd.f32 %v3835, %v4383
        %v4573 = vadd.f32 %v3836, %v4387
        %v4574 = vadd.f32 %v3837, %v4389
        %v4575 = vadd.f32 %v3838, %v4391
        %v4576 = vadd.f32 %v3839, %v4393
        %v4577 = vadd.f32 %v3840, %v4397
        %v4578 = vadd.f32 %v3841, %v4399
        %v4579 = vadd.f32 %v3842, %v4401
        %v4580 = vadd.f32 %v3843, %v4403
        %v4581 = vadd.f32 %v3844, %v4407
        %v4582 = vadd.f32 %v3845, %v4409
        %v4583 = vadd.f32 %v3846, %v4411
        %v4584 = vadd.f32 %v3847, %v4413
        %v4585 = vadd.f32 %v3848, %v4417
        %v4586 = vadd.f32 %v3849, %v4419
        %v4587 = vadd.f32 %v3850, %v4421
        %v4588 = vadd.f32 %v3851, %v4423
        %v4589 = vadd.f32 %v3852, %v4427
        %v4590 = vadd.f32 %v3853, %v4429
        %v4591 = vadd.f32 %v3854, %v4431
        %v4592 = vadd.f32 %v3855, %v4433
        %v4593 = vadd.f32 %v3856, %v4437
        %v4594 = vadd.f32 %v3857, %v4439
        %v4595 = vadd.f32 %v3858, %v4441
        %v4596 = vadd.f32 %v3859, %v4443
        %v4597 = vadd.f32 %v3860, %v4447
        %v4598 = vadd.f32 %v3861, %v4449
        %v4599 = vadd.f32 %v3862, %v4451
        %v4600 = vadd.f32 %v3863, %v4453
        %v4601 = vadd.f32 %v3864, %v4457
        %v4602 = vadd.f32 %v3865, %v4459
        %v4603 = vadd.f32 %v3866, %v4461
        %v4604 = vadd.f32 %v3867, %v4463
        %v4605 = vadd.f32 %v3868, %v4467
        %v4606 = vadd.f32 %v3869, %v4469
        %v4607 = vadd.f32 %v3870, %v4471
        %v4608 = vadd.f32 %v3871, %v4473
        %v4609 = vadd.f32 %v3872, %v4477
        %v4610 = vadd.f32 %v3873, %v4479
        %v4611 = vadd.f32 %v3874, %v4481
        %v4612 = vadd.f32 %v3875, %v4483
        %4613 = vst [vmem:[%s393] sm:$0xff] %v4485
        %4614 = vst [vmem:[%s393 + $0x8] sm:$0xff] %v4486
        %4615 = vst [vmem:[%s393 + $0x10] sm:$0xff] %v4487
        %4616 = vst [vmem:[%s393 + $0x18] sm:$0xff] %v4488
        %4617 = vst [vmem:[%s393 + $0x20] sm:$0xff] %v4489
        %4618 = vst [vmem:[%s393 + $0x28] sm:$0xff] %v4490
        %4619 = vst [vmem:[%s393 + $0x30] sm:$0xff] %v4491
        %4620 = vst [vmem:[%s393 + $0x38] sm:$0xff] %v4492
        %4621 = vst [vmem:[%s393 + $0x40] sm:$0xff] %v4493
        %4622 = vst [vmem:[%s393 + $0x48] sm:$0xff] %v4494
        %4623 = vst [vmem:[%s393 + $0x50] sm:$0xff] %v4495
        %4624 = vst [vmem:[%s393 + $0x58] sm:$0xff] %v4496
        %4625 = vst [vmem:[%s393 + $0x60] sm:$0xff] %v4497
        %4626 = vst [vmem:[%s393 + $0x68] sm:$0xff] %v4498
        %4627 = vst [vmem:[%s393 + $0x70] sm:$0xff] %v4499
        %4628 = vst [vmem:[%s393 + $0x78] sm:$0xff] %v4500
        %4629 = vst [vmem:[%s393 + $0x80] sm:$0xff] %v4501
        %4630 = vst [vmem:[%s393 + $0x88] sm:$0xff] %v4502
        %4631 = vst [vmem:[%s393 + $0x90] sm:$0xff] %v4503
        %4632 = vst [vmem:[%s393 + $0x98] sm:$0xff] %v4504
        %4633 = vst [vmem:[%s393 + $0xa0] sm:$0xff] %v4505
        %4634 = vst [vmem:[%s393 + $0xa8] sm:$0xff] %v4506
        %4635 = vst [vmem:[%s393 + $0xb0] sm:$0xff] %v4507
        %4636 = vst [vmem:[%s393 + $0xb8] sm:$0xff] %v4508
        %4637 = vst [vmem:[%s393 + $0xc0] sm:$0xff] %v4509
        %4638 = vst [vmem:[%s393 + $0xc8] sm:$0xff] %v4510
        %4639 = vst [vmem:[%s393 + $0xd0] sm:$0xff] %v4511
        %4640 = vst [vmem:[%s393 + $0xd8] sm:$0xff] %v4512
        %4641 = vst [vmem:[%s393 + $0xe0] sm:$0xff] %v4513
        %4642 = vst [vmem:[%s393 + $0xe8] sm:$0xff] %v4514
        %4643 = vst [vmem:[%s393 + $0xf0] sm:$0xff] %v4515
        %4644 = vst [vmem:[%s393 + $0xf8] sm:$0xff] %v4516
        %4645 = vst [vmem:[%s393 + $0x100] sm:$0xff] %v4517
        %4646 = vst [vmem:[%s393 + $0x108] sm:$0xff] %v4518
        %4647 = vst [vmem:[%s393 + $0x110] sm:$0xff] %v4519
        %4648 = vst [vmem:[%s393 + $0x118] sm:$0xff] %v4520
        %4649 = vst [vmem:[%s393 + $0x120] sm:$0xff] %v4521
        %4650 = vst [vmem:[%s393 + $0x128] sm:$0xff] %v4522
        %4651 = vst [vmem:[%s393 + $0x130] sm:$0xff] %v4523
        %4652 = vst [vmem:[%s393 + $0x138] sm:$0xff] %v4524
        %4653 = vst [vmem:[%s393 + $0x140] sm:$0xff] %v4525
        %4654 = vst [vmem:[%s393 + $0x148] sm:$0xff] %v4526
        %4655 = vst [vmem:[%s393 + $0x150] sm:$0xff] %v4527
        %4656 = vst [vmem:[%s393 + $0x158] sm:$0xff] %v4528
        %4657 = vst [vmem:[%s393 + $0x160] sm:$0xff] %v4529
        %4658 = vst [vmem:[%s393 + $0x168] sm:$0xff] %v4530
        %4659 = vst [vmem:[%s393 + $0x170] sm:$0xff] %v4531
        %4660 = vst [vmem:[%s393 + $0x178] sm:$0xff] %v4532
        %4661 = vst [vmem:[%s393 + $0x180] sm:$0xff] %v4533
        %4662 = vst [vmem:[%s393 + $0x188] sm:$0xff] %v4534
        %4663 = vst [vmem:[%s393 + $0x190] sm:$0xff] %v4535
        %4664 = vst [vmem:[%s393 + $0x198] sm:$0xff] %v4536
        %4665 = vst [vmem:[%s393 + $0x1a0] sm:$0xff] %v4537
        %4666 = vst [vmem:[%s393 + $0x1a8] sm:$0xff] %v4538
        %4667 = vst [vmem:[%s393 + $0x1b0] sm:$0xff] %v4539
        %4668 = vst [vmem:[%s393 + $0x1b8] sm:$0xff] %v4540
        %4669 = vst [vmem:[%s393 + $0x1c0] sm:$0xff] %v4541
        %4670 = vst [vmem:[%s393 + $0x1c8] sm:$0xff] %v4542
        %4671 = vst [vmem:[%s393 + $0x1d0] sm:$0xff] %v4543
        %4672 = vst [vmem:[%s393 + $0x1d8] sm:$0xff] %v4544
        %4673 = vst [vmem:[%s393 + $0x1e0] sm:$0xff] %v4545
        %4674 = vst [vmem:[%s393 + $0x1e8] sm:$0xff] %v4546
        %4675 = vst [vmem:[%s393 + $0x1f0] sm:$0xff] %v4547
        %4676 = vst [vmem:[%s393 + $0x1f8] sm:$0xff] %v4548
        %4677 = vst [vmem:[%s393 + $0x200] sm:$0xff] %v4549
        %4678 = vst [vmem:[%s393 + $0x208] sm:$0xff] %v4550
        %4679 = vst [vmem:[%s393 + $0x210] sm:$0xff] %v4551
        %4680 = vst [vmem:[%s393 + $0x218] sm:$0xff] %v4552
        %4681 = vst [vmem:[%s393 + $0x220] sm:$0xff] %v4553
        %4682 = vst [vmem:[%s393 + $0x228] sm:$0xff] %v4554
        %4683 = vst [vmem:[%s393 + $0x230] sm:$0xff] %v4555
        %4684 = vst [vmem:[%s393 + $0x238] sm:$0xff] %v4556
        %4685 = vst [vmem:[%s393 + $0x240] sm:$0xff] %v4557
        %4686 = vst [vmem:[%s393 + $0x248] sm:$0xff] %v4558
        %4687 = vst [vmem:[%s393 + $0x250] sm:$0xff] %v4559
        %4688 = vst [vmem:[%s393 + $0x258] sm:$0xff] %v4560
        %4689 = vst [vmem:[%s393 + $0x260] sm:$0xff] %v4561
        %4690 = vst [vmem:[%s393 + $0x268] sm:$0xff] %v4562
        %4691 = vst [vmem:[%s393 + $0x270] sm:$0xff] %v4563
        %4692 = vst [vmem:[%s393 + $0x278] sm:$0xff] %v4564
        %4693 = vst [vmem:[%s393 + $0x280] sm:$0xff] %v4565
        %4694 = vst [vmem:[%s393 + $0x288] sm:$0xff] %v4566
        %4695 = vst [vmem:[%s393 + $0x290] sm:$0xff] %v4567
        %4696 = vst [vmem:[%s393 + $0x298] sm:$0xff] %v4568
        %4697 = vst [vmem:[%s393 + $0x2a0] sm:$0xff] %v4569
        %4698 = vst [vmem:[%s393 + $0x2a8] sm:$0xff] %v4570
        %4699 = vst [vmem:[%s393 + $0x2b0] sm:$0xff] %v4571
        %4700 = vst [vmem:[%s393 + $0x2b8] sm:$0xff] %v4572
        %4701 = vst [vmem:[%s393 + $0x2c0] sm:$0xff] %v4573
        %4702 = vst [vmem:[%s393 + $0x2c8] sm:$0xff] %v4574
        %4703 = vst [vmem:[%s393 + $0x2d0] sm:$0xff] %v4575
        %4704 = vst [vmem:[%s393 + $0x2d8] sm:$0xff] %v4576
        %4705 = vst [vmem:[%s393 + $0x2e0] sm:$0xff] %v4577
        %4706 = vst [vmem:[%s393 + $0x2e8] sm:$0xff] %v4578
        %4707 = vst [vmem:[%s393 + $0x2f0] sm:$0xff] %v4579
        %4708 = vst [vmem:[%s393 + $0x2f8] sm:$0xff] %v4580
        %4709 = vst [vmem:[%s393 + $0x300] sm:$0xff] %v4581
        %4710 = vst [vmem:[%s393 + $0x308] sm:$0xff] %v4582
        %4711 = vst [vmem:[%s393 + $0x310] sm:$0xff] %v4583
        %4712 = vst [vmem:[%s393 + $0x318] sm:$0xff] %v4584
        %4713 = vst [vmem:[%s393 + $0x320] sm:$0xff] %v4585
        %4714 = vst [vmem:[%s393 + $0x328] sm:$0xff] %v4586
        %4715 = vst [vmem:[%s393 + $0x330] sm:$0xff] %v4587
        %4716 = vst [vmem:[%s393 + $0x338] sm:$0xff] %v4588
        %4717 = vst [vmem:[%s393 + $0x340] sm:$0xff] %v4589
        %4718 = vst [vmem:[%s393 + $0x348] sm:$0xff] %v4590
        %4719 = vst [vmem:[%s393 + $0x350] sm:$0xff] %v4591
        %4720 = vst [vmem:[%s393 + $0x358] sm:$0xff] %v4592
        %4721 = vst [vmem:[%s393 + $0x360] sm:$0xff] %v4593
        %4722 = vst [vmem:[%s393 + $0x368] sm:$0xff] %v4594
        %4723 = vst [vmem:[%s393 + $0x370] sm:$0xff] %v4595
        %4724 = vst [vmem:[%s393 + $0x378] sm:$0xff] %v4596
        %4725 = vst [vmem:[%s393 + $0x380] sm:$0xff] %v4597
        %4726 = vst [vmem:[%s393 + $0x388] sm:$0xff] %v4598
        %4727 = vst [vmem:[%s393 + $0x390] sm:$0xff] %v4599
        %4728 = vst [vmem:[%s393 + $0x398] sm:$0xff] %v4600
        %4729 = vst [vmem:[%s393 + $0x3a0] sm:$0xff] %v4601
        %4730 = vst [vmem:[%s393 + $0x3a8] sm:$0xff] %v4602
        %4731 = vst [vmem:[%s393 + $0x3b0] sm:$0xff] %v4603
        %4732 = vst [vmem:[%s393 + $0x3b8] sm:$0xff] %v4604
        %4733 = vst [vmem:[%s393 + $0x3c0] sm:$0xff] %v4605
        %4734 = vst [vmem:[%s393 + $0x3c8] sm:$0xff] %v4606
        %4735 = vst [vmem:[%s393 + $0x3d0] sm:$0xff] %v4607
        %4736 = vst [vmem:[%s393 + $0x3d8] sm:$0xff] %v4608
        %4737 = vst [vmem:[%s393 + $0x3e0] sm:$0xff] %v4609
        %4738 = vst [vmem:[%s393 + $0x3e8] sm:$0xff] %v4610
        %4739 = vst [vmem:[%s393 + $0x3f0] sm:$0xff] %v4611
        %4740 = vst [vmem:[%s393 + $0x3f8] sm:$0xff] %v4612
        %p4741 = scmp.eq.s32.totalorder %s39, 3
        // Predicated region
        $region57: #{tpu_custom_call.1} parent=35 // pred_check
          %p4742 = pneg %p4741
        $region58: #{tpu_custom_call.1} parent=35 // pred_check_branch
          %4744 = sbr.rel (%p4742) target = $region60
        $region59: #{tpu_custom_call.1} parent=35 // pred_region
          %v4745 = vld [vmem:[#allocation2] sm:$0xff]
          %v4746 = vld [vmem:[#allocation2 + $0x8] sm:$0xff]
          %v4747 = vld [vmem:[#allocation2 + $0x10] sm:$0xff]
          %v4748 = vld [vmem:[#allocation2 + $0x18] sm:$0xff]
          %v4749 = vld [vmem:[#allocation2 + $0x20] sm:$0xff]
          %v4750 = vld [vmem:[#allocation2 + $0x28] sm:$0xff]
          %v4751 = vld [vmem:[#allocation2 + $0x30] sm:$0xff]
          %v4752 = vld [vmem:[#allocation2 + $0x38] sm:$0xff]
          %v4753 = vld [vmem:[#allocation2 + $0x40] sm:$0xff]
          %v4754 = vld [vmem:[#allocation2 + $0x48] sm:$0xff]
          %v4755 = vld [vmem:[#allocation2 + $0x50] sm:$0xff]
          %v4756 = vld [vmem:[#allocation2 + $0x58] sm:$0xff]
          %v4757 = vld [vmem:[#allocation2 + $0x60] sm:$0xff]
          %v4758 = vld [vmem:[#allocation2 + $0x68] sm:$0xff]
          %v4759 = vld [vmem:[#allocation2 + $0x70] sm:$0xff]
          %v4760 = vld [vmem:[#allocation2 + $0x78] sm:$0xff]
          %v4761 = vld [vmem:[#allocation2 + $0x80] sm:$0xff]
          %v4762 = vld [vmem:[#allocation2 + $0x88] sm:$0xff]
          %v4763 = vld [vmem:[#allocation2 + $0x90] sm:$0xff]
          %v4764 = vld [vmem:[#allocation2 + $0x98] sm:$0xff]
          %v4765 = vld [vmem:[#allocation2 + $0xa0] sm:$0xff]
          %v4766 = vld [vmem:[#allocation2 + $0xa8] sm:$0xff]
          %v4767 = vld [vmem:[#allocation2 + $0xb0] sm:$0xff]
          %v4768 = vld [vmem:[#allocation2 + $0xb8] sm:$0xff]
          %v4769 = vld [vmem:[#allocation2 + $0xc0] sm:$0xff]
          %v4770 = vld [vmem:[#allocation2 + $0xc8] sm:$0xff]
          %v4771 = vld [vmem:[#allocation2 + $0xd0] sm:$0xff]
          %v4772 = vld [vmem:[#allocation2 + $0xd8] sm:$0xff]
          %v4773 = vld [vmem:[#allocation2 + $0xe0] sm:$0xff]
          %v4774 = vld [vmem:[#allocation2 + $0xe8] sm:$0xff]
          %v4775 = vld [vmem:[#allocation2 + $0xf0] sm:$0xff]
          %v4776 = vld [vmem:[#allocation2 + $0xf8] sm:$0xff]
          %v4777 = vld [vmem:[#allocation2 + $0x100] sm:$0xff]
          %v4778 = vld [vmem:[#allocation2 + $0x108] sm:$0xff]
          %v4779 = vld [vmem:[#allocation2 + $0x110] sm:$0xff]
          %v4780 = vld [vmem:[#allocation2 + $0x118] sm:$0xff]
          %v4781 = vld [vmem:[#allocation2 + $0x120] sm:$0xff]
          %v4782 = vld [vmem:[#allocation2 + $0x128] sm:$0xff]
          %v4783 = vld [vmem:[#allocation2 + $0x130] sm:$0xff]
          %v4784 = vld [vmem:[#allocation2 + $0x138] sm:$0xff]
          %v4785 = vld [vmem:[#allocation2 + $0x140] sm:$0xff]
          %v4786 = vld [vmem:[#allocation2 + $0x148] sm:$0xff]
          %v4787 = vld [vmem:[#allocation2 + $0x150] sm:$0xff]
          %v4788 = vld [vmem:[#allocation2 + $0x158] sm:$0xff]
          %v4789 = vld [vmem:[#allocation2 + $0x160] sm:$0xff]
          %v4790 = vld [vmem:[#allocation2 + $0x168] sm:$0xff]
          %v4791 = vld [vmem:[#allocation2 + $0x170] sm:$0xff]
          %v4792 = vld [vmem:[#allocation2 + $0x178] sm:$0xff]
          %v4793 = vld [vmem:[#allocation2 + $0x180] sm:$0xff]
          %v4794 = vld [vmem:[#allocation2 + $0x188] sm:$0xff]
          %v4795 = vld [vmem:[#allocation2 + $0x190] sm:$0xff]
          %v4796 = vld [vmem:[#allocation2 + $0x198] sm:$0xff]
          %v4797 = vld [vmem:[#allocation2 + $0x1a0] sm:$0xff]
          %v4798 = vld [vmem:[#allocation2 + $0x1a8] sm:$0xff]
          %v4799 = vld [vmem:[#allocation2 + $0x1b0] sm:$0xff]
          %v4800 = vld [vmem:[#allocation2 + $0x1b8] sm:$0xff]
          %v4801 = vld [vmem:[#allocation2 + $0x1c0] sm:$0xff]
          %v4802 = vld [vmem:[#allocation2 + $0x1c8] sm:$0xff]
          %v4803 = vld [vmem:[#allocation2 + $0x1d0] sm:$0xff]
          %v4804 = vld [vmem:[#allocation2 + $0x1d8] sm:$0xff]
          %v4805 = vld [vmem:[#allocation2 + $0x1e0] sm:$0xff]
          %v4806 = vld [vmem:[#allocation2 + $0x1e8] sm:$0xff]
          %v4807 = vld [vmem:[#allocation2 + $0x1f0] sm:$0xff]
          %v4808 = vld [vmem:[#allocation2 + $0x1f8] sm:$0xff]
          %v4809 = vadd.f32 %v4745, 1e-12
          %v4810 = vadd.f32 %v4746, 1e-12
          %v4811 = vadd.f32 %v4747, 1e-12
          %v4812 = vadd.f32 %v4748, 1e-12
          %v4813 = vadd.f32 %v4749, 1e-12
          %v4814 = vadd.f32 %v4750, 1e-12
          %v4815 = vadd.f32 %v4751, 1e-12
          %v4816 = vadd.f32 %v4752, 1e-12
          %v4817 = vadd.f32 %v4753, 1e-12
          %v4818 = vadd.f32 %v4754, 1e-12
          %v4819 = vadd.f32 %v4755, 1e-12
          %v4820 = vadd.f32 %v4756, 1e-12
          %v4821 = vadd.f32 %v4757, 1e-12
          %v4822 = vadd.f32 %v4758, 1e-12
          %v4823 = vadd.f32 %v4759, 1e-12
          %v4824 = vadd.f32 %v4760, 1e-12
          %v4825 = vadd.f32 %v4761, 1e-12
          %v4826 = vadd.f32 %v4762, 1e-12
          %v4827 = vadd.f32 %v4763, 1e-12
          %v4828 = vadd.f32 %v4764, 1e-12
          %v4829 = vadd.f32 %v4765, 1e-12
          %v4830 = vadd.f32 %v4766, 1e-12
          %v4831 = vadd.f32 %v4767, 1e-12
          %v4832 = vadd.f32 %v4768, 1e-12
          %v4833 = vadd.f32 %v4769, 1e-12
          %v4834 = vadd.f32 %v4770, 1e-12
          %v4835 = vadd.f32 %v4771, 1e-12
          %v4836 = vadd.f32 %v4772, 1e-12
          %v4837 = vadd.f32 %v4773, 1e-12
          %v4838 = vadd.f32 %v4774, 1e-12
          %v4839 = vadd.f32 %v4775, 1e-12
          %v4840 = vadd.f32 %v4776, 1e-12
          %v4841 = vadd.f32 %v4777, 1e-12
          %v4842 = vadd.f32 %v4778, 1e-12
          %v4843 = vadd.f32 %v4779, 1e-12
          %v4844 = vadd.f32 %v4780, 1e-12
          %v4845 = vadd.f32 %v4781, 1e-12
          %v4846 = vadd.f32 %v4782, 1e-12
          %v4847 = vadd.f32 %v4783, 1e-12
          %v4848 = vadd.f32 %v4784, 1e-12
          %v4849 = vadd.f32 %v4785, 1e-12
          %v4850 = vadd.f32 %v4786, 1e-12
          %v4851 = vadd.f32 %v4787, 1e-12
          %v4852 = vadd.f32 %v4788, 1e-12
          %v4853 = vadd.f32 %v4789, 1e-12
          %v4854 = vadd.f32 %v4790, 1e-12
          %v4855 = vadd.f32 %v4791, 1e-12
          %v4856 = vadd.f32 %v4792, 1e-12
          %v4857 = vadd.f32 %v4793, 1e-12
          %v4858 = vadd.f32 %v4794, 1e-12
          %v4859 = vadd.f32 %v4795, 1e-12
          %v4860 = vadd.f32 %v4796, 1e-12
          %v4861 = vadd.f32 %v4797, 1e-12
          %v4862 = vadd.f32 %v4798, 1e-12
          %v4863 = vadd.f32 %v4799, 1e-12
          %v4864 = vadd.f32 %v4800, 1e-12
          %v4865 = vadd.f32 %v4801, 1e-12
          %v4866 = vadd.f32 %v4802, 1e-12
          %v4867 = vadd.f32 %v4803, 1e-12
          %v4868 = vadd.f32 %v4804, 1e-12
          %v4869 = vadd.f32 %v4805, 1e-12
          %v4870 = vadd.f32 %v4806, 1e-12
          %v4871 = vadd.f32 %v4807, 1e-12
          %v4872 = vadd.f32 %v4808, 1e-12
          %v4873 = vrcp.pop %v4809
          %v4874 = vmul.f32 1.0, %v4873
          %v4875 = vrcp.pop %v4810
          %v4876 = vmul.f32 1.0, %v4875
          %v4877 = vrcp.pop %v4811
          %v4878 = vmul.f32 1.0, %v4877
          %v4879 = vrcp.pop %v4812
          %v4880 = vmul.f32 1.0, %v4879
          %v4881 = vrcp.pop %v4813
          %v4882 = vmul.f32 1.0, %v4881
          %v4883 = vrcp.pop %v4814
          %v4884 = vmul.f32 1.0, %v4883
          %v4885 = vrcp.pop %v4815
          %v4886 = vmul.f32 1.0, %v4885
          %v4887 = vrcp.pop %v4816
          %v4888 = vmul.f32 1.0, %v4887
          %v4889 = vrcp.pop %v4817
          %v4890 = vmul.f32 1.0, %v4889
          %v4891 = vrcp.pop %v4818
          %v4892 = vmul.f32 1.0, %v4891
          %v4893 = vrcp.pop %v4819
          %v4894 = vmul.f32 1.0, %v4893
          %v4895 = vrcp.pop %v4820
          %v4896 = vmul.f32 1.0, %v4895
          %v4897 = vrcp.pop %v4821
          %v4898 = vmul.f32 1.0, %v4897
          %v4899 = vrcp.pop %v4822
          %v4900 = vmul.f32 1.0, %v4899
          %v4901 = vrcp.pop %v4823
          %v4902 = vmul.f32 1.0, %v4901
          %v4903 = vrcp.pop %v4824
          %v4904 = vmul.f32 1.0, %v4903
          %v4905 = vrcp.pop %v4825
          %v4906 = vmul.f32 1.0, %v4905
          %v4907 = vrcp.pop %v4826
          %v4908 = vmul.f32 1.0, %v4907
          %v4909 = vrcp.pop %v4827
          %v4910 = vmul.f32 1.0, %v4909
          %v4911 = vrcp.pop %v4828
          %v4912 = vmul.f32 1.0, %v4911
          %v4913 = vrcp.pop %v4829
          %v4914 = vmul.f32 1.0, %v4913
          %v4915 = vrcp.pop %v4830
          %v4916 = vmul.f32 1.0, %v4915
          %v4917 = vrcp.pop %v4831
          %v4918 = vmul.f32 1.0, %v4917
          %v4919 = vrcp.pop %v4832
          %v4920 = vmul.f32 1.0, %v4919
          %v4921 = vrcp.pop %v4833
          %v4922 = vmul.f32 1.0, %v4921
          %v4923 = vrcp.pop %v4834
          %v4924 = vmul.f32 1.0, %v4923
          %v4925 = vrcp.pop %v4835
          %v4926 = vmul.f32 1.0, %v4925
          %v4927 = vrcp.pop %v4836
          %v4928 = vmul.f32 1.0, %v4927
          %v4929 = vrcp.pop %v4837
          %v4930 = vmul.f32 1.0, %v4929
          %v4931 = vrcp.pop %v4838
          %v4932 = vmul.f32 1.0, %v4931
          %v4933 = vrcp.pop %v4839
          %v4934 = vmul.f32 1.0, %v4933
          %v4935 = vrcp.pop %v4840
          %v4936 = vmul.f32 1.0, %v4935
          %v4937 = vrcp.pop %v4841
          %v4938 = vmul.f32 1.0, %v4937
          %v4939 = vrcp.pop %v4842
          %v4940 = vmul.f32 1.0, %v4939
          %v4941 = vrcp.pop %v4843
          %v4942 = vmul.f32 1.0, %v4941
          %v4943 = vrcp.pop %v4844
          %v4944 = vmul.f32 1.0, %v4943
          %v4945 = vrcp.pop %v4845
          %v4946 = vmul.f32 1.0, %v4945
          %v4947 = vrcp.pop %v4846
          %v4948 = vmul.f32 1.0, %v4947
          %v4949 = vrcp.pop %v4847
          %v4950 = vmul.f32 1.0, %v4949
          %v4951 = vrcp.pop %v4848
          %v4952 = vmul.f32 1.0, %v4951
          %v4953 = vrcp.pop %v4849
          %v4954 = vmul.f32 1.0, %v4953
          %v4955 = vrcp.pop %v4850
          %v4956 = vmul.f32 1.0, %v4955
          %v4957 = vrcp.pop %v4851
          %v4958 = vmul.f32 1.0, %v4957
          %v4959 = vrcp.pop %v4852
          %v4960 = vmul.f32 1.0, %v4959
          %v4961 = vrcp.pop %v4853
          %v4962 = vmul.f32 1.0, %v4961
          %v4963 = vrcp.pop %v4854
          %v4964 = vmul.f32 1.0, %v4963
          %v4965 = vrcp.pop %v4855
          %v4966 = vmul.f32 1.0, %v4965
          %v4967 = vrcp.pop %v4856
          %v4968 = vmul.f32 1.0, %v4967
          %v4969 = vrcp.pop %v4857
          %v4970 = vmul.f32 1.0, %v4969
          %v4971 = vrcp.pop %v4858
          %v4972 = vmul.f32 1.0, %v4971
          %v4973 = vrcp.pop %v4859
          %v4974 = vmul.f32 1.0, %v4973
          %v4975 = vrcp.pop %v4860
          %v4976 = vmul.f32 1.0, %v4975
          %v4977 = vrcp.pop %v4861
          %v4978 = vmul.f32 1.0, %v4977
          %v4979 = vrcp.pop %v4862
          %v4980 = vmul.f32 1.0, %v4979
          %v4981 = vrcp.pop %v4863
          %v4982 = vmul.f32 1.0, %v4981
          %v4983 = vrcp.pop %v4864
          %v4984 = vmul.f32 1.0, %v4983
          %v4985 = vrcp.pop %v4865
          %v4986 = vmul.f32 1.0, %v4985
          %v4987 = vrcp.pop %v4866
          %v4988 = vmul.f32 1.0, %v4987
          %v4989 = vrcp.pop %v4867
          %v4990 = vmul.f32 1.0, %v4989
          %v4991 = vrcp.pop %v4868
          %v4992 = vmul.f32 1.0, %v4991
          %v4993 = vrcp.pop %v4869
          %v4994 = vmul.f32 1.0, %v4993
          %v4995 = vrcp.pop %v4870
          %v4996 = vmul.f32 1.0, %v4995
          %v4997 = vrcp.pop %v4871
          %v4998 = vmul.f32 1.0, %v4997
          %v4999 = vrcp.pop %v4872
          %v5000 = vmul.f32 1.0, %v4999
          %v5001 = vld [vmem:[#allocation3] sm:$0xff]
          %v5002 = vld [vmem:[#allocation3 + $0x8] sm:$0xff]
          %v5003 = vld [vmem:[#allocation3 + $0x10] sm:$0xff]
          %v5004 = vld [vmem:[#allocation3 + $0x18] sm:$0xff]
          %v5005 = vld [vmem:[#allocation3 + $0x20] sm:$0xff]
          %v5006 = vld [vmem:[#allocation3 + $0x28] sm:$0xff]
          %v5007 = vld [vmem:[#allocation3 + $0x30] sm:$0xff]
          %v5008 = vld [vmem:[#allocation3 + $0x38] sm:$0xff]
          %v5009 = vld [vmem:[#allocation3 + $0x40] sm:$0xff]
          %v5010 = vld [vmem:[#allocation3 + $0x48] sm:$0xff]
          %v5011 = vld [vmem:[#allocation3 + $0x50] sm:$0xff]
          %v5012 = vld [vmem:[#allocation3 + $0x58] sm:$0xff]
          %v5013 = vld [vmem:[#allocation3 + $0x60] sm:$0xff]
          %v5014 = vld [vmem:[#allocation3 + $0x68] sm:$0xff]
          %v5015 = vld [vmem:[#allocation3 + $0x70] sm:$0xff]
          %v5016 = vld [vmem:[#allocation3 + $0x78] sm:$0xff]
          %v5017 = vld [vmem:[#allocation3 + $0x80] sm:$0xff]
          %v5018 = vld [vmem:[#allocation3 + $0x88] sm:$0xff]
          %v5019 = vld [vmem:[#allocation3 + $0x90] sm:$0xff]
          %v5020 = vld [vmem:[#allocation3 + $0x98] sm:$0xff]
          %v5021 = vld [vmem:[#allocation3 + $0xa0] sm:$0xff]
          %v5022 = vld [vmem:[#allocation3 + $0xa8] sm:$0xff]
          %v5023 = vld [vmem:[#allocation3 + $0xb0] sm:$0xff]
          %v5024 = vld [vmem:[#allocation3 + $0xb8] sm:$0xff]
          %v5025 = vld [vmem:[#allocation3 + $0xc0] sm:$0xff]
          %v5026 = vld [vmem:[#allocation3 + $0xc8] sm:$0xff]
          %v5027 = vld [vmem:[#allocation3 + $0xd0] sm:$0xff]
          %v5028 = vld [vmem:[#allocation3 + $0xd8] sm:$0xff]
          %v5029 = vld [vmem:[#allocation3 + $0xe0] sm:$0xff]
          %v5030 = vld [vmem:[#allocation3 + $0xe8] sm:$0xff]
          %v5031 = vld [vmem:[#allocation3 + $0xf0] sm:$0xff]
          %v5032 = vld [vmem:[#allocation3 + $0xf8] sm:$0xff]
          %v5033 = vld [vmem:[#allocation3 + $0x100] sm:$0xff]
          %v5034 = vld [vmem:[#allocation3 + $0x108] sm:$0xff]
          %v5035 = vld [vmem:[#allocation3 + $0x110] sm:$0xff]
          %v5036 = vld [vmem:[#allocation3 + $0x118] sm:$0xff]
          %v5037 = vld [vmem:[#allocation3 + $0x120] sm:$0xff]
          %v5038 = vld [vmem:[#allocation3 + $0x128] sm:$0xff]
          %v5039 = vld [vmem:[#allocation3 + $0x130] sm:$0xff]
          %v5040 = vld [vmem:[#allocation3 + $0x138] sm:$0xff]
          %v5041 = vld [vmem:[#allocation3 + $0x140] sm:$0xff]
          %v5042 = vld [vmem:[#allocation3 + $0x148] sm:$0xff]
          %v5043 = vld [vmem:[#allocation3 + $0x150] sm:$0xff]
          %v5044 = vld [vmem:[#allocation3 + $0x158] sm:$0xff]
          %v5045 = vld [vmem:[#allocation3 + $0x160] sm:$0xff]
          %v5046 = vld [vmem:[#allocation3 + $0x168] sm:$0xff]
          %v5047 = vld [vmem:[#allocation3 + $0x170] sm:$0xff]
          %v5048 = vld [vmem:[#allocation3 + $0x178] sm:$0xff]
          %v5049 = vld [vmem:[#allocation3 + $0x180] sm:$0xff]
          %v5050 = vld [vmem:[#allocation3 + $0x188] sm:$0xff]
          %v5051 = vld [vmem:[#allocation3 + $0x190] sm:$0xff]
          %v5052 = vld [vmem:[#allocation3 + $0x198] sm:$0xff]
          %v5053 = vld [vmem:[#allocation3 + $0x1a0] sm:$0xff]
          %v5054 = vld [vmem:[#allocation3 + $0x1a8] sm:$0xff]
          %v5055 = vld [vmem:[#allocation3 + $0x1b0] sm:$0xff]
          %v5056 = vld [vmem:[#allocation3 + $0x1b8] sm:$0xff]
          %v5057 = vld [vmem:[#allocation3 + $0x1c0] sm:$0xff]
          %v5058 = vld [vmem:[#allocation3 + $0x1c8] sm:$0xff]
          %v5059 = vld [vmem:[#allocation3 + $0x1d0] sm:$0xff]
          %v5060 = vld [vmem:[#allocation3 + $0x1d8] sm:$0xff]
          %v5061 = vld [vmem:[#allocation3 + $0x1e0] sm:$0xff]
          %v5062 = vld [vmem:[#allocation3 + $0x1e8] sm:$0xff]
          %v5063 = vld [vmem:[#allocation3 + $0x1f0] sm:$0xff]
          %v5064 = vld [vmem:[#allocation3 + $0x1f8] sm:$0xff]
          %v5065 = vld [vmem:[#allocation3 + $0x200] sm:$0xff]
          %v5066 = vld [vmem:[#allocation3 + $0x208] sm:$0xff]
          %v5067 = vld [vmem:[#allocation3 + $0x210] sm:$0xff]
          %v5068 = vld [vmem:[#allocation3 + $0x218] sm:$0xff]
          %v5069 = vld [vmem:[#allocation3 + $0x220] sm:$0xff]
          %v5070 = vld [vmem:[#allocation3 + $0x228] sm:$0xff]
          %v5071 = vld [vmem:[#allocation3 + $0x230] sm:$0xff]
          %v5072 = vld [vmem:[#allocation3 + $0x238] sm:$0xff]
          %v5073 = vld [vmem:[#allocation3 + $0x240] sm:$0xff]
          %v5074 = vld [vmem:[#allocation3 + $0x248] sm:$0xff]
          %v5075 = vld [vmem:[#allocation3 + $0x250] sm:$0xff]
          %v5076 = vld [vmem:[#allocation3 + $0x258] sm:$0xff]
          %v5077 = vld [vmem:[#allocation3 + $0x260] sm:$0xff]
          %v5078 = vld [vmem:[#allocation3 + $0x268] sm:$0xff]
          %v5079 = vld [vmem:[#allocation3 + $0x270] sm:$0xff]
          %v5080 = vld [vmem:[#allocation3 + $0x278] sm:$0xff]
          %v5081 = vld [vmem:[#allocation3 + $0x280] sm:$0xff]
          %v5082 = vld [vmem:[#allocation3 + $0x288] sm:$0xff]
          %v5083 = vld [vmem:[#allocation3 + $0x290] sm:$0xff]
          %v5084 = vld [vmem:[#allocation3 + $0x298] sm:$0xff]
          %v5085 = vld [vmem:[#allocation3 + $0x2a0] sm:$0xff]
          %v5086 = vld [vmem:[#allocation3 + $0x2a8] sm:$0xff]
          %v5087 = vld [vmem:[#allocation3 + $0x2b0] sm:$0xff]
          %v5088 = vld [vmem:[#allocation3 + $0x2b8] sm:$0xff]
          %v5089 = vld [vmem:[#allocation3 + $0x2c0] sm:$0xff]
          %v5090 = vld [vmem:[#allocation3 + $0x2c8] sm:$0xff]
          %v5091 = vld [vmem:[#allocation3 + $0x2d0] sm:$0xff]
          %v5092 = vld [vmem:[#allocation3 + $0x2d8] sm:$0xff]
          %v5093 = vld [vmem:[#allocation3 + $0x2e0] sm:$0xff]
          %v5094 = vld [vmem:[#allocation3 + $0x2e8] sm:$0xff]
          %v5095 = vld [vmem:[#allocation3 + $0x2f0] sm:$0xff]
          %v5096 = vld [vmem:[#allocation3 + $0x2f8] sm:$0xff]
          %v5097 = vld [vmem:[#allocation3 + $0x300] sm:$0xff]
          %v5098 = vld [vmem:[#allocation3 + $0x308] sm:$0xff]
          %v5099 = vld [vmem:[#allocation3 + $0x310] sm:$0xff]
          %v5100 = vld [vmem:[#allocation3 + $0x318] sm:$0xff]
          %v5101 = vld [vmem:[#allocation3 + $0x320] sm:$0xff]
          %v5102 = vld [vmem:[#allocation3 + $0x328] sm:$0xff]
          %v5103 = vld [vmem:[#allocation3 + $0x330] sm:$0xff]
          %v5104 = vld [vmem:[#allocation3 + $0x338] sm:$0xff]
          %v5105 = vld [vmem:[#allocation3 + $0x340] sm:$0xff]
          %v5106 = vld [vmem:[#allocation3 + $0x348] sm:$0xff]
          %v5107 = vld [vmem:[#allocation3 + $0x350] sm:$0xff]
          %v5108 = vld [vmem:[#allocation3 + $0x358] sm:$0xff]
          %v5109 = vld [vmem:[#allocation3 + $0x360] sm:$0xff]
          %v5110 = vld [vmem:[#allocation3 + $0x368] sm:$0xff]
          %v5111 = vld [vmem:[#allocation3 + $0x370] sm:$0xff]
          %v5112 = vld [vmem:[#allocation3 + $0x378] sm:$0xff]
          %v5113 = vld [vmem:[#allocation3 + $0x380] sm:$0xff]
          %v5114 = vld [vmem:[#allocation3 + $0x388] sm:$0xff]
          %v5115 = vld [vmem:[#allocation3 + $0x390] sm:$0xff]
          %v5116 = vld [vmem:[#allocation3 + $0x398] sm:$0xff]
          %v5117 = vld [vmem:[#allocation3 + $0x3a0] sm:$0xff]
          %v5118 = vld [vmem:[#allocation3 + $0x3a8] sm:$0xff]
          %v5119 = vld [vmem:[#allocation3 + $0x3b0] sm:$0xff]
          %v5120 = vld [vmem:[#allocation3 + $0x3b8] sm:$0xff]
          %v5121 = vld [vmem:[#allocation3 + $0x3c0] sm:$0xff]
          %v5122 = vld [vmem:[#allocation3 + $0x3c8] sm:$0xff]
          %v5123 = vld [vmem:[#allocation3 + $0x3d0] sm:$0xff]
          %v5124 = vld [vmem:[#allocation3 + $0x3d8] sm:$0xff]
          %v5125 = vld [vmem:[#allocation3 + $0x3e0] sm:$0xff]
          %v5126 = vld [vmem:[#allocation3 + $0x3e8] sm:$0xff]
          %v5127 = vld [vmem:[#allocation3 + $0x3f0] sm:$0xff]
          %v5128 = vld [vmem:[#allocation3 + $0x3f8] sm:$0xff]
          %v5129 = vld [vmem:[#allocation3 + $0x400] sm:$0xff]
          %v5130 = vld [vmem:[#allocation3 + $0x408] sm:$0xff]
          %v5131 = vld [vmem:[#allocation3 + $0x410] sm:$0xff]
          %v5132 = vld [vmem:[#allocation3 + $0x418] sm:$0xff]
          %v5133 = vld [vmem:[#allocation3 + $0x420] sm:$0xff]
          %v5134 = vld [vmem:[#allocation3 + $0x428] sm:$0xff]
          %v5135 = vld [vmem:[#allocation3 + $0x430] sm:$0xff]
          %v5136 = vld [vmem:[#allocation3 + $0x438] sm:$0xff]
          %v5137 = vld [vmem:[#allocation3 + $0x440] sm:$0xff]
          %v5138 = vld [vmem:[#allocation3 + $0x448] sm:$0xff]
          %v5139 = vld [vmem:[#allocation3 + $0x450] sm:$0xff]
          %v5140 = vld [vmem:[#allocation3 + $0x458] sm:$0xff]
          %v5141 = vld [vmem:[#allocation3 + $0x460] sm:$0xff]
          %v5142 = vld [vmem:[#allocation3 + $0x468] sm:$0xff]
          %v5143 = vld [vmem:[#allocation3 + $0x470] sm:$0xff]
          %v5144 = vld [vmem:[#allocation3 + $0x478] sm:$0xff]
          %v5145 = vld [vmem:[#allocation3 + $0x480] sm:$0xff]
          %v5146 = vld [vmem:[#allocation3 + $0x488] sm:$0xff]
          %v5147 = vld [vmem:[#allocation3 + $0x490] sm:$0xff]
          %v5148 = vld [vmem:[#allocation3 + $0x498] sm:$0xff]
          %v5149 = vld [vmem:[#allocation3 + $0x4a0] sm:$0xff]
          %v5150 = vld [vmem:[#allocation3 + $0x4a8] sm:$0xff]
          %v5151 = vld [vmem:[#allocation3 + $0x4b0] sm:$0xff]
          %v5152 = vld [vmem:[#allocation3 + $0x4b8] sm:$0xff]
          %v5153 = vld [vmem:[#allocation3 + $0x4c0] sm:$0xff]
          %v5154 = vld [vmem:[#allocation3 + $0x4c8] sm:$0xff]
          %v5155 = vld [vmem:[#allocation3 + $0x4d0] sm:$0xff]
          %v5156 = vld [vmem:[#allocation3 + $0x4d8] sm:$0xff]
          %v5157 = vld [vmem:[#allocation3 + $0x4e0] sm:$0xff]
          %v5158 = vld [vmem:[#allocation3 + $0x4e8] sm:$0xff]
          %v5159 = vld [vmem:[#allocation3 + $0x4f0] sm:$0xff]
          %v5160 = vld [vmem:[#allocation3 + $0x4f8] sm:$0xff]
          %v5161 = vld [vmem:[#allocation3 + $0x500] sm:$0xff]
          %v5162 = vld [vmem:[#allocation3 + $0x508] sm:$0xff]
          %v5163 = vld [vmem:[#allocation3 + $0x510] sm:$0xff]
          %v5164 = vld [vmem:[#allocation3 + $0x518] sm:$0xff]
          %v5165 = vld [vmem:[#allocation3 + $0x520] sm:$0xff]
          %v5166 = vld [vmem:[#allocation3 + $0x528] sm:$0xff]
          %v5167 = vld [vmem:[#allocation3 + $0x530] sm:$0xff]
          %v5168 = vld [vmem:[#allocation3 + $0x538] sm:$0xff]
          %v5169 = vld [vmem:[#allocation3 + $0x540] sm:$0xff]
          %v5170 = vld [vmem:[#allocation3 + $0x548] sm:$0xff]
          %v5171 = vld [vmem:[#allocation3 + $0x550] sm:$0xff]
          %v5172 = vld [vmem:[#allocation3 + $0x558] sm:$0xff]
          %v5173 = vld [vmem:[#allocation3 + $0x560] sm:$0xff]
          %v5174 = vld [vmem:[#allocation3 + $0x568] sm:$0xff]
          %v5175 = vld [vmem:[#allocation3 + $0x570] sm:$0xff]
          %v5176 = vld [vmem:[#allocation3 + $0x578] sm:$0xff]
          %v5177 = vld [vmem:[#allocation3 + $0x580] sm:$0xff]
          %v5178 = vld [vmem:[#allocation3 + $0x588] sm:$0xff]
          %v5179 = vld [vmem:[#allocation3 + $0x590] sm:$0xff]
          %v5180 = vld [vmem:[#allocation3 + $0x598] sm:$0xff]
          %v5181 = vld [vmem:[#allocation3 + $0x5a0] sm:$0xff]
          %v5182 = vld [vmem:[#allocation3 + $0x5a8] sm:$0xff]
          %v5183 = vld [vmem:[#allocation3 + $0x5b0] sm:$0xff]
          %v5184 = vld [vmem:[#allocation3 + $0x5b8] sm:$0xff]
          %v5185 = vld [vmem:[#allocation3 + $0x5c0] sm:$0xff]
          %v5186 = vld [vmem:[#allocation3 + $0x5c8] sm:$0xff]
          %v5187 = vld [vmem:[#allocation3 + $0x5d0] sm:$0xff]
          %v5188 = vld [vmem:[#allocation3 + $0x5d8] sm:$0xff]
          %v5189 = vld [vmem:[#allocation3 + $0x5e0] sm:$0xff]
          %v5190 = vld [vmem:[#allocation3 + $0x5e8] sm:$0xff]
          %v5191 = vld [vmem:[#allocation3 + $0x5f0] sm:$0xff]
          %v5192 = vld [vmem:[#allocation3 + $0x5f8] sm:$0xff]
          %v5193 = vld [vmem:[#allocation3 + $0x600] sm:$0xff]
          %v5194 = vld [vmem:[#allocation3 + $0x608] sm:$0xff]
          %v5195 = vld [vmem:[#allocation3 + $0x610] sm:$0xff]
          %v5196 = vld [vmem:[#allocation3 + $0x618] sm:$0xff]
          %v5197 = vld [vmem:[#allocation3 + $0x620] sm:$0xff]
          %v5198 = vld [vmem:[#allocation3 + $0x628] sm:$0xff]
          %v5199 = vld [vmem:[#allocation3 + $0x630] sm:$0xff]
          %v5200 = vld [vmem:[#allocation3 + $0x638] sm:$0xff]
          %v5201 = vld [vmem:[#allocation3 + $0x640] sm:$0xff]
          %v5202 = vld [vmem:[#allocation3 + $0x648] sm:$0xff]
          %v5203 = vld [vmem:[#allocation3 + $0x650] sm:$0xff]
          %v5204 = vld [vmem:[#allocation3 + $0x658] sm:$0xff]
          %v5205 = vld [vmem:[#allocation3 + $0x660] sm:$0xff]
          %v5206 = vld [vmem:[#allocation3 + $0x668] sm:$0xff]
          %v5207 = vld [vmem:[#allocation3 + $0x670] sm:$0xff]
          %v5208 = vld [vmem:[#allocation3 + $0x678] sm:$0xff]
          %v5209 = vld [vmem:[#allocation3 + $0x680] sm:$0xff]
          %v5210 = vld [vmem:[#allocation3 + $0x688] sm:$0xff]
          %v5211 = vld [vmem:[#allocation3 + $0x690] sm:$0xff]
          %v5212 = vld [vmem:[#allocation3 + $0x698] sm:$0xff]
          %v5213 = vld [vmem:[#allocation3 + $0x6a0] sm:$0xff]
          %v5214 = vld [vmem:[#allocation3 + $0x6a8] sm:$0xff]
          %v5215 = vld [vmem:[#allocation3 + $0x6b0] sm:$0xff]
          %v5216 = vld [vmem:[#allocation3 + $0x6b8] sm:$0xff]
          %v5217 = vld [vmem:[#allocation3 + $0x6c0] sm:$0xff]
          %v5218 = vld [vmem:[#allocation3 + $0x6c8] sm:$0xff]
          %v5219 = vld [vmem:[#allocation3 + $0x6d0] sm:$0xff]
          %v5220 = vld [vmem:[#allocation3 + $0x6d8] sm:$0xff]
          %v5221 = vld [vmem:[#allocation3 + $0x6e0] sm:$0xff]
          %v5222 = vld [vmem:[#allocation3 + $0x6e8] sm:$0xff]
          %v5223 = vld [vmem:[#allocation3 + $0x6f0] sm:$0xff]
          %v5224 = vld [vmem:[#allocation3 + $0x6f8] sm:$0xff]
          %v5225 = vld [vmem:[#allocation3 + $0x700] sm:$0xff]
          %v5226 = vld [vmem:[#allocation3 + $0x708] sm:$0xff]
          %v5227 = vld [vmem:[#allocation3 + $0x710] sm:$0xff]
          %v5228 = vld [vmem:[#allocation3 + $0x718] sm:$0xff]
          %v5229 = vld [vmem:[#allocation3 + $0x720] sm:$0xff]
          %v5230 = vld [vmem:[#allocation3 + $0x728] sm:$0xff]
          %v5231 = vld [vmem:[#allocation3 + $0x730] sm:$0xff]
          %v5232 = vld [vmem:[#allocation3 + $0x738] sm:$0xff]
          %v5233 = vld [vmem:[#allocation3 + $0x740] sm:$0xff]
          %v5234 = vld [vmem:[#allocation3 + $0x748] sm:$0xff]
          %v5235 = vld [vmem:[#allocation3 + $0x750] sm:$0xff]
          %v5236 = vld [vmem:[#allocation3 + $0x758] sm:$0xff]
          %v5237 = vld [vmem:[#allocation3 + $0x760] sm:$0xff]
          %v5238 = vld [vmem:[#allocation3 + $0x768] sm:$0xff]
          %v5239 = vld [vmem:[#allocation3 + $0x770] sm:$0xff]
          %v5240 = vld [vmem:[#allocation3 + $0x778] sm:$0xff]
          %v5241 = vld [vmem:[#allocation3 + $0x780] sm:$0xff]
          %v5242 = vld [vmem:[#allocation3 + $0x788] sm:$0xff]
          %v5243 = vld [vmem:[#allocation3 + $0x790] sm:$0xff]
          %v5244 = vld [vmem:[#allocation3 + $0x798] sm:$0xff]
          %v5245 = vld [vmem:[#allocation3 + $0x7a0] sm:$0xff]
          %v5246 = vld [vmem:[#allocation3 + $0x7a8] sm:$0xff]
          %v5247 = vld [vmem:[#allocation3 + $0x7b0] sm:$0xff]
          %v5248 = vld [vmem:[#allocation3 + $0x7b8] sm:$0xff]
          %v5249 = vld [vmem:[#allocation3 + $0x7c0] sm:$0xff]
          %v5250 = vld [vmem:[#allocation3 + $0x7c8] sm:$0xff]
          %v5251 = vld [vmem:[#allocation3 + $0x7d0] sm:$0xff]
          %v5252 = vld [vmem:[#allocation3 + $0x7d8] sm:$0xff]
          %v5253 = vld [vmem:[#allocation3 + $0x7e0] sm:$0xff]
          %v5254 = vld [vmem:[#allocation3 + $0x7e8] sm:$0xff]
          %v5255 = vld [vmem:[#allocation3 + $0x7f0] sm:$0xff]
          %v5256 = vld [vmem:[#allocation3 + $0x7f8] sm:$0xff]
          %v5257 = vunpack.c.l.bf16 %v5001
          %v5258 = vunpack.c.l.bf16 %v5002
          %v5259 = vunpack.c.l.bf16 %v5003
          %v5260 = vunpack.c.l.bf16 %v5004
          %v5261 = vunpack.c.l.bf16 %v5005
          %v5262 = vunpack.c.l.bf16 %v5006
          %v5263 = vunpack.c.l.bf16 %v5007
          %v5264 = vunpack.c.l.bf16 %v5008
          %v5265 = vunpack.c.h.bf16 %v5001
          %v5266 = vunpack.c.h.bf16 %v5002
          %v5267 = vunpack.c.h.bf16 %v5003
          %v5268 = vunpack.c.h.bf16 %v5004
          %v5269 = vunpack.c.h.bf16 %v5005
          %v5270 = vunpack.c.h.bf16 %v5006
          %v5271 = vunpack.c.h.bf16 %v5007
          %v5272 = vunpack.c.h.bf16 %v5008
          %v5273 = vunpack.c.l.bf16 %v5009
          %v5274 = vunpack.c.l.bf16 %v5010
          %v5275 = vunpack.c.l.bf16 %v5011
          %v5276 = vunpack.c.l.bf16 %v5012
          %v5277 = vunpack.c.l.bf16 %v5013
          %v5278 = vunpack.c.l.bf16 %v5014
          %v5279 = vunpack.c.l.bf16 %v5015
          %v5280 = vunpack.c.l.bf16 %v5016
          %v5281 = vunpack.c.h.bf16 %v5009
          %v5282 = vunpack.c.h.bf16 %v5010
          %v5283 = vunpack.c.h.bf16 %v5011
          %v5284 = vunpack.c.h.bf16 %v5012
          %v5285 = vunpack.c.h.bf16 %v5013
          %v5286 = vunpack.c.h.bf16 %v5014
          %v5287 = vunpack.c.h.bf16 %v5015
          %v5288 = vunpack.c.h.bf16 %v5016
          %v5289 = vunpack.c.l.bf16 %v5017
          %v5290 = vunpack.c.l.bf16 %v5018
          %v5291 = vunpack.c.l.bf16 %v5019
          %v5292 = vunpack.c.l.bf16 %v5020
          %v5293 = vunpack.c.l.bf16 %v5021
          %v5294 = vunpack.c.l.bf16 %v5022
          %v5295 = vunpack.c.l.bf16 %v5023
          %v5296 = vunpack.c.l.bf16 %v5024
          %v5297 = vunpack.c.h.bf16 %v5017
          %v5298 = vunpack.c.h.bf16 %v5018
          %v5299 = vunpack.c.h.bf16 %v5019
          %v5300 = vunpack.c.h.bf16 %v5020
          %v5301 = vunpack.c.h.bf16 %v5021
          %v5302 = vunpack.c.h.bf16 %v5022
          %v5303 = vunpack.c.h.bf16 %v5023
          %v5304 = vunpack.c.h.bf16 %v5024
          %v5305 = vunpack.c.l.bf16 %v5025
          %v5306 = vunpack.c.l.bf16 %v5026
          %v5307 = vunpack.c.l.bf16 %v5027
          %v5308 = vunpack.c.l.bf16 %v5028
          %v5309 = vunpack.c.l.bf16 %v5029
          %v5310 = vunpack.c.l.bf16 %v5030
          %v5311 = vunpack.c.l.bf16 %v5031
          %v5312 = vunpack.c.l.bf16 %v5032
          %v5313 = vunpack.c.h.bf16 %v5025
          %v5314 = vunpack.c.h.bf16 %v5026
          %v5315 = vunpack.c.h.bf16 %v5027
          %v5316 = vunpack.c.h.bf16 %v5028
          %v5317 = vunpack.c.h.bf16 %v5029
          %v5318 = vunpack.c.h.bf16 %v5030
          %v5319 = vunpack.c.h.bf16 %v5031
          %v5320 = vunpack.c.h.bf16 %v5032
          %v5321 = vunpack.c.l.bf16 %v5033
          %v5322 = vunpack.c.l.bf16 %v5034
          %v5323 = vunpack.c.l.bf16 %v5035
          %v5324 = vunpack.c.l.bf16 %v5036
          %v5325 = vunpack.c.l.bf16 %v5037
          %v5326 = vunpack.c.l.bf16 %v5038
          %v5327 = vunpack.c.l.bf16 %v5039
          %v5328 = vunpack.c.l.bf16 %v5040
          %v5329 = vunpack.c.h.bf16 %v5033
          %v5330 = vunpack.c.h.bf16 %v5034
          %v5331 = vunpack.c.h.bf16 %v5035
          %v5332 = vunpack.c.h.bf16 %v5036
          %v5333 = vunpack.c.h.bf16 %v5037
          %v5334 = vunpack.c.h.bf16 %v5038
          %v5335 = vunpack.c.h.bf16 %v5039
          %v5336 = vunpack.c.h.bf16 %v5040
          %v5337 = vunpack.c.l.bf16 %v5041
          %v5338 = vunpack.c.l.bf16 %v5042
          %v5339 = vunpack.c.l.bf16 %v5043
          %v5340 = vunpack.c.l.bf16 %v5044
          %v5341 = vunpack.c.l.bf16 %v5045
          %v5342 = vunpack.c.l.bf16 %v5046
          %v5343 = vunpack.c.l.bf16 %v5047
          %v5344 = vunpack.c.l.bf16 %v5048
          %v5345 = vunpack.c.h.bf16 %v5041
          %v5346 = vunpack.c.h.bf16 %v5042
          %v5347 = vunpack.c.h.bf16 %v5043
          %v5348 = vunpack.c.h.bf16 %v5044
          %v5349 = vunpack.c.h.bf16 %v5045
          %v5350 = vunpack.c.h.bf16 %v5046
          %v5351 = vunpack.c.h.bf16 %v5047
          %v5352 = vunpack.c.h.bf16 %v5048
          %v5353 = vunpack.c.l.bf16 %v5049
          %v5354 = vunpack.c.l.bf16 %v5050
          %v5355 = vunpack.c.l.bf16 %v5051
          %v5356 = vunpack.c.l.bf16 %v5052
          %v5357 = vunpack.c.l.bf16 %v5053
          %v5358 = vunpack.c.l.bf16 %v5054
          %v5359 = vunpack.c.l.bf16 %v5055
          %v5360 = vunpack.c.l.bf16 %v5056
          %v5361 = vunpack.c.h.bf16 %v5049
          %v5362 = vunpack.c.h.bf16 %v5050
          %v5363 = vunpack.c.h.bf16 %v5051
          %v5364 = vunpack.c.h.bf16 %v5052
          %v5365 = vunpack.c.h.bf16 %v5053
          %v5366 = vunpack.c.h.bf16 %v5054
          %v5367 = vunpack.c.h.bf16 %v5055
          %v5368 = vunpack.c.h.bf16 %v5056
          %v5369 = vunpack.c.l.bf16 %v5057
          %v5370 = vunpack.c.l.bf16 %v5058
          %v5371 = vunpack.c.l.bf16 %v5059
          %v5372 = vunpack.c.l.bf16 %v5060
          %v5373 = vunpack.c.l.bf16 %v5061
          %v5374 = vunpack.c.l.bf16 %v5062
          %v5375 = vunpack.c.l.bf16 %v5063
          %v5376 = vunpack.c.l.bf16 %v5064
          %v5377 = vunpack.c.h.bf16 %v5057
          %v5378 = vunpack.c.h.bf16 %v5058
          %v5379 = vunpack.c.h.bf16 %v5059
          %v5380 = vunpack.c.h.bf16 %v5060
          %v5381 = vunpack.c.h.bf16 %v5061
          %v5382 = vunpack.c.h.bf16 %v5062
          %v5383 = vunpack.c.h.bf16 %v5063
          %v5384 = vunpack.c.h.bf16 %v5064
          %v5385 = vunpack.c.l.bf16 %v5065
          %v5386 = vunpack.c.l.bf16 %v5066
          %v5387 = vunpack.c.l.bf16 %v5067
          %v5388 = vunpack.c.l.bf16 %v5068
          %v5389 = vunpack.c.l.bf16 %v5069
          %v5390 = vunpack.c.l.bf16 %v5070
          %v5391 = vunpack.c.l.bf16 %v5071
          %v5392 = vunpack.c.l.bf16 %v5072
          %v5393 = vunpack.c.h.bf16 %v5065
          %v5394 = vunpack.c.h.bf16 %v5066
          %v5395 = vunpack.c.h.bf16 %v5067
          %v5396 = vunpack.c.h.bf16 %v5068
          %v5397 = vunpack.c.h.bf16 %v5069
          %v5398 = vunpack.c.h.bf16 %v5070
          %v5399 = vunpack.c.h.bf16 %v5071
          %v5400 = vunpack.c.h.bf16 %v5072
          %v5401 = vunpack.c.l.bf16 %v5073
          %v5402 = vunpack.c.l.bf16 %v5074
          %v5403 = vunpack.c.l.bf16 %v5075
          %v5404 = vunpack.c.l.bf16 %v5076
          %v5405 = vunpack.c.l.bf16 %v5077
          %v5406 = vunpack.c.l.bf16 %v5078
          %v5407 = vunpack.c.l.bf16 %v5079
          %v5408 = vunpack.c.l.bf16 %v5080
          %v5409 = vunpack.c.h.bf16 %v5073
          %v5410 = vunpack.c.h.bf16 %v5074
          %v5411 = vunpack.c.h.bf16 %v5075
          %v5412 = vunpack.c.h.bf16 %v5076
          %v5413 = vunpack.c.h.bf16 %v5077
          %v5414 = vunpack.c.h.bf16 %v5078
          %v5415 = vunpack.c.h.bf16 %v5079
          %v5416 = vunpack.c.h.bf16 %v5080
          %v5417 = vunpack.c.l.bf16 %v5081
          %v5418 = vunpack.c.l.bf16 %v5082
          %v5419 = vunpack.c.l.bf16 %v5083
          %v5420 = vunpack.c.l.bf16 %v5084
          %v5421 = vunpack.c.l.bf16 %v5085
          %v5422 = vunpack.c.l.bf16 %v5086
          %v5423 = vunpack.c.l.bf16 %v5087
          %v5424 = vunpack.c.l.bf16 %v5088
          %v5425 = vunpack.c.h.bf16 %v5081
          %v5426 = vunpack.c.h.bf16 %v5082
          %v5427 = vunpack.c.h.bf16 %v5083
          %v5428 = vunpack.c.h.bf16 %v5084
          %v5429 = vunpack.c.h.bf16 %v5085
          %v5430 = vunpack.c.h.bf16 %v5086
          %v5431 = vunpack.c.h.bf16 %v5087
          %v5432 = vunpack.c.h.bf16 %v5088
          %v5433 = vunpack.c.l.bf16 %v5089
          %v5434 = vunpack.c.l.bf16 %v5090
          %v5435 = vunpack.c.l.bf16 %v5091
          %v5436 = vunpack.c.l.bf16 %v5092
          %v5437 = vunpack.c.l.bf16 %v5093
          %v5438 = vunpack.c.l.bf16 %v5094
          %v5439 = vunpack.c.l.bf16 %v5095
          %v5440 = vunpack.c.l.bf16 %v5096
          %v5441 = vunpack.c.h.bf16 %v5089
          %v5442 = vunpack.c.h.bf16 %v5090
          %v5443 = vunpack.c.h.bf16 %v5091
          %v5444 = vunpack.c.h.bf16 %v5092
          %v5445 = vunpack.c.h.bf16 %v5093
          %v5446 = vunpack.c.h.bf16 %v5094
          %v5447 = vunpack.c.h.bf16 %v5095
          %v5448 = vunpack.c.h.bf16 %v5096
          %v5449 = vunpack.c.l.bf16 %v5097
          %v5450 = vunpack.c.l.bf16 %v5098
          %v5451 = vunpack.c.l.bf16 %v5099
          %v5452 = vunpack.c.l.bf16 %v5100
          %v5453 = vunpack.c.l.bf16 %v5101
          %v5454 = vunpack.c.l.bf16 %v5102
          %v5455 = vunpack.c.l.bf16 %v5103
          %v5456 = vunpack.c.l.bf16 %v5104
          %v5457 = vunpack.c.h.bf16 %v5097
          %v5458 = vunpack.c.h.bf16 %v5098
          %v5459 = vunpack.c.h.bf16 %v5099
          %v5460 = vunpack.c.h.bf16 %v5100
          %v5461 = vunpack.c.h.bf16 %v5101
          %v5462 = vunpack.c.h.bf16 %v5102
          %v5463 = vunpack.c.h.bf16 %v5103
          %v5464 = vunpack.c.h.bf16 %v5104
          %v5465 = vunpack.c.l.bf16 %v5105
          %v5466 = vunpack.c.l.bf16 %v5106
          %v5467 = vunpack.c.l.bf16 %v5107
          %v5468 = vunpack.c.l.bf16 %v5108
          %v5469 = vunpack.c.l.bf16 %v5109
          %v5470 = vunpack.c.l.bf16 %v5110
          %v5471 = vunpack.c.l.bf16 %v5111
          %v5472 = vunpack.c.l.bf16 %v5112
          %v5473 = vunpack.c.h.bf16 %v5105
          %v5474 = vunpack.c.h.bf16 %v5106
          %v5475 = vunpack.c.h.bf16 %v5107
          %v5476 = vunpack.c.h.bf16 %v5108
          %v5477 = vunpack.c.h.bf16 %v5109
          %v5478 = vunpack.c.h.bf16 %v5110
          %v5479 = vunpack.c.h.bf16 %v5111
          %v5480 = vunpack.c.h.bf16 %v5112
          %v5481 = vunpack.c.l.bf16 %v5113
          %v5482 = vunpack.c.l.bf16 %v5114
          %v5483 = vunpack.c.l.bf16 %v5115
          %v5484 = vunpack.c.l.bf16 %v5116
          %v5485 = vunpack.c.l.bf16 %v5117
          %v5486 = vunpack.c.l.bf16 %v5118
          %v5487 = vunpack.c.l.bf16 %v5119
          %v5488 = vunpack.c.l.bf16 %v5120
          %v5489 = vunpack.c.h.bf16 %v5113
          %v5490 = vunpack.c.h.bf16 %v5114
          %v5491 = vunpack.c.h.bf16 %v5115
          %v5492 = vunpack.c.h.bf16 %v5116
          %v5493 = vunpack.c.h.bf16 %v5117
          %v5494 = vunpack.c.h.bf16 %v5118
          %v5495 = vunpack.c.h.bf16 %v5119
          %v5496 = vunpack.c.h.bf16 %v5120
          %v5497 = vunpack.c.l.bf16 %v5121
          %v5498 = vunpack.c.l.bf16 %v5122
          %v5499 = vunpack.c.l.bf16 %v5123
          %v5500 = vunpack.c.l.bf16 %v5124
          %v5501 = vunpack.c.l.bf16 %v5125
          %v5502 = vunpack.c.l.bf16 %v5126
          %v5503 = vunpack.c.l.bf16 %v5127
          %v5504 = vunpack.c.l.bf16 %v5128
          %v5505 = vunpack.c.h.bf16 %v5121
          %v5506 = vunpack.c.h.bf16 %v5122
          %v5507 = vunpack.c.h.bf16 %v5123
          %v5508 = vunpack.c.h.bf16 %v5124
          %v5509 = vunpack.c.h.bf16 %v5125
          %v5510 = vunpack.c.h.bf16 %v5126
          %v5511 = vunpack.c.h.bf16 %v5127
          %v5512 = vunpack.c.h.bf16 %v5128
          %v5513 = vunpack.c.l.bf16 %v5129
          %v5514 = vunpack.c.l.bf16 %v5130
          %v5515 = vunpack.c.l.bf16 %v5131
          %v5516 = vunpack.c.l.bf16 %v5132
          %v5517 = vunpack.c.l.bf16 %v5133
          %v5518 = vunpack.c.l.bf16 %v5134
          %v5519 = vunpack.c.l.bf16 %v5135
          %v5520 = vunpack.c.l.bf16 %v5136
          %v5521 = vunpack.c.h.bf16 %v5129
          %v5522 = vunpack.c.h.bf16 %v5130
          %v5523 = vunpack.c.h.bf16 %v5131
          %v5524 = vunpack.c.h.bf16 %v5132
          %v5525 = vunpack.c.h.bf16 %v5133
          %v5526 = vunpack.c.h.bf16 %v5134
          %v5527 = vunpack.c.h.bf16 %v5135
          %v5528 = vunpack.c.h.bf16 %v5136
          %v5529 = vunpack.c.l.bf16 %v5137
          %v5530 = vunpack.c.l.bf16 %v5138
          %v5531 = vunpack.c.l.bf16 %v5139
          %v5532 = vunpack.c.l.bf16 %v5140
          %v5533 = vunpack.c.l.bf16 %v5141
          %v5534 = vunpack.c.l.bf16 %v5142
          %v5535 = vunpack.c.l.bf16 %v5143
          %v5536 = vunpack.c.l.bf16 %v5144
          %v5537 = vunpack.c.h.bf16 %v5137
          %v5538 = vunpack.c.h.bf16 %v5138
          %v5539 = vunpack.c.h.bf16 %v5139
          %v5540 = vunpack.c.h.bf16 %v5140
          %v5541 = vunpack.c.h.bf16 %v5141
          %v5542 = vunpack.c.h.bf16 %v5142
          %v5543 = vunpack.c.h.bf16 %v5143
          %v5544 = vunpack.c.h.bf16 %v5144
          %v5545 = vunpack.c.l.bf16 %v5145
          %v5546 = vunpack.c.l.bf16 %v5146
          %v5547 = vunpack.c.l.bf16 %v5147
          %v5548 = vunpack.c.l.bf16 %v5148
          %v5549 = vunpack.c.l.bf16 %v5149
          %v5550 = vunpack.c.l.bf16 %v5150
          %v5551 = vunpack.c.l.bf16 %v5151
          %v5552 = vunpack.c.l.bf16 %v5152
          %v5553 = vunpack.c.h.bf16 %v5145
          %v5554 = vunpack.c.h.bf16 %v5146
          %v5555 = vunpack.c.h.bf16 %v5147
          %v5556 = vunpack.c.h.bf16 %v5148
          %v5557 = vunpack.c.h.bf16 %v5149
          %v5558 = vunpack.c.h.bf16 %v5150
          %v5559 = vunpack.c.h.bf16 %v5151
          %v5560 = vunpack.c.h.bf16 %v5152
          %v5561 = vunpack.c.l.bf16 %v5153
          %v5562 = vunpack.c.l.bf16 %v5154
          %v5563 = vunpack.c.l.bf16 %v5155
          %v5564 = vunpack.c.l.bf16 %v5156
          %v5565 = vunpack.c.l.bf16 %v5157
          %v5566 = vunpack.c.l.bf16 %v5158
          %v5567 = vunpack.c.l.bf16 %v5159
          %v5568 = vunpack.c.l.bf16 %v5160
          %v5569 = vunpack.c.h.bf16 %v5153
          %v5570 = vunpack.c.h.bf16 %v5154
          %v5571 = vunpack.c.h.bf16 %v5155
          %v5572 = vunpack.c.h.bf16 %v5156
          %v5573 = vunpack.c.h.bf16 %v5157
          %v5574 = vunpack.c.h.bf16 %v5158
          %v5575 = vunpack.c.h.bf16 %v5159
          %v5576 = vunpack.c.h.bf16 %v5160
          %v5577 = vunpack.c.l.bf16 %v5161
          %v5578 = vunpack.c.l.bf16 %v5162
          %v5579 = vunpack.c.l.bf16 %v5163
          %v5580 = vunpack.c.l.bf16 %v5164
          %v5581 = vunpack.c.l.bf16 %v5165
          %v5582 = vunpack.c.l.bf16 %v5166
          %v5583 = vunpack.c.l.bf16 %v5167
          %v5584 = vunpack.c.l.bf16 %v5168
          %v5585 = vunpack.c.h.bf16 %v5161
          %v5586 = vunpack.c.h.bf16 %v5162
          %v5587 = vunpack.c.h.bf16 %v5163
          %v5588 = vunpack.c.h.bf16 %v5164
          %v5589 = vunpack.c.h.bf16 %v5165
          %v5590 = vunpack.c.h.bf16 %v5166
          %v5591 = vunpack.c.h.bf16 %v5167
          %v5592 = vunpack.c.h.bf16 %v5168
          %v5593 = vunpack.c.l.bf16 %v5169
          %v5594 = vunpack.c.l.bf16 %v5170
          %v5595 = vunpack.c.l.bf16 %v5171
          %v5596 = vunpack.c.l.bf16 %v5172
          %v5597 = vunpack.c.l.bf16 %v5173
          %v5598 = vunpack.c.l.bf16 %v5174
          %v5599 = vunpack.c.l.bf16 %v5175
          %v5600 = vunpack.c.l.bf16 %v5176
          %v5601 = vunpack.c.h.bf16 %v5169
          %v5602 = vunpack.c.h.bf16 %v5170
          %v5603 = vunpack.c.h.bf16 %v5171
          %v5604 = vunpack.c.h.bf16 %v5172
          %v5605 = vunpack.c.h.bf16 %v5173
          %v5606 = vunpack.c.h.bf16 %v5174
          %v5607 = vunpack.c.h.bf16 %v5175
          %v5608 = vunpack.c.h.bf16 %v5176
          %v5609 = vunpack.c.l.bf16 %v5177
          %v5610 = vunpack.c.l.bf16 %v5178
          %v5611 = vunpack.c.l.bf16 %v5179
          %v5612 = vunpack.c.l.bf16 %v5180
          %v5613 = vunpack.c.l.bf16 %v5181
          %v5614 = vunpack.c.l.bf16 %v5182
          %v5615 = vunpack.c.l.bf16 %v5183
          %v5616 = vunpack.c.l.bf16 %v5184
          %v5617 = vunpack.c.h.bf16 %v5177
          %v5618 = vunpack.c.h.bf16 %v5178
          %v5619 = vunpack.c.h.bf16 %v5179
          %v5620 = vunpack.c.h.bf16 %v5180
          %v5621 = vunpack.c.h.bf16 %v5181
          %v5622 = vunpack.c.h.bf16 %v5182
          %v5623 = vunpack.c.h.bf16 %v5183
          %v5624 = vunpack.c.h.bf16 %v5184
          %v5625 = vunpack.c.l.bf16 %v5185
          %v5626 = vunpack.c.l.bf16 %v5186
          %v5627 = vunpack.c.l.bf16 %v5187
          %v5628 = vunpack.c.l.bf16 %v5188
          %v5629 = vunpack.c.l.bf16 %v5189
          %v5630 = vunpack.c.l.bf16 %v5190
          %v5631 = vunpack.c.l.bf16 %v5191
          %v5632 = vunpack.c.l.bf16 %v5192
          %v5633 = vunpack.c.h.bf16 %v5185
          %v5634 = vunpack.c.h.bf16 %v5186
          %v5635 = vunpack.c.h.bf16 %v5187
          %v5636 = vunpack.c.h.bf16 %v5188
          %v5637 = vunpack.c.h.bf16 %v5189
          %v5638 = vunpack.c.h.bf16 %v5190
          %v5639 = vunpack.c.h.bf16 %v5191
          %v5640 = vunpack.c.h.bf16 %v5192
          %v5641 = vunpack.c.l.bf16 %v5193
          %v5642 = vunpack.c.l.bf16 %v5194
          %v5643 = vunpack.c.l.bf16 %v5195
          %v5644 = vunpack.c.l.bf16 %v5196
          %v5645 = vunpack.c.l.bf16 %v5197
          %v5646 = vunpack.c.l.bf16 %v5198
          %v5647 = vunpack.c.l.bf16 %v5199
          %v5648 = vunpack.c.l.bf16 %v5200
          %v5649 = vunpack.c.h.bf16 %v5193
          %v5650 = vunpack.c.h.bf16 %v5194
          %v5651 = vunpack.c.h.bf16 %v5195
          %v5652 = vunpack.c.h.bf16 %v5196
          %v5653 = vunpack.c.h.bf16 %v5197
          %v5654 = vunpack.c.h.bf16 %v5198
          %v5655 = vunpack.c.h.bf16 %v5199
          %v5656 = vunpack.c.h.bf16 %v5200
          %v5657 = vunpack.c.l.bf16 %v5201
          %v5658 = vunpack.c.l.bf16 %v5202
          %v5659 = vunpack.c.l.bf16 %v5203
          %v5660 = vunpack.c.l.bf16 %v5204
          %v5661 = vunpack.c.l.bf16 %v5205
          %v5662 = vunpack.c.l.bf16 %v5206
          %v5663 = vunpack.c.l.bf16 %v5207
          %v5664 = vunpack.c.l.bf16 %v5208
          %v5665 = vunpack.c.h.bf16 %v5201
          %v5666 = vunpack.c.h.bf16 %v5202
          %v5667 = vunpack.c.h.bf16 %v5203
          %v5668 = vunpack.c.h.bf16 %v5204
          %v5669 = vunpack.c.h.bf16 %v5205
          %v5670 = vunpack.c.h.bf16 %v5206
          %v5671 = vunpack.c.h.bf16 %v5207
          %v5672 = vunpack.c.h.bf16 %v5208
          %v5673 = vunpack.c.l.bf16 %v5209
          %v5674 = vunpack.c.l.bf16 %v5210
          %v5675 = vunpack.c.l.bf16 %v5211
          %v5676 = vunpack.c.l.bf16 %v5212
          %v5677 = vunpack.c.l.bf16 %v5213
          %v5678 = vunpack.c.l.bf16 %v5214
          %v5679 = vunpack.c.l.bf16 %v5215
          %v5680 = vunpack.c.l.bf16 %v5216
          %v5681 = vunpack.c.h.bf16 %v5209
          %v5682 = vunpack.c.h.bf16 %v5210
          %v5683 = vunpack.c.h.bf16 %v5211
          %v5684 = vunpack.c.h.bf16 %v5212
          %v5685 = vunpack.c.h.bf16 %v5213
          %v5686 = vunpack.c.h.bf16 %v5214
          %v5687 = vunpack.c.h.bf16 %v5215
          %v5688 = vunpack.c.h.bf16 %v5216
          %v5689 = vunpack.c.l.bf16 %v5217
          %v5690 = vunpack.c.l.bf16 %v5218
          %v5691 = vunpack.c.l.bf16 %v5219
          %v5692 = vunpack.c.l.bf16 %v5220
          %v5693 = vunpack.c.l.bf16 %v5221
          %v5694 = vunpack.c.l.bf16 %v5222
          %v5695 = vunpack.c.l.bf16 %v5223
          %v5696 = vunpack.c.l.bf16 %v5224
          %v5697 = vunpack.c.h.bf16 %v5217
          %v5698 = vunpack.c.h.bf16 %v5218
          %v5699 = vunpack.c.h.bf16 %v5219
          %v5700 = vunpack.c.h.bf16 %v5220
          %v5701 = vunpack.c.h.bf16 %v5221
          %v5702 = vunpack.c.h.bf16 %v5222
          %v5703 = vunpack.c.h.bf16 %v5223
          %v5704 = vunpack.c.h.bf16 %v5224
          %v5705 = vunpack.c.l.bf16 %v5225
          %v5706 = vunpack.c.l.bf16 %v5226
          %v5707 = vunpack.c.l.bf16 %v5227
          %v5708 = vunpack.c.l.bf16 %v5228
          %v5709 = vunpack.c.l.bf16 %v5229
          %v5710 = vunpack.c.l.bf16 %v5230
          %v5711 = vunpack.c.l.bf16 %v5231
          %v5712 = vunpack.c.l.bf16 %v5232
          %v5713 = vunpack.c.h.bf16 %v5225
          %v5714 = vunpack.c.h.bf16 %v5226
          %v5715 = vunpack.c.h.bf16 %v5227
          %v5716 = vunpack.c.h.bf16 %v5228
          %v5717 = vunpack.c.h.bf16 %v5229
          %v5718 = vunpack.c.h.bf16 %v5230
          %v5719 = vunpack.c.h.bf16 %v5231
          %v5720 = vunpack.c.h.bf16 %v5232
          %v5721 = vunpack.c.l.bf16 %v5233
          %v5722 = vunpack.c.l.bf16 %v5234
          %v5723 = vunpack.c.l.bf16 %v5235
          %v5724 = vunpack.c.l.bf16 %v5236
          %v5725 = vunpack.c.l.bf16 %v5237
          %v5726 = vunpack.c.l.bf16 %v5238
          %v5727 = vunpack.c.l.bf16 %v5239
          %v5728 = vunpack.c.l.bf16 %v5240
          %v5729 = vunpack.c.h.bf16 %v5233
          %v5730 = vunpack.c.h.bf16 %v5234
          %v5731 = vunpack.c.h.bf16 %v5235
          %v5732 = vunpack.c.h.bf16 %v5236
          %v5733 = vunpack.c.h.bf16 %v5237
          %v5734 = vunpack.c.h.bf16 %v5238
          %v5735 = vunpack.c.h.bf16 %v5239
          %v5736 = vunpack.c.h.bf16 %v5240
          %v5737 = vunpack.c.l.bf16 %v5241
          %v5738 = vunpack.c.l.bf16 %v5242
          %v5739 = vunpack.c.l.bf16 %v5243
          %v5740 = vunpack.c.l.bf16 %v5244
          %v5741 = vunpack.c.l.bf16 %v5245
          %v5742 = vunpack.c.l.bf16 %v5246
          %v5743 = vunpack.c.l.bf16 %v5247
          %v5744 = vunpack.c.l.bf16 %v5248
          %v5745 = vunpack.c.h.bf16 %v5241
          %v5746 = vunpack.c.h.bf16 %v5242
          %v5747 = vunpack.c.h.bf16 %v5243
          %v5748 = vunpack.c.h.bf16 %v5244
          %v5749 = vunpack.c.h.bf16 %v5245
          %v5750 = vunpack.c.h.bf16 %v5246
          %v5751 = vunpack.c.h.bf16 %v5247
          %v5752 = vunpack.c.h.bf16 %v5248
          %v5753 = vunpack.c.l.bf16 %v5249
          %v5754 = vunpack.c.l.bf16 %v5250
          %v5755 = vunpack.c.l.bf16 %v5251
          %v5756 = vunpack.c.l.bf16 %v5252
          %v5757 = vunpack.c.l.bf16 %v5253
          %v5758 = vunpack.c.l.bf16 %v5254
          %v5759 = vunpack.c.l.bf16 %v5255
          %v5760 = vunpack.c.l.bf16 %v5256
          %v5761 = vunpack.c.h.bf16 %v5249
          %v5762 = vunpack.c.h.bf16 %v5250
          %v5763 = vunpack.c.h.bf16 %v5251
          %v5764 = vunpack.c.h.bf16 %v5252
          %v5765 = vunpack.c.h.bf16 %v5253
          %v5766 = vunpack.c.h.bf16 %v5254
          %v5767 = vunpack.c.h.bf16 %v5255
          %v5768 = vunpack.c.h.bf16 %v5256
          %5770 = vset.pattern.permute.xlu0 0
          %5771 = vperm.xlu0 %5770, %v4874
          %v5772 = vpop.permute.xlu0 %5771
          %5775 = vset.pattern.permute.xlu0 0
          %5776 = vperm.xlu0 %5775, %v4876
          %v5777 = vpop.permute.xlu0 %5776
          %5780 = vset.pattern.permute.xlu0 0
          %5781 = vperm.xlu0 %5780, %v4878
          %v5782 = vpop.permute.xlu0 %5781
          %5785 = vset.pattern.permute.xlu0 0
          %5786 = vperm.xlu0 %5785, %v4880
          %v5787 = vpop.permute.xlu0 %5786
          %5790 = vset.pattern.permute.xlu0 0
          %5791 = vperm.xlu0 %5790, %v4882
          %v5792 = vpop.permute.xlu0 %5791
          %5795 = vset.pattern.permute.xlu0 0
          %5796 = vperm.xlu0 %5795, %v4884
          %v5797 = vpop.permute.xlu0 %5796
          %5800 = vset.pattern.permute.xlu0 0
          %5801 = vperm.xlu0 %5800, %v4886
          %v5802 = vpop.permute.xlu0 %5801
          %5805 = vset.pattern.permute.xlu0 0
          %5806 = vperm.xlu0 %5805, %v4888
          %v5807 = vpop.permute.xlu0 %5806
          %5810 = vset.pattern.permute.xlu0 0
          %5811 = vperm.xlu0 %5810, %v4890
          %v5812 = vpop.permute.xlu0 %5811
          %5815 = vset.pattern.permute.xlu0 0
          %5816 = vperm.xlu0 %5815, %v4892
          %v5817 = vpop.permute.xlu0 %5816
          %5820 = vset.pattern.permute.xlu0 0
          %5821 = vperm.xlu0 %5820, %v4894
          %v5822 = vpop.permute.xlu0 %5821
          %5825 = vset.pattern.permute.xlu0 0
          %5826 = vperm.xlu0 %5825, %v4896
          %v5827 = vpop.permute.xlu0 %5826
          %5830 = vset.pattern.permute.xlu0 0
          %5831 = vperm.xlu0 %5830, %v4898
          %v5832 = vpop.permute.xlu0 %5831
          %5835 = vset.pattern.permute.xlu0 0
          %5836 = vperm.xlu0 %5835, %v4900
          %v5837 = vpop.permute.xlu0 %5836
          %5840 = vset.pattern.permute.xlu0 0
          %5841 = vperm.xlu0 %5840, %v4902
          %v5842 = vpop.permute.xlu0 %5841
          %5845 = vset.pattern.permute.xlu0 0
          %5846 = vperm.xlu0 %5845, %v4904
          %v5847 = vpop.permute.xlu0 %5846
          %5850 = vset.pattern.permute.xlu0 0
          %5851 = vperm.xlu0 %5850, %v4906
          %v5852 = vpop.permute.xlu0 %5851
          %5855 = vset.pattern.permute.xlu0 0
          %5856 = vperm.xlu0 %5855, %v4908
          %v5857 = vpop.permute.xlu0 %5856
          %5860 = vset.pattern.permute.xlu0 0
          %5861 = vperm.xlu0 %5860, %v4910
          %v5862 = vpop.permute.xlu0 %5861
          %5865 = vset.pattern.permute.xlu0 0
          %5866 = vperm.xlu0 %5865, %v4912
          %v5867 = vpop.permute.xlu0 %5866
          %5870 = vset.pattern.permute.xlu0 0
          %5871 = vperm.xlu0 %5870, %v4914
          %v5872 = vpop.permute.xlu0 %5871
          %5875 = vset.pattern.permute.xlu0 0
          %5876 = vperm.xlu0 %5875, %v4916
          %v5877 = vpop.permute.xlu0 %5876
          %5880 = vset.pattern.permute.xlu0 0
          %5881 = vperm.xlu0 %5880, %v4918
          %v5882 = vpop.permute.xlu0 %5881
          %5885 = vset.pattern.permute.xlu0 0
          %5886 = vperm.xlu0 %5885, %v4920
          %v5887 = vpop.permute.xlu0 %5886
          %5890 = vset.pattern.permute.xlu0 0
          %5891 = vperm.xlu0 %5890, %v4922
          %v5892 = vpop.permute.xlu0 %5891
          %5895 = vset.pattern.permute.xlu0 0
          %5896 = vperm.xlu0 %5895, %v4924
          %v5897 = vpop.permute.xlu0 %5896
          %5900 = vset.pattern.permute.xlu0 0
          %5901 = vperm.xlu0 %5900, %v4926
          %v5902 = vpop.permute.xlu0 %5901
          %5905 = vset.pattern.permute.xlu0 0
          %5906 = vperm.xlu0 %5905, %v4928
          %v5907 = vpop.permute.xlu0 %5906
          %5910 = vset.pattern.permute.xlu0 0
          %5911 = vperm.xlu0 %5910, %v4930
          %v5912 = vpop.permute.xlu0 %5911
          %5915 = vset.pattern.permute.xlu0 0
          %5916 = vperm.xlu0 %5915, %v4932
          %v5917 = vpop.permute.xlu0 %5916
          %5920 = vset.pattern.permute.xlu0 0
          %5921 = vperm.xlu0 %5920, %v4934
          %v5922 = vpop.permute.xlu0 %5921
          %5925 = vset.pattern.permute.xlu0 0
          %5926 = vperm.xlu0 %5925, %v4936
          %v5927 = vpop.permute.xlu0 %5926
          %5930 = vset.pattern.permute.xlu0 0
          %5931 = vperm.xlu0 %5930, %v4938
          %v5932 = vpop.permute.xlu0 %5931
          %5935 = vset.pattern.permute.xlu0 0
          %5936 = vperm.xlu0 %5935, %v4940
          %v5937 = vpop.permute.xlu0 %5936
          %5940 = vset.pattern.permute.xlu0 0
          %5941 = vperm.xlu0 %5940, %v4942
          %v5942 = vpop.permute.xlu0 %5941
          %5945 = vset.pattern.permute.xlu0 0
          %5946 = vperm.xlu0 %5945, %v4944
          %v5947 = vpop.permute.xlu0 %5946
          %5950 = vset.pattern.permute.xlu0 0
          %5951 = vperm.xlu0 %5950, %v4946
          %v5952 = vpop.permute.xlu0 %5951
          %5955 = vset.pattern.permute.xlu0 0
          %5956 = vperm.xlu0 %5955, %v4948
          %v5957 = vpop.permute.xlu0 %5956
          %5960 = vset.pattern.permute.xlu0 0
          %5961 = vperm.xlu0 %5960, %v4950
          %v5962 = vpop.permute.xlu0 %5961
          %5965 = vset.pattern.permute.xlu0 0
          %5966 = vperm.xlu0 %5965, %v4952
          %v5967 = vpop.permute.xlu0 %5966
          %5970 = vset.pattern.permute.xlu0 0
          %5971 = vperm.xlu0 %5970, %v4954
          %v5972 = vpop.permute.xlu0 %5971
          %5975 = vset.pattern.permute.xlu0 0
          %5976 = vperm.xlu0 %5975, %v4956
          %v5977 = vpop.permute.xlu0 %5976
          %5980 = vset.pattern.permute.xlu0 0
          %5981 = vperm.xlu0 %5980, %v4958
          %v5982 = vpop.permute.xlu0 %5981
          %5985 = vset.pattern.permute.xlu0 0
          %5986 = vperm.xlu0 %5985, %v4960
          %v5987 = vpop.permute.xlu0 %5986
          %5990 = vset.pattern.permute.xlu0 0
          %5991 = vperm.xlu0 %5990, %v4962
          %v5992 = vpop.permute.xlu0 %5991
          %5995 = vset.pattern.permute.xlu0 0
          %5996 = vperm.xlu0 %5995, %v4964
          %v5997 = vpop.permute.xlu0 %5996
          %6000 = vset.pattern.permute.xlu0 0
          %6001 = vperm.xlu0 %6000, %v4966
          %v6002 = vpop.permute.xlu0 %6001
          %6005 = vset.pattern.permute.xlu0 0
          %6006 = vperm.xlu0 %6005, %v4968
          %v6007 = vpop.permute.xlu0 %6006
          %6010 = vset.pattern.permute.xlu0 0
          %6011 = vperm.xlu0 %6010, %v4970
          %v6012 = vpop.permute.xlu0 %6011
          %6015 = vset.pattern.permute.xlu0 0
          %6016 = vperm.xlu0 %6015, %v4972
          %v6017 = vpop.permute.xlu0 %6016
          %6020 = vset.pattern.permute.xlu0 0
          %6021 = vperm.xlu0 %6020, %v4974
          %v6022 = vpop.permute.xlu0 %6021
          %6025 = vset.pattern.permute.xlu0 0
          %6026 = vperm.xlu0 %6025, %v4976
          %v6027 = vpop.permute.xlu0 %6026
          %6030 = vset.pattern.permute.xlu0 0
          %6031 = vperm.xlu0 %6030, %v4978
          %v6032 = vpop.permute.xlu0 %6031
          %6035 = vset.pattern.permute.xlu0 0
          %6036 = vperm.xlu0 %6035, %v4980
          %v6037 = vpop.permute.xlu0 %6036
          %6040 = vset.pattern.permute.xlu0 0
          %6041 = vperm.xlu0 %6040, %v4982
          %v6042 = vpop.permute.xlu0 %6041
          %6045 = vset.pattern.permute.xlu0 0
          %6046 = vperm.xlu0 %6045, %v4984
          %v6047 = vpop.permute.xlu0 %6046
          %6050 = vset.pattern.permute.xlu0 0
          %6051 = vperm.xlu0 %6050, %v4986
          %v6052 = vpop.permute.xlu0 %6051
          %6055 = vset.pattern.permute.xlu0 0
          %6056 = vperm.xlu0 %6055, %v4988
          %v6057 = vpop.permute.xlu0 %6056
          %6060 = vset.pattern.permute.xlu0 0
          %6061 = vperm.xlu0 %6060, %v4990
          %v6062 = vpop.permute.xlu0 %6061
          %6065 = vset.pattern.permute.xlu0 0
          %6066 = vperm.xlu0 %6065, %v4992
          %v6067 = vpop.permute.xlu0 %6066
          %6070 = vset.pattern.permute.xlu0 0
          %6071 = vperm.xlu0 %6070, %v4994
          %v6072 = vpop.permute.xlu0 %6071
          %6075 = vset.pattern.permute.xlu0 0
          %6076 = vperm.xlu0 %6075, %v4996
          %v6077 = vpop.permute.xlu0 %6076
          %6080 = vset.pattern.permute.xlu0 0
          %6081 = vperm.xlu0 %6080, %v4998
          %v6082 = vpop.permute.xlu0 %6081
          %6085 = vset.pattern.permute.xlu0 0
          %6086 = vperm.xlu0 %6085, %v5000
          %v6087 = vpop.permute.xlu0 %6086
          %v6089 = vmul.f32 %v5257, %v5772
          %v6090 = vmul.f32 %v5258, %v5772
          %v6091 = vmul.f32 %v5259, %v5772
          %v6092 = vmul.f32 %v5260, %v5772
          %v6093 = vmul.f32 %v5261, %v5772
          %v6094 = vmul.f32 %v5262, %v5772
          %v6095 = vmul.f32 %v5263, %v5772
          %v6096 = vmul.f32 %v5264, %v5772
          %v6097 = vmul.f32 %v5265, %v5777
          %v6098 = vmul.f32 %v5266, %v5777
          %v6099 = vmul.f32 %v5267, %v5777
          %v6100 = vmul.f32 %v5268, %v5777
          %v6101 = vmul.f32 %v5269, %v5777
          %v6102 = vmul.f32 %v5270, %v5777
          %v6103 = vmul.f32 %v5271, %v5777
          %v6104 = vmul.f32 %v5272, %v5777
          %v6105 = vmul.f32 %v5273, %v5782
          %v6106 = vmul.f32 %v5274, %v5782
          %v6107 = vmul.f32 %v5275, %v5782
          %v6108 = vmul.f32 %v5276, %v5782
          %v6109 = vmul.f32 %v5277, %v5782
          %v6110 = vmul.f32 %v5278, %v5782
          %v6111 = vmul.f32 %v5279, %v5782
          %v6112 = vmul.f32 %v5280, %v5782
          %v6113 = vmul.f32 %v5281, %v5787
          %v6114 = vmul.f32 %v5282, %v5787
          %v6115 = vmul.f32 %v5283, %v5787
          %v6116 = vmul.f32 %v5284, %v5787
          %v6117 = vmul.f32 %v5285, %v5787
          %v6118 = vmul.f32 %v5286, %v5787
          %v6119 = vmul.f32 %v5287, %v5787
          %v6120 = vmul.f32 %v5288, %v5787
          %v6121 = vmul.f32 %v5289, %v5792
          %v6122 = vmul.f32 %v5290, %v5792
          %v6123 = vmul.f32 %v5291, %v5792
          %v6124 = vmul.f32 %v5292, %v5792
          %v6125 = vmul.f32 %v5293, %v5792
          %v6126 = vmul.f32 %v5294, %v5792
          %v6127 = vmul.f32 %v5295, %v5792
          %v6128 = vmul.f32 %v5296, %v5792
          %v6129 = vmul.f32 %v5297, %v5797
          %v6130 = vmul.f32 %v5298, %v5797
          %v6131 = vmul.f32 %v5299, %v5797
          %v6132 = vmul.f32 %v5300, %v5797
          %v6133 = vmul.f32 %v5301, %v5797
          %v6134 = vmul.f32 %v5302, %v5797
          %v6135 = vmul.f32 %v5303, %v5797
          %v6136 = vmul.f32 %v5304, %v5797
          %v6137 = vmul.f32 %v5305, %v5802
          %v6138 = vmul.f32 %v5306, %v5802
          %v6139 = vmul.f32 %v5307, %v5802
          %v6140 = vmul.f32 %v5308, %v5802
          %v6141 = vmul.f32 %v5309, %v5802
          %v6142 = vmul.f32 %v5310, %v5802
          %v6143 = vmul.f32 %v5311, %v5802
          %v6144 = vmul.f32 %v5312, %v5802
          %v6145 = vmul.f32 %v5313, %v5807
          %v6146 = vmul.f32 %v5314, %v5807
          %v6147 = vmul.f32 %v5315, %v5807
          %v6148 = vmul.f32 %v5316, %v5807
          %v6149 = vmul.f32 %v5317, %v5807
          %v6150 = vmul.f32 %v5318, %v5807
          %v6151 = vmul.f32 %v5319, %v5807
          %v6152 = vmul.f32 %v5320, %v5807
          %v6153 = vmul.f32 %v5321, %v5812
          %v6154 = vmul.f32 %v5322, %v5812
          %v6155 = vmul.f32 %v5323, %v5812
          %v6156 = vmul.f32 %v5324, %v5812
          %v6157 = vmul.f32 %v5325, %v5812
          %v6158 = vmul.f32 %v5326, %v5812
          %v6159 = vmul.f32 %v5327, %v5812
          %v6160 = vmul.f32 %v5328, %v5812
          %v6161 = vmul.f32 %v5329, %v5817
          %v6162 = vmul.f32 %v5330, %v5817
          %v6163 = vmul.f32 %v5331, %v5817
          %v6164 = vmul.f32 %v5332, %v5817
          %v6165 = vmul.f32 %v5333, %v5817
          %v6166 = vmul.f32 %v5334, %v5817
          %v6167 = vmul.f32 %v5335, %v5817
          %v6168 = vmul.f32 %v5336, %v5817
          %v6169 = vmul.f32 %v5337, %v5822
          %v6170 = vmul.f32 %v5338, %v5822
          %v6171 = vmul.f32 %v5339, %v5822
          %v6172 = vmul.f32 %v5340, %v5822
          %v6173 = vmul.f32 %v5341, %v5822
          %v6174 = vmul.f32 %v5342, %v5822
          %v6175 = vmul.f32 %v5343, %v5822
          %v6176 = vmul.f32 %v5344, %v5822
          %v6177 = vmul.f32 %v5345, %v5827
          %v6178 = vmul.f32 %v5346, %v5827
          %v6179 = vmul.f32 %v5347, %v5827
          %v6180 = vmul.f32 %v5348, %v5827
          %v6181 = vmul.f32 %v5349, %v5827
          %v6182 = vmul.f32 %v5350, %v5827
          %v6183 = vmul.f32 %v5351, %v5827
          %v6184 = vmul.f32 %v5352, %v5827
          %v6185 = vmul.f32 %v5353, %v5832
          %v6186 = vmul.f32 %v5354, %v5832
          %v6187 = vmul.f32 %v5355, %v5832
          %v6188 = vmul.f32 %v5356, %v5832
          %v6189 = vmul.f32 %v5357, %v5832
          %v6190 = vmul.f32 %v5358, %v5832
          %v6191 = vmul.f32 %v5359, %v5832
          %v6192 = vmul.f32 %v5360, %v5832
          %v6193 = vmul.f32 %v5361, %v5837
          %v6194 = vmul.f32 %v5362, %v5837
          %v6195 = vmul.f32 %v5363, %v5837
          %v6196 = vmul.f32 %v5364, %v5837
          %v6197 = vmul.f32 %v5365, %v5837
          %v6198 = vmul.f32 %v5366, %v5837
          %v6199 = vmul.f32 %v5367, %v5837
          %v6200 = vmul.f32 %v5368, %v5837
          %v6201 = vmul.f32 %v5369, %v5842
          %v6202 = vmul.f32 %v5370, %v5842
          %v6203 = vmul.f32 %v5371, %v5842
          %v6204 = vmul.f32 %v5372, %v5842
          %v6205 = vmul.f32 %v5373, %v5842
          %v6206 = vmul.f32 %v5374, %v5842
          %v6207 = vmul.f32 %v5375, %v5842
          %v6208 = vmul.f32 %v5376, %v5842
          %v6209 = vmul.f32 %v5377, %v5847
          %v6210 = vmul.f32 %v5378, %v5847
          %v6211 = vmul.f32 %v5379, %v5847
          %v6212 = vmul.f32 %v5380, %v5847
          %v6213 = vmul.f32 %v5381, %v5847
          %v6214 = vmul.f32 %v5382, %v5847
          %v6215 = vmul.f32 %v5383, %v5847
          %v6216 = vmul.f32 %v5384, %v5847
          %v6217 = vmul.f32 %v5385, %v5852
          %v6218 = vmul.f32 %v5386, %v5852
          %v6219 = vmul.f32 %v5387, %v5852
          %v6220 = vmul.f32 %v5388, %v5852
          %v6221 = vmul.f32 %v5389, %v5852
          %v6222 = vmul.f32 %v5390, %v5852
          %v6223 = vmul.f32 %v5391, %v5852
          %v6224 = vmul.f32 %v5392, %v5852
          %v6225 = vmul.f32 %v5393, %v5857
          %v6226 = vmul.f32 %v5394, %v5857
          %v6227 = vmul.f32 %v5395, %v5857
          %v6228 = vmul.f32 %v5396, %v5857
          %v6229 = vmul.f32 %v5397, %v5857
          %v6230 = vmul.f32 %v5398, %v5857
          %v6231 = vmul.f32 %v5399, %v5857
          %v6232 = vmul.f32 %v5400, %v5857
          %v6233 = vmul.f32 %v5401, %v5862
          %v6234 = vmul.f32 %v5402, %v5862
          %v6235 = vmul.f32 %v5403, %v5862
          %v6236 = vmul.f32 %v5404, %v5862
          %v6237 = vmul.f32 %v5405, %v5862
          %v6238 = vmul.f32 %v5406, %v5862
          %v6239 = vmul.f32 %v5407, %v5862
          %v6240 = vmul.f32 %v5408, %v5862
          %v6241 = vmul.f32 %v5409, %v5867
          %v6242 = vmul.f32 %v5410, %v5867
          %v6243 = vmul.f32 %v5411, %v5867
          %v6244 = vmul.f32 %v5412, %v5867
          %v6245 = vmul.f32 %v5413, %v5867
          %v6246 = vmul.f32 %v5414, %v5867
          %v6247 = vmul.f32 %v5415, %v5867
          %v6248 = vmul.f32 %v5416, %v5867
          %v6249 = vmul.f32 %v5417, %v5872
          %v6250 = vmul.f32 %v5418, %v5872
          %v6251 = vmul.f32 %v5419, %v5872
          %v6252 = vmul.f32 %v5420, %v5872
          %v6253 = vmul.f32 %v5421, %v5872
          %v6254 = vmul.f32 %v5422, %v5872
          %v6255 = vmul.f32 %v5423, %v5872
          %v6256 = vmul.f32 %v5424, %v5872
          %v6257 = vmul.f32 %v5425, %v5877
          %v6258 = vmul.f32 %v5426, %v5877
          %v6259 = vmul.f32 %v5427, %v5877
          %v6260 = vmul.f32 %v5428, %v5877
          %v6261 = vmul.f32 %v5429, %v5877
          %v6262 = vmul.f32 %v5430, %v5877
          %v6263 = vmul.f32 %v5431, %v5877
          %v6264 = vmul.f32 %v5432, %v5877
          %v6265 = vmul.f32 %v5433, %v5882
          %v6266 = vmul.f32 %v5434, %v5882
          %v6267 = vmul.f32 %v5435, %v5882
          %v6268 = vmul.f32 %v5436, %v5882
          %v6269 = vmul.f32 %v5437, %v5882
          %v6270 = vmul.f32 %v5438, %v5882
          %v6271 = vmul.f32 %v5439, %v5882
          %v6272 = vmul.f32 %v5440, %v5882
          %v6273 = vmul.f32 %v5441, %v5887
          %v6274 = vmul.f32 %v5442, %v5887
          %v6275 = vmul.f32 %v5443, %v5887
          %v6276 = vmul.f32 %v5444, %v5887
          %v6277 = vmul.f32 %v5445, %v5887
          %v6278 = vmul.f32 %v5446, %v5887
          %v6279 = vmul.f32 %v5447, %v5887
          %v6280 = vmul.f32 %v5448, %v5887
          %v6281 = vmul.f32 %v5449, %v5892
          %v6282 = vmul.f32 %v5450, %v5892
          %v6283 = vmul.f32 %v5451, %v5892
          %v6284 = vmul.f32 %v5452, %v5892
          %v6285 = vmul.f32 %v5453, %v5892
          %v6286 = vmul.f32 %v5454, %v5892
          %v6287 = vmul.f32 %v5455, %v5892
          %v6288 = vmul.f32 %v5456, %v5892
          %v6289 = vmul.f32 %v5457, %v5897
          %v6290 = vmul.f32 %v5458, %v5897
          %v6291 = vmul.f32 %v5459, %v5897
          %v6292 = vmul.f32 %v5460, %v5897
          %v6293 = vmul.f32 %v5461, %v5897
          %v6294 = vmul.f32 %v5462, %v5897
          %v6295 = vmul.f32 %v5463, %v5897
          %v6296 = vmul.f32 %v5464, %v5897
          %v6297 = vmul.f32 %v5465, %v5902
          %v6298 = vmul.f32 %v5466, %v5902
          %v6299 = vmul.f32 %v5467, %v5902
          %v6300 = vmul.f32 %v5468, %v5902
          %v6301 = vmul.f32 %v5469, %v5902
          %v6302 = vmul.f32 %v5470, %v5902
          %v6303 = vmul.f32 %v5471, %v5902
          %v6304 = vmul.f32 %v5472, %v5902
          %v6305 = vmul.f32 %v5473, %v5907
          %v6306 = vmul.f32 %v5474, %v5907
          %v6307 = vmul.f32 %v5475, %v5907
          %v6308 = vmul.f32 %v5476, %v5907
          %v6309 = vmul.f32 %v5477, %v5907
          %v6310 = vmul.f32 %v5478, %v5907
          %v6311 = vmul.f32 %v5479, %v5907
          %v6312 = vmul.f32 %v5480, %v5907
          %v6313 = vmul.f32 %v5481, %v5912
          %v6314 = vmul.f32 %v5482, %v5912
          %v6315 = vmul.f32 %v5483, %v5912
          %v6316 = vmul.f32 %v5484, %v5912
          %v6317 = vmul.f32 %v5485, %v5912
          %v6318 = vmul.f32 %v5486, %v5912
          %v6319 = vmul.f32 %v5487, %v5912
          %v6320 = vmul.f32 %v5488, %v5912
          %v6321 = vmul.f32 %v5489, %v5917
          %v6322 = vmul.f32 %v5490, %v5917
          %v6323 = vmul.f32 %v5491, %v5917
          %v6324 = vmul.f32 %v5492, %v5917
          %v6325 = vmul.f32 %v5493, %v5917
          %v6326 = vmul.f32 %v5494, %v5917
          %v6327 = vmul.f32 %v5495, %v5917
          %v6328 = vmul.f32 %v5496, %v5917
          %v6329 = vmul.f32 %v5497, %v5922
          %v6330 = vmul.f32 %v5498, %v5922
          %v6331 = vmul.f32 %v5499, %v5922
          %v6332 = vmul.f32 %v5500, %v5922
          %v6333 = vmul.f32 %v5501, %v5922
          %v6334 = vmul.f32 %v5502, %v5922
          %v6335 = vmul.f32 %v5503, %v5922
          %v6336 = vmul.f32 %v5504, %v5922
          %v6337 = vmul.f32 %v5505, %v5927
          %v6338 = vmul.f32 %v5506, %v5927
          %v6339 = vmul.f32 %v5507, %v5927
          %v6340 = vmul.f32 %v5508, %v5927
          %v6341 = vmul.f32 %v5509, %v5927
          %v6342 = vmul.f32 %v5510, %v5927
          %v6343 = vmul.f32 %v5511, %v5927
          %v6344 = vmul.f32 %v5512, %v5927
          %v6345 = vmul.f32 %v5513, %v5932
          %v6346 = vmul.f32 %v5514, %v5932
          %v6347 = vmul.f32 %v5515, %v5932
          %v6348 = vmul.f32 %v5516, %v5932
          %v6349 = vmul.f32 %v5517, %v5932
          %v6350 = vmul.f32 %v5518, %v5932
          %v6351 = vmul.f32 %v5519, %v5932
          %v6352 = vmul.f32 %v5520, %v5932
          %v6353 = vmul.f32 %v5521, %v5937
          %v6354 = vmul.f32 %v5522, %v5937
          %v6355 = vmul.f32 %v5523, %v5937
          %v6356 = vmul.f32 %v5524, %v5937
          %v6357 = vmul.f32 %v5525, %v5937
          %v6358 = vmul.f32 %v5526, %v5937
          %v6359 = vmul.f32 %v5527, %v5937
          %v6360 = vmul.f32 %v5528, %v5937
          %v6361 = vmul.f32 %v5529, %v5942
          %v6362 = vmul.f32 %v5530, %v5942
          %v6363 = vmul.f32 %v5531, %v5942
          %v6364 = vmul.f32 %v5532, %v5942
          %v6365 = vmul.f32 %v5533, %v5942
          %v6366 = vmul.f32 %v5534, %v5942
          %v6367 = vmul.f32 %v5535, %v5942
          %v6368 = vmul.f32 %v5536, %v5942
          %v6369 = vmul.f32 %v5537, %v5947
          %v6370 = vmul.f32 %v5538, %v5947
          %v6371 = vmul.f32 %v5539, %v5947
          %v6372 = vmul.f32 %v5540, %v5947
          %v6373 = vmul.f32 %v5541, %v5947
          %v6374 = vmul.f32 %v5542, %v5947
          %v6375 = vmul.f32 %v5543, %v5947
          %v6376 = vmul.f32 %v5544, %v5947
          %v6377 = vmul.f32 %v5545, %v5952
          %v6378 = vmul.f32 %v5546, %v5952
          %v6379 = vmul.f32 %v5547, %v5952
          %v6380 = vmul.f32 %v5548, %v5952
          %v6381 = vmul.f32 %v5549, %v5952
          %v6382 = vmul.f32 %v5550, %v5952
          %v6383 = vmul.f32 %v5551, %v5952
          %v6384 = vmul.f32 %v5552, %v5952
          %v6385 = vmul.f32 %v5553, %v5957
          %v6386 = vmul.f32 %v5554, %v5957
          %v6387 = vmul.f32 %v5555, %v5957
          %v6388 = vmul.f32 %v5556, %v5957
          %v6389 = vmul.f32 %v5557, %v5957
          %v6390 = vmul.f32 %v5558, %v5957
          %v6391 = vmul.f32 %v5559, %v5957
          %v6392 = vmul.f32 %v5560, %v5957
          %v6393 = vmul.f32 %v5561, %v5962
          %v6394 = vmul.f32 %v5562, %v5962
          %v6395 = vmul.f32 %v5563, %v5962
          %v6396 = vmul.f32 %v5564, %v5962
          %v6397 = vmul.f32 %v5565, %v5962
          %v6398 = vmul.f32 %v5566, %v5962
          %v6399 = vmul.f32 %v5567, %v5962
          %v6400 = vmul.f32 %v5568, %v5962
          %v6401 = vmul.f32 %v5569, %v5967
          %v6402 = vmul.f32 %v5570, %v5967
          %v6403 = vmul.f32 %v5571, %v5967
          %v6404 = vmul.f32 %v5572, %v5967
          %v6405 = vmul.f32 %v5573, %v5967
          %v6406 = vmul.f32 %v5574, %v5967
          %v6407 = vmul.f32 %v5575, %v5967
          %v6408 = vmul.f32 %v5576, %v5967
          %v6409 = vmul.f32 %v5577, %v5972
          %v6410 = vmul.f32 %v5578, %v5972
          %v6411 = vmul.f32 %v5579, %v5972
          %v6412 = vmul.f32 %v5580, %v5972
          %v6413 = vmul.f32 %v5581, %v5972
          %v6414 = vmul.f32 %v5582, %v5972
          %v6415 = vmul.f32 %v5583, %v5972
          %v6416 = vmul.f32 %v5584, %v5972
          %v6417 = vmul.f32 %v5585, %v5977
          %v6418 = vmul.f32 %v5586, %v5977
          %v6419 = vmul.f32 %v5587, %v5977
          %v6420 = vmul.f32 %v5588, %v5977
          %v6421 = vmul.f32 %v5589, %v5977
          %v6422 = vmul.f32 %v5590, %v5977
          %v6423 = vmul.f32 %v5591, %v5977
          %v6424 = vmul.f32 %v5592, %v5977
          %v6425 = vmul.f32 %v5593, %v5982
          %v6426 = vmul.f32 %v5594, %v5982
          %v6427 = vmul.f32 %v5595, %v5982
          %v6428 = vmul.f32 %v5596, %v5982
          %v6429 = vmul.f32 %v5597, %v5982
          %v6430 = vmul.f32 %v5598, %v5982
          %v6431 = vmul.f32 %v5599, %v5982
          %v6432 = vmul.f32 %v5600, %v5982
          %v6433 = vmul.f32 %v5601, %v5987
          %v6434 = vmul.f32 %v5602, %v5987
          %v6435 = vmul.f32 %v5603, %v5987
          %v6436 = vmul.f32 %v5604, %v5987
          %v6437 = vmul.f32 %v5605, %v5987
          %v6438 = vmul.f32 %v5606, %v5987
          %v6439 = vmul.f32 %v5607, %v5987
          %v6440 = vmul.f32 %v5608, %v5987
          %v6441 = vmul.f32 %v5609, %v5992
          %v6442 = vmul.f32 %v5610, %v5992
          %v6443 = vmul.f32 %v5611, %v5992
          %v6444 = vmul.f32 %v5612, %v5992
          %v6445 = vmul.f32 %v5613, %v5992
          %v6446 = vmul.f32 %v5614, %v5992
          %v6447 = vmul.f32 %v5615, %v5992
          %v6448 = vmul.f32 %v5616, %v5992
          %v6449 = vmul.f32 %v5617, %v5997
          %v6450 = vmul.f32 %v5618, %v5997
          %v6451 = vmul.f32 %v5619, %v5997
          %v6452 = vmul.f32 %v5620, %v5997
          %v6453 = vmul.f32 %v5621, %v5997
          %v6454 = vmul.f32 %v5622, %v5997
          %v6455 = vmul.f32 %v5623, %v5997
          %v6456 = vmul.f32 %v5624, %v5997
          %v6457 = vmul.f32 %v5625, %v6002
          %v6458 = vmul.f32 %v5626, %v6002
          %v6459 = vmul.f32 %v5627, %v6002
          %v6460 = vmul.f32 %v5628, %v6002
          %v6461 = vmul.f32 %v5629, %v6002
          %v6462 = vmul.f32 %v5630, %v6002
          %v6463 = vmul.f32 %v5631, %v6002
          %v6464 = vmul.f32 %v5632, %v6002
          %v6465 = vmul.f32 %v5633, %v6007
          %v6466 = vmul.f32 %v5634, %v6007
          %v6467 = vmul.f32 %v5635, %v6007
          %v6468 = vmul.f32 %v5636, %v6007
          %v6469 = vmul.f32 %v5637, %v6007
          %v6470 = vmul.f32 %v5638, %v6007
          %v6471 = vmul.f32 %v5639, %v6007
          %v6472 = vmul.f32 %v5640, %v6007
          %v6473 = vmul.f32 %v5641, %v6012
          %v6474 = vmul.f32 %v5642, %v6012
          %v6475 = vmul.f32 %v5643, %v6012
          %v6476 = vmul.f32 %v5644, %v6012
          %v6477 = vmul.f32 %v5645, %v6012
          %v6478 = vmul.f32 %v5646, %v6012
          %v6479 = vmul.f32 %v5647, %v6012
          %v6480 = vmul.f32 %v5648, %v6012
          %v6481 = vmul.f32 %v5649, %v6017
          %v6482 = vmul.f32 %v5650, %v6017
          %v6483 = vmul.f32 %v5651, %v6017
          %v6484 = vmul.f32 %v5652, %v6017
          %v6485 = vmul.f32 %v5653, %v6017
          %v6486 = vmul.f32 %v5654, %v6017
          %v6487 = vmul.f32 %v5655, %v6017
          %v6488 = vmul.f32 %v5656, %v6017
          %v6489 = vmul.f32 %v5657, %v6022
          %v6490 = vmul.f32 %v5658, %v6022
          %v6491 = vmul.f32 %v5659, %v6022
          %v6492 = vmul.f32 %v5660, %v6022
          %v6493 = vmul.f32 %v5661, %v6022
          %v6494 = vmul.f32 %v5662, %v6022
          %v6495 = vmul.f32 %v5663, %v6022
          %v6496 = vmul.f32 %v5664, %v6022
          %v6497 = vmul.f32 %v5665, %v6027
          %v6498 = vmul.f32 %v5666, %v6027
          %v6499 = vmul.f32 %v5667, %v6027
          %v6500 = vmul.f32 %v5668, %v6027
          %v6501 = vmul.f32 %v5669, %v6027
          %v6502 = vmul.f32 %v5670, %v6027
          %v6503 = vmul.f32 %v5671, %v6027
          %v6504 = vmul.f32 %v5672, %v6027
          %v6505 = vmul.f32 %v5673, %v6032
          %v6506 = vmul.f32 %v5674, %v6032
          %v6507 = vmul.f32 %v5675, %v6032
          %v6508 = vmul.f32 %v5676, %v6032
          %v6509 = vmul.f32 %v5677, %v6032
          %v6510 = vmul.f32 %v5678, %v6032
          %v6511 = vmul.f32 %v5679, %v6032
          %v6512 = vmul.f32 %v5680, %v6032
          %v6513 = vmul.f32 %v5681, %v6037
          %v6514 = vmul.f32 %v5682, %v6037
          %v6515 = vmul.f32 %v5683, %v6037
          %v6516 = vmul.f32 %v5684, %v6037
          %v6517 = vmul.f32 %v5685, %v6037
          %v6518 = vmul.f32 %v5686, %v6037
          %v6519 = vmul.f32 %v5687, %v6037
          %v6520 = vmul.f32 %v5688, %v6037
          %v6521 = vmul.f32 %v5689, %v6042
          %v6522 = vmul.f32 %v5690, %v6042
          %v6523 = vmul.f32 %v5691, %v6042
          %v6524 = vmul.f32 %v5692, %v6042
          %v6525 = vmul.f32 %v5693, %v6042
          %v6526 = vmul.f32 %v5694, %v6042
          %v6527 = vmul.f32 %v5695, %v6042
          %v6528 = vmul.f32 %v5696, %v6042
          %v6529 = vmul.f32 %v5697, %v6047
          %v6530 = vmul.f32 %v5698, %v6047
          %v6531 = vmul.f32 %v5699, %v6047
          %v6532 = vmul.f32 %v5700, %v6047
          %v6533 = vmul.f32 %v5701, %v6047
          %v6534 = vmul.f32 %v5702, %v6047
          %v6535 = vmul.f32 %v5703, %v6047
          %v6536 = vmul.f32 %v5704, %v6047
          %v6537 = vmul.f32 %v5705, %v6052
          %v6538 = vmul.f32 %v5706, %v6052
          %v6539 = vmul.f32 %v5707, %v6052
          %v6540 = vmul.f32 %v5708, %v6052
          %v6541 = vmul.f32 %v5709, %v6052
          %v6542 = vmul.f32 %v5710, %v6052
          %v6543 = vmul.f32 %v5711, %v6052
          %v6544 = vmul.f32 %v5712, %v6052
          %v6545 = vmul.f32 %v5713, %v6057
          %v6546 = vmul.f32 %v5714, %v6057
          %v6547 = vmul.f32 %v5715, %v6057
          %v6548 = vmul.f32 %v5716, %v6057
          %v6549 = vmul.f32 %v5717, %v6057
          %v6550 = vmul.f32 %v5718, %v6057
          %v6551 = vmul.f32 %v5719, %v6057
          %v6552 = vmul.f32 %v5720, %v6057
          %v6553 = vmul.f32 %v5721, %v6062
          %v6554 = vmul.f32 %v5722, %v6062
          %v6555 = vmul.f32 %v5723, %v6062
          %v6556 = vmul.f32 %v5724, %v6062
          %v6557 = vmul.f32 %v5725, %v6062
          %v6558 = vmul.f32 %v5726, %v6062
          %v6559 = vmul.f32 %v5727, %v6062
          %v6560 = vmul.f32 %v5728, %v6062
          %v6561 = vmul.f32 %v5729, %v6067
          %v6562 = vmul.f32 %v5730, %v6067
          %v6563 = vmul.f32 %v5731, %v6067
          %v6564 = vmul.f32 %v5732, %v6067
          %v6565 = vmul.f32 %v5733, %v6067
          %v6566 = vmul.f32 %v5734, %v6067
          %v6567 = vmul.f32 %v5735, %v6067
          %v6568 = vmul.f32 %v5736, %v6067
          %v6569 = vmul.f32 %v5737, %v6072
          %v6570 = vmul.f32 %v5738, %v6072
          %v6571 = vmul.f32 %v5739, %v6072
          %v6572 = vmul.f32 %v5740, %v6072
          %v6573 = vmul.f32 %v5741, %v6072
          %v6574 = vmul.f32 %v5742, %v6072
          %v6575 = vmul.f32 %v5743, %v6072
          %v6576 = vmul.f32 %v5744, %v6072
          %v6577 = vmul.f32 %v5745, %v6077
          %v6578 = vmul.f32 %v5746, %v6077
          %v6579 = vmul.f32 %v5747, %v6077
          %v6580 = vmul.f32 %v5748, %v6077
          %v6581 = vmul.f32 %v5749, %v6077
          %v6582 = vmul.f32 %v5750, %v6077
          %v6583 = vmul.f32 %v5751, %v6077
          %v6584 = vmul.f32 %v5752, %v6077
          %v6585 = vmul.f32 %v5753, %v6082
          %v6586 = vmul.f32 %v5754, %v6082
          %v6587 = vmul.f32 %v5755, %v6082
          %v6588 = vmul.f32 %v5756, %v6082
          %v6589 = vmul.f32 %v5757, %v6082
          %v6590 = vmul.f32 %v5758, %v6082
          %v6591 = vmul.f32 %v5759, %v6082
          %v6592 = vmul.f32 %v5760, %v6082
          %v6593 = vmul.f32 %v5761, %v6087
          %v6594 = vmul.f32 %v5762, %v6087
          %v6595 = vmul.f32 %v5763, %v6087
          %v6596 = vmul.f32 %v5764, %v6087
          %v6597 = vmul.f32 %v5765, %v6087
          %v6598 = vmul.f32 %v5766, %v6087
          %v6599 = vmul.f32 %v5767, %v6087
          %v6600 = vmul.f32 %v5768, %v6087
          %v6601 = vadd.f32 %v6089, %v6097
          %v6602 = vadd.f32 %v6601, %v6105
          %v6603 = vadd.f32 %v6602, %v6113
          %v6604 = vadd.f32 %v6603, %v6121
          %v6605 = vadd.f32 %v6604, %v6129
          %v6606 = vadd.f32 %v6605, %v6137
          %v6607 = vadd.f32 %v6606, %v6145
          %v6608 = vadd.f32 %v6607, %v6153
          %v6609 = vadd.f32 %v6608, %v6161
          %v6610 = vadd.f32 %v6609, %v6169
          %v6611 = vadd.f32 %v6610, %v6177
          %v6612 = vadd.f32 %v6611, %v6185
          %v6613 = vadd.f32 %v6612, %v6193
          %v6614 = vadd.f32 %v6613, %v6201
          %v6615 = vadd.f32 %v6614, %v6209
          %v6616 = vadd.f32 %v6615, %v6217
          %v6617 = vadd.f32 %v6616, %v6225
          %v6618 = vadd.f32 %v6617, %v6233
          %v6619 = vadd.f32 %v6618, %v6241
          %v6620 = vadd.f32 %v6619, %v6249
          %v6621 = vadd.f32 %v6620, %v6257
          %v6622 = vadd.f32 %v6621, %v6265
          %v6623 = vadd.f32 %v6622, %v6273
          %v6624 = vadd.f32 %v6623, %v6281
          %v6625 = vadd.f32 %v6624, %v6289
          %v6626 = vadd.f32 %v6625, %v6297
          %v6627 = vadd.f32 %v6626, %v6305
          %v6628 = vadd.f32 %v6627, %v6313
          %v6629 = vadd.f32 %v6628, %v6321
          %v6630 = vadd.f32 %v6629, %v6329
          %v6631 = vadd.f32 %v6630, %v6337
          %v6632 = vadd.f32 %v6631, %v6345
          %v6633 = vadd.f32 %v6632, %v6353
          %v6634 = vadd.f32 %v6633, %v6361
          %v6635 = vadd.f32 %v6634, %v6369
          %v6636 = vadd.f32 %v6635, %v6377
          %v6637 = vadd.f32 %v6636, %v6385
          %v6638 = vadd.f32 %v6637, %v6393
          %v6639 = vadd.f32 %v6638, %v6401
          %v6640 = vadd.f32 %v6639, %v6409
          %v6641 = vadd.f32 %v6640, %v6417
          %v6642 = vadd.f32 %v6641, %v6425
          %v6643 = vadd.f32 %v6642, %v6433
          %v6644 = vadd.f32 %v6643, %v6441
          %v6645 = vadd.f32 %v6644, %v6449
          %v6646 = vadd.f32 %v6645, %v6457
          %v6647 = vadd.f32 %v6646, %v6465
          %v6648 = vadd.f32 %v6647, %v6473
          %v6649 = vadd.f32 %v6648, %v6481
          %v6650 = vadd.f32 %v6649, %v6489
          %v6651 = vadd.f32 %v6650, %v6497
          %v6652 = vadd.f32 %v6651, %v6505
          %v6653 = vadd.f32 %v6652, %v6513
          %v6654 = vadd.f32 %v6653, %v6521
          %v6655 = vadd.f32 %v6654, %v6529
          %v6656 = vadd.f32 %v6655, %v6537
          %v6657 = vadd.f32 %v6656, %v6545
          %v6658 = vadd.f32 %v6657, %v6553
          %v6659 = vadd.f32 %v6658, %v6561
          %v6660 = vadd.f32 %v6659, %v6569
          %v6661 = vadd.f32 %v6660, %v6577
          %v6662 = vadd.f32 %v6661, %v6585
          %v6663 = vadd.f32 %v6662, %v6593
          %v6664 = vrot.slane %v6663, 4
          %v6665 = vadd.f32 %v6663, %v6664
          %v6666 = vrot.slane %v6665, 2
          %v6667 = vadd.f32 %v6665, %v6666
          %v6668 = vrot.slane %v6667, 1
          %v6669 = vadd.f32 %v6667, %v6668
          %v6670 = vadd.f32 %v6090, %v6098
          %v6671 = vadd.f32 %v6670, %v6106
          %v6672 = vadd.f32 %v6671, %v6114
          %v6673 = vadd.f32 %v6672, %v6122
          %v6674 = vadd.f32 %v6673, %v6130
          %v6675 = vadd.f32 %v6674, %v6138
          %v6676 = vadd.f32 %v6675, %v6146
          %v6677 = vadd.f32 %v6676, %v6154
          %v6678 = vadd.f32 %v6677, %v6162
          %v6679 = vadd.f32 %v6678, %v6170
          %v6680 = vadd.f32 %v6679, %v6178
          %v6681 = vadd.f32 %v6680, %v6186
          %v6682 = vadd.f32 %v6681, %v6194
          %v6683 = vadd.f32 %v6682, %v6202
          %v6684 = vadd.f32 %v6683, %v6210
          %v6685 = vadd.f32 %v6684, %v6218
          %v6686 = vadd.f32 %v6685, %v6226
          %v6687 = vadd.f32 %v6686, %v6234
          %v6688 = vadd.f32 %v6687, %v6242
          %v6689 = vadd.f32 %v6688, %v6250
          %v6690 = vadd.f32 %v6689, %v6258
          %v6691 = vadd.f32 %v6690, %v6266
          %v6692 = vadd.f32 %v6691, %v6274
          %v6693 = vadd.f32 %v6692, %v6282
          %v6694 = vadd.f32 %v6693, %v6290
          %v6695 = vadd.f32 %v6694, %v6298
          %v6696 = vadd.f32 %v6695, %v6306
          %v6697 = vadd.f32 %v6696, %v6314
          %v6698 = vadd.f32 %v6697, %v6322
          %v6699 = vadd.f32 %v6698, %v6330
          %v6700 = vadd.f32 %v6699, %v6338
          %v6701 = vadd.f32 %v6700, %v6346
          %v6702 = vadd.f32 %v6701, %v6354
          %v6703 = vadd.f32 %v6702, %v6362
          %v6704 = vadd.f32 %v6703, %v6370
          %v6705 = vadd.f32 %v6704, %v6378
          %v6706 = vadd.f32 %v6705, %v6386
          %v6707 = vadd.f32 %v6706, %v6394
          %v6708 = vadd.f32 %v6707, %v6402
          %v6709 = vadd.f32 %v6708, %v6410
          %v6710 = vadd.f32 %v6709, %v6418
          %v6711 = vadd.f32 %v6710, %v6426
          %v6712 = vadd.f32 %v6711, %v6434
          %v6713 = vadd.f32 %v6712, %v6442
          %v6714 = vadd.f32 %v6713, %v6450
          %v6715 = vadd.f32 %v6714, %v6458
          %v6716 = vadd.f32 %v6715, %v6466
          %v6717 = vadd.f32 %v6716, %v6474
          %v6718 = vadd.f32 %v6717, %v6482
          %v6719 = vadd.f32 %v6718, %v6490
          %v6720 = vadd.f32 %v6719, %v6498
          %v6721 = vadd.f32 %v6720, %v6506
          %v6722 = vadd.f32 %v6721, %v6514
          %v6723 = vadd.f32 %v6722, %v6522
          %v6724 = vadd.f32 %v6723, %v6530
          %v6725 = vadd.f32 %v6724, %v6538
          %v6726 = vadd.f32 %v6725, %v6546
          %v6727 = vadd.f32 %v6726, %v6554
          %v6728 = vadd.f32 %v6727, %v6562
          %v6729 = vadd.f32 %v6728, %v6570
          %v6730 = vadd.f32 %v6729, %v6578
          %v6731 = vadd.f32 %v6730, %v6586
          %v6732 = vadd.f32 %v6731, %v6594
          %v6733 = vrot.slane %v6732, 4
          %v6734 = vadd.f32 %v6732, %v6733
          %v6735 = vrot.slane %v6734, 2
          %v6736 = vadd.f32 %v6734, %v6735
          %v6737 = vrot.slane %v6736, 1
          %v6738 = vadd.f32 %v6736, %v6737
          %v6739 = vadd.f32 %v6091, %v6099
          %v6740 = vadd.f32 %v6739, %v6107
          %v6741 = vadd.f32 %v6740, %v6115
          %v6742 = vadd.f32 %v6741, %v6123
          %v6743 = vadd.f32 %v6742, %v6131
          %v6744 = vadd.f32 %v6743, %v6139
          %v6745 = vadd.f32 %v6744, %v6147
          %v6746 = vadd.f32 %v6745, %v6155
          %v6747 = vadd.f32 %v6746, %v6163
          %v6748 = vadd.f32 %v6747, %v6171
          %v6749 = vadd.f32 %v6748, %v6179
          %v6750 = vadd.f32 %v6749, %v6187
          %v6751 = vadd.f32 %v6750, %v6195
          %v6752 = vadd.f32 %v6751, %v6203
          %v6753 = vadd.f32 %v6752, %v6211
          %v6754 = vadd.f32 %v6753, %v6219
          %v6755 = vadd.f32 %v6754, %v6227
          %v6756 = vadd.f32 %v6755, %v6235
          %v6757 = vadd.f32 %v6756, %v6243
          %v6758 = vadd.f32 %v6757, %v6251
          %v6759 = vadd.f32 %v6758, %v6259
          %v6760 = vadd.f32 %v6759, %v6267
          %v6761 = vadd.f32 %v6760, %v6275
          %v6762 = vadd.f32 %v6761, %v6283
          %v6763 = vadd.f32 %v6762, %v6291
          %v6764 = vadd.f32 %v6763, %v6299
          %v6765 = vadd.f32 %v6764, %v6307
          %v6766 = vadd.f32 %v6765, %v6315
          %v6767 = vadd.f32 %v6766, %v6323
          %v6768 = vadd.f32 %v6767, %v6331
          %v6769 = vadd.f32 %v6768, %v6339
          %v6770 = vadd.f32 %v6769, %v6347
          %v6771 = vadd.f32 %v6770, %v6355
          %v6772 = vadd.f32 %v6771, %v6363
          %v6773 = vadd.f32 %v6772, %v6371
          %v6774 = vadd.f32 %v6773, %v6379
          %v6775 = vadd.f32 %v6774, %v6387
          %v6776 = vadd.f32 %v6775, %v6395
          %v6777 = vadd.f32 %v6776, %v6403
          %v6778 = vadd.f32 %v6777, %v6411
          %v6779 = vadd.f32 %v6778, %v6419
          %v6780 = vadd.f32 %v6779, %v6427
          %v6781 = vadd.f32 %v6780, %v6435
          %v6782 = vadd.f32 %v6781, %v6443
          %v6783 = vadd.f32 %v6782, %v6451
          %v6784 = vadd.f32 %v6783, %v6459
          %v6785 = vadd.f32 %v6784, %v6467
          %v6786 = vadd.f32 %v6785, %v6475
          %v6787 = vadd.f32 %v6786, %v6483
          %v6788 = vadd.f32 %v6787, %v6491
          %v6789 = vadd.f32 %v6788, %v6499
          %v6790 = vadd.f32 %v6789, %v6507
          %v6791 = vadd.f32 %v6790, %v6515
          %v6792 = vadd.f32 %v6791, %v6523
          %v6793 = vadd.f32 %v6792, %v6531
          %v6794 = vadd.f32 %v6793, %v6539
          %v6795 = vadd.f32 %v6794, %v6547
          %v6796 = vadd.f32 %v6795, %v6555
          %v6797 = vadd.f32 %v6796, %v6563
          %v6798 = vadd.f32 %v6797, %v6571
          %v6799 = vadd.f32 %v6798, %v6579
          %v6800 = vadd.f32 %v6799, %v6587
          %v6801 = vadd.f32 %v6800, %v6595
          %v6802 = vrot.slane %v6801, 4
          %v6803 = vadd.f32 %v6801, %v6802
          %v6804 = vrot.slane %v6803, 2
          %v6805 = vadd.f32 %v6803, %v6804
          %v6806 = vrot.slane %v6805, 1
          %v6807 = vadd.f32 %v6805, %v6806
          %v6808 = vadd.f32 %v6092, %v6100
          %v6809 = vadd.f32 %v6808, %v6108
          %v6810 = vadd.f32 %v6809, %v6116
          %v6811 = vadd.f32 %v6810, %v6124
          %v6812 = vadd.f32 %v6811, %v6132
          %v6813 = vadd.f32 %v6812, %v6140
          %v6814 = vadd.f32 %v6813, %v6148
          %v6815 = vadd.f32 %v6814, %v6156
          %v6816 = vadd.f32 %v6815, %v6164
          %v6817 = vadd.f32 %v6816, %v6172
          %v6818 = vadd.f32 %v6817, %v6180
          %v6819 = vadd.f32 %v6818, %v6188
          %v6820 = vadd.f32 %v6819, %v6196
          %v6821 = vadd.f32 %v6820, %v6204
          %v6822 = vadd.f32 %v6821, %v6212
          %v6823 = vadd.f32 %v6822, %v6220
          %v6824 = vadd.f32 %v6823, %v6228
          %v6825 = vadd.f32 %v6824, %v6236
          %v6826 = vadd.f32 %v6825, %v6244
          %v6827 = vadd.f32 %v6826, %v6252
          %v6828 = vadd.f32 %v6827, %v6260
          %v6829 = vadd.f32 %v6828, %v6268
          %v6830 = vadd.f32 %v6829, %v6276
          %v6831 = vadd.f32 %v6830, %v6284
          %v6832 = vadd.f32 %v6831, %v6292
          %v6833 = vadd.f32 %v6832, %v6300
          %v6834 = vadd.f32 %v6833, %v6308
          %v6835 = vadd.f32 %v6834, %v6316
          %v6836 = vadd.f32 %v6835, %v6324
          %v6837 = vadd.f32 %v6836, %v6332
          %v6838 = vadd.f32 %v6837, %v6340
          %v6839 = vadd.f32 %v6838, %v6348
          %v6840 = vadd.f32 %v6839, %v6356
          %v6841 = vadd.f32 %v6840, %v6364
          %v6842 = vadd.f32 %v6841, %v6372
          %v6843 = vadd.f32 %v6842, %v6380
          %v6844 = vadd.f32 %v6843, %v6388
          %v6845 = vadd.f32 %v6844, %v6396
          %v6846 = vadd.f32 %v6845, %v6404
          %v6847 = vadd.f32 %v6846, %v6412
          %v6848 = vadd.f32 %v6847, %v6420
          %v6849 = vadd.f32 %v6848, %v6428
          %v6850 = vadd.f32 %v6849, %v6436
          %v6851 = vadd.f32 %v6850, %v6444
          %v6852 = vadd.f32 %v6851, %v6452
          %v6853 = vadd.f32 %v6852, %v6460
          %v6854 = vadd.f32 %v6853, %v6468
          %v6855 = vadd.f32 %v6854, %v6476
          %v6856 = vadd.f32 %v6855, %v6484
          %v6857 = vadd.f32 %v6856, %v6492
          %v6858 = vadd.f32 %v6857, %v6500
          %v6859 = vadd.f32 %v6858, %v6508
          %v6860 = vadd.f32 %v6859, %v6516
          %v6861 = vadd.f32 %v6860, %v6524
          %v6862 = vadd.f32 %v6861, %v6532
          %v6863 = vadd.f32 %v6862, %v6540
          %v6864 = vadd.f32 %v6863, %v6548
          %v6865 = vadd.f32 %v6864, %v6556
          %v6866 = vadd.f32 %v6865, %v6564
          %v6867 = vadd.f32 %v6866, %v6572
          %v6868 = vadd.f32 %v6867, %v6580
          %v6869 = vadd.f32 %v6868, %v6588
          %v6870 = vadd.f32 %v6869, %v6596
          %v6871 = vrot.slane %v6870, 4
          %v6872 = vadd.f32 %v6870, %v6871
          %v6873 = vrot.slane %v6872, 2
          %v6874 = vadd.f32 %v6872, %v6873
          %v6875 = vrot.slane %v6874, 1
          %v6876 = vadd.f32 %v6874, %v6875
          %v6877 = vadd.f32 %v6093, %v6101
          %v6878 = vadd.f32 %v6877, %v6109
          %v6879 = vadd.f32 %v6878, %v6117
          %v6880 = vadd.f32 %v6879, %v6125
          %v6881 = vadd.f32 %v6880, %v6133
          %v6882 = vadd.f32 %v6881, %v6141
          %v6883 = vadd.f32 %v6882, %v6149
          %v6884 = vadd.f32 %v6883, %v6157
          %v6885 = vadd.f32 %v6884, %v6165
          %v6886 = vadd.f32 %v6885, %v6173
          %v6887 = vadd.f32 %v6886, %v6181
          %v6888 = vadd.f32 %v6887, %v6189
          %v6889 = vadd.f32 %v6888, %v6197
          %v6890 = vadd.f32 %v6889, %v6205
          %v6891 = vadd.f32 %v6890, %v6213
          %v6892 = vadd.f32 %v6891, %v6221
          %v6893 = vadd.f32 %v6892, %v6229
          %v6894 = vadd.f32 %v6893, %v6237
          %v6895 = vadd.f32 %v6894, %v6245
          %v6896 = vadd.f32 %v6895, %v6253
          %v6897 = vadd.f32 %v6896, %v6261
          %v6898 = vadd.f32 %v6897, %v6269
          %v6899 = vadd.f32 %v6898, %v6277
          %v6900 = vadd.f32 %v6899, %v6285
          %v6901 = vadd.f32 %v6900, %v6293
          %v6902 = vadd.f32 %v6901, %v6301
          %v6903 = vadd.f32 %v6902, %v6309
          %v6904 = vadd.f32 %v6903, %v6317
          %v6905 = vadd.f32 %v6904, %v6325
          %v6906 = vadd.f32 %v6905, %v6333
          %v6907 = vadd.f32 %v6906, %v6341
          %v6908 = vadd.f32 %v6907, %v6349
          %v6909 = vadd.f32 %v6908, %v6357
          %v6910 = vadd.f32 %v6909, %v6365
          %v6911 = vadd.f32 %v6910, %v6373
          %v6912 = vadd.f32 %v6911, %v6381
          %v6913 = vadd.f32 %v6912, %v6389
          %v6914 = vadd.f32 %v6913, %v6397
          %v6915 = vadd.f32 %v6914, %v6405
          %v6916 = vadd.f32 %v6915, %v6413
          %v6917 = vadd.f32 %v6916, %v6421
          %v6918 = vadd.f32 %v6917, %v6429
          %v6919 = vadd.f32 %v6918, %v6437
          %v6920 = vadd.f32 %v6919, %v6445
          %v6921 = vadd.f32 %v6920, %v6453
          %v6922 = vadd.f32 %v6921, %v6461
          %v6923 = vadd.f32 %v6922, %v6469
          %v6924 = vadd.f32 %v6923, %v6477
          %v6925 = vadd.f32 %v6924, %v6485
          %v6926 = vadd.f32 %v6925, %v6493
          %v6927 = vadd.f32 %v6926, %v6501
          %v6928 = vadd.f32 %v6927, %v6509
          %v6929 = vadd.f32 %v6928, %v6517
          %v6930 = vadd.f32 %v6929, %v6525
          %v6931 = vadd.f32 %v6930, %v6533
          %v6932 = vadd.f32 %v6931, %v6541
          %v6933 = vadd.f32 %v6932, %v6549
          %v6934 = vadd.f32 %v6933, %v6557
          %v6935 = vadd.f32 %v6934, %v6565
          %v6936 = vadd.f32 %v6935, %v6573
          %v6937 = vadd.f32 %v6936, %v6581
          %v6938 = vadd.f32 %v6937, %v6589
          %v6939 = vadd.f32 %v6938, %v6597
          %v6940 = vrot.slane %v6939, 4
          %v6941 = vadd.f32 %v6939, %v6940
          %v6942 = vrot.slane %v6941, 2
          %v6943 = vadd.f32 %v6941, %v6942
          %v6944 = vrot.slane %v6943, 1
          %v6945 = vadd.f32 %v6943, %v6944
          %v6946 = vadd.f32 %v6094, %v6102
          %v6947 = vadd.f32 %v6946, %v6110
          %v6948 = vadd.f32 %v6947, %v6118
          %v6949 = vadd.f32 %v6948, %v6126
          %v6950 = vadd.f32 %v6949, %v6134
          %v6951 = vadd.f32 %v6950, %v6142
          %v6952 = vadd.f32 %v6951, %v6150
          %v6953 = vadd.f32 %v6952, %v6158
          %v6954 = vadd.f32 %v6953, %v6166
          %v6955 = vadd.f32 %v6954, %v6174
          %v6956 = vadd.f32 %v6955, %v6182
          %v6957 = vadd.f32 %v6956, %v6190
          %v6958 = vadd.f32 %v6957, %v6198
          %v6959 = vadd.f32 %v6958, %v6206
          %v6960 = vadd.f32 %v6959, %v6214
          %v6961 = vadd.f32 %v6960, %v6222
          %v6962 = vadd.f32 %v6961, %v6230
          %v6963 = vadd.f32 %v6962, %v6238
          %v6964 = vadd.f32 %v6963, %v6246
          %v6965 = vadd.f32 %v6964, %v6254
          %v6966 = vadd.f32 %v6965, %v6262
          %v6967 = vadd.f32 %v6966, %v6270
          %v6968 = vadd.f32 %v6967, %v6278
          %v6969 = vadd.f32 %v6968, %v6286
          %v6970 = vadd.f32 %v6969, %v6294
          %v6971 = vadd.f32 %v6970, %v6302
          %v6972 = vadd.f32 %v6971, %v6310
          %v6973 = vadd.f32 %v6972, %v6318
          %v6974 = vadd.f32 %v6973, %v6326
          %v6975 = vadd.f32 %v6974, %v6334
          %v6976 = vadd.f32 %v6975, %v6342
          %v6977 = vadd.f32 %v6976, %v6350
          %v6978 = vadd.f32 %v6977, %v6358
          %v6979 = vadd.f32 %v6978, %v6366
          %v6980 = vadd.f32 %v6979, %v6374
          %v6981 = vadd.f32 %v6980, %v6382
          %v6982 = vadd.f32 %v6981, %v6390
          %v6983 = vadd.f32 %v6982, %v6398
          %v6984 = vadd.f32 %v6983, %v6406
          %v6985 = vadd.f32 %v6984, %v6414
          %v6986 = vadd.f32 %v6985, %v6422
          %v6987 = vadd.f32 %v6986, %v6430
          %v6988 = vadd.f32 %v6987, %v6438
          %v6989 = vadd.f32 %v6988, %v6446
          %v6990 = vadd.f32 %v6989, %v6454
          %v6991 = vadd.f32 %v6990, %v6462
          %v6992 = vadd.f32 %v6991, %v6470
          %v6993 = vadd.f32 %v6992, %v6478
          %v6994 = vadd.f32 %v6993, %v6486
          %v6995 = vadd.f32 %v6994, %v6494
          %v6996 = vadd.f32 %v6995, %v6502
          %v6997 = vadd.f32 %v6996, %v6510
          %v6998 = vadd.f32 %v6997, %v6518
          %v6999 = vadd.f32 %v6998, %v6526
          %v7000 = vadd.f32 %v6999, %v6534
          %v7001 = vadd.f32 %v7000, %v6542
          %v7002 = vadd.f32 %v7001, %v6550
          %v7003 = vadd.f32 %v7002, %v6558
          %v7004 = vadd.f32 %v7003, %v6566
          %v7005 = vadd.f32 %v7004, %v6574
          %v7006 = vadd.f32 %v7005, %v6582
          %v7007 = vadd.f32 %v7006, %v6590
          %v7008 = vadd.f32 %v7007, %v6598
          %v7009 = vrot.slane %v7008, 4
          %v7010 = vadd.f32 %v7008, %v7009
          %v7011 = vrot.slane %v7010, 2
          %v7012 = vadd.f32 %v7010, %v7011
          %v7013 = vrot.slane %v7012, 1
          %v7014 = vadd.f32 %v7012, %v7013
          %v7015 = vadd.f32 %v6095, %v6103
          %v7016 = vadd.f32 %v7015, %v6111
          %v7017 = vadd.f32 %v7016, %v6119
          %v7018 = vadd.f32 %v7017, %v6127
          %v7019 = vadd.f32 %v7018, %v6135
          %v7020 = vadd.f32 %v7019, %v6143
          %v7021 = vadd.f32 %v7020, %v6151
          %v7022 = vadd.f32 %v7021, %v6159
          %v7023 = vadd.f32 %v7022, %v6167
          %v7024 = vadd.f32 %v7023, %v6175
          %v7025 = vadd.f32 %v7024, %v6183
          %v7026 = vadd.f32 %v7025, %v6191
          %v7027 = vadd.f32 %v7026, %v6199
          %v7028 = vadd.f32 %v7027, %v6207
          %v7029 = vadd.f32 %v7028, %v6215
          %v7030 = vadd.f32 %v7029, %v6223
          %v7031 = vadd.f32 %v7030, %v6231
          %v7032 = vadd.f32 %v7031, %v6239
          %v7033 = vadd.f32 %v7032, %v6247
          %v7034 = vadd.f32 %v7033, %v6255
          %v7035 = vadd.f32 %v7034, %v6263
          %v7036 = vadd.f32 %v7035, %v6271
          %v7037 = vadd.f32 %v7036, %v6279
          %v7038 = vadd.f32 %v7037, %v6287
          %v7039 = vadd.f32 %v7038, %v6295
          %v7040 = vadd.f32 %v7039, %v6303
          %v7041 = vadd.f32 %v7040, %v6311
          %v7042 = vadd.f32 %v7041, %v6319
          %v7043 = vadd.f32 %v7042, %v6327
          %v7044 = vadd.f32 %v7043, %v6335
          %v7045 = vadd.f32 %v7044, %v6343
          %v7046 = vadd.f32 %v7045, %v6351
          %v7047 = vadd.f32 %v7046, %v6359
          %v7048 = vadd.f32 %v7047, %v6367
          %v7049 = vadd.f32 %v7048, %v6375
          %v7050 = vadd.f32 %v7049, %v6383
          %v7051 = vadd.f32 %v7050, %v6391
          %v7052 = vadd.f32 %v7051, %v6399
          %v7053 = vadd.f32 %v7052, %v6407
          %v7054 = vadd.f32 %v7053, %v6415
          %v7055 = vadd.f32 %v7054, %v6423
          %v7056 = vadd.f32 %v7055, %v6431
          %v7057 = vadd.f32 %v7056, %v6439
          %v7058 = vadd.f32 %v7057, %v6447
          %v7059 = vadd.f32 %v7058, %v6455
          %v7060 = vadd.f32 %v7059, %v6463
          %v7061 = vadd.f32 %v7060, %v6471
          %v7062 = vadd.f32 %v7061, %v6479
          %v7063 = vadd.f32 %v7062, %v6487
          %v7064 = vadd.f32 %v7063, %v6495
          %v7065 = vadd.f32 %v7064, %v6503
          %v7066 = vadd.f32 %v7065, %v6511
          %v7067 = vadd.f32 %v7066, %v6519
          %v7068 = vadd.f32 %v7067, %v6527
          %v7069 = vadd.f32 %v7068, %v6535
          %v7070 = vadd.f32 %v7069, %v6543
          %v7071 = vadd.f32 %v7070, %v6551
          %v7072 = vadd.f32 %v7071, %v6559
          %v7073 = vadd.f32 %v7072, %v6567
          %v7074 = vadd.f32 %v7073, %v6575
          %v7075 = vadd.f32 %v7074, %v6583
          %v7076 = vadd.f32 %v7075, %v6591
          %v7077 = vadd.f32 %v7076, %v6599
          %v7078 = vrot.slane %v7077, 4
          %v7079 = vadd.f32 %v7077, %v7078
          %v7080 = vrot.slane %v7079, 2
          %v7081 = vadd.f32 %v7079, %v7080
          %v7082 = vrot.slane %v7081, 1
          %v7083 = vadd.f32 %v7081, %v7082
          %v7084 = vadd.f32 %v6096, %v6104
          %v7085 = vadd.f32 %v7084, %v6112
          %v7086 = vadd.f32 %v7085, %v6120
          %v7087 = vadd.f32 %v7086, %v6128
          %v7088 = vadd.f32 %v7087, %v6136
          %v7089 = vadd.f32 %v7088, %v6144
          %v7090 = vadd.f32 %v7089, %v6152
          %v7091 = vadd.f32 %v7090, %v6160
          %v7092 = vadd.f32 %v7091, %v6168
          %v7093 = vadd.f32 %v7092, %v6176
          %v7094 = vadd.f32 %v7093, %v6184
          %v7095 = vadd.f32 %v7094, %v6192
          %v7096 = vadd.f32 %v7095, %v6200
          %v7097 = vadd.f32 %v7096, %v6208
          %v7098 = vadd.f32 %v7097, %v6216
          %v7099 = vadd.f32 %v7098, %v6224
          %v7100 = vadd.f32 %v7099, %v6232
          %v7101 = vadd.f32 %v7100, %v6240
          %v7102 = vadd.f32 %v7101, %v6248
          %v7103 = vadd.f32 %v7102, %v6256
          %v7104 = vadd.f32 %v7103, %v6264
          %v7105 = vadd.f32 %v7104, %v6272
          %v7106 = vadd.f32 %v7105, %v6280
          %v7107 = vadd.f32 %v7106, %v6288
          %v7108 = vadd.f32 %v7107, %v6296
          %v7109 = vadd.f32 %v7108, %v6304
          %v7110 = vadd.f32 %v7109, %v6312
          %v7111 = vadd.f32 %v7110, %v6320
          %v7112 = vadd.f32 %v7111, %v6328
          %v7113 = vadd.f32 %v7112, %v6336
          %v7114 = vadd.f32 %v7113, %v6344
          %v7115 = vadd.f32 %v7114, %v6352
          %v7116 = vadd.f32 %v7115, %v6360
          %v7117 = vadd.f32 %v7116, %v6368
          %v7118 = vadd.f32 %v7117, %v6376
          %v7119 = vadd.f32 %v7118, %v6384
          %v7120 = vadd.f32 %v7119, %v6392
          %v7121 = vadd.f32 %v7120, %v6400
          %v7122 = vadd.f32 %v7121, %v6408
          %v7123 = vadd.f32 %v7122, %v6416
          %v7124 = vadd.f32 %v7123, %v6424
          %v7125 = vadd.f32 %v7124, %v6432
          %v7126 = vadd.f32 %v7125, %v6440
          %v7127 = vadd.f32 %v7126, %v6448
          %v7128 = vadd.f32 %v7127, %v6456
          %v7129 = vadd.f32 %v7128, %v6464
          %v7130 = vadd.f32 %v7129, %v6472
          %v7131 = vadd.f32 %v7130, %v6480
          %v7132 = vadd.f32 %v7131, %v6488
          %v7133 = vadd.f32 %v7132, %v6496
          %v7134 = vadd.f32 %v7133, %v6504
          %v7135 = vadd.f32 %v7134, %v6512
          %v7136 = vadd.f32 %v7135, %v6520
          %v7137 = vadd.f32 %v7136, %v6528
          %v7138 = vadd.f32 %v7137, %v6536
          %v7139 = vadd.f32 %v7138, %v6544
          %v7140 = vadd.f32 %v7139, %v6552
          %v7141 = vadd.f32 %v7140, %v6560
          %v7142 = vadd.f32 %v7141, %v6568
          %v7143 = vadd.f32 %v7142, %v6576
          %v7144 = vadd.f32 %v7143, %v6584
          %v7145 = vadd.f32 %v7144, %v6592
          %v7146 = vadd.f32 %v7145, %v6600
          %v7147 = vrot.slane %v7146, 4
          %v7148 = vadd.f32 %v7146, %v7147
          %v7149 = vrot.slane %v7148, 2
          %v7150 = vadd.f32 %v7148, %v7149
          %v7151 = vrot.slane %v7150, 1
          %v7152 = vadd.f32 %v7150, %v7151
          %v7161 = vcombine.low %v6669, %v6738
          %v7162 = vcombine.low %v6807, %v6876
          %v7163 = vcombine.low %v6945, %v7014
          %v7164 = vcombine.low %v7083, %v7152
          %v7166 = vunpack.c.l.s4 1966171168
          %v7167 = vunpack.c.0.s8 %v7166
          %v7168 = vlaneseq
          %v7169 = vshrl.u32 %v7168, 7
          %v7170 = vsub.s32 %v7167, %v7169
          %v7171 = vrot.slane %v7161, %v7170
          %v7173 = vunpack.c.l.s4 1966171168
          %v7174 = vunpack.c.0.s8 %v7173
          %v7175 = vlaneseq
          %v7176 = vshrl.u32 %v7175, 7
          %v7177 = vsub.s32 %v7174, %v7176
          %v7178 = vrot.slane %v7162, %v7177
          %v7180 = vunpack.c.l.s4 1966171168
          %v7181 = vunpack.c.0.s8 %v7180
          %v7182 = vlaneseq
          %v7183 = vshrl.u32 %v7182, 7
          %v7184 = vsub.s32 %v7181, %v7183
          %v7185 = vrot.slane %v7163, %v7184
          %v7187 = vunpack.c.l.s4 1966171168
          %v7188 = vunpack.c.0.s8 %v7187
          %v7189 = vlaneseq
          %v7190 = vshrl.u32 %v7189, 7
          %v7191 = vsub.s32 %v7188, %v7190
          %v7192 = vrot.slane %v7164, %v7191
          %v7193 = vcombine.low %v7171, %v7178
          %v7194 = vcombine.low %v7185, %v7192
          %v7196 = vunpack.c.l.s4 1966171168
          %v7197 = vunpack.c.0.s8 %v7196
          %v7198 = vlaneseq
          %v7199 = vshrl.u32 %v7198, 7
          %v7200 = vsub.s32 %v7197, %v7199
          %v7201 = vrot.slane %v7193, %v7200
          %v7203 = vunpack.c.l.s4 1966171168
          %v7204 = vunpack.c.0.s8 %v7203
          %v7205 = vlaneseq
          %v7206 = vshrl.u32 %v7205, 7
          %v7207 = vsub.s32 %v7204, %v7206
          %v7208 = vrot.slane %v7194, %v7207
          %v7209 = vcombine.low %v7201, %v7208
          %7211 = vst [vmem:[%s400] sm:$0xff] %v7209
        $region60: #{tpu_custom_call.1} parent=35 // pred_fallthru
          _
        %s7212 = sand.u32 %s167, 1
        %s7213 = scalar_lea.sflag [#allocation6], %s7212
        %s7214 = sand.u32 %s167, 1
        %s7215 = smul.addr %s7214, 1024
        %s7216 = scalar_lea.vmem [#allocation12], %s7215
        %s7217 = sand.u32 %s195, 1
        %s7218 = scalar_lea.sflag [#allocation14], %s7217
        %s7219 = sand.u32 %s195, 1
        %s7220 = smul.addr %s7219, 8
        %s7221 = scalar_lea.vmem [#allocation13], %s7220
        // Predicated region
        $region61: #{tpu_custom_call.1} parent=35 // pred_check
          %p7222 = pneg %p177
        $region62: #{tpu_custom_call.1} parent=35 // pred_check_branch
          %7224 = sbr.rel (%p7222) target = $region64
        $region63: #{tpu_custom_call.1} parent=35 // pred_region
          %s7225 = smul.u32 64, %s38
          %s7227 = ssub.s32 16384, 16384
          %7228 = vsyncadd %s7213, %s7227
          %s7229 = smul.addr %s7225, 2
          %s7230 = smul.addr %s37, 128
          %s7231 = sadd.s32 %s7229, %s7230
          %s7232 = smul.addr %s7231, 128
          %s7233 = scalar_lea.hbm %s4, %s7232
          %s7234 = sshll.u32 %s7216, 4
          %s7235 = int_to_ptr.vmem [resolvable:$true] %s7234
          %7240 = dma.vmem_to_hbm [thread:$0]  %s7235, 16384, %s7233, %s7213, 256, 256, 16
        $region64: #{tpu_custom_call.1} parent=35 // pred_fallthru
          _
        // Predicated region
        $region65: #{tpu_custom_call.1} parent=35 // pred_check
          %p7241 = pneg %p205
        $region66: #{tpu_custom_call.1} parent=35 // pred_check_branch
          %7243 = sbr.rel (%p7241) target = $region68
        $region67: #{tpu_custom_call.1} parent=35 // pred_region
          %s7244 = sadd.s32 %s37, %s38
          %s7246 = ssub.s32 128, 128
          %7247 = vsyncadd %s7218, %s7246
          %s7248 = smul.addr %s7244, 8
          %s7249 = smul.addr %s7248, 16
          %s7250 = scalar_lea.hbm %s5, %s7249
          %s7252 = sshll.u32 %s7221, 4
          %s7253 = int_to_ptr.vmem [resolvable:$true] %s7252
          %7255 = dma.vmem_to_hbm [thread:$0]  %s7253, 128, %s7250, %s7218
        $region68: #{tpu_custom_call.1} parent=35 // pred_fallthru
          _
      $region36: #{tpu_custom_call.1} parent=5 // pred_fallthru
        _
      %p7256 = scmp.le.s32.totalorder 2, %s27
      // Predicated region
      $region69: #{tpu_custom_call.1} parent=5 // pred_check
        %p7257 = pneg %p7256
      $region70: #{tpu_custom_call.1} parent=5 // pred_check_branch
        %7259 = sbr.rel (%p7257) target = $region72
      $region71: #{tpu_custom_call.1} parent=5 // pred_region
        %s7260 = ssub.s32 %s27, 2
        // Predicated region
        $region73: #{tpu_custom_call.1} parent=71 // pred_check
          %p7261 = pneg %p183
        $region74: #{tpu_custom_call.1} parent=71 // pred_check_branch
          %7263 = sbr.rel (%p7261) target = $region76
        $region75: #{tpu_custom_call.1} parent=71 // pred_region
          %s7264 = sand.u32 %s168, 1
          %s7265 = scalar_lea.sflag [#allocation6], %s7264
          %s7266 = sand.u32 %s168, 1
          %s7267 = smul.addr %s7266, 1024
          %s7268 = scalar_lea.vmem [#allocation12], %s7267
          %7269 = dma.done %s7265, 16384
        $region76: #{tpu_custom_call.1} parent=71 // pred_fallthru
          _
        // Predicated region
        $region77: #{tpu_custom_call.1} parent=71 // pred_check
          %p7270 = pneg %p211
        $region78: #{tpu_custom_call.1} parent=71 // pred_check_branch
          %7272 = sbr.rel (%p7270) target = $region80
        $region79: #{tpu_custom_call.1} parent=71 // pred_region
          %s7273 = sand.u32 %s196, 1
          %s7274 = scalar_lea.sflag [#allocation14], %s7273
          %s7275 = sand.u32 %s196, 1
          %s7276 = smul.addr %s7275, 8
          %s7277 = scalar_lea.vmem [#allocation13], %s7276
          %7278 = dma.done %s7274, 128
        $region80: #{tpu_custom_call.1} parent=71 // pred_fallthru
          _
      $region72: #{tpu_custom_call.1} parent=5 // pred_fallthru
        _
    $region6: #{tpu_custom_call.1} parent=1 // loop_footer
      %s31 = sadd.s32 1, %s27
    $region7: #{tpu_custom_call.1} parent=1 // loop_footer_branch
      %26 = sbr.rel target = $region3
    $region8: #{tpu_custom_call.1} parent=1 // loop_exit
      _
    %7279 = vsyncpa [#allocation5], 1
    %s7280 = scalar_lea.sflag [#allocation5], 1
    %7281 = vsyncpa %s7280, 1
    %7282 = vsyncpa [#allocation8], 1
    %s7283 = scalar_lea.sflag [#allocation8], 1
    %7284 = vsyncpa %s7283, 1
    %7285 = vsyncpa [#allocation11], 1
    %s7286 = scalar_lea.sflag [#allocation11], 1
    %7287 = vsyncpa %s7286, 1
    %7288 = vsyncpa [#allocation6], 1
    %s7289 = scalar_lea.sflag [#allocation6], 1
    %7290 = vsyncpa %s7289, 1
    %7291 = vsyncpa [#allocation14], 1
    %s7292 = scalar_lea.sflag [#allocation14], 1
    %7293 = vsyncpa %s7292, 1

</llo_original>
